<compile_context>
chip_gen: v7x
topology: tpu7x:2x2x1
jax: 0.10.0
libtpu: 0.0.40
codegen_flags: <defaults>
</compile_context>

<pallas_src>
import functools

import jax
import jax.numpy as jnp
from jax import lax
from jax.experimental import pallas as pl
from jax.experimental.pallas import tpu as pltpu

EPS = 1e-5
SLOPE = 0.1
LANE = 128
VMEM_LIMIT_BYTES = 64 * 1024 * 1024  # fits v7x's 64 MiB/TC; fine on v5e/v6e


def _cparams(n_parallel):
    return pltpu.CompilerParams(
        dimension_semantics=("parallel",) * n_parallel,
        vmem_limit_bytes=VMEM_LIMIT_BYTES,
    )


def _round_up(x, m):
    return (x + m - 1) // m * m


def _pick_rows(n, target):
    """Largest divisor of n that is <= target and a multiple of 8 (fallback: n)."""
    best = None
    for d in range(1, min(n, target) + 1):
        if n % d == 0 and d % 8 == 0:
            best = d
    return best if best is not None else n


def _pick_th(h, w, target_rows):
    """Largest divisor of h with th*(w+2) <= target_rows and a multiple of 8."""
    wp = w + 2
    best = None
    for d in range(1, h + 1):
        if h % d == 0 and d * wp <= target_rows and (d * wp) % 8 == 0:
            best = d
    return best if best is not None else h


# ---------------------------------------------------------------------------
# K1a: 1x1 conv (channel matmul) + per-tile BN partial sums
# ---------------------------------------------------------------------------
def _conv1x1_stats_kernel(x_ref, w_ref, y_ref, st_ref):
    y = jnp.dot(x_ref[...], w_ref[...], preferred_element_type=jnp.float32)
    y_ref[...] = y
    s = jnp.sum(y, axis=0, keepdims=True)
    q = jnp.sum(y * y, axis=0, keepdims=True)
    st_ref[...] = jnp.concatenate([s, q], axis=0)[None]          # (1, 2, C)


def _conv1x1_stats(x2d, w1):
    m, cin = x2d.shape
    ch = w1.shape[1]
    tm = _pick_rows(m, 1024)
    g = m // tm
    return pl.pallas_call(
        _conv1x1_stats_kernel,
        grid=(g,),
        in_specs=[
            pl.BlockSpec((tm, cin), lambda i: (i, 0)),
            pl.BlockSpec((cin, ch), lambda i: (0, 0)),
        ],
        out_specs=[
            pl.BlockSpec((tm, ch), lambda i: (i, 0)),
            pl.BlockSpec((1, 2, ch), lambda i: (i, 0, 0)),
        ],
        out_shape=[
            jax.ShapeDtypeStruct((m, ch), jnp.float32),
            jax.ShapeDtypeStruct((g, 2, ch), jnp.float32),
        ],
        compiler_params=_cparams(1),
    )(x2d, w1)


# ---------------------------------------------------------------------------
# K2a: 3x3 conv as 9 accumulated shifted matmuls over a DMA'd halo window
#      + per-tile BN partial sums.  Output stays in "padded column" layout
#      (rows = N*H*(W+2)); the two pad columns per image row are zeroed and
#      excluded from the stats, and sliced away in the wrapper.
# ---------------------------------------------------------------------------
def _conv3x3_stats_kernel(p_ref, w2_ref, y2_ref, st_ref, pbuf, acc, dma_sem,
                          *, h, w, th):
    wp = w + 2
    out_rows = th * wp
    halo_rows = (th + 2) * wp + 2
    n = pl.program_id(0)
    hb = pl.program_id(1)
    # start row inside the (flattened, +1-row-padded) padded activation slab
    row0 = n * (h + 2) * wp + hb * th * wp
    cp = pltpu.make_async_copy(p_ref.at[pl.ds(row0, halo_rows), :], pbuf, dma_sem)
    cp.start()
    cp.wait()

    acc[...] = jnp.zeros_like(acc)
    for k in range(9):                       # static loop over the 9 taps
        dy, dx = divmod(k, 3)
        lhs = pbuf[pl.ds(dy * wp + dx, out_rows), :]
        acc[...] += jnp.dot(lhs, w2_ref[k], preferred_element_type=jnp.float32)

    col = lax.broadcasted_iota(jnp.int32, (out_rows, 1), 0) % wp
    valid = jnp.logical_and(col >= 1, col <= w)
    y = jnp.where(valid, acc[...], 0.0)      # zero the padded columns
    y2_ref[...] = y
    s = jnp.sum(y, axis=0, keepdims=True)
    q = jnp.sum(y * y, axis=0, keepdims=True)
    st_ref[...] = jnp.concatenate([s, q], axis=0)[None, None]    # (1, 1, 2, C)


def _conv3x3_stats(p_flat, w2mat, n_img, h, w):
    chp, coutp = w2mat.shape[1], w2mat.shape[2]
    wp = w + 2
    th = _pick_th(h, w, 1024)
    n_hblocks = h // th
    out_rows = th * wp
    halo_rows = (th + 2) * wp + 2
    kernel = functools.partial(_conv3x3_stats_kernel, h=h, w=w, th=th)
    return pl.pallas_call(
        kernel,
        grid=(n_img, n_hblocks),
        in_specs=[
            pl.BlockSpec(memory_space=pl.ANY),                   # manual halo DMA
            pl.BlockSpec((9, chp, coutp), lambda i, j: (0, 0, 0)),
        ],
        out_specs=[
            pl.BlockSpec((out_rows, coutp), lambda i, j: (i * n_hblocks + j, 0)),
            pl.BlockSpec((1, 1, 2, coutp), lambda i, j: (i, j, 0, 0)),
        ],
        out_shape=[
            jax.ShapeDtypeStruct((n_img * h * wp, coutp), jnp.float32),
            jax.ShapeDtypeStruct((n_img, n_hblocks, 2, coutp), jnp.float32),
        ],
        scratch_shapes=[
            pltpu.VMEM((halo_rows, chp), jnp.float32),           # halo'd input window
            pltpu.VMEM((out_rows, coutp), jnp.float32),          # f32 accumulator
            pltpu.SemaphoreType.DMA,
        ],
        compiler_params=_cparams(2),
    )(p_flat, w2mat)


# ---------------------------------------------------------------------------
# K1b / K2b: BN-folded affine + LeakyReLU (+ residual)
# ---------------------------------------------------------------------------
def _affine_lrelu_kernel(y_ref, sc_ref, sh_ref, o_ref):
    z = y_ref[...] * sc_ref[...] + sh_ref[...]
    o_ref[...] = jnp.where(z >= 0, z, SLOPE * z)


def _affine_lrelu_res_kernel(y_ref, sc_ref, sh_ref, r_ref, o_ref):
    z = y_ref[...] * sc_ref[...] + sh_ref[...]
    o_ref[...] = jnp.where(z >= 0, z, SLOPE * z) + r_ref[...]


def _affine_lrelu(y, scale, shift):
    m, c = y.shape
    tm = _pick_rows(m, 1024)
    g = m // tm
    return pl.pallas_call(
        _affine_lrelu_kernel,
        grid=(g,),
        in_specs=[
            pl.BlockSpec((tm, c), lambda i: (i, 0)),
            pl.BlockSpec((1, c), lambda i: (0, 0)),
            pl.BlockSpec((1, c), lambda i: (0, 0)),
        ],
        out_specs=pl.BlockSpec((tm, c), lambda i: (i, 0)),
        out_shape=jax.ShapeDtypeStruct((m, c), jnp.float32),
        compiler_params=_cparams(1),
    )(y, scale, shift)


def _affine_lrelu_res(y, scale, shift, res):
    m, c = y.shape
    tm = _pick_rows(m, 1024)
    g = m // tm
    return pl.pallas_call(
        _affine_lrelu_res_kernel,
        grid=(g,),
        in_specs=[
            pl.BlockSpec((tm, c), lambda i: (i, 0)),
            pl.BlockSpec((1, c), lambda i: (0, 0)),
            pl.BlockSpec((1, c), lambda i: (0, 0)),
            pl.BlockSpec((tm, c), lambda i: (i, 0)),
        ],
        out_specs=pl.BlockSpec((tm, c), lambda i: (i, 0)),
        out_shape=jax.ShapeDtypeStruct((m, c), jnp.float32),
        input_output_aliases={3: 0},   # write the result into the residual buffer
        compiler_params=_cparams(1),
    )(y, scale, shift, res)


# ---------------------------------------------------------------------------
# BN fold: combine per-tile partial sums -> per-channel scale / shift
# ---------------------------------------------------------------------------
def _bn_fold(stats, count, gamma, beta):
    s = stats.reshape(-1, 2, stats.shape[-1])
    tot = jnp.sum(s, axis=0)                              # (2, C)
    mean = tot[0] / count
    var = jnp.maximum(tot[1] / count - mean * mean, 0.0)  # biased variance
    scale = gamma * lax.rsqrt(var + EPS)
    shift = beta - mean * scale
    return scale.reshape(1, -1), shift.reshape(1, -1)


# ---------------------------------------------------------------------------
# ResBlock forward (wrapper): NCHW in -> NCHW out
# ---------------------------------------------------------------------------
def resblock_forward(x_nchw, params):
    n, cin, h, w = x_nchw.shape
    ch = params["w1"].shape[1]
    cinp = _round_up(max(cin, LANE), LANE)
    chp = _round_up(max(ch, LANE), LANE)
    m = n * h * w
    wp = w + 2

    # NCHW -> NHWC -> lane-dense (M, Cinp) slab                        (glue)
    x_nhwc = jnp.transpose(x_nchw, (0, 2, 3, 1)).astype(jnp.float32)
    x2d = jnp.pad(x_nhwc.reshape(m, cin), ((0, 0), (0, cinp - cin)))

    # ---- conv1: 1x1 + BN + LeakyReLU ----
    w1p = jnp.pad(params["w1"], ((0, cinp - cin), (0, chp - ch)))
    y1, stats1 = _conv1x1_stats(x2d, w1p)
    g1p = jnp.pad(params["g1"], (0, chp - ch), constant_values=1.0)
    b1p = jnp.pad(params["b1"], (0, chp - ch))
    scale1, shift1 = _bn_fold(stats1, m, g1p, b1p)
    y1a = _affine_lrelu(y1, scale1, shift1)                           # (M, Chp)

    # ---- conv2: 3x3 / pad=1 + BN + LeakyReLU + residual ----
    # Spatially pad the *activated* map (so the border contributes zeros),
    # flatten rows, add one extra zero row front/back so every tap is an
    # in-bounds slice of the DMA'd halo window.  (~1.1x traffic vs 9x im2col.)
    p_flat = jnp.pad(y1a.reshape(n, h, w, chp),
                     ((0, 0), (1, 1), (1, 1), (0, 0))).reshape(n * (h + 2) * wp, chp)
    p_flat = jnp.pad(p_flat, ((1, 1), (0, 0)))

    w2p = jnp.pad(params["w2"], ((0, 0), (0, 0), (0, chp - ch), (0, cinp - cin)))
    w2mat = w2p.reshape(9, chp, cinp)                                 # (ky*kx, Ci, Co)
    y2, stats2 = _conv3x3_stats(p_flat, w2mat, n, h, w)               # padded-col layout
    g2p = jnp.pad(params["g2"], (0, cinp - cin), constant_values=1.0)
    b2p = jnp.pad(params["b2"], (0, cinp - cin))
    scale2, shift2 = _bn_fold(stats2, m, g2p, b2p)

    # residual in the same padded-column layout as y2                 (glue)
    xres = jnp.pad(x_nhwc, ((0, 0), (0, 0), (1, 1), (0, cinp - cin))).reshape(
        n * h * wp, cinp)
    out_pc = _affine_lrelu_res(y2, scale2, shift2, xres)

    # drop padded columns / channels, back to NCHW                    (glue)
    out = out_pc.reshape(n, h, wp, cinp)[:, :, 1:w + 1, :cin]
    return jnp.transpose(out, (0, 3, 1, 2))


# ---------------------------------------------------------------------------
# Pure-JAX reference (lax.conv) for validation
# ---------------------------------------------------------------------------
def _bn_train(y, g, b):
    mean = jnp.mean(y, axis=(0, 2, 3), keepdims=True)
    var = jnp.mean((y - mean) ** 2, axis=(0, 2, 3), keepdims=True)
    return (y - mean) * lax.rsqrt(var + EPS) * g.reshape(1, -1, 1, 1) + b.reshape(1, -1, 1, 1)


def _leaky(z):
    return jnp.where(z >= 0, z, SLOPE * z)


def resblock_reference(x, params):
    cin = x.shape[1]
    ch = params["w1"].shape[1]
    w1_oihw = params["w1"].T.reshape(ch, cin, 1, 1)
    y = lax.conv_general_dilated(x, w1_oihw, (1, 1), "SAME",
                                 dimension_numbers=("NCHW", "OIHW", "NCHW"))
    y = _leaky(_bn_train(y, params["g1"], params["b1"]))
    w2_oihw = jnp.transpose(params["w2"], (3, 2, 0, 1))   # HWIO -> OIHW
    y = lax.conv_general_dilated(y, w2_oihw, (1, 1), "SAME",
                                 dimension_numbers=("NCHW", "OIHW", "NCHW"))
    y = _leaky(_bn_train(y, params["g2"], params["b2"]))
    return y + x


# ---------------------------------------------------------------------------
def make_params(key, in_dim):
    hidden = in_dim // 2
    k1, k2, k3, k4, k5, k6 = jax.random.split(key, 6)
    return {
        # conv1: 1x1, stored as (Cin, Ch)
        "w1": 0.1 * jax.random.normal(k1, (in_dim, hidden), jnp.float32),
        "g1": 1.0 + 0.1 * jax.random.normal(k2, (hidden,), jnp.float32),
        "b1": 0.1 * jax.random.normal(k3, (hidden,), jnp.float32),
        # conv2: 3x3, stored HWIO (ky, kx, Ch, Cout)
        "w2": 0.1 * jax.random.normal(k4, (3, 3, hidden, in_dim), jnp.float32),
        "g2": 1.0 + 0.1 * jax.random.normal(k5, (in_dim,), jnp.float32),
        "b2": 0.1 * jax.random.normal(k6, (in_dim,), jnp.float32),
    }


if __name__ == "__main__":
    N, C, H, W = 2, 4, 16, 16          # in_dim = 4 (even), hidden = 2
    key = jax.random.PRNGKey(0)
    kx, kp = jax.random.split(key)
    x = jax.random.normal(kx, (N, C, H, W), jnp.float32)
    params = make_params(kp, C)

    out = jax.jit(resblock_forward)(x, params)
    out = jax.block_until_ready(out)

    ref = resblock_reference(x, params)
    assert out.shape == (N, C, H, W)
    assert jnp.allclose(out, ref, rtol=1e-3, atol=1e-3), "mismatch vs reference"

    print("KERNEL_OK")
</pallas_src>

<mosaic_0001>
module attributes {stable_mosaic.version = 11 : i64} {
  func.func @_conv1x1_stats_kernel(%arg0: i32, %arg1: memref<512x128xf32, #tpu.memory_space<vmem>>, %arg2: memref<128x128xf32, #tpu.memory_space<vmem>>, %arg3: memref<512x128xf32, #tpu.memory_space<vmem>>, %arg4: memref<1x2x128xf32, #tpu.memory_space<vmem>>) attributes {dimension_semantics = [#tpu.dimension_semantics<parallel>], iteration_bounds = array<i64: 1>, scalar_prefetch = 0 : i64, scratch_operands = 0 : i64, tpu.core_type = #tpu.core_type<tc>, window_params = [{transform_indices = @transform_0, window_bounds = array<i64: 512, 128>}, {pipeline_mode = #tpu.pipeline_mode<synchronous>, transform_indices = @transform_1, window_bounds = array<i64: 128, 128>}, {transform_indices = @transform_2, window_bounds = array<i64: 512, 128>}, {transform_indices = @transform_3, window_bounds = array<i64: 1, 2, 128>}]} {
    %c0 = arith.constant 0 : index
    %c0_0 = arith.constant 0 : index
    %0 = vector.load %arg1[%c0, %c0_0] : memref<512x128xf32, #tpu.memory_space<vmem>>, vector<512x128xf32>
    %c0_1 = arith.constant 0 : index
    %c0_2 = arith.constant 0 : index
    %1 = vector.load %arg2[%c0_1, %c0_2] : memref<128x128xf32, #tpu.memory_space<vmem>>, vector<128x128xf32>
    %cst = arith.constant dense<0.000000e+00> : vector<512x128xf32>
    %2 = tpu.matmul %0, %1, %cst {dimension_numbers = #tpu.dot_dimension_numbers<[1], [0], [0], [1], [0, 0, 1, 1], [], []>} : vector<512x128xf32>, vector<128x128xf32>, vector<512x128xf32> -> vector<512x128xf32>
    %c0_3 = arith.constant 0 : index
    %c0_4 = arith.constant 0 : index
    %3 = vector.load %arg3[%c0_3, %c0_4] : memref<512x128xf32, #tpu.memory_space<vmem>>, vector<512x128xf32>
    tpu.vector_store %arg3[%c0_3, %c0_4], %2 {strides = array<i32>} : memref<512x128xf32, #tpu.memory_space<vmem>>, vector<512x128xf32>,
    %cst_5 = arith.constant dense<0.000000e+00> : vector<128xf32>
    %4 = vector.multi_reduction <add>, %2, %cst_5 [0] : vector<512x128xf32> to vector<128xf32>
    %5 = vector.shape_cast %4 : vector<128xf32> to vector<1x128xf32>
    %6 = arith.mulf %2, %2 : vector<512x128xf32>
    %cst_6 = arith.constant dense<0.000000e+00> : vector<128xf32>
    %7 = vector.multi_reduction <add>, %6, %cst_6 [0] : vector<512x128xf32> to vector<128xf32>
    %8 = vector.shape_cast %7 : vector<128xf32> to vector<1x128xf32>
    %9 = tpu.concatenate %5, %8 in 0 : vector<1x128xf32>, vector<1x128xf32> -> vector<2x128xf32>
    %10 = vector.shape_cast %9 : vector<2x128xf32> to vector<1x2x128xf32>
    %c0_7 = arith.constant 0 : index
    %c0_8 = arith.constant 0 : index
    %c0_9 = arith.constant 0 : index
    %11 = vector.load %arg4[%c0_7, %c0_8, %c0_9] : memref<1x2x128xf32, #tpu.memory_space<vmem>>, vector<1x2x128xf32>
    tpu.vector_store %arg4[%c0_7, %c0_8, %c0_9], %10 {strides = array<i32>} : memref<1x2x128xf32, #tpu.memory_space<vmem>>, vector<1x2x128xf32>,
    return
  }
  func.func @transform_0(%arg0: i32) -> (i32, i32) {
    %c0_i32 = arith.constant 0 : i32
    %c0_i32_0 = arith.constant 0 : i32
    return %arg0, %c0_i32 : i32, i32
  }
  func.func @transform_1(%arg0: i32) -> (i32, i32) {
    %c0_i32 = arith.constant 0 : i32
    %c0_i32_0 = arith.constant 0 : i32
    %c0_i32_1 = arith.constant 0 : i32
    return %c0_i32, %c0_i32_0 : i32, i32
  }
  func.func @transform_2(%arg0: i32) -> (i32, i32) {
    %c0_i32 = arith.constant 0 : i32
    %c0_i32_0 = arith.constant 0 : i32
    return %arg0, %c0_i32 : i32, i32
  }
  func.func @transform_3(%arg0: i32) -> (i32, i32, i32) {
    %c0_i32 = arith.constant 0 : i32
    %c0_i32_0 = arith.constant 0 : i32
    %c0_i32_1 = arith.constant 0 : i32
    return %arg0, %c0_i32, %c0_i32_0 : i32, i32, i32
  }
}

module attributes {stable_mosaic.version = 11 : i64} {
  func.func @_affine_lrelu_kernel(%arg0: i32, %arg1: memref<512x128xf32, #tpu.memory_space<vmem>>, %arg2: memref<1x128xf32, #tpu.memory_space<vmem>>, %arg3: memref<1x128xf32, #tpu.memory_space<vmem>>, %arg4: memref<512x128xf32, #tpu.memory_space<vmem>>) attributes {dimension_semantics = [#tpu.dimension_semantics<parallel>], iteration_bounds = array<i64: 1>, scalar_prefetch = 0 : i64, scratch_operands = 0 : i64, tpu.core_type = #tpu.core_type<tc>, window_params = [{transform_indices = @transform_0, window_bounds = array<i64: 512, 128>}, {pipeline_mode = #tpu.pipeline_mode<synchronous>, transform_indices = @transform_1, window_bounds = array<i64: 1, 128>}, {pipeline_mode = #tpu.pipeline_mode<synchronous>, transform_indices = @transform_2, window_bounds = array<i64: 1, 128>}, {transform_indices = @transform_3, window_bounds = array<i64: 512, 128>}]} {
    %c0 = arith.constant 0 : index
    %c0_0 = arith.constant 0 : index
    %0 = vector.load %arg1[%c0, %c0_0] : memref<512x128xf32, #tpu.memory_space<vmem>>, vector<512x128xf32>
    %c0_1 = arith.constant 0 : index
    %c0_2 = arith.constant 0 : index
    %1 = vector.load %arg2[%c0_1, %c0_2] : memref<1x128xf32, #tpu.memory_space<vmem>>, vector<1x128xf32>
    %2 = vector.broadcast %1 : vector<1x128xf32> to vector<512x128xf32>
    %3 = arith.mulf %0, %2 : vector<512x128xf32>
    %c0_3 = arith.constant 0 : index
    %c0_4 = arith.constant 0 : index
    %4 = vector.load %arg3[%c0_3, %c0_4] : memref<1x128xf32, #tpu.memory_space<vmem>>, vector<1x128xf32>
    %5 = vector.broadcast %4 : vector<1x128xf32> to vector<512x128xf32>
    %6 = arith.addf %3, %5 : vector<512x128xf32>
    %cst = arith.constant 0.000000e+00 : f32
    %7 = vector.broadcast %cst : f32 to vector<512x128xf32>
    %8 = arith.cmpf oge, %6, %7 : vector<512x128xf32>
    %cst_5 = arith.constant 1.000000e-01 : f32
    %9 = vector.broadcast %cst_5 : f32 to vector<512x128xf32>
    %10 = arith.mulf %9, %6 : vector<512x128xf32>
    %11 = arith.select %8, %6, %10 : vector<512x128xi1>, vector<512x128xf32>
    %c0_6 = arith.constant 0 : index
    %c0_7 = arith.constant 0 : index
    %12 = vector.load %arg4[%c0_6, %c0_7] : memref<512x128xf32, #tpu.memory_space<vmem>>, vector<512x128xf32>
    tpu.vector_store %arg4[%c0_6, %c0_7], %11 {strides = array<i32>} : memref<512x128xf32, #tpu.memory_space<vmem>>, vector<512x128xf32>,
    return
  }
  func.func @transform_0(%arg0: i32) -> (i32, i32) {
    %c0_i32 = arith.constant 0 : i32
    %c0_i32_0 = arith.constant 0 : i32
    return %arg0, %c0_i32 : i32, i32
  }
  func.func @transform_1(%arg0: i32) -> (i32, i32) {
    %c0_i32 = arith.constant 0 : i32
    %c0_i32_0 = arith.constant 0 : i32
    %c0_i32_1 = arith.constant 0 : i32
    return %c0_i32, %c0_i32_0 : i32, i32
  }
  func.func @transform_2(%arg0: i32) -> (i32, i32) {
    %c0_i32 = arith.constant 0 : i32
    %c0_i32_0 = arith.constant 0 : i32
    %c0_i32_1 = arith.constant 0 : i32
    return %c0_i32, %c0_i32_0 : i32, i32
  }
  func.func @transform_3(%arg0: i32) -> (i32, i32) {
    %c0_i32 = arith.constant 0 : i32
    %c0_i32_0 = arith.constant 0 : i32
    return %arg0, %c0_i32 : i32, i32
  }
}

module attributes {stable_mosaic.version = 11 : i64} {
  func.func @_conv3x3_stats_kernel(%arg0: i32, %arg1: i32, %arg2: memref<650x128xf32, #tpu.memory_space<any>>, %arg3: memref<9x128x128xf32, #tpu.memory_space<vmem>>, %arg4: memref<288x128xf32, #tpu.memory_space<vmem>>, %arg5: memref<1x1x2x128xf32, #tpu.memory_space<vmem>>, %arg6: memref<326x128xf32, #tpu.memory_space<vmem>>, %arg7: memref<288x128xf32, #tpu.memory_space<vmem>>, %arg8: memref<!tpu.dma_semaphore, #tpu.memory_space<semaphore_mem>>) attributes {dimension_semantics = [#tpu.dimension_semantics<parallel>, #tpu.dimension_semantics<parallel>], iteration_bounds = array<i64: 2, 1>, scalar_prefetch = 0 : i64, scratch_operands = 3 : i64, tpu.core_type = #tpu.core_type<tc>, window_params = [{}, {pipeline_mode = #tpu.pipeline_mode<synchronous>, transform_indices = @transform_1, window_bounds = array<i64: 9, 128, 128>}, {transform_indices = @transform_2, window_bounds = array<i64: 288, 128>}, {transform_indices = @transform_3, window_bounds = array<i64: 1, 1, 2, 128>}]} {
    %c18_i32 = arith.constant 18 : i32
    %0 = arith.muli %arg0, %c18_i32 : i32
    %c18_i32_0 = arith.constant 18 : i32
    %1 = arith.muli %0, %c18_i32_0 : i32
    %c16_i32 = arith.constant 16 : i32
    %2 = arith.muli %arg1, %c16_i32 : i32
    %c18_i32_1 = arith.constant 18 : i32
    %3 = arith.muli %2, %c18_i32_1 : i32
    %4 = arith.addi %1, %3 : i32
    %c0_i32 = arith.constant 0 : i32
    %5 = tpu.memref_slice %arg2[%4, %c0_i32] : memref<650x128xf32, #tpu.memory_space<any>> -> memref<326x128xf32, #tpu.memory_space<any>>
    tpu.enqueue_dma source(%5 : memref<326x128xf32, #tpu.memory_space<any>>) target(%arg6 : memref<326x128xf32, #tpu.memory_space<vmem>>) target_semaphore(%arg8 : memref<!tpu.dma_semaphore, #tpu.memory_space<semaphore_mem>>)
    %c0_i32_2 = arith.constant 0 : i32
    %6 = tpu.memref_slice %arg2[%4, %c0_i32_2] : memref<650x128xf32, #tpu.memory_space<any>> -> memref<326x128xf32, #tpu.memory_space<any>>
    tpu.wait_dma2 semaphore(%arg8 : memref<!tpu.dma_semaphore, #tpu.memory_space<semaphore_mem>>) src(%6 : memref<326x128xf32, #tpu.memory_space<any>>) dst(%arg6 : memref<326x128xf32, #tpu.memory_space<vmem>>)
    %cst = arith.constant 0.000000e+00 : f32
    %7 = vector.broadcast %cst : f32 to vector<288x128xf32>
    %c0 = arith.constant 0 : index
    %c0_3 = arith.constant 0 : index
    %8 = vector.load %arg7[%c0, %c0_3] : memref<288x128xf32, #tpu.memory_space<vmem>>, vector<288x128xf32>
    tpu.vector_store %arg7[%c0, %c0_3], %7 {strides = array<i32>} : memref<288x128xf32, #tpu.memory_space<vmem>>, vector<288x128xf32>,
    %c0_4 = arith.constant 0 : index
    %c0_5 = arith.constant 0 : index
    %9 = vector.load %arg6[%c0_4, %c0_5] : memref<326x128xf32, #tpu.memory_space<vmem>>, vector<288x128xf32>
    %c0_6 = arith.constant 0 : index
    %c0_7 = arith.constant 0 : index
    %10 = vector.load %arg7[%c0_6, %c0_7] : memref<288x128xf32, #tpu.memory_space<vmem>>, vector<288x128xf32>
    %c0_8 = arith.constant 0 : index
    %c0_9 = arith.constant 0 : index
    %c0_10 = arith.constant 0 : index
    %11 = vector.load %arg3[%c0_8, %c0_9, %c0_10] : memref<9x128x128xf32, #tpu.memory_space<vmem>>, vector<1x128x128xf32>
    %12 = vector.shape_cast %11 : vector<1x128x128xf32> to vector<128x128xf32>
    %cst_11 = arith.constant dense<0.000000e+00> : vector<288x128xf32>
    %13 = tpu.matmul %9, %12, %cst_11 {dimension_numbers = #tpu.dot_dimension_numbers<[1], [0], [0], [1], [0, 0, 1, 1], [], []>} : vector<288x128xf32>, vector<128x128xf32>, vector<288x128xf32> -> vector<288x128xf32>
    %14 = arith.addf %10, %13 : vector<288x128xf32>
    %c0_12 = arith.constant 0 : index
    %c0_13 = arith.constant 0 : index
    %15 = vector.load %arg7[%c0_12, %c0_13] : memref<288x128xf32, #tpu.memory_space<vmem>>, vector<288x128xf32>
    tpu.vector_store %arg7[%c0_12, %c0_13], %14 {strides = array<i32>} : memref<288x128xf32, #tpu.memory_space<vmem>>, vector<288x128xf32>,
    %c1 = arith.constant 1 : index
    %c0_14 = arith.constant 0 : index
    %16 = vector.load %arg6[%c1, %c0_14] : memref<326x128xf32, #tpu.memory_space<vmem>>, vector<288x128xf32>
    %c0_15 = arith.constant 0 : index
    %c0_16 = arith.constant 0 : index
    %17 = vector.load %arg7[%c0_15, %c0_16] : memref<288x128xf32, #tpu.memory_space<vmem>>, vector<288x128xf32>
    %c1_17 = arith.constant 1 : index
    %c0_18 = arith.constant 0 : index
    %c0_19 = arith.constant 0 : index
    %18 = vector.load %arg3[%c1_17, %c0_18, %c0_19] : memref<9x128x128xf32, #tpu.memory_space<vmem>>, vector<1x128x128xf32>
    %19 = vector.shape_cast %18 : vector<1x128x128xf32> to vector<128x128xf32>
    %cst_20 = arith.constant dense<0.000000e+00> : vector<288x128xf32>
    %20 = tpu.matmul %16, %19, %cst_20 {dimension_numbers = #tpu.dot_dimension_numbers<[1], [0], [0], [1], [0, 0, 1, 1], [], []>} : vector<288x128xf32>, vector<128x128xf32>, vector<288x128xf32> -> vector<288x128xf32>
    %21 = arith.addf %17, %20 : vector<288x128xf32>
    %c0_21 = arith.constant 0 : index
    %c0_22 = arith.constant 0 : index
    %22 = vector.load %arg7[%c0_21, %c0_22] : memref<288x128xf32, #tpu.memory_space<vmem>>, vector<288x128xf32>
    tpu.vector_store %arg7[%c0_21, %c0_22], %21 {strides = array<i32>} : memref<288x128xf32, #tpu.memory_space<vmem>>, vector<288x128xf32>,
    %c2 = arith.constant 2 : index
    %c0_23 = arith.constant 0 : index
    %23 = vector.load %arg6[%c2, %c0_23] : memref<326x128xf32, #tpu.memory_space<vmem>>, vector<288x128xf32>
    %c0_24 = arith.constant 0 : index
    %c0_25 = arith.constant 0 : index
    %24 = vector.load %arg7[%c0_24, %c0_25] : memref<288x128xf32, #tpu.memory_space<vmem>>, vector<288x128xf32>
    %c2_26 = arith.constant 2 : index
    %c0_27 = arith.constant 0 : index
    %c0_28 = arith.constant 0 : index
    %25 = vector.load %arg3[%c2_26, %c0_27, %c0_28] : memref<9x128x128xf32, #tpu.memory_space<vmem>>, vector<1x128x128xf32>
    %26 = vector.shape_cast %25 : vector<1x128x128xf32> to vector<128x128xf32>
    %cst_29 = arith.constant dense<0.000000e+00> : vector<288x128xf32>
    %27 = tpu.matmul %23, %26, %cst_29 {dimension_numbers = #tpu.dot_dimension_numbers<[1], [0], [0], [1], [0, 0, 1, 1], [], []>} : vector<288x128xf32>, vector<128x128xf32>, vector<288x128xf32> -> vector<288x128xf32>
    %28 = arith.addf %24, %27 : vector<288x128xf32>
    %c0_30 = arith.constant 0 : index
    %c0_31 = arith.constant 0 : index
    %29 = vector.load %arg7[%c0_30, %c0_31] : memref<288x128xf32, #tpu.memory_space<vmem>>, vector<288x128xf32>
    tpu.vector_store %arg7[%c0_30, %c0_31], %28 {strides = array<i32>} : memref<288x128xf32, #tpu.memory_space<vmem>>, vector<288x128xf32>,
    %c18 = arith.constant 18 : index
    %c0_32 = arith.constant 0 : index
    %30 = vector.load %arg6[%c18, %c0_32] : memref<326x128xf32, #tpu.memory_space<vmem>>, vector<288x128xf32>
    %c0_33 = arith.constant 0 : index
    %c0_34 = arith.constant 0 : index
    %31 = vector.load %arg7[%c0_33, %c0_34] : memref<288x128xf32, #tpu.memory_space<vmem>>, vector<288x128xf32>
    %c3 = arith.constant 3 : index
    %c0_35 = arith.constant 0 : index
    %c0_36 = arith.constant 0 : index
    %32 = vector.load %arg3[%c3, %c0_35, %c0_36] : memref<9x128x128xf32, #tpu.memory_space<vmem>>, vector<1x128x128xf32>
    %33 = vector.shape_cast %32 : vector<1x128x128xf32> to vector<128x128xf32>
    %cst_37 = arith.constant dense<0.000000e+00> : vector<288x128xf32>
    %34 = tpu.matmul %30, %33, %cst_37 {dimension_numbers = #tpu.dot_dimension_numbers<[1], [0], [0], [1], [0, 0, 1, 1], [], []>} : vector<288x128xf32>, vector<128x128xf32>, vector<288x128xf32> -> vector<288x128xf32>
    %35 = arith.addf %31, %34 : vector<288x128xf32>
    %c0_38 = arith.constant 0 : index
    %c0_39 = arith.constant 0 : index
    %36 = vector.load %arg7[%c0_38, %c0_39] : memref<288x128xf32, #tpu.memory_space<vmem>>, vector<288x128xf32>
    tpu.vector_store %arg7[%c0_38, %c0_39], %35 {strides = array<i32>} : memref<288x128xf32, #tpu.memory_space<vmem>>, vector<288x128xf32>,
    %c19 = arith.constant 19 : index
    %c0_40 = arith.constant 0 : index
    %37 = vector.load %arg6[%c19, %c0_40] : memref<326x128xf32, #tpu.memory_space<vmem>>, vector<288x128xf32>
    %c0_41 = arith.constant 0 : index
    %c0_42 = arith.constant 0 : index
    %38 = vector.load %arg7[%c0_41, %c0_42] : memref<288x128xf32, #tpu.memory_space<vmem>>, vector<288x128xf32>
    %c4 = arith.constant 4 : index
    %c0_43 = arith.constant 0 : index
    %c0_44 = arith.constant 0 : index
    %39 = vector.load %arg3[%c4, %c0_43, %c0_44] : memref<9x128x128xf32, #tpu.memory_space<vmem>>, vector<1x128x128xf32>
    %40 = vector.shape_cast %39 : vector<1x128x128xf32> to vector<128x128xf32>
    %cst_45 = arith.constant dense<0.000000e+00> : vector<288x128xf32>
    %41 = tpu.matmul %37, %40, %cst_45 {dimension_numbers = #tpu.dot_dimension_numbers<[1], [0], [0], [1], [0, 0, 1, 1], [], []>} : vector<288x128xf32>, vector<128x128xf32>, vector<288x128xf32> -> vector<288x128xf32>
    %42 = arith.addf %38, %41 : vector<288x128xf32>
    %c0_46 = arith.constant 0 : index
    %c0_47 = arith.constant 0 : index
    %43 = vector.load %arg7[%c0_46, %c0_47] : memref<288x128xf32, #tpu.memory_space<vmem>>, vector<288x128xf32>
    tpu.vector_store %arg7[%c0_46, %c0_47], %42 {strides = array<i32>} : memref<288x128xf32, #tpu.memory_space<vmem>>, vector<288x128xf32>,
    %c20 = arith.constant 20 : index
    %c0_48 = arith.constant 0 : index
    %44 = vector.load %arg6[%c20, %c0_48] : memref<326x128xf32, #tpu.memory_space<vmem>>, vector<288x128xf32>
    %c0_49 = arith.constant 0 : index
    %c0_50 = arith.constant 0 : index
    %45 = vector.load %arg7[%c0_49, %c0_50] : memref<288x128xf32, #tpu.memory_space<vmem>>, vector<288x128xf32>
    %c5 = arith.constant 5 : index
    %c0_51 = arith.constant 0 : index
    %c0_52 = arith.constant 0 : index
    %46 = vector.load %arg3[%c5, %c0_51, %c0_52] : memref<9x128x128xf32, #tpu.memory_space<vmem>>, vector<1x128x128xf32>
    %47 = vector.shape_cast %46 : vector<1x128x128xf32> to vector<128x128xf32>
    %cst_53 = arith.constant dense<0.000000e+00> : vector<288x128xf32>
    %48 = tpu.matmul %44, %47, %cst_53 {dimension_numbers = #tpu.dot_dimension_numbers<[1], [0], [0], [1], [0, 0, 1, 1], [], []>} : vector<288x128xf32>, vector<128x128xf32>, vector<288x128xf32> -> vector<288x128xf32>
    %49 = arith.addf %45, %48 : vector<288x128xf32>
    %c0_54 = arith.constant 0 : index
    %c0_55 = arith.constant 0 : index
    %50 = vector.load %arg7[%c0_54, %c0_55] : memref<288x128xf32, #tpu.memory_space<vmem>>, vector<288x128xf32>
    tpu.vector_store %arg7[%c0_54, %c0_55], %49 {strides = array<i32>} : memref<288x128xf32, #tpu.memory_space<vmem>>, vector<288x128xf32>,
    %c36 = arith.constant 36 : index
    %c0_56 = arith.constant 0 : index
    %51 = vector.load %arg6[%c36, %c0_56] : memref<326x128xf32, #tpu.memory_space<vmem>>, vector<288x128xf32>
    %c0_57 = arith.constant 0 : index
    %c0_58 = arith.constant 0 : index
    %52 = vector.load %arg7[%c0_57, %c0_58] : memref<288x128xf32, #tpu.memory_space<vmem>>, vector<288x128xf32>
    %c6 = arith.constant 6 : index
    %c0_59 = arith.constant 0 : index
    %c0_60 = arith.constant 0 : index
    %53 = vector.load %arg3[%c6, %c0_59, %c0_60] : memref<9x128x128xf32, #tpu.memory_space<vmem>>, vector<1x128x128xf32>
    %54 = vector.shape_cast %53 : vector<1x128x128xf32> to vector<128x128xf32>
    %cst_61 = arith.constant dense<0.000000e+00> : vector<288x128xf32>
    %55 = tpu.matmul %51, %54, %cst_61 {dimension_numbers = #tpu.dot_dimension_numbers<[1], [0], [0], [1], [0, 0, 1, 1], [], []>} : vector<288x128xf32>, vector<128x128xf32>, vector<288x128xf32> -> vector<288x128xf32>
    %56 = arith.addf %52, %55 : vector<288x128xf32>
    %c0_62 = arith.constant 0 : index
    %c0_63 = arith.constant 0 : index
    %57 = vector.load %arg7[%c0_62, %c0_63] : memref<288x128xf32, #tpu.memory_space<vmem>>, vector<288x128xf32>
    tpu.vector_store %arg7[%c0_62, %c0_63], %56 {strides = array<i32>} : memref<288x128xf32, #tpu.memory_space<vmem>>, vector<288x128xf32>,
    %c37 = arith.constant 37 : index
    %c0_64 = arith.constant 0 : index
    %58 = vector.load %arg6[%c37, %c0_64] : memref<326x128xf32, #tpu.memory_space<vmem>>, vector<288x128xf32>
    %c0_65 = arith.constant 0 : index
    %c0_66 = arith.constant 0 : index
    %59 = vector.load %arg7[%c0_65, %c0_66] : memref<288x128xf32, #tpu.memory_space<vmem>>, vector<288x128xf32>
    %c7 = arith.constant 7 : index
    %c0_67 = arith.constant 0 : index
    %c0_68 = arith.constant 0 : index
    %60 = vector.load %arg3[%c7, %c0_67, %c0_68] : memref<9x128x128xf32, #tpu.memory_space<vmem>>, vector<1x128x128xf32>
    %61 = vector.shape_cast %60 : vector<1x128x128xf32> to vector<128x128xf32>
    %cst_69 = arith.constant dense<0.000000e+00> : vector<288x128xf32>
    %62 = tpu.matmul %58, %61, %cst_69 {dimension_numbers = #tpu.dot_dimension_numbers<[1], [0], [0], [1], [0, 0, 1, 1], [], []>} : vector<288x128xf32>, vector<128x128xf32>, vector<288x128xf32> -> vector<288x128xf32>
    %63 = arith.addf %59, %62 : vector<288x128xf32>
    %c0_70 = arith.constant 0 : index
    %c0_71 = arith.constant 0 : index
    %64 = vector.load %arg7[%c0_70, %c0_71] : memref<288x128xf32, #tpu.memory_space<vmem>>, vector<288x128xf32>
    tpu.vector_store %arg7[%c0_70, %c0_71], %63 {strides = array<i32>} : memref<288x128xf32, #tpu.memory_space<vmem>>, vector<288x128xf32>,
    %c38 = arith.constant 38 : index
    %c0_72 = arith.constant 0 : index
    %65 = vector.load %arg6[%c38, %c0_72] : memref<326x128xf32, #tpu.memory_space<vmem>>, vector<288x128xf32>
    %c0_73 = arith.constant 0 : index
    %c0_74 = arith.constant 0 : index
    %66 = vector.load %arg7[%c0_73, %c0_74] : memref<288x128xf32, #tpu.memory_space<vmem>>, vector<288x128xf32>
    %c8 = arith.constant 8 : index
    %c0_75 = arith.constant 0 : index
    %c0_76 = arith.constant 0 : index
    %67 = vector.load %arg3[%c8, %c0_75, %c0_76] : memref<9x128x128xf32, #tpu.memory_space<vmem>>, vector<1x128x128xf32>
    %68 = vector.shape_cast %67 : vector<1x128x128xf32> to vector<128x128xf32>
    %cst_77 = arith.constant dense<0.000000e+00> : vector<288x128xf32>
    %69 = tpu.matmul %65, %68, %cst_77 {dimension_numbers = #tpu.dot_dimension_numbers<[1], [0], [0], [1], [0, 0, 1, 1], [], []>} : vector<288x128xf32>, vector<128x128xf32>, vector<288x128xf32> -> vector<288x128xf32>
    %70 = arith.addf %66, %69 : vector<288x128xf32>
    %c0_78 = arith.constant 0 : index
    %c0_79 = arith.constant 0 : index
    %71 = vector.load %arg7[%c0_78, %c0_79] : memref<288x128xf32, #tpu.memory_space<vmem>>, vector<288x128xf32>
    tpu.vector_store %arg7[%c0_78, %c0_79], %70 {strides = array<i32>} : memref<288x128xf32, #tpu.memory_space<vmem>>, vector<288x128xf32>,
    %72 = tpu.iota {dimensions = array<i32: 0>} : vector<288x1xi32>
    %c18_i32_80 = arith.constant 18 : i32
    %c0_i32_81 = arith.constant 0 : i32
    %73 = arith.cmpi eq, %c18_i32_80, %c0_i32_81 : i32
    %c1_i32 = arith.constant 1 : i32
    %74 = arith.select %73, %c1_i32, %c18_i32_80 : i32
    %75 = vector.broadcast %74 : i32 to vector<288x1xi32>
    %76 = arith.remsi %72, %75 : vector<288x1xi32>
    %c0_i32_82 = arith.constant 0 : i32
    %77 = vector.broadcast %c0_i32_82 : i32 to vector<288x1xi32>
    %78 = arith.cmpi ne, %76, %77 : vector<288x1xi32>
    %c0_i32_83 = arith.constant 0 : i32
    %79 = vector.broadcast %c0_i32_83 : i32 to vector<288x1xi32>
    %80 = arith.cmpi slt, %76, %79 : vector<288x1xi32>
    %c0_i32_84 = arith.constant 0 : i32
    %81 = arith.cmpi slt, %74, %c0_i32_84 : i32
    %82 = vector.broadcast %81 : i1 to vector<288x1xi1>
    %83 = vector.broadcast %82 : vector<288x1xi1> to vector<288x1xi1>
    %84 = arith.xori %80, %83 : vector<288x1xi1>
    %85 = arith.andi %84, %78 : vector<288x1xi1>
    %86 = vector.broadcast %74 : i32 to vector<288x1xi32>
    %87 = arith.addi %76, %86 : vector<288x1xi32>
    %88 = arith.select %85, %87, %76 : vector<288x1xi1>, vector<288x1xi32>
    %c1_i32_85 = arith.constant 1 : i32
    %89 = vector.broadcast %c1_i32_85 : i32 to vector<288x1xi32>
    %90 = arith.cmpi sge, %88, %89 : vector<288x1xi32>
    %c16_i32_86 = arith.constant 16 : i32
    %91 = vector.broadcast %c16_i32_86 : i32 to vector<288x1xi32>
    %92 = arith.cmpi sle, %88, %91 : vector<288x1xi32>
    %93 = arith.andi %90, %92 : vector<288x1xi1>
    %c0_87 = arith.constant 0 : index
    %c0_88 = arith.constant 0 : index
    %94 = vector.load %arg7[%c0_87, %c0_88] : memref<288x128xf32, #tpu.memory_space<vmem>>, vector<288x128xf32>
    %cst_89 = arith.constant 0.000000e+00 : f32
    %95 = vector.shape_cast %93 : vector<288x1xi1> to vector<288x1xi1>
    %96 = vector.broadcast %95 : vector<288x1xi1> to vector<288x128xi1>
    %97 = vector.broadcast %cst_89 : f32 to vector<288x128xf32>
    %98 = arith.select %96, %94, %97 : vector<288x128xi1>, vector<288x128xf32>
    %c0_90 = arith.constant 0 : index
    %c0_91 = arith.constant 0 : index
    %99 = vector.load %arg4[%c0_90, %c0_91] : memref<288x128xf32, #tpu.memory_space<vmem>>, vector<288x128xf32>
    tpu.vector_store %arg4[%c0_90, %c0_91], %98 {strides = array<i32>} : memref<288x128xf32, #tpu.memory_space<vmem>>, vector<288x128xf32>,
    %cst_92 = arith.constant dense<0.000000e+00> : vector<128xf32>
    %100 = vector.multi_reduction <add>, %98, %cst_92 [0] : vector<288x128xf32> to vector<128xf32>
    %101 = vector.shape_cast %100 : vector<128xf32> to vector<1x128xf32>
    %102 = arith.mulf %98, %98 : vector<288x128xf32>
    %cst_93 = arith.constant dense<0.000000e+00> : vector<128xf32>
    %103 = vector.multi_reduction <add>, %102, %cst_93 [0] : vector<288x128xf32> to vector<128xf32>
    %104 = vector.shape_cast %103 : vector<128xf32> to vector<1x128xf32>
    %105 = tpu.concatenate %101, %104 in 0 : vector<1x128xf32>, vector<1x128xf32> -> vector<2x128xf32>
    %106 = vector.shape_cast %105 : vector<2x128xf32> to vector<1x1x2x128xf32>
    %c0_94 = arith.constant 0 : index
    %c0_95 = arith.constant 0 : index
    %c0_96 = arith.constant 0 : index
    %c0_97 = arith.constant 0 : index
    %107 = vector.load %arg5[%c0_94, %c0_95, %c0_96, %c0_97] : memref<1x1x2x128xf32, #tpu.memory_space<vmem>>, vector<1x1x2x128xf32>
    tpu.vector_store %arg5[%c0_94, %c0_95, %c0_96, %c0_97], %106 {strides = array<i32>} : memref<1x1x2x128xf32, #tpu.memory_space<vmem>>, vector<1x1x2x128xf32>,
    return
  }
  func.func @transform_1(%arg0: i32, %arg1: i32) -> (i32, i32, i32) {
    %c0_i32 = arith.constant 0 : i32
    %c0_i32_0 = arith.constant 0 : i32
    %c0_i32_1 = arith.constant 0 : i32
    %c0_i32_2 = arith.constant 0 : i32
    return %c0_i32, %c0_i32_0, %c0_i32_1 : i32, i32, i32
  }
  func.func @transform_2(%arg0: i32, %arg1: i32) -> (i32, i32) {
    %c1_i32 = arith.constant 1 : i32
    %0 = arith.muli %arg0, %c1_i32 : i32
    %1 = arith.addi %0, %arg1 : i32
    %c0_i32 = arith.constant 0 : i32
    %c0_i32_0 = arith.constant 0 : i32
    return %1, %c0_i32 : i32, i32
  }
  func.func @transform_3(%arg0: i32, %arg1: i32) -> (i32, i32, i32, i32) {
    %c0_i32 = arith.constant 0 : i32
    %c0_i32_0 = arith.constant 0 : i32
    %c0_i32_1 = arith.constant 0 : i32
    return %arg0, %arg1, %c0_i32, %c0_i32_0 : i32, i32, i32, i32
  }
}

module attributes {stable_mosaic.version = 11 : i64} {
  func.func @_affine_lrelu_res_kernel(%arg0: i32, %arg1: memref<576x128xf32, #tpu.memory_space<vmem>>, %arg2: memref<1x128xf32, #tpu.memory_space<vmem>>, %arg3: memref<1x128xf32, #tpu.memory_space<vmem>>, %arg4: memref<576x128xf32, #tpu.memory_space<vmem>>, %arg5: memref<576x128xf32, #tpu.memory_space<vmem>>) attributes {dimension_semantics = [#tpu.dimension_semantics<parallel>], iteration_bounds = array<i64: 1>, scalar_prefetch = 0 : i64, scratch_operands = 0 : i64, tpu.core_type = #tpu.core_type<tc>, window_params = [{transform_indices = @transform_0, window_bounds = array<i64: 576, 128>}, {pipeline_mode = #tpu.pipeline_mode<synchronous>, transform_indices = @transform_1, window_bounds = array<i64: 1, 128>}, {pipeline_mode = #tpu.pipeline_mode<synchronous>, transform_indices = @transform_2, window_bounds = array<i64: 1, 128>}, {transform_indices = @transform_3, window_bounds = array<i64: 576, 128>}, {transform_indices = @transform_4, window_bounds = array<i64: 576, 128>}]} {
    %c0 = arith.constant 0 : index
    %c0_0 = arith.constant 0 : index
    %0 = vector.load %arg1[%c0, %c0_0] : memref<576x128xf32, #tpu.memory_space<vmem>>, vector<576x128xf32>
    %c0_1 = arith.constant 0 : index
    %c0_2 = arith.constant 0 : index
    %1 = vector.load %arg2[%c0_1, %c0_2] : memref<1x128xf32, #tpu.memory_space<vmem>>, vector<1x128xf32>
    %2 = vector.broadcast %1 : vector<1x128xf32> to vector<576x128xf32>
    %3 = arith.mulf %0, %2 : vector<576x128xf32>
    %c0_3 = arith.constant 0 : index
    %c0_4 = arith.constant 0 : index
    %4 = vector.load %arg3[%c0_3, %c0_4] : memref<1x128xf32, #tpu.memory_space<vmem>>, vector<1x128xf32>
    %5 = vector.broadcast %4 : vector<1x128xf32> to vector<576x128xf32>
    %6 = arith.addf %3, %5 : vector<576x128xf32>
    %cst = arith.constant 0.000000e+00 : f32
    %7 = vector.broadcast %cst : f32 to vector<576x128xf32>
    %8 = arith.cmpf oge, %6, %7 : vector<576x128xf32>
    %cst_5 = arith.constant 1.000000e-01 : f32
    %9 = vector.broadcast %cst_5 : f32 to vector<576x128xf32>
    %10 = arith.mulf %9, %6 : vector<576x128xf32>
    %11 = arith.select %8, %6, %10 : vector<576x128xi1>, vector<576x128xf32>
    %c0_6 = arith.constant 0 : index
    %c0_7 = arith.constant 0 : index
    %12 = vector.load %arg4[%c0_6, %c0_7] : memref<576x128xf32, #tpu.memory_space<vmem>>, vector<576x128xf32>
    %13 = arith.addf %11, %12 : vector<576x128xf32>
    %c0_8 = arith.constant 0 : index
    %c0_9 = arith.constant 0 : index
    %14 = vector.load %arg5[%c0_8, %c0_9] : memref<576x128xf32, #tpu.memory_space<vmem>>, vector<576x128xf32>
    tpu.vector_store %arg5[%c0_8, %c0_9], %13 {strides = array<i32>} : memref<576x128xf32, #tpu.memory_space<vmem>>, vector<576x128xf32>,
    return
  }
  func.func @transform_0(%arg0: i32) -> (i32, i32) {
    %c0_i32 = arith.constant 0 : i32
    %c0_i32_0 = arith.constant 0 : i32
    return %arg0, %c0_i32 : i32, i32
  }
  func.func @transform_1(%arg0: i32) -> (i32, i32) {
    %c0_i32 = arith.constant 0 : i32
    %c0_i32_0 = arith.constant 0 : i32
    %c0_i32_1 = arith.constant 0 : i32
    return %c0_i32, %c0_i32_0 : i32, i32
  }
  func.func @transform_2(%arg0: i32) -> (i32, i32) {
    %c0_i32 = arith.constant 0 : i32
    %c0_i32_0 = arith.constant 0 : i32
    %c0_i32_1 = arith.constant 0 : i32
    return %c0_i32, %c0_i32_0 : i32, i32
  }
  func.func @transform_3(%arg0: i32) -> (i32, i32) {
    %c0_i32 = arith.constant 0 : i32
    %c0_i32_0 = arith.constant 0 : i32
    return %arg0, %c0_i32 : i32, i32
  }
  func.func @transform_4(%arg0: i32) -> (i32, i32) {
    %c0_i32 = arith.constant 0 : i32
    %c0_i32_0 = arith.constant 0 : i32
    return %arg0, %c0_i32 : i32, i32
  }
}

</mosaic_0001>

<llo_original>
// kernel: resblock_forward.5
$region0: #{resblock_forward.5}
  #allocation0 [shape = 'u32[]', space=smem, size = 0x4, offset = 0x4, fixed_abs, tag = 'smem constant byte address 0x4 - core index']
  #allocation1 [shape = 'u32[144,128]{1,0:T(1,128)}', space=vmem, size = 0x12000, scoped, tag = 'internal scratch']
  %s0 = inlined_call_operand.hbm [shape: f32[512,128], index: 0, kind: input, shape index: {}]
  %s1 = inlined_call_operand.hbm [shape: f32[1,128], index: 1, kind: input, shape index: {}]
  %s2 = inlined_call_operand.hbm [shape: f32[1,128], index: 2, kind: input, shape index: {}]
  %s3 = inlined_call_operand.hbm [shape: f32[512,128], index: 3, kind: output, shape index: {}]
  %s4 = sld [smem:[#allocation0]]
  $region34: #{resblock_forward.5} parent=0
    _
  %s6 = ssub.s32 1, %s4
  %s7 = scalar_select 0, %s6, %s4
  $region1: #{resblock_forward.5} parent=0
    #allocation2 [shape = 'u8[262144]{0}', space=vmem, size = 0x40000, scoped, tag = 'input window, operand 0, single buffered']
    #allocation3 [shape = 's32[1]{0}', space=sflag, size = 0x4, scoped, tag = 'scoped memory for resblock_forward.5']
    #allocation4 [shape = 's32[1]{0}', space=sflag, size = 0x4, scoped, tag = 'scoped memory for resblock_forward.5']
    #allocation5 [shape = 'u8[512]{0}', space=vmem, size = 0x400, scoped, tag = 'input window, operand 1, single buffered']
    #allocation6 [shape = 's32[1]{0}', space=sflag, size = 0x4, scoped, tag = 'scoped memory for resblock_forward.5']
    #allocation7 [shape = 'u8[512]{0}', space=vmem, size = 0x400, scoped, tag = 'input window, operand 2, single buffered']
    #allocation8 [shape = 'u8[262144]{0}', space=vmem, size = 0x40000, scoped, tag = 'output window, operand 0, single buffered']
    %8 = vsyncpa [#allocation3], 0
    %9 = vsyncpa [#allocation6], 0
    %10 = vsyncpa [#allocation4], 0
    // Predicated region
    $region2: #{resblock_forward.5} parent=1 // pred_check
      _
    $region3: #{resblock_forward.5} parent=1 // pred_check_branch
      %12 = sbr.rel (0) target = $region5
    $region4: #{resblock_forward.5} parent=1 // pred_region
      %s14 = ssub.s32 8192, 8192
      %15 = vsyncadd [#allocation3], %s14
      %s16 = sshll.u32 [#allocation2], 4
      %s17 = int_to_ptr.vmem [resolvable:$true] %s16
      %22 = dma.hbm_to_vmem [thread:$0]  %s0, 8192, %s17, [#allocation3], 128, 128, 8
    $region5: #{resblock_forward.5} parent=1 // pred_fallthru
      _
    // Predicated region
    $region6: #{resblock_forward.5} parent=1 // pred_check
      _
    $region7: #{resblock_forward.5} parent=1 // pred_check_branch
      %24 = sbr.rel (0) target = $region9
    $region8: #{resblock_forward.5} parent=1 // pred_region
      %s26 = ssub.s32 16, 16
      %27 = vsyncadd [#allocation6], %s26
      %s29 = sshll.u32 [#allocation5], 4
      %s30 = int_to_ptr.vmem [resolvable:$true] %s29
      %32 = dma.hbm_to_vmem [thread:$0]  %s1, 16, %s30, [#allocation6]
    $region9: #{resblock_forward.5} parent=1 // pred_fallthru
      _
    // Predicated region
    $region10: #{resblock_forward.5} parent=1 // pred_check
      _
    $region11: #{resblock_forward.5} parent=1 // pred_check_branch
      %34 = sbr.rel (0) target = $region13
    $region12: #{resblock_forward.5} parent=1 // pred_region
      %s36 = ssub.s32 16, 16
      %37 = vsyncadd [#allocation6], %s36
      %s39 = sshll.u32 [#allocation7], 4
      %s40 = int_to_ptr.vmem [resolvable:$true] %s39
      %42 = dma.hbm_to_vmem [thread:$0]  %s2, 16, %s40, [#allocation6]
    $region13: #{resblock_forward.5} parent=1 // pred_fallthru
      _
    // Predicated region
    $region14: #{resblock_forward.5} parent=1 // pred_check
      _
    $region15: #{resblock_forward.5} parent=1 // pred_check_branch
      %44 = sbr.rel (0) target = $region17
    $region16: #{resblock_forward.5} parent=1 // pred_region
      %45 = dma.done [#allocation3], 8192
    $region17: #{resblock_forward.5} parent=1 // pred_fallthru
      _
    // Predicated region
    $region18: #{resblock_forward.5} parent=1 // pred_check
      _
    $region19: #{resblock_forward.5} parent=1 // pred_check_branch
      %47 = sbr.rel (0) target = $region21
    $region20: #{resblock_forward.5} parent=1 // pred_region
      %48 = dma.done [#allocation6], 16
    $region21: #{resblock_forward.5} parent=1 // pred_fallthru
      _
    // Predicated region
    $region22: #{resblock_forward.5} parent=1 // pred_check
      _
    $region23: #{resblock_forward.5} parent=1 // pred_check_branch
      %50 = sbr.rel (0) target = $region25
    $region24: #{resblock_forward.5} parent=1 // pred_region
      %51 = dma.done [#allocation6], 16
    $region25: #{resblock_forward.5} parent=1 // pred_fallthru
      _
    %v52 = vld [vmem:[#allocation2] sm:$0xff]
    %v53 = vld [vmem:[#allocation2 + $0x8] sm:$0xff]
    %v54 = vld [vmem:[#allocation2 + $0x10] sm:$0xff]
    %v55 = vld [vmem:[#allocation2 + $0x18] sm:$0xff]
    %v56 = vld [vmem:[#allocation2 + $0x20] sm:$0xff]
    %v57 = vld [vmem:[#allocation2 + $0x28] sm:$0xff]
    %v58 = vld [vmem:[#allocation2 + $0x30] sm:$0xff]
    %v59 = vld [vmem:[#allocation2 + $0x38] sm:$0xff]
    %v60 = vld [vmem:[#allocation2 + $0x40] sm:$0xff]
    %v61 = vld [vmem:[#allocation2 + $0x48] sm:$0xff]
    %v62 = vld [vmem:[#allocation2 + $0x50] sm:$0xff]
    %v63 = vld [vmem:[#allocation2 + $0x58] sm:$0xff]
    %v64 = vld [vmem:[#allocation2 + $0x60] sm:$0xff]
    %v65 = vld [vmem:[#allocation2 + $0x68] sm:$0xff]
    %v66 = vld [vmem:[#allocation2 + $0x70] sm:$0xff]
    %v67 = vld [vmem:[#allocation2 + $0x78] sm:$0xff]
    %v68 = vld [vmem:[#allocation2 + $0x80] sm:$0xff]
    %v69 = vld [vmem:[#allocation2 + $0x88] sm:$0xff]
    %v70 = vld [vmem:[#allocation2 + $0x90] sm:$0xff]
    %v71 = vld [vmem:[#allocation2 + $0x98] sm:$0xff]
    %v72 = vld [vmem:[#allocation2 + $0xa0] sm:$0xff]
    %v73 = vld [vmem:[#allocation2 + $0xa8] sm:$0xff]
    %v74 = vld [vmem:[#allocation2 + $0xb0] sm:$0xff]
    %v75 = vld [vmem:[#allocation2 + $0xb8] sm:$0xff]
    %v76 = vld [vmem:[#allocation2 + $0xc0] sm:$0xff]
    %v77 = vld [vmem:[#allocation2 + $0xc8] sm:$0xff]
    %v78 = vld [vmem:[#allocation2 + $0xd0] sm:$0xff]
    %v79 = vld [vmem:[#allocation2 + $0xd8] sm:$0xff]
    %v80 = vld [vmem:[#allocation2 + $0xe0] sm:$0xff]
    %v81 = vld [vmem:[#allocation2 + $0xe8] sm:$0xff]
    %v82 = vld [vmem:[#allocation2 + $0xf0] sm:$0xff]
    %v83 = vld [vmem:[#allocation2 + $0xf8] sm:$0xff]
    %v84 = vld [vmem:[#allocation2 + $0x100] sm:$0xff]
    %v85 = vld [vmem:[#allocation2 + $0x108] sm:$0xff]
    %v86 = vld [vmem:[#allocation2 + $0x110] sm:$0xff]
    %v87 = vld [vmem:[#allocation2 + $0x118] sm:$0xff]
    %v88 = vld [vmem:[#allocation2 + $0x120] sm:$0xff]
    %v89 = vld [vmem:[#allocation2 + $0x128] sm:$0xff]
    %v90 = vld [vmem:[#allocation2 + $0x130] sm:$0xff]
    %v91 = vld [vmem:[#allocation2 + $0x138] sm:$0xff]
    %v92 = vld [vmem:[#allocation2 + $0x140] sm:$0xff]
    %v93 = vld [vmem:[#allocation2 + $0x148] sm:$0xff]
    %v94 = vld [vmem:[#allocation2 + $0x150] sm:$0xff]
    %v95 = vld [vmem:[#allocation2 + $0x158] sm:$0xff]
    %v96 = vld [vmem:[#allocation2 + $0x160] sm:$0xff]
    %v97 = vld [vmem:[#allocation2 + $0x168] sm:$0xff]
    %v98 = vld [vmem:[#allocation2 + $0x170] sm:$0xff]
    %v99 = vld [vmem:[#allocation2 + $0x178] sm:$0xff]
    %v100 = vld [vmem:[#allocation2 + $0x180] sm:$0xff]
    %v101 = vld [vmem:[#allocation2 + $0x188] sm:$0xff]
    %v102 = vld [vmem:[#allocation2 + $0x190] sm:$0xff]
    %v103 = vld [vmem:[#allocation2 + $0x198] sm:$0xff]
    %v104 = vld [vmem:[#allocation2 + $0x1a0] sm:$0xff]
    %v105 = vld [vmem:[#allocation2 + $0x1a8] sm:$0xff]
    %v106 = vld [vmem:[#allocation2 + $0x1b0] sm:$0xff]
    %v107 = vld [vmem:[#allocation2 + $0x1b8] sm:$0xff]
    %v108 = vld [vmem:[#allocation2 + $0x1c0] sm:$0xff]
    %v109 = vld [vmem:[#allocation2 + $0x1c8] sm:$0xff]
    %v110 = vld [vmem:[#allocation2 + $0x1d0] sm:$0xff]
    %v111 = vld [vmem:[#allocation2 + $0x1d8] sm:$0xff]
    %v112 = vld [vmem:[#allocation2 + $0x1e0] sm:$0xff]
    %v113 = vld [vmem:[#allocation2 + $0x1e8] sm:$0xff]
    %v114 = vld [vmem:[#allocation2 + $0x1f0] sm:$0xff]
    %v115 = vld [vmem:[#allocation2 + $0x1f8] sm:$0xff]
    %v116 = vld [vmem:[#allocation5] sm:$0x1]
    %v118 = vlaneseq
    %v119 = vshrl.u32 %v118, 7
    %v120 = vsub.s32 0, %v119
    %v121 = vrot.slane %v116, %v120
    %v123 = vmul.f32 %v52, %v121
    %v124 = vmul.f32 %v53, %v121
    %v125 = vmul.f32 %v54, %v121
    %v126 = vmul.f32 %v55, %v121
    %v127 = vmul.f32 %v56, %v121
    %v128 = vmul.f32 %v57, %v121
    %v129 = vmul.f32 %v58, %v121
    %v130 = vmul.f32 %v59, %v121
    %v131 = vmul.f32 %v60, %v121
    %v132 = vmul.f32 %v61, %v121
    %v133 = vmul.f32 %v62, %v121
    %v134 = vmul.f32 %v63, %v121
    %v135 = vmul.f32 %v64, %v121
    %v136 = vmul.f32 %v65, %v121
    %v137 = vmul.f32 %v66, %v121
    %v138 = vmul.f32 %v67, %v121
    %v139 = vmul.f32 %v68, %v121
    %v140 = vmul.f32 %v69, %v121
    %v141 = vmul.f32 %v70, %v121
    %v142 = vmul.f32 %v71, %v121
    %v143 = vmul.f32 %v72, %v121
    %v144 = vmul.f32 %v73, %v121
    %v145 = vmul.f32 %v74, %v121
    %v146 = vmul.f32 %v75, %v121
    %v147 = vmul.f32 %v76, %v121
    %v148 = vmul.f32 %v77, %v121
    %v149 = vmul.f32 %v78, %v121
    %v150 = vmul.f32 %v79, %v121
    %v151 = vmul.f32 %v80, %v121
    %v152 = vmul.f32 %v81, %v121
    %v153 = vmul.f32 %v82, %v121
    %v154 = vmul.f32 %v83, %v121
    %v155 = vmul.f32 %v84, %v121
    %v156 = vmul.f32 %v85, %v121
    %v157 = vmul.f32 %v86, %v121
    %v158 = vmul.f32 %v87, %v121
    %v159 = vmul.f32 %v88, %v121
    %v160 = vmul.f32 %v89, %v121
    %v161 = vmul.f32 %v90, %v121
    %v162 = vmul.f32 %v91, %v121
    %v163 = vmul.f32 %v92, %v121
    %v164 = vmul.f32 %v93, %v121
    %v165 = vmul.f32 %v94, %v121
    %v166 = vmul.f32 %v95, %v121
    %v167 = vmul.f32 %v96, %v121
    %v168 = vmul.f32 %v97, %v121
    %v169 = vmul.f32 %v98, %v121
    %v170 = vmul.f32 %v99, %v121
    %v171 = vmul.f32 %v100, %v121
    %v172 = vmul.f32 %v101, %v121
    %v173 = vmul.f32 %v102, %v121
    %v174 = vmul.f32 %v103, %v121
    %v175 = vmul.f32 %v104, %v121
    %v176 = vmul.f32 %v105, %v121
    %v177 = vmul.f32 %v106, %v121
    %v178 = vmul.f32 %v107, %v121
    %v179 = vmul.f32 %v108, %v121
    %v180 = vmul.f32 %v109, %v121
    %v181 = vmul.f32 %v110, %v121
    %v182 = vmul.f32 %v111, %v121
    %v183 = vmul.f32 %v112, %v121
    %v184 = vmul.f32 %v113, %v121
    %v185 = vmul.f32 %v114, %v121
    %v186 = vmul.f32 %v115, %v121
    %v187 = vld [vmem:[#allocation7] sm:$0x1]
    %v189 = vlaneseq
    %v190 = vshrl.u32 %v189, 7
    %v191 = vsub.s32 0, %v190
    %v192 = vrot.slane %v187, %v191
    %v194 = vadd.f32 %v123, %v192
    %v195 = vadd.f32 %v124, %v192
    %v196 = vadd.f32 %v125, %v192
    %v197 = vadd.f32 %v126, %v192
    %v198 = vadd.f32 %v127, %v192
    %v199 = vadd.f32 %v128, %v192
    %v200 = vadd.f32 %v129, %v192
    %v201 = vadd.f32 %v130, %v192
    %v202 = vadd.f32 %v131, %v192
    %v203 = vadd.f32 %v132, %v192
    %v204 = vadd.f32 %v133, %v192
    %v205 = vadd.f32 %v134, %v192
    %v206 = vadd.f32 %v135, %v192
    %v207 = vadd.f32 %v136, %v192
    %v208 = vadd.f32 %v137, %v192
    %v209 = vadd.f32 %v138, %v192
    %v210 = vadd.f32 %v139, %v192
    %v211 = vadd.f32 %v140, %v192
    %v212 = vadd.f32 %v141, %v192
    %v213 = vadd.f32 %v142, %v192
    %v214 = vadd.f32 %v143, %v192
    %v215 = vadd.f32 %v144, %v192
    %v216 = vadd.f32 %v145, %v192
    %v217 = vadd.f32 %v146, %v192
    %v218 = vadd.f32 %v147, %v192
    %v219 = vadd.f32 %v148, %v192
    %v220 = vadd.f32 %v149, %v192
    %v221 = vadd.f32 %v150, %v192
    %v222 = vadd.f32 %v151, %v192
    %v223 = vadd.f32 %v152, %v192
    %v224 = vadd.f32 %v153, %v192
    %v225 = vadd.f32 %v154, %v192
    %v226 = vadd.f32 %v155, %v192
    %v227 = vadd.f32 %v156, %v192
    %v228 = vadd.f32 %v157, %v192
    %v229 = vadd.f32 %v158, %v192
    %v230 = vadd.f32 %v159, %v192
    %v231 = vadd.f32 %v160, %v192
    %v232 = vadd.f32 %v161, %v192
    %v233 = vadd.f32 %v162, %v192
    %v234 = vadd.f32 %v163, %v192
    %v235 = vadd.f32 %v164, %v192
    %v236 = vadd.f32 %v165, %v192
    %v237 = vadd.f32 %v166, %v192
    %v238 = vadd.f32 %v167, %v192
    %v239 = vadd.f32 %v168, %v192
    %v240 = vadd.f32 %v169, %v192
    %v241 = vadd.f32 %v170, %v192
    %v242 = vadd.f32 %v171, %v192
    %v243 = vadd.f32 %v172, %v192
    %v244 = vadd.f32 %v173, %v192
    %v245 = vadd.f32 %v174, %v192
    %v246 = vadd.f32 %v175, %v192
    %v247 = vadd.f32 %v176, %v192
    %v248 = vadd.f32 %v177, %v192
    %v249 = vadd.f32 %v178, %v192
    %v250 = vadd.f32 %v179, %v192
    %v251 = vadd.f32 %v180, %v192
    %v252 = vadd.f32 %v181, %v192
    %v253 = vadd.f32 %v182, %v192
    %v254 = vadd.f32 %v183, %v192
    %v255 = vadd.f32 %v184, %v192
    %v256 = vadd.f32 %v185, %v192
    %v257 = vadd.f32 %v186, %v192
    %vm258 = vcmp.ge.f32.partialorder %v194, 0.0
    %vm259 = vcmp.ge.f32.partialorder %v195, 0.0
    %vm260 = vcmp.ge.f32.partialorder %v196, 0.0
    %vm261 = vcmp.ge.f32.partialorder %v197, 0.0
    %vm262 = vcmp.ge.f32.partialorder %v198, 0.0
    %vm263 = vcmp.ge.f32.partialorder %v199, 0.0
    %vm264 = vcmp.ge.f32.partialorder %v200, 0.0
    %vm265 = vcmp.ge.f32.partialorder %v201, 0.0
    %vm266 = vcmp.ge.f32.partialorder %v202, 0.0
    %vm267 = vcmp.ge.f32.partialorder %v203, 0.0
    %vm268 = vcmp.ge.f32.partialorder %v204, 0.0
    %vm269 = vcmp.ge.f32.partialorder %v205, 0.0
    %vm270 = vcmp.ge.f32.partialorder %v206, 0.0
    %vm271 = vcmp.ge.f32.partialorder %v207, 0.0
    %vm272 = vcmp.ge.f32.partialorder %v208, 0.0
    %vm273 = vcmp.ge.f32.partialorder %v209, 0.0
    %vm274 = vcmp.ge.f32.partialorder %v210, 0.0
    %vm275 = vcmp.ge.f32.partialorder %v211, 0.0
    %vm276 = vcmp.ge.f32.partialorder %v212, 0.0
    %vm277 = vcmp.ge.f32.partialorder %v213, 0.0
    %vm278 = vcmp.ge.f32.partialorder %v214, 0.0
    %vm279 = vcmp.ge.f32.partialorder %v215, 0.0
    %vm280 = vcmp.ge.f32.partialorder %v216, 0.0
    %vm281 = vcmp.ge.f32.partialorder %v217, 0.0
    %vm282 = vcmp.ge.f32.partialorder %v218, 0.0
    %vm283 = vcmp.ge.f32.partialorder %v219, 0.0
    %vm284 = vcmp.ge.f32.partialorder %v220, 0.0
    %vm285 = vcmp.ge.f32.partialorder %v221, 0.0
    %vm286 = vcmp.ge.f32.partialorder %v222, 0.0
    %vm287 = vcmp.ge.f32.partialorder %v223, 0.0
    %vm288 = vcmp.ge.f32.partialorder %v224, 0.0
    %vm289 = vcmp.ge.f32.partialorder %v225, 0.0
    %vm290 = vcmp.ge.f32.partialorder %v226, 0.0
    %vm291 = vcmp.ge.f32.partialorder %v227, 0.0
    %vm292 = vcmp.ge.f32.partialorder %v228, 0.0
    %vm293 = vcmp.ge.f32.partialorder %v229, 0.0
    %vm294 = vcmp.ge.f32.partialorder %v230, 0.0
    %vm295 = vcmp.ge.f32.partialorder %v231, 0.0
    %vm296 = vcmp.ge.f32.partialorder %v232, 0.0
    %vm297 = vcmp.ge.f32.partialorder %v233, 0.0
    %vm298 = vcmp.ge.f32.partialorder %v234, 0.0
    %vm299 = vcmp.ge.f32.partialorder %v235, 0.0
    %vm300 = vcmp.ge.f32.partialorder %v236, 0.0
    %vm301 = vcmp.ge.f32.partialorder %v237, 0.0
    %vm302 = vcmp.ge.f32.partialorder %v238, 0.0
    %vm303 = vcmp.ge.f32.partialorder %v239, 0.0
    %vm304 = vcmp.ge.f32.partialorder %v240, 0.0
    %vm305 = vcmp.ge.f32.partialorder %v241, 0.0
    %vm306 = vcmp.ge.f32.partialorder %v242, 0.0
    %vm307 = vcmp.ge.f32.partialorder %v243, 0.0
    %vm308 = vcmp.ge.f32.partialorder %v244, 0.0
    %vm309 = vcmp.ge.f32.partialorder %v245, 0.0
    %vm310 = vcmp.ge.f32.partialorder %v246, 0.0
    %vm311 = vcmp.ge.f32.partialorder %v247, 0.0
    %vm312 = vcmp.ge.f32.partialorder %v248, 0.0
    %vm313 = vcmp.ge.f32.partialorder %v249, 0.0
    %vm314 = vcmp.ge.f32.partialorder %v250, 0.0
    %vm315 = vcmp.ge.f32.partialorder %v251, 0.0
    %vm316 = vcmp.ge.f32.partialorder %v252, 0.0
    %vm317 = vcmp.ge.f32.partialorder %v253, 0.0
    %vm318 = vcmp.ge.f32.partialorder %v254, 0.0
    %vm319 = vcmp.ge.f32.partialorder %v255, 0.0
    %vm320 = vcmp.ge.f32.partialorder %v256, 0.0
    %vm321 = vcmp.ge.f32.partialorder %v257, 0.0
    %v322 = vmul.f32 %v194, 0.1
    %v323 = vmul.f32 %v195, 0.1
    %v324 = vmul.f32 %v196, 0.1
    %v325 = vmul.f32 %v197, 0.1
    %v326 = vmul.f32 %v198, 0.1
    %v327 = vmul.f32 %v199, 0.1
    %v328 = vmul.f32 %v200, 0.1
    %v329 = vmul.f32 %v201, 0.1
    %v330 = vmul.f32 %v202, 0.1
    %v331 = vmul.f32 %v203, 0.1
    %v332 = vmul.f32 %v204, 0.1
    %v333 = vmul.f32 %v205, 0.1
    %v334 = vmul.f32 %v206, 0.1
    %v335 = vmul.f32 %v207, 0.1
    %v336 = vmul.f32 %v208, 0.1
    %v337 = vmul.f32 %v209, 0.1
    %v338 = vmul.f32 %v210, 0.1
    %v339 = vmul.f32 %v211, 0.1
    %v340 = vmul.f32 %v212, 0.1
    %v341 = vmul.f32 %v213, 0.1
    %v342 = vmul.f32 %v214, 0.1
    %v343 = vmul.f32 %v215, 0.1
    %v344 = vmul.f32 %v216, 0.1
    %v345 = vmul.f32 %v217, 0.1
    %v346 = vmul.f32 %v218, 0.1
    %v347 = vmul.f32 %v219, 0.1
    %v348 = vmul.f32 %v220, 0.1
    %v349 = vmul.f32 %v221, 0.1
    %v350 = vmul.f32 %v222, 0.1
    %v351 = vmul.f32 %v223, 0.1
    %v352 = vmul.f32 %v224, 0.1
    %v353 = vmul.f32 %v225, 0.1
    %v354 = vmul.f32 %v226, 0.1
    %v355 = vmul.f32 %v227, 0.1
    %v356 = vmul.f32 %v228, 0.1
    %v357 = vmul.f32 %v229, 0.1
    %v358 = vmul.f32 %v230, 0.1
    %v359 = vmul.f32 %v231, 0.1
    %v360 = vmul.f32 %v232, 0.1
    %v361 = vmul.f32 %v233, 0.1
    %v362 = vmul.f32 %v234, 0.1
    %v363 = vmul.f32 %v235, 0.1
    %v364 = vmul.f32 %v236, 0.1
    %v365 = vmul.f32 %v237, 0.1
    %v366 = vmul.f32 %v238, 0.1
    %v367 = vmul.f32 %v239, 0.1
    %v368 = vmul.f32 %v240, 0.1
    %v369 = vmul.f32 %v241, 0.1
    %v370 = vmul.f32 %v242, 0.1
    %v371 = vmul.f32 %v243, 0.1
    %v372 = vmul.f32 %v244, 0.1
    %v373 = vmul.f32 %v245, 0.1
    %v374 = vmul.f32 %v246, 0.1
    %v375 = vmul.f32 %v247, 0.1
    %v376 = vmul.f32 %v248, 0.1
    %v377 = vmul.f32 %v249, 0.1
    %v378 = vmul.f32 %v250, 0.1
    %v379 = vmul.f32 %v251, 0.1
    %v380 = vmul.f32 %v252, 0.1
    %v381 = vmul.f32 %v253, 0.1
    %v382 = vmul.f32 %v254, 0.1
    %v383 = vmul.f32 %v255, 0.1
    %v384 = vmul.f32 %v256, 0.1
    %v385 = vmul.f32 %v257, 0.1
    %v386 = vsel %vm258, %v194, %v322
    %v387 = vsel %vm259, %v195, %v323
    %v388 = vsel %vm260, %v196, %v324
    %v389 = vsel %vm261, %v197, %v325
    %v390 = vsel %vm262, %v198, %v326
    %v391 = vsel %vm263, %v199, %v327
    %v392 = vsel %vm264, %v200, %v328
    %v393 = vsel %vm265, %v201, %v329
    %v394 = vsel %vm266, %v202, %v330
    %v395 = vsel %vm267, %v203, %v331
    %v396 = vsel %vm268, %v204, %v332
    %v397 = vsel %vm269, %v205, %v333
    %v398 = vsel %vm270, %v206, %v334
    %v399 = vsel %vm271, %v207, %v335
    %v400 = vsel %vm272, %v208, %v336
    %v401 = vsel %vm273, %v209, %v337
    %v402 = vsel %vm274, %v210, %v338
    %v403 = vsel %vm275, %v211, %v339
    %v404 = vsel %vm276, %v212, %v340
    %v405 = vsel %vm277, %v213, %v341
    %v406 = vsel %vm278, %v214, %v342
    %v407 = vsel %vm279, %v215, %v343
    %v408 = vsel %vm280, %v216, %v344
    %v409 = vsel %vm281, %v217, %v345
    %v410 = vsel %vm282, %v218, %v346
    %v411 = vsel %vm283, %v219, %v347
    %v412 = vsel %vm284, %v220, %v348
    %v413 = vsel %vm285, %v221, %v349
    %v414 = vsel %vm286, %v222, %v350
    %v415 = vsel %vm287, %v223, %v351
    %v416 = vsel %vm288, %v224, %v352
    %v417 = vsel %vm289, %v225, %v353
    %v418 = vsel %vm290, %v226, %v354
    %v419 = vsel %vm291, %v227, %v355
    %v420 = vsel %vm292, %v228, %v356
    %v421 = vsel %vm293, %v229, %v357
    %v422 = vsel %vm294, %v230, %v358
    %v423 = vsel %vm295, %v231, %v359
    %v424 = vsel %vm296, %v232, %v360
    %v425 = vsel %vm297, %v233, %v361
    %v426 = vsel %vm298, %v234, %v362
    %v427 = vsel %vm299, %v235, %v363
    %v428 = vsel %vm300, %v236, %v364
    %v429 = vsel %vm301, %v237, %v365
    %v430 = vsel %vm302, %v238, %v366
    %v431 = vsel %vm303, %v239, %v367
    %v432 = vsel %vm304, %v240, %v368
    %v433 = vsel %vm305, %v241, %v369
    %v434 = vsel %vm306, %v242, %v370
    %v435 = vsel %vm307, %v243, %v371
    %v436 = vsel %vm308, %v244, %v372
    %v437 = vsel %vm309, %v245, %v373
    %v438 = vsel %vm310, %v246, %v374
    %v439 = vsel %vm311, %v247, %v375
    %v440 = vsel %vm312, %v248, %v376
    %v441 = vsel %vm313, %v249, %v377
    %v442 = vsel %vm314, %v250, %v378
    %v443 = vsel %vm315, %v251, %v379
    %v444 = vsel %vm316, %v252, %v380
    %v445 = vsel %vm317, %v253, %v381
    %v446 = vsel %vm318, %v254, %v382
    %v447 = vsel %vm319, %v255, %v383
    %v448 = vsel %vm320, %v256, %v384
    %v449 = vsel %vm321, %v257, %v385
    %450 = vst [vmem:[#allocation8] sm:$0xff] %v386
    %451 = vst [vmem:[#allocation8 + $0x8] sm:$0xff] %v387
    %452 = vst [vmem:[#allocation8 + $0x10] sm:$0xff] %v388
    %453 = vst [vmem:[#allocation8 + $0x18] sm:$0xff] %v389
    %454 = vst [vmem:[#allocation8 + $0x20] sm:$0xff] %v390
    %455 = vst [vmem:[#allocation8 + $0x28] sm:$0xff] %v391
    %456 = vst [vmem:[#allocation8 + $0x30] sm:$0xff] %v392
    %457 = vst [vmem:[#allocation8 + $0x38] sm:$0xff] %v393
    %458 = vst [vmem:[#allocation8 + $0x40] sm:$0xff] %v394
    %459 = vst [vmem:[#allocation8 + $0x48] sm:$0xff] %v395
    %460 = vst [vmem:[#allocation8 + $0x50] sm:$0xff] %v396
    %461 = vst [vmem:[#allocation8 + $0x58] sm:$0xff] %v397
    %462 = vst [vmem:[#allocation8 + $0x60] sm:$0xff] %v398
    %463 = vst [vmem:[#allocation8 + $0x68] sm:$0xff] %v399
    %464 = vst [vmem:[#allocation8 + $0x70] sm:$0xff] %v400
    %465 = vst [vmem:[#allocation8 + $0x78] sm:$0xff] %v401
    %466 = vst [vmem:[#allocation8 + $0x80] sm:$0xff] %v402
    %467 = vst [vmem:[#allocation8 + $0x88] sm:$0xff] %v403
    %468 = vst [vmem:[#allocation8 + $0x90] sm:$0xff] %v404
    %469 = vst [vmem:[#allocation8 + $0x98] sm:$0xff] %v405
    %470 = vst [vmem:[#allocation8 + $0xa0] sm:$0xff] %v406
    %471 = vst [vmem:[#allocation8 + $0xa8] sm:$0xff] %v407
    %472 = vst [vmem:[#allocation8 + $0xb0] sm:$0xff] %v408
    %473 = vst [vmem:[#allocation8 + $0xb8] sm:$0xff] %v409
    %474 = vst [vmem:[#allocation8 + $0xc0] sm:$0xff] %v410
    %475 = vst [vmem:[#allocation8 + $0xc8] sm:$0xff] %v411
    %476 = vst [vmem:[#allocation8 + $0xd0] sm:$0xff] %v412
    %477 = vst [vmem:[#allocation8 + $0xd8] sm:$0xff] %v413
    %478 = vst [vmem:[#allocation8 + $0xe0] sm:$0xff] %v414
    %479 = vst [vmem:[#allocation8 + $0xe8] sm:$0xff] %v415
    %480 = vst [vmem:[#allocation8 + $0xf0] sm:$0xff] %v416
    %481 = vst [vmem:[#allocation8 + $0xf8] sm:$0xff] %v417
    %482 = vst [vmem:[#allocation8 + $0x100] sm:$0xff] %v418
    %483 = vst [vmem:[#allocation8 + $0x108] sm:$0xff] %v419
    %484 = vst [vmem:[#allocation8 + $0x110] sm:$0xff] %v420
    %485 = vst [vmem:[#allocation8 + $0x118] sm:$0xff] %v421
    %486 = vst [vmem:[#allocation8 + $0x120] sm:$0xff] %v422
    %487 = vst [vmem:[#allocation8 + $0x128] sm:$0xff] %v423
    %488 = vst [vmem:[#allocation8 + $0x130] sm:$0xff] %v424
    %489 = vst [vmem:[#allocation8 + $0x138] sm:$0xff] %v425
    %490 = vst [vmem:[#allocation8 + $0x140] sm:$0xff] %v426
    %491 = vst [vmem:[#allocation8 + $0x148] sm:$0xff] %v427
    %492 = vst [vmem:[#allocation8 + $0x150] sm:$0xff] %v428
    %493 = vst [vmem:[#allocation8 + $0x158] sm:$0xff] %v429
    %494 = vst [vmem:[#allocation8 + $0x160] sm:$0xff] %v430
    %495 = vst [vmem:[#allocation8 + $0x168] sm:$0xff] %v431
    %496 = vst [vmem:[#allocation8 + $0x170] sm:$0xff] %v432
    %497 = vst [vmem:[#allocation8 + $0x178] sm:$0xff] %v433
    %498 = vst [vmem:[#allocation8 + $0x180] sm:$0xff] %v434
    %499 = vst [vmem:[#allocation8 + $0x188] sm:$0xff] %v435
    %500 = vst [vmem:[#allocation8 + $0x190] sm:$0xff] %v436
    %501 = vst [vmem:[#allocation8 + $0x198] sm:$0xff] %v437
    %502 = vst [vmem:[#allocation8 + $0x1a0] sm:$0xff] %v438
    %503 = vst [vmem:[#allocation8 + $0x1a8] sm:$0xff] %v439
    %504 = vst [vmem:[#allocation8 + $0x1b0] sm:$0xff] %v440
    %505 = vst [vmem:[#allocation8 + $0x1b8] sm:$0xff] %v441
    %506 = vst [vmem:[#allocation8 + $0x1c0] sm:$0xff] %v442
    %507 = vst [vmem:[#allocation8 + $0x1c8] sm:$0xff] %v443
    %508 = vst [vmem:[#allocation8 + $0x1d0] sm:$0xff] %v444
    %509 = vst [vmem:[#allocation8 + $0x1d8] sm:$0xff] %v445
    %510 = vst [vmem:[#allocation8 + $0x1e0] sm:$0xff] %v446
    %511 = vst [vmem:[#allocation8 + $0x1e8] sm:$0xff] %v447
    %512 = vst [vmem:[#allocation8 + $0x1f0] sm:$0xff] %v448
    %513 = vst [vmem:[#allocation8 + $0x1f8] sm:$0xff] %v449
    // Predicated region
    $region26: #{resblock_forward.5} parent=1 // pred_check
      _
    $region27: #{resblock_forward.5} parent=1 // pred_check_branch
      %515 = sbr.rel (0) target = $region29
    $region28: #{resblock_forward.5} parent=1 // pred_region
      %s517 = ssub.s32 8192, 8192
      %518 = vsyncadd [#allocation4], %s517
      %s519 = sshll.u32 [#allocation8], 4
      %s520 = int_to_ptr.vmem [resolvable:$true] %s519
      %525 = dma.vmem_to_hbm [thread:$0]  %s520, 8192, %s3, [#allocation4], 128, 128, 8
    $region29: #{resblock_forward.5} parent=1 // pred_fallthru
      _
    // Predicated region
    $region30: #{resblock_forward.5} parent=1 // pred_check
      _
    $region31: #{resblock_forward.5} parent=1 // pred_check_branch
      %527 = sbr.rel (0) target = $region33
    $region32: #{resblock_forward.5} parent=1 // pred_region
      %528 = dma.done [#allocation4], 8192
    $region33: #{resblock_forward.5} parent=1 // pred_fallthru
      _
    %529 = vsyncpa [#allocation3], 1
    %530 = vsyncpa [#allocation6], 1
    %531 = vsyncpa [#allocation4], 1

// kernel: resblock_forward.4
$region0: #{resblock_forward.4}
  #allocation0 [shape = 'u32[]', space=smem, size = 0x4, offset = 0x4, fixed_abs, tag = 'smem constant byte address 0x4 - core index']
  #allocation1 [shape = 'u32[144,128]{1,0:T(1,128)}', space=vmem, size = 0x12000, scoped, tag = 'internal scratch']
  %s0 = inlined_call_operand.hbm [shape: f32[512,128], index: 0, kind: input, shape index: {}]
  %s1 = inlined_call_operand.hbm [shape: f32[128,128], index: 1, kind: input, shape index: {}]
  %s2 = inlined_call_operand.hbm [shape: f32[512,128], index: 2, kind: output, shape index: {0}]
  %s3 = inlined_call_operand.hbm [shape: f32[1,2,128], index: 3, kind: output, shape index: {1}]
  %4 = xla_tuple %s2, %s3
  %s5 = sld [smem:[#allocation0]]
  $region34: #{resblock_forward.4} parent=0
    _
  %s7 = ssub.s32 1, %s5
  %s8 = scalar_select 0, %s7, %s5
  $region1: #{resblock_forward.4} parent=0
    #allocation2 [shape = 'u8[262144]{0}', space=vmem, size = 0x40000, scoped, tag = 'input window, operand 0, single buffered']
    #allocation3 [shape = 's32[1]{0}', space=sflag, size = 0x4, scoped, tag = 'scoped memory for resblock_forward.4']
    #allocation4 [shape = 's32[1]{0}', space=sflag, size = 0x4, scoped, tag = 'scoped memory for resblock_forward.4']
    #allocation5 [shape = 'u8[65536]{0}', space=vmem, size = 0x10000, scoped, tag = 'input window, operand 1, single buffered']
    #allocation6 [shape = 's32[1]{0}', space=sflag, size = 0x4, scoped, tag = 'scoped memory for resblock_forward.4']
    #allocation7 [shape = 'u8[262144]{0}', space=vmem, size = 0x40000, scoped, tag = 'output window, operand 0, single buffered']
    #allocation8 [shape = 'u8[1024]{0}', space=vmem, size = 0x400, scoped, tag = 'output window, operand 1, single buffered']
    #allocation9 [shape = 's32[1]{0}', space=sflag, size = 0x4, scoped, tag = 'scoped memory for resblock_forward.4']
    %9 = vsyncpa [#allocation3], 0
    %10 = vsyncpa [#allocation6], 0
    %11 = vsyncpa [#allocation4], 0
    %12 = vsyncpa [#allocation9], 0
    // Predicated region
    $region2: #{resblock_forward.4} parent=1 // pred_check
      _
    $region3: #{resblock_forward.4} parent=1 // pred_check_branch
      %14 = sbr.rel (0) target = $region5
    $region4: #{resblock_forward.4} parent=1 // pred_region
      %s16 = ssub.s32 8192, 8192
      %17 = vsyncadd [#allocation3], %s16
      %s18 = sshll.u32 [#allocation2], 4
      %s19 = int_to_ptr.vmem [resolvable:$true] %s18
      %24 = dma.hbm_to_vmem [thread:$0]  %s0, 8192, %s19, [#allocation3], 128, 128, 8
    $region5: #{resblock_forward.4} parent=1 // pred_fallthru
      _
    // Predicated region
    $region6: #{resblock_forward.4} parent=1 // pred_check
      _
    $region7: #{resblock_forward.4} parent=1 // pred_check_branch
      %26 = sbr.rel (0) target = $region9
    $region8: #{resblock_forward.4} parent=1 // pred_region
      %s28 = ssub.s32 2048, 2048
      %29 = vsyncadd [#allocation6], %s28
      %s30 = sshll.u32 [#allocation5], 4
      %s31 = int_to_ptr.vmem [resolvable:$true] %s30
      %36 = dma.hbm_to_vmem [thread:$0]  %s1, 2048, %s31, [#allocation6], 128, 128, 8
    $region9: #{resblock_forward.4} parent=1 // pred_fallthru
      _
    // Predicated region
    $region10: #{resblock_forward.4} parent=1 // pred_check
      _
    $region11: #{resblock_forward.4} parent=1 // pred_check_branch
      %38 = sbr.rel (0) target = $region13
    $region12: #{resblock_forward.4} parent=1 // pred_region
      %39 = dma.done [#allocation3], 8192
    $region13: #{resblock_forward.4} parent=1 // pred_fallthru
      _
    // Predicated region
    $region14: #{resblock_forward.4} parent=1 // pred_check
      _
    $region15: #{resblock_forward.4} parent=1 // pred_check_branch
      %41 = sbr.rel (0) target = $region17
    $region16: #{resblock_forward.4} parent=1 // pred_region
      %42 = dma.done [#allocation6], 2048
    $region17: #{resblock_forward.4} parent=1 // pred_fallthru
      _
    %v43 = vld [vmem:[#allocation2] sm:$0xff]
    %v44 = vld [vmem:[#allocation2 + $0x8] sm:$0xff]
    %v45 = vld [vmem:[#allocation2 + $0x10] sm:$0xff]
    %v46 = vld [vmem:[#allocation2 + $0x18] sm:$0xff]
    %v47 = vld [vmem:[#allocation2 + $0x20] sm:$0xff]
    %v48 = vld [vmem:[#allocation2 + $0x28] sm:$0xff]
    %v49 = vld [vmem:[#allocation2 + $0x30] sm:$0xff]
    %v50 = vld [vmem:[#allocation2 + $0x38] sm:$0xff]
    %v51 = vld [vmem:[#allocation2 + $0x40] sm:$0xff]
    %v52 = vld [vmem:[#allocation2 + $0x48] sm:$0xff]
    %v53 = vld [vmem:[#allocation2 + $0x50] sm:$0xff]
    %v54 = vld [vmem:[#allocation2 + $0x58] sm:$0xff]
    %v55 = vld [vmem:[#allocation2 + $0x60] sm:$0xff]
    %v56 = vld [vmem:[#allocation2 + $0x68] sm:$0xff]
    %v57 = vld [vmem:[#allocation2 + $0x70] sm:$0xff]
    %v58 = vld [vmem:[#allocation2 + $0x78] sm:$0xff]
    %v59 = vld [vmem:[#allocation2 + $0x80] sm:$0xff]
    %v60 = vld [vmem:[#allocation2 + $0x88] sm:$0xff]
    %v61 = vld [vmem:[#allocation2 + $0x90] sm:$0xff]
    %v62 = vld [vmem:[#allocation2 + $0x98] sm:$0xff]
    %v63 = vld [vmem:[#allocation2 + $0xa0] sm:$0xff]
    %v64 = vld [vmem:[#allocation2 + $0xa8] sm:$0xff]
    %v65 = vld [vmem:[#allocation2 + $0xb0] sm:$0xff]
    %v66 = vld [vmem:[#allocation2 + $0xb8] sm:$0xff]
    %v67 = vld [vmem:[#allocation2 + $0xc0] sm:$0xff]
    %v68 = vld [vmem:[#allocation2 + $0xc8] sm:$0xff]
    %v69 = vld [vmem:[#allocation2 + $0xd0] sm:$0xff]
    %v70 = vld [vmem:[#allocation2 + $0xd8] sm:$0xff]
    %v71 = vld [vmem:[#allocation2 + $0xe0] sm:$0xff]
    %v72 = vld [vmem:[#allocation2 + $0xe8] sm:$0xff]
    %v73 = vld [vmem:[#allocation2 + $0xf0] sm:$0xff]
    %v74 = vld [vmem:[#allocation2 + $0xf8] sm:$0xff]
    %v75 = vld [vmem:[#allocation2 + $0x100] sm:$0xff]
    %v76 = vld [vmem:[#allocation2 + $0x108] sm:$0xff]
    %v77 = vld [vmem:[#allocation2 + $0x110] sm:$0xff]
    %v78 = vld [vmem:[#allocation2 + $0x118] sm:$0xff]
    %v79 = vld [vmem:[#allocation2 + $0x120] sm:$0xff]
    %v80 = vld [vmem:[#allocation2 + $0x128] sm:$0xff]
    %v81 = vld [vmem:[#allocation2 + $0x130] sm:$0xff]
    %v82 = vld [vmem:[#allocation2 + $0x138] sm:$0xff]
    %v83 = vld [vmem:[#allocation2 + $0x140] sm:$0xff]
    %v84 = vld [vmem:[#allocation2 + $0x148] sm:$0xff]
    %v85 = vld [vmem:[#allocation2 + $0x150] sm:$0xff]
    %v86 = vld [vmem:[#allocation2 + $0x158] sm:$0xff]
    %v87 = vld [vmem:[#allocation2 + $0x160] sm:$0xff]
    %v88 = vld [vmem:[#allocation2 + $0x168] sm:$0xff]
    %v89 = vld [vmem:[#allocation2 + $0x170] sm:$0xff]
    %v90 = vld [vmem:[#allocation2 + $0x178] sm:$0xff]
    %v91 = vld [vmem:[#allocation2 + $0x180] sm:$0xff]
    %v92 = vld [vmem:[#allocation2 + $0x188] sm:$0xff]
    %v93 = vld [vmem:[#allocation2 + $0x190] sm:$0xff]
    %v94 = vld [vmem:[#allocation2 + $0x198] sm:$0xff]
    %v95 = vld [vmem:[#allocation2 + $0x1a0] sm:$0xff]
    %v96 = vld [vmem:[#allocation2 + $0x1a8] sm:$0xff]
    %v97 = vld [vmem:[#allocation2 + $0x1b0] sm:$0xff]
    %v98 = vld [vmem:[#allocation2 + $0x1b8] sm:$0xff]
    %v99 = vld [vmem:[#allocation2 + $0x1c0] sm:$0xff]
    %v100 = vld [vmem:[#allocation2 + $0x1c8] sm:$0xff]
    %v101 = vld [vmem:[#allocation2 + $0x1d0] sm:$0xff]
    %v102 = vld [vmem:[#allocation2 + $0x1d8] sm:$0xff]
    %v103 = vld [vmem:[#allocation2 + $0x1e0] sm:$0xff]
    %v104 = vld [vmem:[#allocation2 + $0x1e8] sm:$0xff]
    %v105 = vld [vmem:[#allocation2 + $0x1f0] sm:$0xff]
    %v106 = vld [vmem:[#allocation2 + $0x1f8] sm:$0xff]
    %v107 = vld [vmem:[#allocation5] sm:$0xff]
    %v108 = vld [vmem:[#allocation5 + $0x8] sm:$0xff]
    %v109 = vld [vmem:[#allocation5 + $0x10] sm:$0xff]
    %v110 = vld [vmem:[#allocation5 + $0x18] sm:$0xff]
    %v111 = vld [vmem:[#allocation5 + $0x20] sm:$0xff]
    %v112 = vld [vmem:[#allocation5 + $0x28] sm:$0xff]
    %v113 = vld [vmem:[#allocation5 + $0x30] sm:$0xff]
    %v114 = vld [vmem:[#allocation5 + $0x38] sm:$0xff]
    %v115 = vld [vmem:[#allocation5 + $0x40] sm:$0xff]
    %v116 = vld [vmem:[#allocation5 + $0x48] sm:$0xff]
    %v117 = vld [vmem:[#allocation5 + $0x50] sm:$0xff]
    %v118 = vld [vmem:[#allocation5 + $0x58] sm:$0xff]
    %v119 = vld [vmem:[#allocation5 + $0x60] sm:$0xff]
    %v120 = vld [vmem:[#allocation5 + $0x68] sm:$0xff]
    %v121 = vld [vmem:[#allocation5 + $0x70] sm:$0xff]
    %v122 = vld [vmem:[#allocation5 + $0x78] sm:$0xff]
    %123 = vmatprep.subr.mxu0 0.0
    %124 = vmatpush1.msra.mxu0 %v107
    %125 = vmatprep.subr.mxu0 0.0
    %126 = vmatpush1.msra.mxu0 %v108
    %127 = vmatprep.subr.mxu0 0.0
    %128 = vmatpush1.msra.mxu0 %v109
    %129 = vmatprep.subr.mxu0 0.0
    %130 = vmatpush1.msra.mxu0 %v110
    %131 = vmatprep.subr.mxu0 0.0
    %132 = vmatpush1.msra.mxu0 %v111
    %133 = vmatprep.subr.mxu0 0.0
    %134 = vmatpush1.msra.mxu0 %v112
    %135 = vmatprep.subr.mxu0 0.0
    %136 = vmatpush1.msra.mxu0 %v113
    %137 = vmatprep.subr.mxu0 0.0
    %138 = vmatpush1.msra.mxu0 %v114
    %139 = vmatprep.subr.mxu0 0.0
    %140 = vmatpush1.msra.mxu0 %v115
    %141 = vmatprep.subr.mxu0 0.0
    %142 = vmatpush1.msra.mxu0 %v116
    %143 = vmatprep.subr.mxu0 0.0
    %144 = vmatpush1.msra.mxu0 %v117
    %145 = vmatprep.subr.mxu0 0.0
    %146 = vmatpush1.msra.mxu0 %v118
    %147 = vmatprep.subr.mxu0 0.0
    %148 = vmatpush1.msra.mxu0 %v119
    %149 = vmatprep.subr.mxu0 0.0
    %150 = vmatpush1.msra.mxu0 %v120
    %151 = vmatprep.subr.mxu0 0.0
    %152 = vmatpush1.msra.mxu0 %v121
    %153 = vmatprep.subr.mxu0 0.0
    %154 = vmatpush1.msra.mxu0 %v122
    %155 = vmatprep.subr.mxu0 0.0
    %156 = vmatpush1.msra.mxu0 0.0
    %157 = vmatprep.subr.mxu0 0.0
    %158 = vmatpush1.msra.mxu0 0.0
    %159 = vmatprep.subr.mxu0 0.0
    %160 = vmatpush1.msra.mxu0 0.0
    %161 = vmatprep.subr.mxu0 0.0
    %162 = vmatpush1.msra.mxu0 0.0
    %163 = vmatprep.subr.mxu0 0.0
    %164 = vmatpush1.msra.mxu0 0.0
    %165 = vmatprep.subr.mxu0 0.0
    %166 = vmatpush1.msra.mxu0 0.0
    %167 = vmatprep.subr.mxu0 0.0
    %168 = vmatpush1.msra.mxu0 0.0
    %169 = vmatprep.subr.mxu0 0.0
    %170 = vmatpush1.msra.mxu0 0.0
    %171 = vmatprep.subr.mxu0 0.0
    %172 = vmatpush1.msra.mxu0 0.0
    %173 = vmatprep.subr.mxu0 0.0
    %174 = vmatpush1.msra.mxu0 0.0
    %175 = vmatprep.subr.mxu0 0.0
    %176 = vmatpush1.msra.mxu0 0.0
    %177 = vmatprep.subr.mxu0 0.0
    %178 = vmatpush1.msra.mxu0 0.0
    %179 = vmatprep.subr.mxu0 0.0
    %180 = vmatpush1.msra.mxu0 0.0
    %181 = vmatprep.subr.mxu0 0.0
    %182 = vmatpush1.msra.mxu0 0.0
    %183 = vmatprep.subr.mxu0 0.0
    %184 = vmatpush1.msra.mxu0 0.0
    %185 = vmatprep.subr.mxu0 0.0
    %186 = vmatpush1.msra.mxu0 0.0
    %187 = vmatprep.mubr.f32.mxu0 0.0
    %188 = vmatmul.mubr.f32.gmra.mrb[0].mxu0 %v43
    %v189 = vpop.f32.mrb[0].mxu0
    %v190 = vadd.f32 0.0, %v189
    %v191 = vpop.f32.mrb[0].mxu0
    %192 = vmatprep.mubr.f32.mxu0 0.0
    %193 = vmatmul.mubr.f32.gmra.mrb[0].mxu0 %v44
    %v194 = vpop.f32.mrb[0].mxu0
    %v195 = vadd.f32 0.0, %v194
    %v196 = vpop.f32.mrb[0].mxu0
    %197 = vmatprep.mubr.f32.mxu0 0.0
    %198 = vmatmul.mubr.f32.gmra.mrb[0].mxu0 %v45
    %v199 = vpop.f32.mrb[0].mxu0
    %v200 = vadd.f32 0.0, %v199
    %v201 = vpop.f32.mrb[0].mxu0
    %202 = vmatprep.mubr.f32.mxu0 0.0
    %203 = vmatmul.mubr.f32.gmra.mrb[0].mxu0 %v46
    %v204 = vpop.f32.mrb[0].mxu0
    %v205 = vadd.f32 0.0, %v204
    %v206 = vpop.f32.mrb[0].mxu0
    %207 = vmatprep.mubr.f32.mxu0 0.0
    %208 = vmatmul.mubr.f32.gmra.mrb[0].mxu0 %v47
    %v209 = vpop.f32.mrb[0].mxu0
    %v210 = vadd.f32 0.0, %v209
    %v211 = vpop.f32.mrb[0].mxu0
    %212 = vmatprep.mubr.f32.mxu0 0.0
    %213 = vmatmul.mubr.f32.gmra.mrb[0].mxu0 %v48
    %v214 = vpop.f32.mrb[0].mxu0
    %v215 = vadd.f32 0.0, %v214
    %v216 = vpop.f32.mrb[0].mxu0
    %217 = vmatprep.mubr.f32.mxu0 0.0
    %218 = vmatmul.mubr.f32.gmra.mrb[0].mxu0 %v49
    %v219 = vpop.f32.mrb[0].mxu0
    %v220 = vadd.f32 0.0, %v219
    %v221 = vpop.f32.mrb[0].mxu0
    %222 = vmatprep.mubr.f32.mxu0 0.0
    %223 = vmatmul.mubr.f32.gmra.mrb[0].mxu0 %v50
    %v224 = vpop.f32.mrb[0].mxu0
    %v225 = vadd.f32 0.0, %v224
    %v226 = vpop.f32.mrb[0].mxu0
    %227 = vmatprep.mubr.f32.mxu0 0.0
    %228 = vmatmul.mubr.f32.gmra.mrb[0].mxu0 %v51
    %v229 = vpop.f32.mrb[0].mxu0
    %v230 = vadd.f32 0.0, %v229
    %v231 = vpop.f32.mrb[0].mxu0
    %232 = vmatprep.mubr.f32.mxu0 0.0
    %233 = vmatmul.mubr.f32.gmra.mrb[0].mxu0 %v52
    %v234 = vpop.f32.mrb[0].mxu0
    %v235 = vadd.f32 0.0, %v234
    %v236 = vpop.f32.mrb[0].mxu0
    %237 = vmatprep.mubr.f32.mxu0 0.0
    %238 = vmatmul.mubr.f32.gmra.mrb[0].mxu0 %v53
    %v239 = vpop.f32.mrb[0].mxu0
    %v240 = vadd.f32 0.0, %v239
    %v241 = vpop.f32.mrb[0].mxu0
    %242 = vmatprep.mubr.f32.mxu0 0.0
    %243 = vmatmul.mubr.f32.gmra.mrb[0].mxu0 %v54
    %v244 = vpop.f32.mrb[0].mxu0
    %v245 = vadd.f32 0.0, %v244
    %v246 = vpop.f32.mrb[0].mxu0
    %247 = vmatprep.mubr.f32.mxu0 0.0
    %248 = vmatmul.mubr.f32.gmra.mrb[0].mxu0 %v55
    %v249 = vpop.f32.mrb[0].mxu0
    %v250 = vadd.f32 0.0, %v249
    %v251 = vpop.f32.mrb[0].mxu0
    %252 = vmatprep.mubr.f32.mxu0 0.0
    %253 = vmatmul.mubr.f32.gmra.mrb[0].mxu0 %v56
    %v254 = vpop.f32.mrb[0].mxu0
    %v255 = vadd.f32 0.0, %v254
    %v256 = vpop.f32.mrb[0].mxu0
    %257 = vmatprep.mubr.f32.mxu0 0.0
    %258 = vmatmul.mubr.f32.gmra.mrb[0].mxu0 %v57
    %v259 = vpop.f32.mrb[0].mxu0
    %v260 = vadd.f32 0.0, %v259
    %v261 = vpop.f32.mrb[0].mxu0
    %262 = vmatprep.mubr.f32.mxu0 0.0
    %263 = vmatmul.mubr.f32.gmra.mrb[0].mxu0 %v58
    %v264 = vpop.f32.mrb[0].mxu0
    %v265 = vadd.f32 0.0, %v264
    %v266 = vpop.f32.mrb[0].mxu0
    %267 = vmatprep.mubr.f32.mxu0 0.0
    %268 = vmatmul.mubr.f32.gmra.mrb[0].mxu0 %v59
    %v269 = vpop.f32.mrb[0].mxu0
    %v270 = vadd.f32 0.0, %v269
    %v271 = vpop.f32.mrb[0].mxu0
    %272 = vmatprep.mubr.f32.mxu0 0.0
    %273 = vmatmul.mubr.f32.gmra.mrb[0].mxu0 %v60
    %v274 = vpop.f32.mrb[0].mxu0
    %v275 = vadd.f32 0.0, %v274
    %v276 = vpop.f32.mrb[0].mxu0
    %277 = vmatprep.mubr.f32.mxu0 0.0
    %278 = vmatmul.mubr.f32.gmra.mrb[0].mxu0 %v61
    %v279 = vpop.f32.mrb[0].mxu0
    %v280 = vadd.f32 0.0, %v279
    %v281 = vpop.f32.mrb[0].mxu0
    %282 = vmatprep.mubr.f32.mxu0 0.0
    %283 = vmatmul.mubr.f32.gmra.mrb[0].mxu0 %v62
    %v284 = vpop.f32.mrb[0].mxu0
    %v285 = vadd.f32 0.0, %v284
    %v286 = vpop.f32.mrb[0].mxu0
    %287 = vmatprep.mubr.f32.mxu0 0.0
    %288 = vmatmul.mubr.f32.gmra.mrb[0].mxu0 %v63
    %v289 = vpop.f32.mrb[0].mxu0
    %v290 = vadd.f32 0.0, %v289
    %v291 = vpop.f32.mrb[0].mxu0
    %292 = vmatprep.mubr.f32.mxu0 0.0
    %293 = vmatmul.mubr.f32.gmra.mrb[0].mxu0 %v64
    %v294 = vpop.f32.mrb[0].mxu0
    %v295 = vadd.f32 0.0, %v294
    %v296 = vpop.f32.mrb[0].mxu0
    %297 = vmatprep.mubr.f32.mxu0 0.0
    %298 = vmatmul.mubr.f32.gmra.mrb[0].mxu0 %v65
    %v299 = vpop.f32.mrb[0].mxu0
    %v300 = vadd.f32 0.0, %v299
    %v301 = vpop.f32.mrb[0].mxu0
    %302 = vmatprep.mubr.f32.mxu0 0.0
    %303 = vmatmul.mubr.f32.gmra.mrb[0].mxu0 %v66
    %v304 = vpop.f32.mrb[0].mxu0
    %v305 = vadd.f32 0.0, %v304
    %v306 = vpop.f32.mrb[0].mxu0
    %307 = vmatprep.mubr.f32.mxu0 0.0
    %308 = vmatmul.mubr.f32.gmra.mrb[0].mxu0 %v67
    %v309 = vpop.f32.mrb[0].mxu0
    %v310 = vadd.f32 0.0, %v309
    %v311 = vpop.f32.mrb[0].mxu0
    %312 = vmatprep.mubr.f32.mxu0 0.0
    %313 = vmatmul.mubr.f32.gmra.mrb[0].mxu0 %v68
    %v314 = vpop.f32.mrb[0].mxu0
    %v315 = vadd.f32 0.0, %v314
    %v316 = vpop.f32.mrb[0].mxu0
    %317 = vmatprep.mubr.f32.mxu0 0.0
    %318 = vmatmul.mubr.f32.gmra.mrb[0].mxu0 %v69
    %v319 = vpop.f32.mrb[0].mxu0
    %v320 = vadd.f32 0.0, %v319
    %v321 = vpop.f32.mrb[0].mxu0
    %322 = vmatprep.mubr.f32.mxu0 0.0
    %323 = vmatmul.mubr.f32.gmra.mrb[0].mxu0 %v70
    %v324 = vpop.f32.mrb[0].mxu0
    %v325 = vadd.f32 0.0, %v324
    %v326 = vpop.f32.mrb[0].mxu0
    %327 = vmatprep.mubr.f32.mxu0 0.0
    %328 = vmatmul.mubr.f32.gmra.mrb[0].mxu0 %v71
    %v329 = vpop.f32.mrb[0].mxu0
    %v330 = vadd.f32 0.0, %v329
    %v331 = vpop.f32.mrb[0].mxu0
    %332 = vmatprep.mubr.f32.mxu0 0.0
    %333 = vmatmul.mubr.f32.gmra.mrb[0].mxu0 %v72
    %v334 = vpop.f32.mrb[0].mxu0
    %v335 = vadd.f32 0.0, %v334
    %v336 = vpop.f32.mrb[0].mxu0
    %337 = vmatprep.mubr.f32.mxu0 0.0
    %338 = vmatmul.mubr.f32.gmra.mrb[0].mxu0 %v73
    %v339 = vpop.f32.mrb[0].mxu0
    %v340 = vadd.f32 0.0, %v339
    %v341 = vpop.f32.mrb[0].mxu0
    %342 = vmatprep.mubr.f32.mxu0 0.0
    %343 = vmatmul.mubr.f32.gmra.mrb[0].mxu0 %v74
    %v344 = vpop.f32.mrb[0].mxu0
    %v345 = vadd.f32 0.0, %v344
    %v346 = vpop.f32.mrb[0].mxu0
    %347 = vmatprep.mubr.f32.mxu0 0.0
    %348 = vmatmul.mubr.f32.gmra.mrb[0].mxu0 %v75
    %v349 = vpop.f32.mrb[0].mxu0
    %v350 = vadd.f32 0.0, %v349
    %v351 = vpop.f32.mrb[0].mxu0
    %352 = vmatprep.mubr.f32.mxu0 0.0
    %353 = vmatmul.mubr.f32.gmra.mrb[0].mxu0 %v76
    %v354 = vpop.f32.mrb[0].mxu0
    %v355 = vadd.f32 0.0, %v354
    %v356 = vpop.f32.mrb[0].mxu0
    %357 = vmatprep.mubr.f32.mxu0 0.0
    %358 = vmatmul.mubr.f32.gmra.mrb[0].mxu0 %v77
    %v359 = vpop.f32.mrb[0].mxu0
    %v360 = vadd.f32 0.0, %v359
    %v361 = vpop.f32.mrb[0].mxu0
    %362 = vmatprep.mubr.f32.mxu0 0.0
    %363 = vmatmul.mubr.f32.gmra.mrb[0].mxu0 %v78
    %v364 = vpop.f32.mrb[0].mxu0
    %v365 = vadd.f32 0.0, %v364
    %v366 = vpop.f32.mrb[0].mxu0
    %367 = vmatprep.mubr.f32.mxu0 0.0
    %368 = vmatmul.mubr.f32.gmra.mrb[0].mxu0 %v79
    %v369 = vpop.f32.mrb[0].mxu0
    %v370 = vadd.f32 0.0, %v369
    %v371 = vpop.f32.mrb[0].mxu0
    %372 = vmatprep.mubr.f32.mxu0 0.0
    %373 = vmatmul.mubr.f32.gmra.mrb[0].mxu0 %v80
    %v374 = vpop.f32.mrb[0].mxu0
    %v375 = vadd.f32 0.0, %v374
    %v376 = vpop.f32.mrb[0].mxu0
    %377 = vmatprep.mubr.f32.mxu0 0.0
    %378 = vmatmul.mubr.f32.gmra.mrb[0].mxu0 %v81
    %v379 = vpop.f32.mrb[0].mxu0
    %v380 = vadd.f32 0.0, %v379
    %v381 = vpop.f32.mrb[0].mxu0
    %382 = vmatprep.mubr.f32.mxu0 0.0
    %383 = vmatmul.mubr.f32.gmra.mrb[0].mxu0 %v82
    %v384 = vpop.f32.mrb[0].mxu0
    %v385 = vadd.f32 0.0, %v384
    %v386 = vpop.f32.mrb[0].mxu0
    %387 = vmatprep.mubr.f32.mxu0 0.0
    %388 = vmatmul.mubr.f32.gmra.mrb[0].mxu0 %v83
    %v389 = vpop.f32.mrb[0].mxu0
    %v390 = vadd.f32 0.0, %v389
    %v391 = vpop.f32.mrb[0].mxu0
    %392 = vmatprep.mubr.f32.mxu0 0.0
    %393 = vmatmul.mubr.f32.gmra.mrb[0].mxu0 %v84
    %v394 = vpop.f32.mrb[0].mxu0
    %v395 = vadd.f32 0.0, %v394
    %v396 = vpop.f32.mrb[0].mxu0
    %397 = vmatprep.mubr.f32.mxu0 0.0
    %398 = vmatmul.mubr.f32.gmra.mrb[0].mxu0 %v85
    %v399 = vpop.f32.mrb[0].mxu0
    %v400 = vadd.f32 0.0, %v399
    %v401 = vpop.f32.mrb[0].mxu0
    %402 = vmatprep.mubr.f32.mxu0 0.0
    %403 = vmatmul.mubr.f32.gmra.mrb[0].mxu0 %v86
    %v404 = vpop.f32.mrb[0].mxu0
    %v405 = vadd.f32 0.0, %v404
    %v406 = vpop.f32.mrb[0].mxu0
    %407 = vmatprep.mubr.f32.mxu0 0.0
    %408 = vmatmul.mubr.f32.gmra.mrb[0].mxu0 %v87
    %v409 = vpop.f32.mrb[0].mxu0
    %v410 = vadd.f32 0.0, %v409
    %v411 = vpop.f32.mrb[0].mxu0
    %412 = vmatprep.mubr.f32.mxu0 0.0
    %413 = vmatmul.mubr.f32.gmra.mrb[0].mxu0 %v88
    %v414 = vpop.f32.mrb[0].mxu0
    %v415 = vadd.f32 0.0, %v414
    %v416 = vpop.f32.mrb[0].mxu0
    %417 = vmatprep.mubr.f32.mxu0 0.0
    %418 = vmatmul.mubr.f32.gmra.mrb[0].mxu0 %v89
    %v419 = vpop.f32.mrb[0].mxu0
    %v420 = vadd.f32 0.0, %v419
    %v421 = vpop.f32.mrb[0].mxu0
    %422 = vmatprep.mubr.f32.mxu0 0.0
    %423 = vmatmul.mubr.f32.gmra.mrb[0].mxu0 %v90
    %v424 = vpop.f32.mrb[0].mxu0
    %v425 = vadd.f32 0.0, %v424
    %v426 = vpop.f32.mrb[0].mxu0
    %427 = vmatprep.mubr.f32.mxu0 0.0
    %428 = vmatmul.mubr.f32.gmra.mrb[0].mxu0 %v91
    %v429 = vpop.f32.mrb[0].mxu0
    %v430 = vadd.f32 0.0, %v429
    %v431 = vpop.f32.mrb[0].mxu0
    %432 = vmatprep.mubr.f32.mxu0 0.0
    %433 = vmatmul.mubr.f32.gmra.mrb[0].mxu0 %v92
    %v434 = vpop.f32.mrb[0].mxu0
    %v435 = vadd.f32 0.0, %v434
    %v436 = vpop.f32.mrb[0].mxu0
    %437 = vmatprep.mubr.f32.mxu0 0.0
    %438 = vmatmul.mubr.f32.gmra.mrb[0].mxu0 %v93
    %v439 = vpop.f32.mrb[0].mxu0
    %v440 = vadd.f32 0.0, %v439
    %v441 = vpop.f32.mrb[0].mxu0
    %442 = vmatprep.mubr.f32.mxu0 0.0
    %443 = vmatmul.mubr.f32.gmra.mrb[0].mxu0 %v94
    %v444 = vpop.f32.mrb[0].mxu0
    %v445 = vadd.f32 0.0, %v444
    %v446 = vpop.f32.mrb[0].mxu0
    %447 = vmatprep.mubr.f32.mxu0 0.0
    %448 = vmatmul.mubr.f32.gmra.mrb[0].mxu0 %v95
    %v449 = vpop.f32.mrb[0].mxu0
    %v450 = vadd.f32 0.0, %v449
    %v451 = vpop.f32.mrb[0].mxu0
    %452 = vmatprep.mubr.f32.mxu0 0.0
    %453 = vmatmul.mubr.f32.gmra.mrb[0].mxu0 %v96
    %v454 = vpop.f32.mrb[0].mxu0
    %v455 = vadd.f32 0.0, %v454
    %v456 = vpop.f32.mrb[0].mxu0
    %457 = vmatprep.mubr.f32.mxu0 0.0
    %458 = vmatmul.mubr.f32.gmra.mrb[0].mxu0 %v97
    %v459 = vpop.f32.mrb[0].mxu0
    %v460 = vadd.f32 0.0, %v459
    %v461 = vpop.f32.mrb[0].mxu0
    %462 = vmatprep.mubr.f32.mxu0 0.0
    %463 = vmatmul.mubr.f32.gmra.mrb[0].mxu0 %v98
    %v464 = vpop.f32.mrb[0].mxu0
    %v465 = vadd.f32 0.0, %v464
    %v466 = vpop.f32.mrb[0].mxu0
    %467 = vmatprep.mubr.f32.mxu0 0.0
    %468 = vmatmul.mubr.f32.gmra.mrb[0].mxu0 %v99
    %v469 = vpop.f32.mrb[0].mxu0
    %v470 = vadd.f32 0.0, %v469
    %v471 = vpop.f32.mrb[0].mxu0
    %472 = vmatprep.mubr.f32.mxu0 0.0
    %473 = vmatmul.mubr.f32.gmra.mrb[0].mxu0 %v100
    %v474 = vpop.f32.mrb[0].mxu0
    %v475 = vadd.f32 0.0, %v474
    %v476 = vpop.f32.mrb[0].mxu0
    %477 = vmatprep.mubr.f32.mxu0 0.0
    %478 = vmatmul.mubr.f32.gmra.mrb[0].mxu0 %v101
    %v479 = vpop.f32.mrb[0].mxu0
    %v480 = vadd.f32 0.0, %v479
    %v481 = vpop.f32.mrb[0].mxu0
    %482 = vmatprep.mubr.f32.mxu0 0.0
    %483 = vmatmul.mubr.f32.gmra.mrb[0].mxu0 %v102
    %v484 = vpop.f32.mrb[0].mxu0
    %v485 = vadd.f32 0.0, %v484
    %v486 = vpop.f32.mrb[0].mxu0
    %487 = vmatprep.mubr.f32.mxu0 0.0
    %488 = vmatmul.mubr.f32.gmra.mrb[0].mxu0 %v103
    %v489 = vpop.f32.mrb[0].mxu0
    %v490 = vadd.f32 0.0, %v489
    %v491 = vpop.f32.mrb[0].mxu0
    %492 = vmatprep.mubr.f32.mxu0 0.0
    %493 = vmatmul.mubr.f32.gmra.mrb[0].mxu0 %v104
    %v494 = vpop.f32.mrb[0].mxu0
    %v495 = vadd.f32 0.0, %v494
    %v496 = vpop.f32.mrb[0].mxu0
    %497 = vmatprep.mubr.f32.mxu0 0.0
    %498 = vmatmul.mubr.f32.gmra.mrb[0].mxu0 %v105
    %v499 = vpop.f32.mrb[0].mxu0
    %v500 = vadd.f32 0.0, %v499
    %v501 = vpop.f32.mrb[0].mxu0
    %502 = vmatprep.mubr.f32.mxu0 0.0
    %503 = vmatmul.mubr.f32.gmra.mrb[0].mxu0 %v106
    %v504 = vpop.f32.mrb[0].mxu0
    %v505 = vadd.f32 0.0, %v504
    %v506 = vpop.f32.mrb[0].mxu0
    %507 = vdwg.mxu0
    %508 = vst [vmem:[#allocation7] sm:$0xff] %v190
    %509 = vst [vmem:[#allocation7 + $0x8] sm:$0xff] %v195
    %510 = vst [vmem:[#allocation7 + $0x10] sm:$0xff] %v200
    %511 = vst [vmem:[#allocation7 + $0x18] sm:$0xff] %v205
    %512 = vst [vmem:[#allocation7 + $0x20] sm:$0xff] %v210
    %513 = vst [vmem:[#allocation7 + $0x28] sm:$0xff] %v215
    %514 = vst [vmem:[#allocation7 + $0x30] sm:$0xff] %v220
    %515 = vst [vmem:[#allocation7 + $0x38] sm:$0xff] %v225
    %516 = vst [vmem:[#allocation7 + $0x40] sm:$0xff] %v230
    %517 = vst [vmem:[#allocation7 + $0x48] sm:$0xff] %v235
    %518 = vst [vmem:[#allocation7 + $0x50] sm:$0xff] %v240
    %519 = vst [vmem:[#allocation7 + $0x58] sm:$0xff] %v245
    %520 = vst [vmem:[#allocation7 + $0x60] sm:$0xff] %v250
    %521 = vst [vmem:[#allocation7 + $0x68] sm:$0xff] %v255
    %522 = vst [vmem:[#allocation7 + $0x70] sm:$0xff] %v260
    %523 = vst [vmem:[#allocation7 + $0x78] sm:$0xff] %v265
    %524 = vst [vmem:[#allocation7 + $0x80] sm:$0xff] %v270
    %525 = vst [vmem:[#allocation7 + $0x88] sm:$0xff] %v275
    %526 = vst [vmem:[#allocation7 + $0x90] sm:$0xff] %v280
    %527 = vst [vmem:[#allocation7 + $0x98] sm:$0xff] %v285
    %528 = vst [vmem:[#allocation7 + $0xa0] sm:$0xff] %v290
    %529 = vst [vmem:[#allocation7 + $0xa8] sm:$0xff] %v295
    %530 = vst [vmem:[#allocation7 + $0xb0] sm:$0xff] %v300
    %531 = vst [vmem:[#allocation7 + $0xb8] sm:$0xff] %v305
    %532 = vst [vmem:[#allocation7 + $0xc0] sm:$0xff] %v310
    %533 = vst [vmem:[#allocation7 + $0xc8] sm:$0xff] %v315
    %534 = vst [vmem:[#allocation7 + $0xd0] sm:$0xff] %v320
    %535 = vst [vmem:[#allocation7 + $0xd8] sm:$0xff] %v325
    %536 = vst [vmem:[#allocation7 + $0xe0] sm:$0xff] %v330
    %537 = vst [vmem:[#allocation7 + $0xe8] sm:$0xff] %v335
    %538 = vst [vmem:[#allocation7 + $0xf0] sm:$0xff] %v340
    %539 = vst [vmem:[#allocation7 + $0xf8] sm:$0xff] %v345
    %540 = vst [vmem:[#allocation7 + $0x100] sm:$0xff] %v350
    %541 = vst [vmem:[#allocation7 + $0x108] sm:$0xff] %v355
    %542 = vst [vmem:[#allocation7 + $0x110] sm:$0xff] %v360
    %543 = vst [vmem:[#allocation7 + $0x118] sm:$0xff] %v365
    %544 = vst [vmem:[#allocation7 + $0x120] sm:$0xff] %v370
    %545 = vst [vmem:[#allocation7 + $0x128] sm:$0xff] %v375
    %546 = vst [vmem:[#allocation7 + $0x130] sm:$0xff] %v380
    %547 = vst [vmem:[#allocation7 + $0x138] sm:$0xff] %v385
    %548 = vst [vmem:[#allocation7 + $0x140] sm:$0xff] %v390
    %549 = vst [vmem:[#allocation7 + $0x148] sm:$0xff] %v395
    %550 = vst [vmem:[#allocation7 + $0x150] sm:$0xff] %v400
    %551 = vst [vmem:[#allocation7 + $0x158] sm:$0xff] %v405
    %552 = vst [vmem:[#allocation7 + $0x160] sm:$0xff] %v410
    %553 = vst [vmem:[#allocation7 + $0x168] sm:$0xff] %v415
    %554 = vst [vmem:[#allocation7 + $0x170] sm:$0xff] %v420
    %555 = vst [vmem:[#allocation7 + $0x178] sm:$0xff] %v425
    %556 = vst [vmem:[#allocation7 + $0x180] sm:$0xff] %v430
    %557 = vst [vmem:[#allocation7 + $0x188] sm:$0xff] %v435
    %558 = vst [vmem:[#allocation7 + $0x190] sm:$0xff] %v440
    %559 = vst [vmem:[#allocation7 + $0x198] sm:$0xff] %v445
    %560 = vst [vmem:[#allocation7 + $0x1a0] sm:$0xff] %v450
    %561 = vst [vmem:[#allocation7 + $0x1a8] sm:$0xff] %v455
    %562 = vst [vmem:[#allocation7 + $0x1b0] sm:$0xff] %v460
    %563 = vst [vmem:[#allocation7 + $0x1b8] sm:$0xff] %v465
    %564 = vst [vmem:[#allocation7 + $0x1c0] sm:$0xff] %v470
    %565 = vst [vmem:[#allocation7 + $0x1c8] sm:$0xff] %v475
    %566 = vst [vmem:[#allocation7 + $0x1d0] sm:$0xff] %v480
    %567 = vst [vmem:[#allocation7 + $0x1d8] sm:$0xff] %v485
    %568 = vst [vmem:[#allocation7 + $0x1e0] sm:$0xff] %v490
    %569 = vst [vmem:[#allocation7 + $0x1e8] sm:$0xff] %v495
    %570 = vst [vmem:[#allocation7 + $0x1f0] sm:$0xff] %v500
    %571 = vst [vmem:[#allocation7 + $0x1f8] sm:$0xff] %v505
    %v572 = vadd.f32 %v190, %v195
    %v573 = vadd.f32 %v572, %v200
    %v574 = vadd.f32 %v573, %v205
    %v575 = vadd.f32 %v574, %v210
    %v576 = vadd.f32 %v575, %v215
    %v577 = vadd.f32 %v576, %v220
    %v578 = vadd.f32 %v577, %v225
    %v579 = vadd.f32 %v578, %v230
    %v580 = vadd.f32 %v579, %v235
    %v581 = vadd.f32 %v580, %v240
    %v582 = vadd.f32 %v581, %v245
    %v583 = vadd.f32 %v582, %v250
    %v584 = vadd.f32 %v583, %v255
    %v585 = vadd.f32 %v584, %v260
    %v586 = vadd.f32 %v585, %v265
    %v587 = vadd.f32 %v586, %v270
    %v588 = vadd.f32 %v587, %v275
    %v589 = vadd.f32 %v588, %v280
    %v590 = vadd.f32 %v589, %v285
    %v591 = vadd.f32 %v590, %v290
    %v592 = vadd.f32 %v591, %v295
    %v593 = vadd.f32 %v592, %v300
    %v594 = vadd.f32 %v593, %v305
    %v595 = vadd.f32 %v594, %v310
    %v596 = vadd.f32 %v595, %v315
    %v597 = vadd.f32 %v596, %v320
    %v598 = vadd.f32 %v597, %v325
    %v599 = vadd.f32 %v598, %v330
    %v600 = vadd.f32 %v599, %v335
    %v601 = vadd.f32 %v600, %v340
    %v602 = vadd.f32 %v601, %v345
    %v603 = vadd.f32 %v602, %v350
    %v604 = vadd.f32 %v603, %v355
    %v605 = vadd.f32 %v604, %v360
    %v606 = vadd.f32 %v605, %v365
    %v607 = vadd.f32 %v606, %v370
    %v608 = vadd.f32 %v607, %v375
    %v609 = vadd.f32 %v608, %v380
    %v610 = vadd.f32 %v609, %v385
    %v611 = vadd.f32 %v610, %v390
    %v612 = vadd.f32 %v611, %v395
    %v613 = vadd.f32 %v612, %v400
    %v614 = vadd.f32 %v613, %v405
    %v615 = vadd.f32 %v614, %v410
    %v616 = vadd.f32 %v615, %v415
    %v617 = vadd.f32 %v616, %v420
    %v618 = vadd.f32 %v617, %v425
    %v619 = vadd.f32 %v618, %v430
    %v620 = vadd.f32 %v619, %v435
    %v621 = vadd.f32 %v620, %v440
    %v622 = vadd.f32 %v621, %v445
    %v623 = vadd.f32 %v622, %v450
    %v624 = vadd.f32 %v623, %v455
    %v625 = vadd.f32 %v624, %v460
    %v626 = vadd.f32 %v625, %v465
    %v627 = vadd.f32 %v626, %v470
    %v628 = vadd.f32 %v627, %v475
    %v629 = vadd.f32 %v628, %v480
    %v630 = vadd.f32 %v629, %v485
    %v631 = vadd.f32 %v630, %v490
    %v632 = vadd.f32 %v631, %v495
    %v633 = vadd.f32 %v632, %v500
    %v634 = vadd.f32 %v633, %v505
    %v635 = vrot.slane %v634, 4
    %v636 = vadd.f32 %v634, %v635
    %v637 = vrot.slane %v636, 2
    %v638 = vadd.f32 %v636, %v637
    %v639 = vrot.slane %v638, 1
    %v640 = vadd.f32 %v638, %v639
    %v641 = vmul.f32 %v190, %v190
    %v642 = vmul.f32 %v195, %v195
    %v643 = vmul.f32 %v200, %v200
    %v644 = vmul.f32 %v205, %v205
    %v645 = vmul.f32 %v210, %v210
    %v646 = vmul.f32 %v215, %v215
    %v647 = vmul.f32 %v220, %v220
    %v648 = vmul.f32 %v225, %v225
    %v649 = vmul.f32 %v230, %v230
    %v650 = vmul.f32 %v235, %v235
    %v651 = vmul.f32 %v240, %v240
    %v652 = vmul.f32 %v245, %v245
    %v653 = vmul.f32 %v250, %v250
    %v654 = vmul.f32 %v255, %v255
    %v655 = vmul.f32 %v260, %v260
    %v656 = vmul.f32 %v265, %v265
    %v657 = vmul.f32 %v270, %v270
    %v658 = vmul.f32 %v275, %v275
    %v659 = vmul.f32 %v280, %v280
    %v660 = vmul.f32 %v285, %v285
    %v661 = vmul.f32 %v290, %v290
    %v662 = vmul.f32 %v295, %v295
    %v663 = vmul.f32 %v300, %v300
    %v664 = vmul.f32 %v305, %v305
    %v665 = vmul.f32 %v310, %v310
    %v666 = vmul.f32 %v315, %v315
    %v667 = vmul.f32 %v320, %v320
    %v668 = vmul.f32 %v325, %v325
    %v669 = vmul.f32 %v330, %v330
    %v670 = vmul.f32 %v335, %v335
    %v671 = vmul.f32 %v340, %v340
    %v672 = vmul.f32 %v345, %v345
    %v673 = vmul.f32 %v350, %v350
    %v674 = vmul.f32 %v355, %v355
    %v675 = vmul.f32 %v360, %v360
    %v676 = vmul.f32 %v365, %v365
    %v677 = vmul.f32 %v370, %v370
    %v678 = vmul.f32 %v375, %v375
    %v679 = vmul.f32 %v380, %v380
    %v680 = vmul.f32 %v385, %v385
    %v681 = vmul.f32 %v390, %v390
    %v682 = vmul.f32 %v395, %v395
    %v683 = vmul.f32 %v400, %v400
    %v684 = vmul.f32 %v405, %v405
    %v685 = vmul.f32 %v410, %v410
    %v686 = vmul.f32 %v415, %v415
    %v687 = vmul.f32 %v420, %v420
    %v688 = vmul.f32 %v425, %v425
    %v689 = vmul.f32 %v430, %v430
    %v690 = vmul.f32 %v435, %v435
    %v691 = vmul.f32 %v440, %v440
    %v692 = vmul.f32 %v445, %v445
    %v693 = vmul.f32 %v450, %v450
    %v694 = vmul.f32 %v455, %v455
    %v695 = vmul.f32 %v460, %v460
    %v696 = vmul.f32 %v465, %v465
    %v697 = vmul.f32 %v470, %v470
    %v698 = vmul.f32 %v475, %v475
    %v699 = vmul.f32 %v480, %v480
    %v700 = vmul.f32 %v485, %v485
    %v701 = vmul.f32 %v490, %v490
    %v702 = vmul.f32 %v495, %v495
    %v703 = vmul.f32 %v500, %v500
    %v704 = vmul.f32 %v505, %v505
    %v705 = vadd.f32 %v641, %v642
    %v706 = vadd.f32 %v705, %v643
    %v707 = vadd.f32 %v706, %v644
    %v708 = vadd.f32 %v707, %v645
    %v709 = vadd.f32 %v708, %v646
    %v710 = vadd.f32 %v709, %v647
    %v711 = vadd.f32 %v710, %v648
    %v712 = vadd.f32 %v711, %v649
    %v713 = vadd.f32 %v712, %v650
    %v714 = vadd.f32 %v713, %v651
    %v715 = vadd.f32 %v714, %v652
    %v716 = vadd.f32 %v715, %v653
    %v717 = vadd.f32 %v716, %v654
    %v718 = vadd.f32 %v717, %v655
    %v719 = vadd.f32 %v718, %v656
    %v720 = vadd.f32 %v719, %v657
    %v721 = vadd.f32 %v720, %v658
    %v722 = vadd.f32 %v721, %v659
    %v723 = vadd.f32 %v722, %v660
    %v724 = vadd.f32 %v723, %v661
    %v725 = vadd.f32 %v724, %v662
    %v726 = vadd.f32 %v725, %v663
    %v727 = vadd.f32 %v726, %v664
    %v728 = vadd.f32 %v727, %v665
    %v729 = vadd.f32 %v728, %v666
    %v730 = vadd.f32 %v729, %v667
    %v731 = vadd.f32 %v730, %v668
    %v732 = vadd.f32 %v731, %v669
    %v733 = vadd.f32 %v732, %v670
    %v734 = vadd.f32 %v733, %v671
    %v735 = vadd.f32 %v734, %v672
    %v736 = vadd.f32 %v735, %v673
    %v737 = vadd.f32 %v736, %v674
    %v738 = vadd.f32 %v737, %v675
    %v739 = vadd.f32 %v738, %v676
    %v740 = vadd.f32 %v739, %v677
    %v741 = vadd.f32 %v740, %v678
    %v742 = vadd.f32 %v741, %v679
    %v743 = vadd.f32 %v742, %v680
    %v744 = vadd.f32 %v743, %v681
    %v745 = vadd.f32 %v744, %v682
    %v746 = vadd.f32 %v745, %v683
    %v747 = vadd.f32 %v746, %v684
    %v748 = vadd.f32 %v747, %v685
    %v749 = vadd.f32 %v748, %v686
    %v750 = vadd.f32 %v749, %v687
    %v751 = vadd.f32 %v750, %v688
    %v752 = vadd.f32 %v751, %v689
    %v753 = vadd.f32 %v752, %v690
    %v754 = vadd.f32 %v753, %v691
    %v755 = vadd.f32 %v754, %v692
    %v756 = vadd.f32 %v755, %v693
    %v757 = vadd.f32 %v756, %v694
    %v758 = vadd.f32 %v757, %v695
    %v759 = vadd.f32 %v758, %v696
    %v760 = vadd.f32 %v759, %v697
    %v761 = vadd.f32 %v760, %v698
    %v762 = vadd.f32 %v761, %v699
    %v763 = vadd.f32 %v762, %v700
    %v764 = vadd.f32 %v763, %v701
    %v765 = vadd.f32 %v764, %v702
    %v766 = vadd.f32 %v765, %v703
    %v767 = vadd.f32 %v766, %v704
    %v768 = vrot.slane %v767, 4
    %v769 = vadd.f32 %v767, %v768
    %v770 = vrot.slane %v769, 2
    %v771 = vadd.f32 %v769, %v770
    %v772 = vrot.slane %v771, 1
    %v773 = vadd.f32 %v771, %v772
    %vm774 = vcmask 1040384
    %v775 = vsel %vm774, %v640, %v773
    %776 = vst [vmem:[#allocation8] sm:$0x3] %v775
    // Predicated region
    $region18: #{resblock_forward.4} parent=1 // pred_check
      _
    $region19: #{resblock_forward.4} parent=1 // pred_check_branch
      %778 = sbr.rel (0) target = $region21
    $region20: #{resblock_forward.4} parent=1 // pred_region
      %s780 = ssub.s32 8192, 8192
      %781 = vsyncadd [#allocation4], %s780
      %s782 = sshll.u32 [#allocation7], 4
      %s783 = int_to_ptr.vmem [resolvable:$true] %s782
      %788 = dma.vmem_to_hbm [thread:$0]  %s783, 8192, %s2, [#allocation4], 128, 128, 8
    $region21: #{resblock_forward.4} parent=1 // pred_fallthru
      _
    // Predicated region
    $region22: #{resblock_forward.4} parent=1 // pred_check
      _
    $region23: #{resblock_forward.4} parent=1 // pred_check_branch
      %790 = sbr.rel (0) target = $region25
    $region24: #{resblock_forward.4} parent=1 // pred_region
      %s792 = ssub.s32 32, 32
      %793 = vsyncadd [#allocation9], %s792
      %s795 = sshll.u32 [#allocation8], 4
      %s796 = int_to_ptr.vmem [resolvable:$true] %s795
      %798 = dma.vmem_to_hbm [thread:$0]  %s796, 32, %s3, [#allocation9]
    $region25: #{resblock_forward.4} parent=1 // pred_fallthru
      _
    // Predicated region
    $region26: #{resblock_forward.4} parent=1 // pred_check
      _
    $region27: #{resblock_forward.4} parent=1 // pred_check_branch
      %800 = sbr.rel (0) target = $region29
    $region28: #{resblock_forward.4} parent=1 // pred_region
      %801 = dma.done [#allocation4], 8192
    $region29: #{resblock_forward.4} parent=1 // pred_fallthru
      _
    // Predicated region
    $region30: #{resblock_forward.4} parent=1 // pred_check
      _
    $region31: #{resblock_forward.4} parent=1 // pred_check_branch
      %803 = sbr.rel (0) target = $region33
    $region32: #{resblock_forward.4} parent=1 // pred_region
      %804 = dma.done [#allocation9], 32
    $region33: #{resblock_forward.4} parent=1 // pred_fallthru
      _
    %805 = vsyncpa [#allocation3], 1
    %806 = vsyncpa [#allocation6], 1
    %807 = vsyncpa [#allocation4], 1
    %808 = vsyncpa [#allocation9], 1

// kernel: resblock_forward.7
$region0: #{resblock_forward.7}
  #allocation0 [shape = 'u32[]', space=smem, size = 0x4, offset = 0x4, fixed_abs, tag = 'smem constant byte address 0x4 - core index']
  #allocation1 [shape = 'u32[144,128]{1,0:T(1,128)}', space=vmem, size = 0x12000, scoped, tag = 'internal scratch']
  %s0 = inlined_call_operand.hbm [shape: f32[576,128], index: 0, kind: input, shape index: {}]
  %s1 = inlined_call_operand.hbm [shape: f32[1,128], index: 1, kind: input, shape index: {}]
  %s2 = inlined_call_operand.hbm [shape: f32[1,128], index: 2, kind: input, shape index: {}]
  %s3 = inlined_call_operand.hbm [shape: f32[576,128], index: 3, kind: input, shape index: {}, may-alias: {3,4}]
  %s4 = inlined_call_operand.hbm [shape: f32[576,128], index: 4, kind: output, shape index: {}, may-alias: {3,4}]
  %s5 = sld [smem:[#allocation0]]
  $region42: #{resblock_forward.7} parent=0
    _
  %s7 = ssub.s32 1, %s5
  %s8 = scalar_select 0, %s7, %s5
  $region1: #{resblock_forward.7} parent=0
    #allocation2 [shape = 'u8[294912]{0}', space=vmem, size = 0x48000, scoped, tag = 'input window, operand 0, single buffered']
    #allocation3 [shape = 's32[1]{0}', space=sflag, size = 0x4, scoped, tag = 'scoped memory for resblock_forward.7']
    #allocation4 [shape = 's32[1]{0}', space=sflag, size = 0x4, scoped, tag = 'scoped memory for resblock_forward.7']
    #allocation5 [shape = 'u8[512]{0}', space=vmem, size = 0x400, scoped, tag = 'input window, operand 1, single buffered']
    #allocation6 [shape = 's32[1]{0}', space=sflag, size = 0x4, scoped, tag = 'scoped memory for resblock_forward.7']
    #allocation7 [shape = 'u8[512]{0}', space=vmem, size = 0x400, scoped, tag = 'input window, operand 2, single buffered']
    #allocation8 [shape = 'u8[294912]{0}', space=vmem, size = 0x48000, scoped, tag = 'input window, operand 3, single buffered']
    #allocation9 [shape = 's32[1]{0}', space=sflag, size = 0x4, scoped, tag = 'scoped memory for resblock_forward.7']
    #allocation10 [shape = 'u8[294912]{0}', space=vmem, size = 0x48000, scoped, tag = 'output window, operand 0, single buffered']
    %9 = vsyncpa [#allocation3], 0
    %10 = vsyncpa [#allocation6], 0
    %11 = vsyncpa [#allocation9], 0
    %12 = vsyncpa [#allocation4], 0
    // Predicated region
    $region2: #{resblock_forward.7} parent=1 // pred_check
      _
    $region3: #{resblock_forward.7} parent=1 // pred_check_branch
      %14 = sbr.rel (0) target = $region5
    $region4: #{resblock_forward.7} parent=1 // pred_region
      %s16 = ssub.s32 9216, 9216
      %17 = vsyncadd [#allocation3], %s16
      %s18 = sshll.u32 [#allocation2], 4
      %s19 = int_to_ptr.vmem [resolvable:$true] %s18
      %24 = dma.hbm_to_vmem [thread:$0]  %s0, 9216, %s19, [#allocation3], 128, 128, 8
    $region5: #{resblock_forward.7} parent=1 // pred_fallthru
      _
    // Predicated region
    $region6: #{resblock_forward.7} parent=1 // pred_check
      _
    $region7: #{resblock_forward.7} parent=1 // pred_check_branch
      %26 = sbr.rel (0) target = $region9
    $region8: #{resblock_forward.7} parent=1 // pred_region
      %s28 = ssub.s32 16, 16
      %29 = vsyncadd [#allocation6], %s28
      %s31 = sshll.u32 [#allocation5], 4
      %s32 = int_to_ptr.vmem [resolvable:$true] %s31
      %34 = dma.hbm_to_vmem [thread:$0]  %s1, 16, %s32, [#allocation6]
    $region9: #{resblock_forward.7} parent=1 // pred_fallthru
      _
    // Predicated region
    $region10: #{resblock_forward.7} parent=1 // pred_check
      _
    $region11: #{resblock_forward.7} parent=1 // pred_check_branch
      %36 = sbr.rel (0) target = $region13
    $region12: #{resblock_forward.7} parent=1 // pred_region
      %s38 = ssub.s32 16, 16
      %39 = vsyncadd [#allocation6], %s38
      %s41 = sshll.u32 [#allocation7], 4
      %s42 = int_to_ptr.vmem [resolvable:$true] %s41
      %44 = dma.hbm_to_vmem [thread:$0]  %s2, 16, %s42, [#allocation6]
    $region13: #{resblock_forward.7} parent=1 // pred_fallthru
      _
    // Predicated region
    $region14: #{resblock_forward.7} parent=1 // pred_check
      _
    $region15: #{resblock_forward.7} parent=1 // pred_check_branch
      %46 = sbr.rel (0) target = $region17
    $region16: #{resblock_forward.7} parent=1 // pred_region
      %s48 = ssub.s32 9216, 9216
      %49 = vsyncadd [#allocation9], %s48
      %s50 = sshll.u32 [#allocation8], 4
      %s51 = int_to_ptr.vmem [resolvable:$true] %s50
      %56 = dma.hbm_to_vmem [thread:$0]  %s3, 9216, %s51, [#allocation9], 128, 128, 8
    $region17: #{resblock_forward.7} parent=1 // pred_fallthru
      _
    // Predicated region
    $region18: #{resblock_forward.7} parent=1 // pred_check
      _
    $region19: #{resblock_forward.7} parent=1 // pred_check_branch
      %58 = sbr.rel (0) target = $region21
    $region20: #{resblock_forward.7} parent=1 // pred_region
      %59 = dma.done [#allocation3], 9216
    $region21: #{resblock_forward.7} parent=1 // pred_fallthru
      _
    // Predicated region
    $region22: #{resblock_forward.7} parent=1 // pred_check
      _
    $region23: #{resblock_forward.7} parent=1 // pred_check_branch
      %61 = sbr.rel (0) target = $region25
    $region24: #{resblock_forward.7} parent=1 // pred_region
      %62 = dma.done [#allocation6], 16
    $region25: #{resblock_forward.7} parent=1 // pred_fallthru
      _
    // Predicated region
    $region26: #{resblock_forward.7} parent=1 // pred_check
      _
    $region27: #{resblock_forward.7} parent=1 // pred_check_branch
      %64 = sbr.rel (0) target = $region29
    $region28: #{resblock_forward.7} parent=1 // pred_region
      %65 = dma.done [#allocation6], 16
    $region29: #{resblock_forward.7} parent=1 // pred_fallthru
      _
    // Predicated region
    $region30: #{resblock_forward.7} parent=1 // pred_check
      _
    $region31: #{resblock_forward.7} parent=1 // pred_check_branch
      %67 = sbr.rel (0) target = $region33
    $region32: #{resblock_forward.7} parent=1 // pred_region
      %68 = dma.done [#allocation9], 9216
    $region33: #{resblock_forward.7} parent=1 // pred_fallthru
      _
    %v69 = vld [vmem:[#allocation2] sm:$0xff]
    %v70 = vld [vmem:[#allocation2 + $0x8] sm:$0xff]
    %v71 = vld [vmem:[#allocation2 + $0x10] sm:$0xff]
    %v72 = vld [vmem:[#allocation2 + $0x18] sm:$0xff]
    %v73 = vld [vmem:[#allocation2 + $0x20] sm:$0xff]
    %v74 = vld [vmem:[#allocation2 + $0x28] sm:$0xff]
    %v75 = vld [vmem:[#allocation2 + $0x30] sm:$0xff]
    %v76 = vld [vmem:[#allocation2 + $0x38] sm:$0xff]
    %v77 = vld [vmem:[#allocation2 + $0x40] sm:$0xff]
    %v78 = vld [vmem:[#allocation2 + $0x48] sm:$0xff]
    %v79 = vld [vmem:[#allocation2 + $0x50] sm:$0xff]
    %v80 = vld [vmem:[#allocation2 + $0x58] sm:$0xff]
    %v81 = vld [vmem:[#allocation2 + $0x60] sm:$0xff]
    %v82 = vld [vmem:[#allocation2 + $0x68] sm:$0xff]
    %v83 = vld [vmem:[#allocation2 + $0x70] sm:$0xff]
    %v84 = vld [vmem:[#allocation2 + $0x78] sm:$0xff]
    %v85 = vld [vmem:[#allocation2 + $0x80] sm:$0xff]
    %v86 = vld [vmem:[#allocation2 + $0x88] sm:$0xff]
    %v87 = vld [vmem:[#allocation2 + $0x90] sm:$0xff]
    %v88 = vld [vmem:[#allocation2 + $0x98] sm:$0xff]
    %v89 = vld [vmem:[#allocation2 + $0xa0] sm:$0xff]
    %v90 = vld [vmem:[#allocation2 + $0xa8] sm:$0xff]
    %v91 = vld [vmem:[#allocation2 + $0xb0] sm:$0xff]
    %v92 = vld [vmem:[#allocation2 + $0xb8] sm:$0xff]
    %v93 = vld [vmem:[#allocation2 + $0xc0] sm:$0xff]
    %v94 = vld [vmem:[#allocation2 + $0xc8] sm:$0xff]
    %v95 = vld [vmem:[#allocation2 + $0xd0] sm:$0xff]
    %v96 = vld [vmem:[#allocation2 + $0xd8] sm:$0xff]
    %v97 = vld [vmem:[#allocation2 + $0xe0] sm:$0xff]
    %v98 = vld [vmem:[#allocation2 + $0xe8] sm:$0xff]
    %v99 = vld [vmem:[#allocation2 + $0xf0] sm:$0xff]
    %v100 = vld [vmem:[#allocation2 + $0xf8] sm:$0xff]
    %v101 = vld [vmem:[#allocation2 + $0x100] sm:$0xff]
    %v102 = vld [vmem:[#allocation2 + $0x108] sm:$0xff]
    %v103 = vld [vmem:[#allocation2 + $0x110] sm:$0xff]
    %v104 = vld [vmem:[#allocation2 + $0x118] sm:$0xff]
    %v105 = vld [vmem:[#allocation2 + $0x120] sm:$0xff]
    %v106 = vld [vmem:[#allocation2 + $0x128] sm:$0xff]
    %v107 = vld [vmem:[#allocation2 + $0x130] sm:$0xff]
    %v108 = vld [vmem:[#allocation2 + $0x138] sm:$0xff]
    %v109 = vld [vmem:[#allocation2 + $0x140] sm:$0xff]
    %v110 = vld [vmem:[#allocation2 + $0x148] sm:$0xff]
    %v111 = vld [vmem:[#allocation2 + $0x150] sm:$0xff]
    %v112 = vld [vmem:[#allocation2 + $0x158] sm:$0xff]
    %v113 = vld [vmem:[#allocation2 + $0x160] sm:$0xff]
    %v114 = vld [vmem:[#allocation2 + $0x168] sm:$0xff]
    %v115 = vld [vmem:[#allocation2 + $0x170] sm:$0xff]
    %v116 = vld [vmem:[#allocation2 + $0x178] sm:$0xff]
    %v117 = vld [vmem:[#allocation2 + $0x180] sm:$0xff]
    %v118 = vld [vmem:[#allocation2 + $0x188] sm:$0xff]
    %v119 = vld [vmem:[#allocation2 + $0x190] sm:$0xff]
    %v120 = vld [vmem:[#allocation2 + $0x198] sm:$0xff]
    %v121 = vld [vmem:[#allocation2 + $0x1a0] sm:$0xff]
    %v122 = vld [vmem:[#allocation2 + $0x1a8] sm:$0xff]
    %v123 = vld [vmem:[#allocation2 + $0x1b0] sm:$0xff]
    %v124 = vld [vmem:[#allocation2 + $0x1b8] sm:$0xff]
    %v125 = vld [vmem:[#allocation2 + $0x1c0] sm:$0xff]
    %v126 = vld [vmem:[#allocation2 + $0x1c8] sm:$0xff]
    %v127 = vld [vmem:[#allocation2 + $0x1d0] sm:$0xff]
    %v128 = vld [vmem:[#allocation2 + $0x1d8] sm:$0xff]
    %v129 = vld [vmem:[#allocation2 + $0x1e0] sm:$0xff]
    %v130 = vld [vmem:[#allocation2 + $0x1e8] sm:$0xff]
    %v131 = vld [vmem:[#allocation2 + $0x1f0] sm:$0xff]
    %v132 = vld [vmem:[#allocation2 + $0x1f8] sm:$0xff]
    %v133 = vld [vmem:[#allocation2 + $0x200] sm:$0xff]
    %v134 = vld [vmem:[#allocation2 + $0x208] sm:$0xff]
    %v135 = vld [vmem:[#allocation2 + $0x210] sm:$0xff]
    %v136 = vld [vmem:[#allocation2 + $0x218] sm:$0xff]
    %v137 = vld [vmem:[#allocation2 + $0x220] sm:$0xff]
    %v138 = vld [vmem:[#allocation2 + $0x228] sm:$0xff]
    %v139 = vld [vmem:[#allocation2 + $0x230] sm:$0xff]
    %v140 = vld [vmem:[#allocation2 + $0x238] sm:$0xff]
    %v141 = vld [vmem:[#allocation5] sm:$0x1]
    %v143 = vlaneseq
    %v144 = vshrl.u32 %v143, 7
    %v145 = vsub.s32 0, %v144
    %v146 = vrot.slane %v141, %v145
    %v148 = vmul.f32 %v69, %v146
    %v149 = vmul.f32 %v70, %v146
    %v150 = vmul.f32 %v71, %v146
    %v151 = vmul.f32 %v72, %v146
    %v152 = vmul.f32 %v73, %v146
    %v153 = vmul.f32 %v74, %v146
    %v154 = vmul.f32 %v75, %v146
    %v155 = vmul.f32 %v76, %v146
    %v156 = vmul.f32 %v77, %v146
    %v157 = vmul.f32 %v78, %v146
    %v158 = vmul.f32 %v79, %v146
    %v159 = vmul.f32 %v80, %v146
    %v160 = vmul.f32 %v81, %v146
    %v161 = vmul.f32 %v82, %v146
    %v162 = vmul.f32 %v83, %v146
    %v163 = vmul.f32 %v84, %v146
    %v164 = vmul.f32 %v85, %v146
    %v165 = vmul.f32 %v86, %v146
    %v166 = vmul.f32 %v87, %v146
    %v167 = vmul.f32 %v88, %v146
    %v168 = vmul.f32 %v89, %v146
    %v169 = vmul.f32 %v90, %v146
    %v170 = vmul.f32 %v91, %v146
    %v171 = vmul.f32 %v92, %v146
    %v172 = vmul.f32 %v93, %v146
    %v173 = vmul.f32 %v94, %v146
    %v174 = vmul.f32 %v95, %v146
    %v175 = vmul.f32 %v96, %v146
    %v176 = vmul.f32 %v97, %v146
    %v177 = vmul.f32 %v98, %v146
    %v178 = vmul.f32 %v99, %v146
    %v179 = vmul.f32 %v100, %v146
    %v180 = vmul.f32 %v101, %v146
    %v181 = vmul.f32 %v102, %v146
    %v182 = vmul.f32 %v103, %v146
    %v183 = vmul.f32 %v104, %v146
    %v184 = vmul.f32 %v105, %v146
    %v185 = vmul.f32 %v106, %v146
    %v186 = vmul.f32 %v107, %v146
    %v187 = vmul.f32 %v108, %v146
    %v188 = vmul.f32 %v109, %v146
    %v189 = vmul.f32 %v110, %v146
    %v190 = vmul.f32 %v111, %v146
    %v191 = vmul.f32 %v112, %v146
    %v192 = vmul.f32 %v113, %v146
    %v193 = vmul.f32 %v114, %v146
    %v194 = vmul.f32 %v115, %v146
    %v195 = vmul.f32 %v116, %v146
    %v196 = vmul.f32 %v117, %v146
    %v197 = vmul.f32 %v118, %v146
    %v198 = vmul.f32 %v119, %v146
    %v199 = vmul.f32 %v120, %v146
    %v200 = vmul.f32 %v121, %v146
    %v201 = vmul.f32 %v122, %v146
    %v202 = vmul.f32 %v123, %v146
    %v203 = vmul.f32 %v124, %v146
    %v204 = vmul.f32 %v125, %v146
    %v205 = vmul.f32 %v126, %v146
    %v206 = vmul.f32 %v127, %v146
    %v207 = vmul.f32 %v128, %v146
    %v208 = vmul.f32 %v129, %v146
    %v209 = vmul.f32 %v130, %v146
    %v210 = vmul.f32 %v131, %v146
    %v211 = vmul.f32 %v132, %v146
    %v212 = vmul.f32 %v133, %v146
    %v213 = vmul.f32 %v134, %v146
    %v214 = vmul.f32 %v135, %v146
    %v215 = vmul.f32 %v136, %v146
    %v216 = vmul.f32 %v137, %v146
    %v217 = vmul.f32 %v138, %v146
    %v218 = vmul.f32 %v139, %v146
    %v219 = vmul.f32 %v140, %v146
    %v220 = vld [vmem:[#allocation7] sm:$0x1]
    %v222 = vlaneseq
    %v223 = vshrl.u32 %v222, 7
    %v224 = vsub.s32 0, %v223
    %v225 = vrot.slane %v220, %v224
    %v227 = vadd.f32 %v148, %v225
    %v228 = vadd.f32 %v149, %v225
    %v229 = vadd.f32 %v150, %v225
    %v230 = vadd.f32 %v151, %v225
    %v231 = vadd.f32 %v152, %v225
    %v232 = vadd.f32 %v153, %v225
    %v233 = vadd.f32 %v154, %v225
    %v234 = vadd.f32 %v155, %v225
    %v235 = vadd.f32 %v156, %v225
    %v236 = vadd.f32 %v157, %v225
    %v237 = vadd.f32 %v158, %v225
    %v238 = vadd.f32 %v159, %v225
    %v239 = vadd.f32 %v160, %v225
    %v240 = vadd.f32 %v161, %v225
    %v241 = vadd.f32 %v162, %v225
    %v242 = vadd.f32 %v163, %v225
    %v243 = vadd.f32 %v164, %v225
    %v244 = vadd.f32 %v165, %v225
    %v245 = vadd.f32 %v166, %v225
    %v246 = vadd.f32 %v167, %v225
    %v247 = vadd.f32 %v168, %v225
    %v248 = vadd.f32 %v169, %v225
    %v249 = vadd.f32 %v170, %v225
    %v250 = vadd.f32 %v171, %v225
    %v251 = vadd.f32 %v172, %v225
    %v252 = vadd.f32 %v173, %v225
    %v253 = vadd.f32 %v174, %v225
    %v254 = vadd.f32 %v175, %v225
    %v255 = vadd.f32 %v176, %v225
    %v256 = vadd.f32 %v177, %v225
    %v257 = vadd.f32 %v178, %v225
    %v258 = vadd.f32 %v179, %v225
    %v259 = vadd.f32 %v180, %v225
    %v260 = vadd.f32 %v181, %v225
    %v261 = vadd.f32 %v182, %v225
    %v262 = vadd.f32 %v183, %v225
    %v263 = vadd.f32 %v184, %v225
    %v264 = vadd.f32 %v185, %v225
    %v265 = vadd.f32 %v186, %v225
    %v266 = vadd.f32 %v187, %v225
    %v267 = vadd.f32 %v188, %v225
    %v268 = vadd.f32 %v189, %v225
    %v269 = vadd.f32 %v190, %v225
    %v270 = vadd.f32 %v191, %v225
    %v271 = vadd.f32 %v192, %v225
    %v272 = vadd.f32 %v193, %v225
    %v273 = vadd.f32 %v194, %v225
    %v274 = vadd.f32 %v195, %v225
    %v275 = vadd.f32 %v196, %v225
    %v276 = vadd.f32 %v197, %v225
    %v277 = vadd.f32 %v198, %v225
    %v278 = vadd.f32 %v199, %v225
    %v279 = vadd.f32 %v200, %v225
    %v280 = vadd.f32 %v201, %v225
    %v281 = vadd.f32 %v202, %v225
    %v282 = vadd.f32 %v203, %v225
    %v283 = vadd.f32 %v204, %v225
    %v284 = vadd.f32 %v205, %v225
    %v285 = vadd.f32 %v206, %v225
    %v286 = vadd.f32 %v207, %v225
    %v287 = vadd.f32 %v208, %v225
    %v288 = vadd.f32 %v209, %v225
    %v289 = vadd.f32 %v210, %v225
    %v290 = vadd.f32 %v211, %v225
    %v291 = vadd.f32 %v212, %v225
    %v292 = vadd.f32 %v213, %v225
    %v293 = vadd.f32 %v214, %v225
    %v294 = vadd.f32 %v215, %v225
    %v295 = vadd.f32 %v216, %v225
    %v296 = vadd.f32 %v217, %v225
    %v297 = vadd.f32 %v218, %v225
    %v298 = vadd.f32 %v219, %v225
    %vm299 = vcmp.ge.f32.partialorder %v227, 0.0
    %vm300 = vcmp.ge.f32.partialorder %v228, 0.0
    %vm301 = vcmp.ge.f32.partialorder %v229, 0.0
    %vm302 = vcmp.ge.f32.partialorder %v230, 0.0
    %vm303 = vcmp.ge.f32.partialorder %v231, 0.0
    %vm304 = vcmp.ge.f32.partialorder %v232, 0.0
    %vm305 = vcmp.ge.f32.partialorder %v233, 0.0
    %vm306 = vcmp.ge.f32.partialorder %v234, 0.0
    %vm307 = vcmp.ge.f32.partialorder %v235, 0.0
    %vm308 = vcmp.ge.f32.partialorder %v236, 0.0
    %vm309 = vcmp.ge.f32.partialorder %v237, 0.0
    %vm310 = vcmp.ge.f32.partialorder %v238, 0.0
    %vm311 = vcmp.ge.f32.partialorder %v239, 0.0
    %vm312 = vcmp.ge.f32.partialorder %v240, 0.0
    %vm313 = vcmp.ge.f32.partialorder %v241, 0.0
    %vm314 = vcmp.ge.f32.partialorder %v242, 0.0
    %vm315 = vcmp.ge.f32.partialorder %v243, 0.0
    %vm316 = vcmp.ge.f32.partialorder %v244, 0.0
    %vm317 = vcmp.ge.f32.partialorder %v245, 0.0
    %vm318 = vcmp.ge.f32.partialorder %v246, 0.0
    %vm319 = vcmp.ge.f32.partialorder %v247, 0.0
    %vm320 = vcmp.ge.f32.partialorder %v248, 0.0
    %vm321 = vcmp.ge.f32.partialorder %v249, 0.0
    %vm322 = vcmp.ge.f32.partialorder %v250, 0.0
    %vm323 = vcmp.ge.f32.partialorder %v251, 0.0
    %vm324 = vcmp.ge.f32.partialorder %v252, 0.0
    %vm325 = vcmp.ge.f32.partialorder %v253, 0.0
    %vm326 = vcmp.ge.f32.partialorder %v254, 0.0
    %vm327 = vcmp.ge.f32.partialorder %v255, 0.0
    %vm328 = vcmp.ge.f32.partialorder %v256, 0.0
    %vm329 = vcmp.ge.f32.partialorder %v257, 0.0
    %vm330 = vcmp.ge.f32.partialorder %v258, 0.0
    %vm331 = vcmp.ge.f32.partialorder %v259, 0.0
    %vm332 = vcmp.ge.f32.partialorder %v260, 0.0
    %vm333 = vcmp.ge.f32.partialorder %v261, 0.0
    %vm334 = vcmp.ge.f32.partialorder %v262, 0.0
    %vm335 = vcmp.ge.f32.partialorder %v263, 0.0
    %vm336 = vcmp.ge.f32.partialorder %v264, 0.0
    %vm337 = vcmp.ge.f32.partialorder %v265, 0.0
    %vm338 = vcmp.ge.f32.partialorder %v266, 0.0
    %vm339 = vcmp.ge.f32.partialorder %v267, 0.0
    %vm340 = vcmp.ge.f32.partialorder %v268, 0.0
    %vm341 = vcmp.ge.f32.partialorder %v269, 0.0
    %vm342 = vcmp.ge.f32.partialorder %v270, 0.0
    %vm343 = vcmp.ge.f32.partialorder %v271, 0.0
    %vm344 = vcmp.ge.f32.partialorder %v272, 0.0
    %vm345 = vcmp.ge.f32.partialorder %v273, 0.0
    %vm346 = vcmp.ge.f32.partialorder %v274, 0.0
    %vm347 = vcmp.ge.f32.partialorder %v275, 0.0
    %vm348 = vcmp.ge.f32.partialorder %v276, 0.0
    %vm349 = vcmp.ge.f32.partialorder %v277, 0.0
    %vm350 = vcmp.ge.f32.partialorder %v278, 0.0
    %vm351 = vcmp.ge.f32.partialorder %v279, 0.0
    %vm352 = vcmp.ge.f32.partialorder %v280, 0.0
    %vm353 = vcmp.ge.f32.partialorder %v281, 0.0
    %vm354 = vcmp.ge.f32.partialorder %v282, 0.0
    %vm355 = vcmp.ge.f32.partialorder %v283, 0.0
    %vm356 = vcmp.ge.f32.partialorder %v284, 0.0
    %vm357 = vcmp.ge.f32.partialorder %v285, 0.0
    %vm358 = vcmp.ge.f32.partialorder %v286, 0.0
    %vm359 = vcmp.ge.f32.partialorder %v287, 0.0
    %vm360 = vcmp.ge.f32.partialorder %v288, 0.0
    %vm361 = vcmp.ge.f32.partialorder %v289, 0.0
    %vm362 = vcmp.ge.f32.partialorder %v290, 0.0
    %vm363 = vcmp.ge.f32.partialorder %v291, 0.0
    %vm364 = vcmp.ge.f32.partialorder %v292, 0.0
    %vm365 = vcmp.ge.f32.partialorder %v293, 0.0
    %vm366 = vcmp.ge.f32.partialorder %v294, 0.0
    %vm367 = vcmp.ge.f32.partialorder %v295, 0.0
    %vm368 = vcmp.ge.f32.partialorder %v296, 0.0
    %vm369 = vcmp.ge.f32.partialorder %v297, 0.0
    %vm370 = vcmp.ge.f32.partialorder %v298, 0.0
    %v371 = vmul.f32 %v227, 0.1
    %v372 = vmul.f32 %v228, 0.1
    %v373 = vmul.f32 %v229, 0.1
    %v374 = vmul.f32 %v230, 0.1
    %v375 = vmul.f32 %v231, 0.1
    %v376 = vmul.f32 %v232, 0.1
    %v377 = vmul.f32 %v233, 0.1
    %v378 = vmul.f32 %v234, 0.1
    %v379 = vmul.f32 %v235, 0.1
    %v380 = vmul.f32 %v236, 0.1
    %v381 = vmul.f32 %v237, 0.1
    %v382 = vmul.f32 %v238, 0.1
    %v383 = vmul.f32 %v239, 0.1
    %v384 = vmul.f32 %v240, 0.1
    %v385 = vmul.f32 %v241, 0.1
    %v386 = vmul.f32 %v242, 0.1
    %v387 = vmul.f32 %v243, 0.1
    %v388 = vmul.f32 %v244, 0.1
    %v389 = vmul.f32 %v245, 0.1
    %v390 = vmul.f32 %v246, 0.1
    %v391 = vmul.f32 %v247, 0.1
    %v392 = vmul.f32 %v248, 0.1
    %v393 = vmul.f32 %v249, 0.1
    %v394 = vmul.f32 %v250, 0.1
    %v395 = vmul.f32 %v251, 0.1
    %v396 = vmul.f32 %v252, 0.1
    %v397 = vmul.f32 %v253, 0.1
    %v398 = vmul.f32 %v254, 0.1
    %v399 = vmul.f32 %v255, 0.1
    %v400 = vmul.f32 %v256, 0.1
    %v401 = vmul.f32 %v257, 0.1
    %v402 = vmul.f32 %v258, 0.1
    %v403 = vmul.f32 %v259, 0.1
    %v404 = vmul.f32 %v260, 0.1
    %v405 = vmul.f32 %v261, 0.1
    %v406 = vmul.f32 %v262, 0.1
    %v407 = vmul.f32 %v263, 0.1
    %v408 = vmul.f32 %v264, 0.1
    %v409 = vmul.f32 %v265, 0.1
    %v410 = vmul.f32 %v266, 0.1
    %v411 = vmul.f32 %v267, 0.1
    %v412 = vmul.f32 %v268, 0.1
    %v413 = vmul.f32 %v269, 0.1
    %v414 = vmul.f32 %v270, 0.1
    %v415 = vmul.f32 %v271, 0.1
    %v416 = vmul.f32 %v272, 0.1
    %v417 = vmul.f32 %v273, 0.1
    %v418 = vmul.f32 %v274, 0.1
    %v419 = vmul.f32 %v275, 0.1
    %v420 = vmul.f32 %v276, 0.1
    %v421 = vmul.f32 %v277, 0.1
    %v422 = vmul.f32 %v278, 0.1
    %v423 = vmul.f32 %v279, 0.1
    %v424 = vmul.f32 %v280, 0.1
    %v425 = vmul.f32 %v281, 0.1
    %v426 = vmul.f32 %v282, 0.1
    %v427 = vmul.f32 %v283, 0.1
    %v428 = vmul.f32 %v284, 0.1
    %v429 = vmul.f32 %v285, 0.1
    %v430 = vmul.f32 %v286, 0.1
    %v431 = vmul.f32 %v287, 0.1
    %v432 = vmul.f32 %v288, 0.1
    %v433 = vmul.f32 %v289, 0.1
    %v434 = vmul.f32 %v290, 0.1
    %v435 = vmul.f32 %v291, 0.1
    %v436 = vmul.f32 %v292, 0.1
    %v437 = vmul.f32 %v293, 0.1
    %v438 = vmul.f32 %v294, 0.1
    %v439 = vmul.f32 %v295, 0.1
    %v440 = vmul.f32 %v296, 0.1
    %v441 = vmul.f32 %v297, 0.1
    %v442 = vmul.f32 %v298, 0.1
    %v443 = vsel %vm299, %v227, %v371
    %v444 = vsel %vm300, %v228, %v372
    %v445 = vsel %vm301, %v229, %v373
    %v446 = vsel %vm302, %v230, %v374
    %v447 = vsel %vm303, %v231, %v375
    %v448 = vsel %vm304, %v232, %v376
    %v449 = vsel %vm305, %v233, %v377
    %v450 = vsel %vm306, %v234, %v378
    %v451 = vsel %vm307, %v235, %v379
    %v452 = vsel %vm308, %v236, %v380
    %v453 = vsel %vm309, %v237, %v381
    %v454 = vsel %vm310, %v238, %v382
    %v455 = vsel %vm311, %v239, %v383
    %v456 = vsel %vm312, %v240, %v384
    %v457 = vsel %vm313, %v241, %v385
    %v458 = vsel %vm314, %v242, %v386
    %v459 = vsel %vm315, %v243, %v387
    %v460 = vsel %vm316, %v244, %v388
    %v461 = vsel %vm317, %v245, %v389
    %v462 = vsel %vm318, %v246, %v390
    %v463 = vsel %vm319, %v247, %v391
    %v464 = vsel %vm320, %v248, %v392
    %v465 = vsel %vm321, %v249, %v393
    %v466 = vsel %vm322, %v250, %v394
    %v467 = vsel %vm323, %v251, %v395
    %v468 = vsel %vm324, %v252, %v396
    %v469 = vsel %vm325, %v253, %v397
    %v470 = vsel %vm326, %v254, %v398
    %v471 = vsel %vm327, %v255, %v399
    %v472 = vsel %vm328, %v256, %v400
    %v473 = vsel %vm329, %v257, %v401
    %v474 = vsel %vm330, %v258, %v402
    %v475 = vsel %vm331, %v259, %v403
    %v476 = vsel %vm332, %v260, %v404
    %v477 = vsel %vm333, %v261, %v405
    %v478 = vsel %vm334, %v262, %v406
    %v479 = vsel %vm335, %v263, %v407
    %v480 = vsel %vm336, %v264, %v408
    %v481 = vsel %vm337, %v265, %v409
    %v482 = vsel %vm338, %v266, %v410
    %v483 = vsel %vm339, %v267, %v411
    %v484 = vsel %vm340, %v268, %v412
    %v485 = vsel %vm341, %v269, %v413
    %v486 = vsel %vm342, %v270, %v414
    %v487 = vsel %vm343, %v271, %v415
    %v488 = vsel %vm344, %v272, %v416
    %v489 = vsel %vm345, %v273, %v417
    %v490 = vsel %vm346, %v274, %v418
    %v491 = vsel %vm347, %v275, %v419
    %v492 = vsel %vm348, %v276, %v420
    %v493 = vsel %vm349, %v277, %v421
    %v494 = vsel %vm350, %v278, %v422
    %v495 = vsel %vm351, %v279, %v423
    %v496 = vsel %vm352, %v280, %v424
    %v497 = vsel %vm353, %v281, %v425
    %v498 = vsel %vm354, %v282, %v426
    %v499 = vsel %vm355, %v283, %v427
    %v500 = vsel %vm356, %v284, %v428
    %v501 = vsel %vm357, %v285, %v429
    %v502 = vsel %vm358, %v286, %v430
    %v503 = vsel %vm359, %v287, %v431
    %v504 = vsel %vm360, %v288, %v432
    %v505 = vsel %vm361, %v289, %v433
    %v506 = vsel %vm362, %v290, %v434
    %v507 = vsel %vm363, %v291, %v435
    %v508 = vsel %vm364, %v292, %v436
    %v509 = vsel %vm365, %v293, %v437
    %v510 = vsel %vm366, %v294, %v438
    %v511 = vsel %vm367, %v295, %v439
    %v512 = vsel %vm368, %v296, %v440
    %v513 = vsel %vm369, %v297, %v441
    %v514 = vsel %vm370, %v298, %v442
    %v515 = vld [vmem:[#allocation8] sm:$0xff]
    %v516 = vld [vmem:[#allocation8 + $0x8] sm:$0xff]
    %v517 = vld [vmem:[#allocation8 + $0x10] sm:$0xff]
    %v518 = vld [vmem:[#allocation8 + $0x18] sm:$0xff]
    %v519 = vld [vmem:[#allocation8 + $0x20] sm:$0xff]
    %v520 = vld [vmem:[#allocation8 + $0x28] sm:$0xff]
    %v521 = vld [vmem:[#allocation8 + $0x30] sm:$0xff]
    %v522 = vld [vmem:[#allocation8 + $0x38] sm:$0xff]
    %v523 = vld [vmem:[#allocation8 + $0x40] sm:$0xff]
    %v524 = vld [vmem:[#allocation8 + $0x48] sm:$0xff]
    %v525 = vld [vmem:[#allocation8 + $0x50] sm:$0xff]
    %v526 = vld [vmem:[#allocation8 + $0x58] sm:$0xff]
    %v527 = vld [vmem:[#allocation8 + $0x60] sm:$0xff]
    %v528 = vld [vmem:[#allocation8 + $0x68] sm:$0xff]
    %v529 = vld [vmem:[#allocation8 + $0x70] sm:$0xff]
    %v530 = vld [vmem:[#allocation8 + $0x78] sm:$0xff]
    %v531 = vld [vmem:[#allocation8 + $0x80] sm:$0xff]
    %v532 = vld [vmem:[#allocation8 + $0x88] sm:$0xff]
    %v533 = vld [vmem:[#allocation8 + $0x90] sm:$0xff]
    %v534 = vld [vmem:[#allocation8 + $0x98] sm:$0xff]
    %v535 = vld [vmem:[#allocation8 + $0xa0] sm:$0xff]
    %v536 = vld [vmem:[#allocation8 + $0xa8] sm:$0xff]
    %v537 = vld [vmem:[#allocation8 + $0xb0] sm:$0xff]
    %v538 = vld [vmem:[#allocation8 + $0xb8] sm:$0xff]
    %v539 = vld [vmem:[#allocation8 + $0xc0] sm:$0xff]
    %v540 = vld [vmem:[#allocation8 + $0xc8] sm:$0xff]
    %v541 = vld [vmem:[#allocation8 + $0xd0] sm:$0xff]
    %v542 = vld [vmem:[#allocation8 + $0xd8] sm:$0xff]
    %v543 = vld [vmem:[#allocation8 + $0xe0] sm:$0xff]
    %v544 = vld [vmem:[#allocation8 + $0xe8] sm:$0xff]
    %v545 = vld [vmem:[#allocation8 + $0xf0] sm:$0xff]
    %v546 = vld [vmem:[#allocation8 + $0xf8] sm:$0xff]
    %v547 = vld [vmem:[#allocation8 + $0x100] sm:$0xff]
    %v548 = vld [vmem:[#allocation8 + $0x108] sm:$0xff]
    %v549 = vld [vmem:[#allocation8 + $0x110] sm:$0xff]
    %v550 = vld [vmem:[#allocation8 + $0x118] sm:$0xff]
    %v551 = vld [vmem:[#allocation8 + $0x120] sm:$0xff]
    %v552 = vld [vmem:[#allocation8 + $0x128] sm:$0xff]
    %v553 = vld [vmem:[#allocation8 + $0x130] sm:$0xff]
    %v554 = vld [vmem:[#allocation8 + $0x138] sm:$0xff]
    %v555 = vld [vmem:[#allocation8 + $0x140] sm:$0xff]
    %v556 = vld [vmem:[#allocation8 + $0x148] sm:$0xff]
    %v557 = vld [vmem:[#allocation8 + $0x150] sm:$0xff]
    %v558 = vld [vmem:[#allocation8 + $0x158] sm:$0xff]
    %v559 = vld [vmem:[#allocation8 + $0x160] sm:$0xff]
    %v560 = vld [vmem:[#allocation8 + $0x168] sm:$0xff]
    %v561 = vld [vmem:[#allocation8 + $0x170] sm:$0xff]
    %v562 = vld [vmem:[#allocation8 + $0x178] sm:$0xff]
    %v563 = vld [vmem:[#allocation8 + $0x180] sm:$0xff]
    %v564 = vld [vmem:[#allocation8 + $0x188] sm:$0xff]
    %v565 = vld [vmem:[#allocation8 + $0x190] sm:$0xff]
    %v566 = vld [vmem:[#allocation8 + $0x198] sm:$0xff]
    %v567 = vld [vmem:[#allocation8 + $0x1a0] sm:$0xff]
    %v568 = vld [vmem:[#allocation8 + $0x1a8] sm:$0xff]
    %v569 = vld [vmem:[#allocation8 + $0x1b0] sm:$0xff]
    %v570 = vld [vmem:[#allocation8 + $0x1b8] sm:$0xff]
    %v571 = vld [vmem:[#allocation8 + $0x1c0] sm:$0xff]
    %v572 = vld [vmem:[#allocation8 + $0x1c8] sm:$0xff]
    %v573 = vld [vmem:[#allocation8 + $0x1d0] sm:$0xff]
    %v574 = vld [vmem:[#allocation8 + $0x1d8] sm:$0xff]
    %v575 = vld [vmem:[#allocation8 + $0x1e0] sm:$0xff]
    %v576 = vld [vmem:[#allocation8 + $0x1e8] sm:$0xff]
    %v577 = vld [vmem:[#allocation8 + $0x1f0] sm:$0xff]
    %v578 = vld [vmem:[#allocation8 + $0x1f8] sm:$0xff]
    %v579 = vld [vmem:[#allocation8 + $0x200] sm:$0xff]
    %v580 = vld [vmem:[#allocation8 + $0x208] sm:$0xff]
    %v581 = vld [vmem:[#allocation8 + $0x210] sm:$0xff]
    %v582 = vld [vmem:[#allocation8 + $0x218] sm:$0xff]
    %v583 = vld [vmem:[#allocation8 + $0x220] sm:$0xff]
    %v584 = vld [vmem:[#allocation8 + $0x228] sm:$0xff]
    %v585 = vld [vmem:[#allocation8 + $0x230] sm:$0xff]
    %v586 = vld [vmem:[#allocation8 + $0x238] sm:$0xff]
    %v587 = vadd.f32 %v443, %v515
    %v588 = vadd.f32 %v444, %v516
    %v589 = vadd.f32 %v445, %v517
    %v590 = vadd.f32 %v446, %v518
    %v591 = vadd.f32 %v447, %v519
    %v592 = vadd.f32 %v448, %v520
    %v593 = vadd.f32 %v449, %v521
    %v594 = vadd.f32 %v450, %v522
    %v595 = vadd.f32 %v451, %v523
    %v596 = vadd.f32 %v452, %v524
    %v597 = vadd.f32 %v453, %v525
    %v598 = vadd.f32 %v454, %v526
    %v599 = vadd.f32 %v455, %v527
    %v600 = vadd.f32 %v456, %v528
    %v601 = vadd.f32 %v457, %v529
    %v602 = vadd.f32 %v458, %v530
    %v603 = vadd.f32 %v459, %v531
    %v604 = vadd.f32 %v460, %v532
    %v605 = vadd.f32 %v461, %v533
    %v606 = vadd.f32 %v462, %v534
    %v607 = vadd.f32 %v463, %v535
    %v608 = vadd.f32 %v464, %v536
    %v609 = vadd.f32 %v465, %v537
    %v610 = vadd.f32 %v466, %v538
    %v611 = vadd.f32 %v467, %v539
    %v612 = vadd.f32 %v468, %v540
    %v613 = vadd.f32 %v469, %v541
    %v614 = vadd.f32 %v470, %v542
    %v615 = vadd.f32 %v471, %v543
    %v616 = vadd.f32 %v472, %v544
    %v617 = vadd.f32 %v473, %v545
    %v618 = vadd.f32 %v474, %v546
    %v619 = vadd.f32 %v475, %v547
    %v620 = vadd.f32 %v476, %v548
    %v621 = vadd.f32 %v477, %v549
    %v622 = vadd.f32 %v478, %v550
    %v623 = vadd.f32 %v479, %v551
    %v624 = vadd.f32 %v480, %v552
    %v625 = vadd.f32 %v481, %v553
    %v626 = vadd.f32 %v482, %v554
    %v627 = vadd.f32 %v483, %v555
    %v628 = vadd.f32 %v484, %v556
    %v629 = vadd.f32 %v485, %v557
    %v630 = vadd.f32 %v486, %v558
    %v631 = vadd.f32 %v487, %v559
    %v632 = vadd.f32 %v488, %v560
    %v633 = vadd.f32 %v489, %v561
    %v634 = vadd.f32 %v490, %v562
    %v635 = vadd.f32 %v491, %v563
    %v636 = vadd.f32 %v492, %v564
    %v637 = vadd.f32 %v493, %v565
    %v638 = vadd.f32 %v494, %v566
    %v639 = vadd.f32 %v495, %v567
    %v640 = vadd.f32 %v496, %v568
    %v641 = vadd.f32 %v497, %v569
    %v642 = vadd.f32 %v498, %v570
    %v643 = vadd.f32 %v499, %v571
    %v644 = vadd.f32 %v500, %v572
    %v645 = vadd.f32 %v501, %v573
    %v646 = vadd.f32 %v502, %v574
    %v647 = vadd.f32 %v503, %v575
    %v648 = vadd.f32 %v504, %v576
    %v649 = vadd.f32 %v505, %v577
    %v650 = vadd.f32 %v506, %v578
    %v651 = vadd.f32 %v507, %v579
    %v652 = vadd.f32 %v508, %v580
    %v653 = vadd.f32 %v509, %v581
    %v654 = vadd.f32 %v510, %v582
    %v655 = vadd.f32 %v511, %v583
    %v656 = vadd.f32 %v512, %v584
    %v657 = vadd.f32 %v513, %v585
    %v658 = vadd.f32 %v514, %v586
    %659 = vst [vmem:[#allocation10] sm:$0xff] %v587
    %660 = vst [vmem:[#allocation10 + $0x8] sm:$0xff] %v588
    %661 = vst [vmem:[#allocation10 + $0x10] sm:$0xff] %v589
    %662 = vst [vmem:[#allocation10 + $0x18] sm:$0xff] %v590
    %663 = vst [vmem:[#allocation10 + $0x20] sm:$0xff] %v591
    %664 = vst [vmem:[#allocation10 + $0x28] sm:$0xff] %v592
    %665 = vst [vmem:[#allocation10 + $0x30] sm:$0xff] %v593
    %666 = vst [vmem:[#allocation10 + $0x38] sm:$0xff] %v594
    %667 = vst [vmem:[#allocation10 + $0x40] sm:$0xff] %v595
    %668 = vst [vmem:[#allocation10 + $0x48] sm:$0xff] %v596
    %669 = vst [vmem:[#allocation10 + $0x50] sm:$0xff] %v597
    %670 = vst [vmem:[#allocation10 + $0x58] sm:$0xff] %v598
    %671 = vst [vmem:[#allocation10 + $0x60] sm:$0xff] %v599
    %672 = vst [vmem:[#allocation10 + $0x68] sm:$0xff] %v600
    %673 = vst [vmem:[#allocation10 + $0x70] sm:$0xff] %v601
    %674 = vst [vmem:[#allocation10 + $0x78] sm:$0xff] %v602
    %675 = vst [vmem:[#allocation10 + $0x80] sm:$0xff] %v603
    %676 = vst [vmem:[#allocation10 + $0x88] sm:$0xff] %v604
    %677 = vst [vmem:[#allocation10 + $0x90] sm:$0xff] %v605
    %678 = vst [vmem:[#allocation10 + $0x98] sm:$0xff] %v606
    %679 = vst [vmem:[#allocation10 + $0xa0] sm:$0xff] %v607
    %680 = vst [vmem:[#allocation10 + $0xa8] sm:$0xff] %v608
    %681 = vst [vmem:[#allocation10 + $0xb0] sm:$0xff] %v609
    %682 = vst [vmem:[#allocation10 + $0xb8] sm:$0xff] %v610
    %683 = vst [vmem:[#allocation10 + $0xc0] sm:$0xff] %v611
    %684 = vst [vmem:[#allocation10 + $0xc8] sm:$0xff] %v612
    %685 = vst [vmem:[#allocation10 + $0xd0] sm:$0xff] %v613
    %686 = vst [vmem:[#allocation10 + $0xd8] sm:$0xff] %v614
    %687 = vst [vmem:[#allocation10 + $0xe0] sm:$0xff] %v615
    %688 = vst [vmem:[#allocation10 + $0xe8] sm:$0xff] %v616
    %689 = vst [vmem:[#allocation10 + $0xf0] sm:$0xff] %v617
    %690 = vst [vmem:[#allocation10 + $0xf8] sm:$0xff] %v618
    %691 = vst [vmem:[#allocation10 + $0x100] sm:$0xff] %v619
    %692 = vst [vmem:[#allocation10 + $0x108] sm:$0xff] %v620
    %693 = vst [vmem:[#allocation10 + $0x110] sm:$0xff] %v621
    %694 = vst [vmem:[#allocation10 + $0x118] sm:$0xff] %v622
    %695 = vst [vmem:[#allocation10 + $0x120] sm:$0xff] %v623
    %696 = vst [vmem:[#allocation10 + $0x128] sm:$0xff] %v624
    %697 = vst [vmem:[#allocation10 + $0x130] sm:$0xff] %v625
    %698 = vst [vmem:[#allocation10 + $0x138] sm:$0xff] %v626
    %699 = vst [vmem:[#allocation10 + $0x140] sm:$0xff] %v627
    %700 = vst [vmem:[#allocation10 + $0x148] sm:$0xff] %v628
    %701 = vst [vmem:[#allocation10 + $0x150] sm:$0xff] %v629
    %702 = vst [vmem:[#allocation10 + $0x158] sm:$0xff] %v630
    %703 = vst [vmem:[#allocation10 + $0x160] sm:$0xff] %v631
    %704 = vst [vmem:[#allocation10 + $0x168] sm:$0xff] %v632
    %705 = vst [vmem:[#allocation10 + $0x170] sm:$0xff] %v633
    %706 = vst [vmem:[#allocation10 + $0x178] sm:$0xff] %v634
    %707 = vst [vmem:[#allocation10 + $0x180] sm:$0xff] %v635
    %708 = vst [vmem:[#allocation10 + $0x188] sm:$0xff] %v636
    %709 = vst [vmem:[#allocation10 + $0x190] sm:$0xff] %v637
    %710 = vst [vmem:[#allocation10 + $0x198] sm:$0xff] %v638
    %711 = vst [vmem:[#allocation10 + $0x1a0] sm:$0xff] %v639
    %712 = vst [vmem:[#allocation10 + $0x1a8] sm:$0xff] %v640
    %713 = vst [vmem:[#allocation10 + $0x1b0] sm:$0xff] %v641
    %714 = vst [vmem:[#allocation10 + $0x1b8] sm:$0xff] %v642
    %715 = vst [vmem:[#allocation10 + $0x1c0] sm:$0xff] %v643
    %716 = vst [vmem:[#allocation10 + $0x1c8] sm:$0xff] %v644
    %717 = vst [vmem:[#allocation10 + $0x1d0] sm:$0xff] %v645
    %718 = vst [vmem:[#allocation10 + $0x1d8] sm:$0xff] %v646
    %719 = vst [vmem:[#allocation10 + $0x1e0] sm:$0xff] %v647
    %720 = vst [vmem:[#allocation10 + $0x1e8] sm:$0xff] %v648
    %721 = vst [vmem:[#allocation10 + $0x1f0] sm:$0xff] %v649
    %722 = vst [vmem:[#allocation10 + $0x1f8] sm:$0xff] %v650
    %723 = vst [vmem:[#allocation10 + $0x200] sm:$0xff] %v651
    %724 = vst [vmem:[#allocation10 + $0x208] sm:$0xff] %v652
    %725 = vst [vmem:[#allocation10 + $0x210] sm:$0xff] %v653
    %726 = vst [vmem:[#allocation10 + $0x218] sm:$0xff] %v654
    %727 = vst [vmem:[#allocation10 + $0x220] sm:$0xff] %v655
    %728 = vst [vmem:[#allocation10 + $0x228] sm:$0xff] %v656
    %729 = vst [vmem:[#allocation10 + $0x230] sm:$0xff] %v657
    %730 = vst [vmem:[#allocation10 + $0x238] sm:$0xff] %v658
    // Predicated region
    $region34: #{resblock_forward.7} parent=1 // pred_check
      _
    $region35: #{resblock_forward.7} parent=1 // pred_check_branch
      %732 = sbr.rel (0) target = $region37
    $region36: #{resblock_forward.7} parent=1 // pred_region
      %s734 = ssub.s32 9216, 9216
      %735 = vsyncadd [#allocation4], %s734
      %s736 = sshll.u32 [#allocation10], 4
      %s737 = int_to_ptr.vmem [resolvable:$true] %s736
      %742 = dma.vmem_to_hbm [thread:$0]  %s737, 9216, %s4, [#allocation4], 128, 128, 8
    $region37: #{resblock_forward.7} parent=1 // pred_fallthru
      _
    // Predicated region
    $region38: #{resblock_forward.7} parent=1 // pred_check
      _
    $region39: #{resblock_forward.7} parent=1 // pred_check_branch
      %744 = sbr.rel (0) target = $region41
    $region40: #{resblock_forward.7} parent=1 // pred_region
      %745 = dma.done [#allocation4], 9216
    $region41: #{resblock_forward.7} parent=1 // pred_fallthru
      _
    %746 = vsyncpa [#allocation3], 1
    %747 = vsyncpa [#allocation6], 1
    %748 = vsyncpa [#allocation9], 1
    %749 = vsyncpa [#allocation4], 1

// kernel: resblock_forward.6
$region0: #{resblock_forward.6}
  #allocation0 [shape = 'u32[]', space=smem, size = 0x4, offset = 0x4, fixed_abs, tag = 'smem constant byte address 0x4 - core index']
  #allocation1 [shape = 'u32[144,128]{1,0:T(1,128)}', space=vmem, size = 0x12000, scoped, tag = 'internal scratch']
  #allocation2 [shape = 'f32[326,128]{1,0:T(8,128)}', space=vmem, size = 0x29000, scoped, tag = 'scratch operand']
  #allocation3 [shape = 'f32[288,128]{1,0:T(8,128)}', space=vmem, size = 0x24000, scoped, tag = 'scratch operand']
  #allocation4 [shape = 's32[1]{0}', space=sflag, size = 0x4, scoped, tag = 'scratch operand']
  #allocation11 [shape = 's32[]', space=sflag, size = 0x4, offset = 0, fixed_abs, tag = 'sflag constant byte address 0x0 - dummy sync flag']
  #allocation12 [shape = 's32[]', space=sflag, size = 0x4, offset = 0, fixed_abs, tag = 'sflag constant byte address 0x0 - dummy sync flag']
  #allocation13 [shape = 'u32[]', space=smem, size = 0x4, offset = 0x44, fixed_abs, tag = 'smem constant byte address 0x44 - assertion arg 0']
  #allocation14 [shape = 'u32[]', space=smem, size = 0x4, offset = 0x48, fixed_abs, tag = 'smem constant byte address 0x48 - assertion arg 1']
  %s0 = inlined_call_operand.hbm [shape: f32[650,128], index: 0, kind: input, shape index: {}]
  %s1 = inlined_call_operand.hbm [shape: f32[9,128,128], index: 1, kind: input, shape index: {}]
  %s2 = inlined_call_operand.hbm [shape: f32[576,128], index: 2, kind: output, shape index: {0}]
  %s3 = inlined_call_operand.hbm [shape: f32[2,1,2,128], index: 3, kind: output, shape index: {1}]
  %4 = xla_tuple %s2, %s3
  %s5 = sld [smem:[#allocation0]]
  $region53: #{resblock_forward.6} parent=0
    _
  %s7 = ssub.s32 1, %s5
  %s8 = scalar_select 0, %s7, %s5
  $region1: #{resblock_forward.6} parent=0
    #allocation5 [shape = 'u8[589824]{0}', space=vmem, size = 0x90000, scoped, tag = 'input window, operand 1, single buffered']
    #allocation6 [shape = 's32[2]{0}', space=sflag, size = 0x8, scoped, tag = 'scoped memory for resblock_forward.6']
    #allocation7 [shape = 's32[2]{0}', space=sflag, size = 0x8, scoped, tag = 'scoped memory for resblock_forward.6']
    #allocation8 [shape = 'u8[294912]{0}', space=vmem, size = 0x48000, scoped, tag = 'output window, operand 0']
    #allocation9 [shape = 'u8[2048]{0}', space=vmem, size = 0x800, scoped, tag = 'output window, operand 1']
    #allocation10 [shape = 's32[2]{0}', space=sflag, size = 0x8, scoped, tag = 'scoped memory for resblock_forward.6']
    %9 = vsyncpa [#allocation6], 0
    %10 = vsyncpa [#allocation7], 0
    %s11 = scalar_lea.sflag [#allocation7], 1
    %12 = vsyncpa %s11, 0
    %13 = vsyncpa [#allocation10], 0
    %s14 = scalar_lea.sflag [#allocation10], 1
    %15 = vsyncpa %s14, 0
    loop: start=0, step=1, limit=4
    $region2: #{resblock_forward.6} parent=1 // loop_pre_header
      _
    $region3: #{resblock_forward.6} parent=1 // loop_header
      %s17 = sphi 0, %s21
      %p18 = scmp.ge.s32.totalorder %s17, 4
      %s24 = sphi 0, %s36
      %s25 = sphi 0, %s32
      %s26 = sphi 0, %s24
      %s27 = sphi 0, %s25
      %s28 = sphi 0, %s26
      %s29 = sphi 0, %s27
      %s37 = sphi 0, %s37
      %s39 = sphi 0, %s37
      %s40 = sphi 0, %s39
      %s54 = sphi 0, %s40
      %s62 = sphi 0, %s64
      %s65 = sphi 0, %s62
      %s66 = sphi 0, %s65
      %s82 = sphi 0, %s66
      %s90 = sphi 0, %s92
      %s93 = sphi 0, %s90
      %s94 = sphi 0, %s93
      %s110 = sphi 0, %s94
    $region4: #{resblock_forward.6} parent=1 // loop_header_branch
      %20 = sbr.rel (%p18) target = $region8
    $region5: #{resblock_forward.6} parent=1 // loop_body
      %s22 = ssub.s32 %s17, 1
      %s23 = ssub.s32 %s17, 2
      %s30 = sadd.s32 1, %s25
      %p31 = scmp.ge.s32.totalorder %s30, 1
      %s32 = scalar_select %p31, 0, %s30
      %s33 = sadd.s32 1, %s24
      %s34 = scalar_select %p31, %s33, %s24
      %p35 = scmp.ge.s32.totalorder %s34, 2
      %s36 = scalar_select %p35, 0, %s34
      %s38 = sadd.s32 %s37, 1
      %p41 = scmp.eq.s32.totalorder %s17, 1
      %p42 = scmp.ne.s32.totalorder %s37, %s39
      %p43 = scmp.eq.s32.totalorder %s17, 0
      %p44 = por %p42, %p43
      %p45 = scmp.ne.s32.totalorder %s37, %s39
      %p46 = scmp.eq.s32.totalorder %s22, 1
      %p47 = por %p45, %p46
      %p48 = scmp.ne.s32.totalorder %s39, %s40
      %p49 = scmp.eq.s32.totalorder %s22, 0
      %p50 = por %p48, %p49
      %p51 = scmp.ne.s32.totalorder %s39, %s40
      %p52 = scmp.eq.s32.totalorder %s23, 1
      %p53 = por %p51, %p52
      %p55 = scmp.ne.s32.totalorder %s40, %s54
      %p56 = scmp.eq.s32.totalorder %s23, 0
      %p57 = por %p55, %p56
      %s58 = sadd.s32 %s24, %s25
      %s59 = sadd.s32 %s36, %s32
      %s60 = ssub.s32 %s58, %s59
      %p61 = scmp.eq.s32.totalorder %s60, 0
      %s63 = sadd.s32 %s62, 1
      %s64 = scalar_select %p61, %s62, %s63
      %p67 = pneg %p61
      %p68 = scmp.eq.s32.totalorder %s17, 1
      %p69 = por %p67, %p68
      %p70 = scmp.ne.s32.totalorder %s62, %s65
      %p71 = scmp.eq.s32.totalorder %s17, 0
      %p72 = por %p70, %p71
      %p73 = scmp.ne.s32.totalorder %s62, %s65
      %p74 = scmp.eq.s32.totalorder %s22, 1
      %p75 = por %p73, %p74
      %p76 = scmp.ne.s32.totalorder %s65, %s66
      %p77 = scmp.eq.s32.totalorder %s22, 0
      %p78 = por %p76, %p77
      %p79 = scmp.ne.s32.totalorder %s65, %s66
      %p80 = scmp.eq.s32.totalorder %s23, 1
      %p81 = por %p79, %p80
      %p83 = scmp.ne.s32.totalorder %s66, %s82
      %p84 = scmp.eq.s32.totalorder %s23, 0
      %p85 = por %p83, %p84
      %s86 = ssub.s32 %s24, %s36
      %s87 = ssub.s32 %s25, %s32
      %s88 = sor.u32 %s86, %s87
      %p89 = scmp.eq.s32.totalorder %s88, 0
      %s91 = sadd.s32 %s90, 1
      %s92 = scalar_select %p89, %s90, %s91
      %p95 = pneg %p89
      %p96 = scmp.eq.s32.totalorder %s17, 1
      %p97 = por %p95, %p96
      %p98 = scmp.ne.s32.totalorder %s90, %s93
      %p99 = scmp.eq.s32.totalorder %s17, 0
      %p100 = por %p98, %p99
      %p101 = scmp.ne.s32.totalorder %s90, %s93
      %p102 = scmp.eq.s32.totalorder %s22, 1
      %p103 = por %p101, %p102
      %p104 = scmp.ne.s32.totalorder %s93, %s94
      %p105 = scmp.eq.s32.totalorder %s22, 0
      %p106 = por %p104, %p105
      %p107 = scmp.ne.s32.totalorder %s93, %s94
      %p108 = scmp.eq.s32.totalorder %s23, 1
      %p109 = por %p107, %p108
      %p111 = scmp.ne.s32.totalorder %s94, %s110
      %p112 = scmp.eq.s32.totalorder %s23, 0
      %p113 = por %p111, %p112
      %p114 = scmp.le.s32.totalorder 1, %s17
      %p115 = scmp.lt.s32.totalorder %s17, 3
      %p116 = pnand %p114, %p115
      %p117 = pneg %p116
      // Predicated region
      $region9: #{resblock_forward.6} parent=5 // pred_check
        _
      $region10: #{resblock_forward.6} parent=5 // pred_check_branch
        %119 = sbr.rel (%p116) target = $region12
      $region11: #{resblock_forward.6} parent=5 // pred_region
        %s120 = ssub.s32 %s17, 1
        // Predicated region
        $region13: #{resblock_forward.6} parent=11 // pred_check
          %p121 = pneg %p50
        $region14: #{resblock_forward.6} parent=11 // pred_check_branch
          %123 = sbr.rel (%p121) target = $region16
        $region15: #{resblock_forward.6} parent=11 // pred_region
          %s125 = ssub.s32 18432, 18432
          %126 = vsyncadd [#allocation6], %s125
          %s127 = sshll.u32 [#allocation5], 4
          %s128 = int_to_ptr.vmem [resolvable:$true] %s127
          %133 = dma.hbm_to_vmem [thread:$0]  %s1, 18432, %s128, [#allocation6], 128, 128, 8
        $region16: #{resblock_forward.6} parent=11 // pred_fallthru
          _
      $region12: #{resblock_forward.6} parent=5 // pred_fallthru
        _
      %p134 = scmp.lt.s32.totalorder %s17, 2
      // Predicated region
      $region17: #{resblock_forward.6} parent=5 // pred_check
        %p135 = pneg %p134
      $region18: #{resblock_forward.6} parent=5 // pred_check_branch
        %137 = sbr.rel (%p135) target = $region20
      $region19: #{resblock_forward.6} parent=5 // pred_region
        _
      $region20: #{resblock_forward.6} parent=5 // pred_fallthru
        _
      %p138 = scmp.le.s32.totalorder 1, %s17
      %p139 = scmp.lt.s32.totalorder %s17, 3
      %p140 = pnand %p138, %p139
      %p141 = pneg %p140
      // Predicated region
      $region21: #{resblock_forward.6} parent=5 // pred_check
        _
      $region22: #{resblock_forward.6} parent=5 // pred_check_branch
        %143 = sbr.rel (%p140) target = $region24
      $region23: #{resblock_forward.6} parent=5 // pred_region
        %s144 = ssub.s32 %s17, 1
        // Predicated region
        $region25: #{resblock_forward.6} parent=23 // pred_check
          %p145 = pneg %p50
        $region26: #{resblock_forward.6} parent=23 // pred_check_branch
          %147 = sbr.rel (%p145) target = $region28
        $region27: #{resblock_forward.6} parent=23 // pred_region
          %148 = dma.done [#allocation6], 18432
        $region28: #{resblock_forward.6} parent=23 // pred_fallthru
          _
        %p149 = pneg %p50
        %p150 = pneg %p47
        %p151 = pneg %p78
        %p152 = pneg %p75
        %s153 = sand.u32 %s65, 1
        %s154 = scalar_lea.sflag [#allocation7], %s153
        %s155 = sand.u32 %s65, 1
        %s156 = smul.addr %s155, 288
        %s157 = scalar_lea.vmem [#allocation8], %s156
        %p158 = pneg %p106
        %p159 = pneg %p103
        %s160 = sand.u32 %s93, 1
        %s161 = scalar_lea.sflag [#allocation10], %s160
        %s162 = sand.u32 %s93, 1
        %s163 = smul.addr %s162, 2
        %s164 = scalar_lea.vmem [#allocation9], %s163
        %s165 = sadd.s32 %s26, %s27
        %s166 = smul.u32 36, %s165
        %s167 = smul.u32 %s26, 324
        %s168 = smul.u32 %s27, 288
        %s169 = sadd.s32 %s167, %s168
        %s170 = smul.addr %s169, 16
        %s171 = scalar_lea.hbm %s0, %s170
        // Predicated region
        $region29: #{resblock_forward.6} parent=23 // pred_check
          _
        $region30: #{resblock_forward.6} parent=23 // pred_check_branch
          %173 = sbr.rel target = $region32
        $region31: #{resblock_forward.6} parent=23 // pred_region
          %174 = sst [smem:[#allocation13]] [#allocation12]
          %175 = sst [smem:[#allocation14]] [#allocation11]
        $region32: #{resblock_forward.6} parent=23 // pred_fallthru
          _
        %177 = shalt.err (0)
        %s179 = sshll.u32 [#allocation2], 4
        %s180 = int_to_ptr.vmem [resolvable:$true] %s179
        %182 = dma.hbm_to_vmem [thread:$0]  %s171, 5216, %s180, [#allocation4]
        %s183 = smul.u32 326, 1
        %s184 = sshll.u32 %s183, 4
        %185 = dma.done [#allocation4], %s184
        %186 = vst [vmem:[#allocation3] sm:$0xff] 0.0
        %187 = vst [vmem:[#allocation3 + $0x8] sm:$0xff] 0.0
        %188 = vst [vmem:[#allocation3 + $0x10] sm:$0xff] 0.0
        %189 = vst [vmem:[#allocation3 + $0x18] sm:$0xff] 0.0
        %190 = vst [vmem:[#allocation3 + $0x20] sm:$0xff] 0.0
        %191 = vst [vmem:[#allocation3 + $0x28] sm:$0xff] 0.0
        %192 = vst [vmem:[#allocation3 + $0x30] sm:$0xff] 0.0
        %193 = vst [vmem:[#allocation3 + $0x38] sm:$0xff] 0.0
        %194 = vst [vmem:[#allocation3 + $0x40] sm:$0xff] 0.0
        %195 = vst [vmem:[#allocation3 + $0x48] sm:$0xff] 0.0
        %196 = vst [vmem:[#allocation3 + $0x50] sm:$0xff] 0.0
        %197 = vst [vmem:[#allocation3 + $0x58] sm:$0xff] 0.0
        %198 = vst [vmem:[#allocation3 + $0x60] sm:$0xff] 0.0
        %199 = vst [vmem:[#allocation3 + $0x68] sm:$0xff] 0.0
        %200 = vst [vmem:[#allocation3 + $0x70] sm:$0xff] 0.0
        %201 = vst [vmem:[#allocation3 + $0x78] sm:$0xff] 0.0
        %202 = vst [vmem:[#allocation3 + $0x80] sm:$0xff] 0.0
        %203 = vst [vmem:[#allocation3 + $0x88] sm:$0xff] 0.0
        %204 = vst [vmem:[#allocation3 + $0x90] sm:$0xff] 0.0
        %205 = vst [vmem:[#allocation3 + $0x98] sm:$0xff] 0.0
        %206 = vst [vmem:[#allocation3 + $0xa0] sm:$0xff] 0.0
        %207 = vst [vmem:[#allocation3 + $0xa8] sm:$0xff] 0.0
        %208 = vst [vmem:[#allocation3 + $0xb0] sm:$0xff] 0.0
        %209 = vst [vmem:[#allocation3 + $0xb8] sm:$0xff] 0.0
        %210 = vst [vmem:[#allocation3 + $0xc0] sm:$0xff] 0.0
        %211 = vst [vmem:[#allocation3 + $0xc8] sm:$0xff] 0.0
        %212 = vst [vmem:[#allocation3 + $0xd0] sm:$0xff] 0.0
        %213 = vst [vmem:[#allocation3 + $0xd8] sm:$0xff] 0.0
        %214 = vst [vmem:[#allocation3 + $0xe0] sm:$0xff] 0.0
        %215 = vst [vmem:[#allocation3 + $0xe8] sm:$0xff] 0.0
        %216 = vst [vmem:[#allocation3 + $0xf0] sm:$0xff] 0.0
        %217 = vst [vmem:[#allocation3 + $0xf8] sm:$0xff] 0.0
        %218 = vst [vmem:[#allocation3 + $0x100] sm:$0xff] 0.0
        %219 = vst [vmem:[#allocation3 + $0x108] sm:$0xff] 0.0
        %220 = vst [vmem:[#allocation3 + $0x110] sm:$0xff] 0.0
        %221 = vst [vmem:[#allocation3 + $0x118] sm:$0xff] 0.0
        %v222 = vld [vmem:[#allocation2] sm:$0xff]
        %v223 = vld [vmem:[#allocation2 + $0x8] sm:$0xff]
        %v224 = vld [vmem:[#allocation2 + $0x10] sm:$0xff]
        %v225 = vld [vmem:[#allocation2 + $0x18] sm:$0xff]
        %v226 = vld [vmem:[#allocation2 + $0x20] sm:$0xff]
        %v227 = vld [vmem:[#allocation2 + $0x28] sm:$0xff]
        %v228 = vld [vmem:[#allocation2 + $0x30] sm:$0xff]
        %v229 = vld [vmem:[#allocation2 + $0x38] sm:$0xff]
        %v230 = vld [vmem:[#allocation2 + $0x40] sm:$0xff]
        %v231 = vld [vmem:[#allocation2 + $0x48] sm:$0xff]
        %v232 = vld [vmem:[#allocation2 + $0x50] sm:$0xff]
        %v233 = vld [vmem:[#allocation2 + $0x58] sm:$0xff]
        %v234 = vld [vmem:[#allocation2 + $0x60] sm:$0xff]
        %v235 = vld [vmem:[#allocation2 + $0x68] sm:$0xff]
        %v236 = vld [vmem:[#allocation2 + $0x70] sm:$0xff]
        %v237 = vld [vmem:[#allocation2 + $0x78] sm:$0xff]
        %v238 = vld [vmem:[#allocation2 + $0x80] sm:$0xff]
        %v239 = vld [vmem:[#allocation2 + $0x88] sm:$0xff]
        %v240 = vld [vmem:[#allocation2 + $0x90] sm:$0xff]
        %v241 = vld [vmem:[#allocation2 + $0x98] sm:$0xff]
        %v242 = vld [vmem:[#allocation2 + $0xa0] sm:$0xff]
        %v243 = vld [vmem:[#allocation2 + $0xa8] sm:$0xff]
        %v244 = vld [vmem:[#allocation2 + $0xb0] sm:$0xff]
        %v245 = vld [vmem:[#allocation2 + $0xb8] sm:$0xff]
        %v246 = vld [vmem:[#allocation2 + $0xc0] sm:$0xff]
        %v247 = vld [vmem:[#allocation2 + $0xc8] sm:$0xff]
        %v248 = vld [vmem:[#allocation2 + $0xd0] sm:$0xff]
        %v249 = vld [vmem:[#allocation2 + $0xd8] sm:$0xff]
        %v250 = vld [vmem:[#allocation2 + $0xe0] sm:$0xff]
        %v251 = vld [vmem:[#allocation2 + $0xe8] sm:$0xff]
        %v252 = vld [vmem:[#allocation2 + $0xf0] sm:$0xff]
        %v253 = vld [vmem:[#allocation2 + $0xf8] sm:$0xff]
        %v254 = vld [vmem:[#allocation2 + $0x100] sm:$0xff]
        %v255 = vld [vmem:[#allocation2 + $0x108] sm:$0xff]
        %v256 = vld [vmem:[#allocation2 + $0x110] sm:$0xff]
        %v257 = vld [vmem:[#allocation2 + $0x118] sm:$0xff]
        %v258 = vld [vmem:[#allocation3] sm:$0xff]
        %v259 = vld [vmem:[#allocation3 + $0x8] sm:$0xff]
        %v260 = vld [vmem:[#allocation3 + $0x10] sm:$0xff]
        %v261 = vld [vmem:[#allocation3 + $0x18] sm:$0xff]
        %v262 = vld [vmem:[#allocation3 + $0x20] sm:$0xff]
        %v263 = vld [vmem:[#allocation3 + $0x28] sm:$0xff]
        %v264 = vld [vmem:[#allocation3 + $0x30] sm:$0xff]
        %v265 = vld [vmem:[#allocation3 + $0x38] sm:$0xff]
        %v266 = vld [vmem:[#allocation3 + $0x40] sm:$0xff]
        %v267 = vld [vmem:[#allocation3 + $0x48] sm:$0xff]
        %v268 = vld [vmem:[#allocation3 + $0x50] sm:$0xff]
        %v269 = vld [vmem:[#allocation3 + $0x58] sm:$0xff]
        %v270 = vld [vmem:[#allocation3 + $0x60] sm:$0xff]
        %v271 = vld [vmem:[#allocation3 + $0x68] sm:$0xff]
        %v272 = vld [vmem:[#allocation3 + $0x70] sm:$0xff]
        %v273 = vld [vmem:[#allocation3 + $0x78] sm:$0xff]
        %v274 = vld [vmem:[#allocation3 + $0x80] sm:$0xff]
        %v275 = vld [vmem:[#allocation3 + $0x88] sm:$0xff]
        %v276 = vld [vmem:[#allocation3 + $0x90] sm:$0xff]
        %v277 = vld [vmem:[#allocation3 + $0x98] sm:$0xff]
        %v278 = vld [vmem:[#allocation3 + $0xa0] sm:$0xff]
        %v279 = vld [vmem:[#allocation3 + $0xa8] sm:$0xff]
        %v280 = vld [vmem:[#allocation3 + $0xb0] sm:$0xff]
        %v281 = vld [vmem:[#allocation3 + $0xb8] sm:$0xff]
        %v282 = vld [vmem:[#allocation3 + $0xc0] sm:$0xff]
        %v283 = vld [vmem:[#allocation3 + $0xc8] sm:$0xff]
        %v284 = vld [vmem:[#allocation3 + $0xd0] sm:$0xff]
        %v285 = vld [vmem:[#allocation3 + $0xd8] sm:$0xff]
        %v286 = vld [vmem:[#allocation3 + $0xe0] sm:$0xff]
        %v287 = vld [vmem:[#allocation3 + $0xe8] sm:$0xff]
        %v288 = vld [vmem:[#allocation3 + $0xf0] sm:$0xff]
        %v289 = vld [vmem:[#allocation3 + $0xf8] sm:$0xff]
        %v290 = vld [vmem:[#allocation3 + $0x100] sm:$0xff]
        %v291 = vld [vmem:[#allocation3 + $0x108] sm:$0xff]
        %v292 = vld [vmem:[#allocation3 + $0x110] sm:$0xff]
        %v293 = vld [vmem:[#allocation3 + $0x118] sm:$0xff]
        %v294 = vld [vmem:[#allocation5] sm:$0xff]
        %v295 = vld [vmem:[#allocation5 + $0x8] sm:$0xff]
        %v296 = vld [vmem:[#allocation5 + $0x10] sm:$0xff]
        %v297 = vld [vmem:[#allocation5 + $0x18] sm:$0xff]
        %v298 = vld [vmem:[#allocation5 + $0x20] sm:$0xff]
        %v299 = vld [vmem:[#allocation5 + $0x28] sm:$0xff]
        %v300 = vld [vmem:[#allocation5 + $0x30] sm:$0xff]
        %v301 = vld [vmem:[#allocation5 + $0x38] sm:$0xff]
        %v302 = vld [vmem:[#allocation5 + $0x40] sm:$0xff]
        %v303 = vld [vmem:[#allocation5 + $0x48] sm:$0xff]
        %v304 = vld [vmem:[#allocation5 + $0x50] sm:$0xff]
        %v305 = vld [vmem:[#allocation5 + $0x58] sm:$0xff]
        %v306 = vld [vmem:[#allocation5 + $0x60] sm:$0xff]
        %v307 = vld [vmem:[#allocation5 + $0x68] sm:$0xff]
        %v308 = vld [vmem:[#allocation5 + $0x70] sm:$0xff]
        %v309 = vld [vmem:[#allocation5 + $0x78] sm:$0xff]
        %310 = vmatprep.subr.mxu0 0.0
        %311 = vmatpush1.msra.mxu0 %v294
        %312 = vmatprep.subr.mxu0 0.0
        %313 = vmatpush1.msra.mxu0 %v295
        %314 = vmatprep.subr.mxu0 0.0
        %315 = vmatpush1.msra.mxu0 %v296
        %316 = vmatprep.subr.mxu0 0.0
        %317 = vmatpush1.msra.mxu0 %v297
        %318 = vmatprep.subr.mxu0 0.0
        %319 = vmatpush1.msra.mxu0 %v298
        %320 = vmatprep.subr.mxu0 0.0
        %321 = vmatpush1.msra.mxu0 %v299
        %322 = vmatprep.subr.mxu0 0.0
        %323 = vmatpush1.msra.mxu0 %v300
        %324 = vmatprep.subr.mxu0 0.0
        %325 = vmatpush1.msra.mxu0 %v301
        %326 = vmatprep.subr.mxu0 0.0
        %327 = vmatpush1.msra.mxu0 %v302
        %328 = vmatprep.subr.mxu0 0.0
        %329 = vmatpush1.msra.mxu0 %v303
        %330 = vmatprep.subr.mxu0 0.0
        %331 = vmatpush1.msra.mxu0 %v304
        %332 = vmatprep.subr.mxu0 0.0
        %333 = vmatpush1.msra.mxu0 %v305
        %334 = vmatprep.subr.mxu0 0.0
        %335 = vmatpush1.msra.mxu0 %v306
        %336 = vmatprep.subr.mxu0 0.0
        %337 = vmatpush1.msra.mxu0 %v307
        %338 = vmatprep.subr.mxu0 0.0
        %339 = vmatpush1.msra.mxu0 %v308
        %340 = vmatprep.subr.mxu0 0.0
        %341 = vmatpush1.msra.mxu0 %v309
        %342 = vmatprep.subr.mxu0 0.0
        %343 = vmatpush1.msra.mxu0 0.0
        %344 = vmatprep.subr.mxu0 0.0
        %345 = vmatpush1.msra.mxu0 0.0
        %346 = vmatprep.subr.mxu0 0.0
        %347 = vmatpush1.msra.mxu0 0.0
        %348 = vmatprep.subr.mxu0 0.0
        %349 = vmatpush1.msra.mxu0 0.0
        %350 = vmatprep.subr.mxu0 0.0
        %351 = vmatpush1.msra.mxu0 0.0
        %352 = vmatprep.subr.mxu0 0.0
        %353 = vmatpush1.msra.mxu0 0.0
        %354 = vmatprep.subr.mxu0 0.0
        %355 = vmatpush1.msra.mxu0 0.0
        %356 = vmatprep.subr.mxu0 0.0
        %357 = vmatpush1.msra.mxu0 0.0
        %358 = vmatprep.subr.mxu0 0.0
        %359 = vmatpush1.msra.mxu0 0.0
        %360 = vmatprep.subr.mxu0 0.0
        %361 = vmatpush1.msra.mxu0 0.0
        %362 = vmatprep.subr.mxu0 0.0
        %363 = vmatpush1.msra.mxu0 0.0
        %364 = vmatprep.subr.mxu0 0.0
        %365 = vmatpush1.msra.mxu0 0.0
        %366 = vmatprep.subr.mxu0 0.0
        %367 = vmatpush1.msra.mxu0 0.0
        %368 = vmatprep.subr.mxu0 0.0
        %369 = vmatpush1.msra.mxu0 0.0
        %370 = vmatprep.subr.mxu0 0.0
        %371 = vmatpush1.msra.mxu0 0.0
        %372 = vmatprep.subr.mxu0 0.0
        %373 = vmatpush1.msra.mxu0 0.0
        %374 = vmatprep.mubr.f32.mxu0 0.0
        %375 = vmatmul.mubr.f32.gmra.mrb[0].mxu0 %v222
        %v376 = vpop.f32.mrb[0].mxu0
        %v377 = vadd.f32 0.0, %v376
        %v378 = vpop.f32.mrb[0].mxu0
        %379 = vmatprep.mubr.f32.mxu0 0.0
        %380 = vmatmul.mubr.f32.gmra.mrb[0].mxu0 %v223
        %v381 = vpop.f32.mrb[0].mxu0
        %v382 = vadd.f32 0.0, %v381
        %v383 = vpop.f32.mrb[0].mxu0
        %384 = vmatprep.mubr.f32.mxu0 0.0
        %385 = vmatmul.mubr.f32.gmra.mrb[0].mxu0 %v224
        %v386 = vpop.f32.mrb[0].mxu0
        %v387 = vadd.f32 0.0, %v386
        %v388 = vpop.f32.mrb[0].mxu0
        %389 = vmatprep.mubr.f32.mxu0 0.0
        %390 = vmatmul.mubr.f32.gmra.mrb[0].mxu0 %v225
        %v391 = vpop.f32.mrb[0].mxu0
        %v392 = vadd.f32 0.0, %v391
        %v393 = vpop.f32.mrb[0].mxu0
        %394 = vmatprep.mubr.f32.mxu0 0.0
        %395 = vmatmul.mubr.f32.gmra.mrb[0].mxu0 %v226
        %v396 = vpop.f32.mrb[0].mxu0
        %v397 = vadd.f32 0.0, %v396
        %v398 = vpop.f32.mrb[0].mxu0
        %399 = vmatprep.mubr.f32.mxu0 0.0
        %400 = vmatmul.mubr.f32.gmra.mrb[0].mxu0 %v227
        %v401 = vpop.f32.mrb[0].mxu0
        %v402 = vadd.f32 0.0, %v401
        %v403 = vpop.f32.mrb[0].mxu0
        %404 = vmatprep.mubr.f32.mxu0 0.0
        %405 = vmatmul.mubr.f32.gmra.mrb[0].mxu0 %v228
        %v406 = vpop.f32.mrb[0].mxu0
        %v407 = vadd.f32 0.0, %v406
        %v408 = vpop.f32.mrb[0].mxu0
        %409 = vmatprep.mubr.f32.mxu0 0.0
        %410 = vmatmul.mubr.f32.gmra.mrb[0].mxu0 %v229
        %v411 = vpop.f32.mrb[0].mxu0
        %v412 = vadd.f32 0.0, %v411
        %v413 = vpop.f32.mrb[0].mxu0
        %414 = vmatprep.mubr.f32.mxu0 0.0
        %415 = vmatmul.mubr.f32.gmra.mrb[0].mxu0 %v230
        %v416 = vpop.f32.mrb[0].mxu0
        %v417 = vadd.f32 0.0, %v416
        %v418 = vpop.f32.mrb[0].mxu0
        %419 = vmatprep.mubr.f32.mxu0 0.0
        %420 = vmatmul.mubr.f32.gmra.mrb[0].mxu0 %v231
        %v421 = vpop.f32.mrb[0].mxu0
        %v422 = vadd.f32 0.0, %v421
        %v423 = vpop.f32.mrb[0].mxu0
        %424 = vmatprep.mubr.f32.mxu0 0.0
        %425 = vmatmul.mubr.f32.gmra.mrb[0].mxu0 %v232
        %v426 = vpop.f32.mrb[0].mxu0
        %v427 = vadd.f32 0.0, %v426
        %v428 = vpop.f32.mrb[0].mxu0
        %429 = vmatprep.mubr.f32.mxu0 0.0
        %430 = vmatmul.mubr.f32.gmra.mrb[0].mxu0 %v233
        %v431 = vpop.f32.mrb[0].mxu0
        %v432 = vadd.f32 0.0, %v431
        %v433 = vpop.f32.mrb[0].mxu0
        %434 = vmatprep.mubr.f32.mxu0 0.0
        %435 = vmatmul.mubr.f32.gmra.mrb[0].mxu0 %v234
        %v436 = vpop.f32.mrb[0].mxu0
        %v437 = vadd.f32 0.0, %v436
        %v438 = vpop.f32.mrb[0].mxu0
        %439 = vmatprep.mubr.f32.mxu0 0.0
        %440 = vmatmul.mubr.f32.gmra.mrb[0].mxu0 %v235
        %v441 = vpop.f32.mrb[0].mxu0
        %v442 = vadd.f32 0.0, %v441
        %v443 = vpop.f32.mrb[0].mxu0
        %444 = vmatprep.mubr.f32.mxu0 0.0
        %445 = vmatmul.mubr.f32.gmra.mrb[0].mxu0 %v236
        %v446 = vpop.f32.mrb[0].mxu0
        %v447 = vadd.f32 0.0, %v446
        %v448 = vpop.f32.mrb[0].mxu0
        %449 = vmatprep.mubr.f32.mxu0 0.0
        %450 = vmatmul.mubr.f32.gmra.mrb[0].mxu0 %v237
        %v451 = vpop.f32.mrb[0].mxu0
        %v452 = vadd.f32 0.0, %v451
        %v453 = vpop.f32.mrb[0].mxu0
        %454 = vmatprep.mubr.f32.mxu0 0.0
        %455 = vmatmul.mubr.f32.gmra.mrb[0].mxu0 %v238
        %v456 = vpop.f32.mrb[0].mxu0
        %v457 = vadd.f32 0.0, %v456
        %v458 = vpop.f32.mrb[0].mxu0
        %459 = vmatprep.mubr.f32.mxu0 0.0
        %460 = vmatmul.mubr.f32.gmra.mrb[0].mxu0 %v239
        %v461 = vpop.f32.mrb[0].mxu0
        %v462 = vadd.f32 0.0, %v461
        %v463 = vpop.f32.mrb[0].mxu0
        %464 = vmatprep.mubr.f32.mxu0 0.0
        %465 = vmatmul.mubr.f32.gmra.mrb[0].mxu0 %v240
        %v466 = vpop.f32.mrb[0].mxu0
        %v467 = vadd.f32 0.0, %v466
        %v468 = vpop.f32.mrb[0].mxu0
        %469 = vmatprep.mubr.f32.mxu0 0.0
        %470 = vmatmul.mubr.f32.gmra.mrb[0].mxu0 %v241
        %v471 = vpop.f32.mrb[0].mxu0
        %v472 = vadd.f32 0.0, %v471
        %v473 = vpop.f32.mrb[0].mxu0
        %474 = vmatprep.mubr.f32.mxu0 0.0
        %475 = vmatmul.mubr.f32.gmra.mrb[0].mxu0 %v242
        %v476 = vpop.f32.mrb[0].mxu0
        %v477 = vadd.f32 0.0, %v476
        %v478 = vpop.f32.mrb[0].mxu0
        %479 = vmatprep.mubr.f32.mxu0 0.0
        %480 = vmatmul.mubr.f32.gmra.mrb[0].mxu0 %v243
        %v481 = vpop.f32.mrb[0].mxu0
        %v482 = vadd.f32 0.0, %v481
        %v483 = vpop.f32.mrb[0].mxu0
        %484 = vmatprep.mubr.f32.mxu0 0.0
        %485 = vmatmul.mubr.f32.gmra.mrb[0].mxu0 %v244
        %v486 = vpop.f32.mrb[0].mxu0
        %v487 = vadd.f32 0.0, %v486
        %v488 = vpop.f32.mrb[0].mxu0
        %489 = vmatprep.mubr.f32.mxu0 0.0
        %490 = vmatmul.mubr.f32.gmra.mrb[0].mxu0 %v245
        %v491 = vpop.f32.mrb[0].mxu0
        %v492 = vadd.f32 0.0, %v491
        %v493 = vpop.f32.mrb[0].mxu0
        %494 = vmatprep.mubr.f32.mxu0 0.0
        %495 = vmatmul.mubr.f32.gmra.mrb[0].mxu0 %v246
        %v496 = vpop.f32.mrb[0].mxu0
        %v497 = vadd.f32 0.0, %v496
        %v498 = vpop.f32.mrb[0].mxu0
        %499 = vmatprep.mubr.f32.mxu0 0.0
        %500 = vmatmul.mubr.f32.gmra.mrb[0].mxu0 %v247
        %v501 = vpop.f32.mrb[0].mxu0
        %v502 = vadd.f32 0.0, %v501
        %v503 = vpop.f32.mrb[0].mxu0
        %504 = vmatprep.mubr.f32.mxu0 0.0
        %505 = vmatmul.mubr.f32.gmra.mrb[0].mxu0 %v248
        %v506 = vpop.f32.mrb[0].mxu0
        %v507 = vadd.f32 0.0, %v506
        %v508 = vpop.f32.mrb[0].mxu0
        %509 = vmatprep.mubr.f32.mxu0 0.0
        %510 = vmatmul.mubr.f32.gmra.mrb[0].mxu0 %v249
        %v511 = vpop.f32.mrb[0].mxu0
        %v512 = vadd.f32 0.0, %v511
        %v513 = vpop.f32.mrb[0].mxu0
        %514 = vmatprep.mubr.f32.mxu0 0.0
        %515 = vmatmul.mubr.f32.gmra.mrb[0].mxu0 %v250
        %v516 = vpop.f32.mrb[0].mxu0
        %v517 = vadd.f32 0.0, %v516
        %v518 = vpop.f32.mrb[0].mxu0
        %519 = vmatprep.mubr.f32.mxu0 0.0
        %520 = vmatmul.mubr.f32.gmra.mrb[0].mxu0 %v251
        %v521 = vpop.f32.mrb[0].mxu0
        %v522 = vadd.f32 0.0, %v521
        %v523 = vpop.f32.mrb[0].mxu0
        %524 = vmatprep.mubr.f32.mxu0 0.0
        %525 = vmatmul.mubr.f32.gmra.mrb[0].mxu0 %v252
        %v526 = vpop.f32.mrb[0].mxu0
        %v527 = vadd.f32 0.0, %v526
        %v528 = vpop.f32.mrb[0].mxu0
        %529 = vmatprep.mubr.f32.mxu0 0.0
        %530 = vmatmul.mubr.f32.gmra.mrb[0].mxu0 %v253
        %v531 = vpop.f32.mrb[0].mxu0
        %v532 = vadd.f32 0.0, %v531
        %v533 = vpop.f32.mrb[0].mxu0
        %534 = vmatprep.mubr.f32.mxu0 0.0
        %535 = vmatmul.mubr.f32.gmra.mrb[0].mxu0 %v254
        %v536 = vpop.f32.mrb[0].mxu0
        %v537 = vadd.f32 0.0, %v536
        %v538 = vpop.f32.mrb[0].mxu0
        %539 = vmatprep.mubr.f32.mxu0 0.0
        %540 = vmatmul.mubr.f32.gmra.mrb[0].mxu0 %v255
        %v541 = vpop.f32.mrb[0].mxu0
        %v542 = vadd.f32 0.0, %v541
        %v543 = vpop.f32.mrb[0].mxu0
        %544 = vmatprep.mubr.f32.mxu0 0.0
        %545 = vmatmul.mubr.f32.gmra.mrb[0].mxu0 %v256
        %v546 = vpop.f32.mrb[0].mxu0
        %v547 = vadd.f32 0.0, %v546
        %v548 = vpop.f32.mrb[0].mxu0
        %549 = vmatprep.mubr.f32.mxu0 0.0
        %550 = vmatmul.mubr.f32.gmra.mrb[0].mxu0 %v257
        %v551 = vpop.f32.mrb[0].mxu0
        %v552 = vadd.f32 0.0, %v551
        %v553 = vpop.f32.mrb[0].mxu0
        %554 = vdwg.mxu0
        %v555 = vadd.f32 %v258, %v377
        %v556 = vadd.f32 %v259, %v382
        %v557 = vadd.f32 %v260, %v387
        %v558 = vadd.f32 %v261, %v392
        %v559 = vadd.f32 %v262, %v397
        %v560 = vadd.f32 %v263, %v402
        %v561 = vadd.f32 %v264, %v407
        %v562 = vadd.f32 %v265, %v412
        %v563 = vadd.f32 %v266, %v417
        %v564 = vadd.f32 %v267, %v422
        %v565 = vadd.f32 %v268, %v427
        %v566 = vadd.f32 %v269, %v432
        %v567 = vadd.f32 %v270, %v437
        %v568 = vadd.f32 %v271, %v442
        %v569 = vadd.f32 %v272, %v447
        %v570 = vadd.f32 %v273, %v452
        %v571 = vadd.f32 %v274, %v457
        %v572 = vadd.f32 %v275, %v462
        %v573 = vadd.f32 %v276, %v467
        %v574 = vadd.f32 %v277, %v472
        %v575 = vadd.f32 %v278, %v477
        %v576 = vadd.f32 %v279, %v482
        %v577 = vadd.f32 %v280, %v487
        %v578 = vadd.f32 %v281, %v492
        %v579 = vadd.f32 %v282, %v497
        %v580 = vadd.f32 %v283, %v502
        %v581 = vadd.f32 %v284, %v507
        %v582 = vadd.f32 %v285, %v512
        %v583 = vadd.f32 %v286, %v517
        %v584 = vadd.f32 %v287, %v522
        %v585 = vadd.f32 %v288, %v527
        %v586 = vadd.f32 %v289, %v532
        %v587 = vadd.f32 %v290, %v537
        %v588 = vadd.f32 %v291, %v542
        %v589 = vadd.f32 %v292, %v547
        %v590 = vadd.f32 %v293, %v552
        %591 = vst [vmem:[#allocation3] sm:$0xff] %v555
        %592 = vst [vmem:[#allocation3 + $0x8] sm:$0xff] %v556
        %593 = vst [vmem:[#allocation3 + $0x10] sm:$0xff] %v557
        %594 = vst [vmem:[#allocation3 + $0x18] sm:$0xff] %v558
        %595 = vst [vmem:[#allocation3 + $0x20] sm:$0xff] %v559
        %596 = vst [vmem:[#allocation3 + $0x28] sm:$0xff] %v560
        %597 = vst [vmem:[#allocation3 + $0x30] sm:$0xff] %v561
        %598 = vst [vmem:[#allocation3 + $0x38] sm:$0xff] %v562
        %599 = vst [vmem:[#allocation3 + $0x40] sm:$0xff] %v563
        %600 = vst [vmem:[#allocation3 + $0x48] sm:$0xff] %v564
        %601 = vst [vmem:[#allocation3 + $0x50] sm:$0xff] %v565
        %602 = vst [vmem:[#allocation3 + $0x58] sm:$0xff] %v566
        %603 = vst [vmem:[#allocation3 + $0x60] sm:$0xff] %v567
        %604 = vst [vmem:[#allocation3 + $0x68] sm:$0xff] %v568
        %605 = vst [vmem:[#allocation3 + $0x70] sm:$0xff] %v569
        %606 = vst [vmem:[#allocation3 + $0x78] sm:$0xff] %v570
        %607 = vst [vmem:[#allocation3 + $0x80] sm:$0xff] %v571
        %608 = vst [vmem:[#allocation3 + $0x88] sm:$0xff] %v572
        %609 = vst [vmem:[#allocation3 + $0x90] sm:$0xff] %v573
        %610 = vst [vmem:[#allocation3 + $0x98] sm:$0xff] %v574
        %611 = vst [vmem:[#allocation3 + $0xa0] sm:$0xff] %v575
        %612 = vst [vmem:[#allocation3 + $0xa8] sm:$0xff] %v576
        %613 = vst [vmem:[#allocation3 + $0xb0] sm:$0xff] %v577
        %614 = vst [vmem:[#allocation3 + $0xb8] sm:$0xff] %v578
        %615 = vst [vmem:[#allocation3 + $0xc0] sm:$0xff] %v579
        %616 = vst [vmem:[#allocation3 + $0xc8] sm:$0xff] %v580
        %617 = vst [vmem:[#allocation3 + $0xd0] sm:$0xff] %v581
        %618 = vst [vmem:[#allocation3 + $0xd8] sm:$0xff] %v582
        %619 = vst [vmem:[#allocation3 + $0xe0] sm:$0xff] %v583
        %620 = vst [vmem:[#allocation3 + $0xe8] sm:$0xff] %v584
        %621 = vst [vmem:[#allocation3 + $0xf0] sm:$0xff] %v585
        %622 = vst [vmem:[#allocation3 + $0xf8] sm:$0xff] %v586
        %623 = vst [vmem:[#allocation3 + $0x100] sm:$0xff] %v587
        %624 = vst [vmem:[#allocation3 + $0x108] sm:$0xff] %v588
        %625 = vst [vmem:[#allocation3 + $0x110] sm:$0xff] %v589
        %626 = vst [vmem:[#allocation3 + $0x118] sm:$0xff] %v590
        %v627 = vld [vmem:[#allocation2 + $0x1] sm:$0xff]
        %v628 = vld [vmem:[#allocation2 + $0x9] sm:$0xff]
        %v629 = vld [vmem:[#allocation2 + $0x11] sm:$0xff]
        %v630 = vld [vmem:[#allocation2 + $0x19] sm:$0xff]
        %v631 = vld [vmem:[#allocation2 + $0x21] sm:$0xff]
        %v632 = vld [vmem:[#allocation2 + $0x29] sm:$0xff]
        %v633 = vld [vmem:[#allocation2 + $0x31] sm:$0xff]
        %v634 = vld [vmem:[#allocation2 + $0x39] sm:$0xff]
        %v635 = vld [vmem:[#allocation2 + $0x41] sm:$0xff]
        %v636 = vld [vmem:[#allocation2 + $0x49] sm:$0xff]
        %v637 = vld [vmem:[#allocation2 + $0x51] sm:$0xff]
        %v638 = vld [vmem:[#allocation2 + $0x59] sm:$0xff]
        %v639 = vld [vmem:[#allocation2 + $0x61] sm:$0xff]
        %v640 = vld [vmem:[#allocation2 + $0x69] sm:$0xff]
        %v641 = vld [vmem:[#allocation2 + $0x71] sm:$0xff]
        %v642 = vld [vmem:[#allocation2 + $0x79] sm:$0xff]
        %v643 = vld [vmem:[#allocation2 + $0x81] sm:$0xff]
        %v644 = vld [vmem:[#allocation2 + $0x89] sm:$0xff]
        %v645 = vld [vmem:[#allocation2 + $0x91] sm:$0xff]
        %v646 = vld [vmem:[#allocation2 + $0x99] sm:$0xff]
        %v647 = vld [vmem:[#allocation2 + $0xa1] sm:$0xff]
        %v648 = vld [vmem:[#allocation2 + $0xa9] sm:$0xff]
        %v649 = vld [vmem:[#allocation2 + $0xb1] sm:$0xff]
        %v650 = vld [vmem:[#allocation2 + $0xb9] sm:$0xff]
        %v651 = vld [vmem:[#allocation2 + $0xc1] sm:$0xff]
        %v652 = vld [vmem:[#allocation2 + $0xc9] sm:$0xff]
        %v653 = vld [vmem:[#allocation2 + $0xd1] sm:$0xff]
        %v654 = vld [vmem:[#allocation2 + $0xd9] sm:$0xff]
        %v655 = vld [vmem:[#allocation2 + $0xe1] sm:$0xff]
        %v656 = vld [vmem:[#allocation2 + $0xe9] sm:$0xff]
        %v657 = vld [vmem:[#allocation2 + $0xf1] sm:$0xff]
        %v658 = vld [vmem:[#allocation2 + $0xf9] sm:$0xff]
        %v659 = vld [vmem:[#allocation2 + $0x101] sm:$0xff]
        %v660 = vld [vmem:[#allocation2 + $0x109] sm:$0xff]
        %v661 = vld [vmem:[#allocation2 + $0x111] sm:$0xff]
        %v662 = vld [vmem:[#allocation2 + $0x119] sm:$0xff]
        %v663 = vld [vmem:[#allocation3] sm:$0xff]
        %v664 = vld [vmem:[#allocation3 + $0x8] sm:$0xff]
        %v665 = vld [vmem:[#allocation3 + $0x10] sm:$0xff]
        %v666 = vld [vmem:[#allocation3 + $0x18] sm:$0xff]
        %v667 = vld [vmem:[#allocation3 + $0x20] sm:$0xff]
        %v668 = vld [vmem:[#allocation3 + $0x28] sm:$0xff]
        %v669 = vld [vmem:[#allocation3 + $0x30] sm:$0xff]
        %v670 = vld [vmem:[#allocation3 + $0x38] sm:$0xff]
        %v671 = vld [vmem:[#allocation3 + $0x40] sm:$0xff]
        %v672 = vld [vmem:[#allocation3 + $0x48] sm:$0xff]
        %v673 = vld [vmem:[#allocation3 + $0x50] sm:$0xff]
        %v674 = vld [vmem:[#allocation3 + $0x58] sm:$0xff]
        %v675 = vld [vmem:[#allocation3 + $0x60] sm:$0xff]
        %v676 = vld [vmem:[#allocation3 + $0x68] sm:$0xff]
        %v677 = vld [vmem:[#allocation3 + $0x70] sm:$0xff]
        %v678 = vld [vmem:[#allocation3 + $0x78] sm:$0xff]
        %v679 = vld [vmem:[#allocation3 + $0x80] sm:$0xff]
        %v680 = vld [vmem:[#allocation3 + $0x88] sm:$0xff]
        %v681 = vld [vmem:[#allocation3 + $0x90] sm:$0xff]
        %v682 = vld [vmem:[#allocation3 + $0x98] sm:$0xff]
        %v683 = vld [vmem:[#allocation3 + $0xa0] sm:$0xff]
        %v684 = vld [vmem:[#allocation3 + $0xa8] sm:$0xff]
        %v685 = vld [vmem:[#allocation3 + $0xb0] sm:$0xff]
        %v686 = vld [vmem:[#allocation3 + $0xb8] sm:$0xff]
        %v687 = vld [vmem:[#allocation3 + $0xc0] sm:$0xff]
        %v688 = vld [vmem:[#allocation3 + $0xc8] sm:$0xff]
        %v689 = vld [vmem:[#allocation3 + $0xd0] sm:$0xff]
        %v690 = vld [vmem:[#allocation3 + $0xd8] sm:$0xff]
        %v691 = vld [vmem:[#allocation3 + $0xe0] sm:$0xff]
        %v692 = vld [vmem:[#allocation3 + $0xe8] sm:$0xff]
        %v693 = vld [vmem:[#allocation3 + $0xf0] sm:$0xff]
        %v694 = vld [vmem:[#allocation3 + $0xf8] sm:$0xff]
        %v695 = vld [vmem:[#allocation3 + $0x100] sm:$0xff]
        %v696 = vld [vmem:[#allocation3 + $0x108] sm:$0xff]
        %v697 = vld [vmem:[#allocation3 + $0x110] sm:$0xff]
        %v698 = vld [vmem:[#allocation3 + $0x118] sm:$0xff]
        %s699 = scalar_lea.vmem [#allocation5], 128
        %v700 = vld [vmem:[%s699] sm:$0xff]
        %v701 = vld [vmem:[%s699 + $0x8] sm:$0xff]
        %v702 = vld [vmem:[%s699 + $0x10] sm:$0xff]
        %v703 = vld [vmem:[%s699 + $0x18] sm:$0xff]
        %v704 = vld [vmem:[%s699 + $0x20] sm:$0xff]
        %v705 = vld [vmem:[%s699 + $0x28] sm:$0xff]
        %v706 = vld [vmem:[%s699 + $0x30] sm:$0xff]
        %v707 = vld [vmem:[%s699 + $0x38] sm:$0xff]
        %v708 = vld [vmem:[%s699 + $0x40] sm:$0xff]
        %v709 = vld [vmem:[%s699 + $0x48] sm:$0xff]
        %v710 = vld [vmem:[%s699 + $0x50] sm:$0xff]
        %v711 = vld [vmem:[%s699 + $0x58] sm:$0xff]
        %v712 = vld [vmem:[%s699 + $0x60] sm:$0xff]
        %v713 = vld [vmem:[%s699 + $0x68] sm:$0xff]
        %v714 = vld [vmem:[%s699 + $0x70] sm:$0xff]
        %v715 = vld [vmem:[%s699 + $0x78] sm:$0xff]
        %716 = vmatprep.subr.mxu0 0.0
        %717 = vmatpush1.msra.mxu0 %v700
        %718 = vmatprep.subr.mxu0 0.0
        %719 = vmatpush1.msra.mxu0 %v701
        %720 = vmatprep.subr.mxu0 0.0
        %721 = vmatpush1.msra.mxu0 %v702
        %722 = vmatprep.subr.mxu0 0.0
        %723 = vmatpush1.msra.mxu0 %v703
        %724 = vmatprep.subr.mxu0 0.0
        %725 = vmatpush1.msra.mxu0 %v704
        %726 = vmatprep.subr.mxu0 0.0
        %727 = vmatpush1.msra.mxu0 %v705
        %728 = vmatprep.subr.mxu0 0.0
        %729 = vmatpush1.msra.mxu0 %v706
        %730 = vmatprep.subr.mxu0 0.0
        %731 = vmatpush1.msra.mxu0 %v707
        %732 = vmatprep.subr.mxu0 0.0
        %733 = vmatpush1.msra.mxu0 %v708
        %734 = vmatprep.subr.mxu0 0.0
        %735 = vmatpush1.msra.mxu0 %v709
        %736 = vmatprep.subr.mxu0 0.0
        %737 = vmatpush1.msra.mxu0 %v710
        %738 = vmatprep.subr.mxu0 0.0
        %739 = vmatpush1.msra.mxu0 %v711
        %740 = vmatprep.subr.mxu0 0.0
        %741 = vmatpush1.msra.mxu0 %v712
        %742 = vmatprep.subr.mxu0 0.0
        %743 = vmatpush1.msra.mxu0 %v713
        %744 = vmatprep.subr.mxu0 0.0
        %745 = vmatpush1.msra.mxu0 %v714
        %746 = vmatprep.subr.mxu0 0.0
        %747 = vmatpush1.msra.mxu0 %v715
        %748 = vmatprep.subr.mxu0 0.0
        %749 = vmatpush1.msra.mxu0 0.0
        %750 = vmatprep.subr.mxu0 0.0
        %751 = vmatpush1.msra.mxu0 0.0
        %752 = vmatprep.subr.mxu0 0.0
        %753 = vmatpush1.msra.mxu0 0.0
        %754 = vmatprep.subr.mxu0 0.0
        %755 = vmatpush1.msra.mxu0 0.0
        %756 = vmatprep.subr.mxu0 0.0
        %757 = vmatpush1.msra.mxu0 0.0
        %758 = vmatprep.subr.mxu0 0.0
        %759 = vmatpush1.msra.mxu0 0.0
        %760 = vmatprep.subr.mxu0 0.0
        %761 = vmatpush1.msra.mxu0 0.0
        %762 = vmatprep.subr.mxu0 0.0
        %763 = vmatpush1.msra.mxu0 0.0
        %764 = vmatprep.subr.mxu0 0.0
        %765 = vmatpush1.msra.mxu0 0.0
        %766 = vmatprep.subr.mxu0 0.0
        %767 = vmatpush1.msra.mxu0 0.0
        %768 = vmatprep.subr.mxu0 0.0
        %769 = vmatpush1.msra.mxu0 0.0
        %770 = vmatprep.subr.mxu0 0.0
        %771 = vmatpush1.msra.mxu0 0.0
        %772 = vmatprep.subr.mxu0 0.0
        %773 = vmatpush1.msra.mxu0 0.0
        %774 = vmatprep.subr.mxu0 0.0
        %775 = vmatpush1.msra.mxu0 0.0
        %776 = vmatprep.subr.mxu0 0.0
        %777 = vmatpush1.msra.mxu0 0.0
        %778 = vmatprep.subr.mxu0 0.0
        %779 = vmatpush1.msra.mxu0 0.0
        %780 = vmatprep.mubr.f32.mxu0 0.0
        %781 = vmatmul.mubr.f32.gmra.mrb[0].mxu0 %v627
        %v782 = vpop.f32.mrb[0].mxu0
        %v783 = vadd.f32 0.0, %v782
        %v784 = vpop.f32.mrb[0].mxu0
        %785 = vmatprep.mubr.f32.mxu0 0.0
        %786 = vmatmul.mubr.f32.gmra.mrb[0].mxu0 %v628
        %v787 = vpop.f32.mrb[0].mxu0
        %v788 = vadd.f32 0.0, %v787
        %v789 = vpop.f32.mrb[0].mxu0
        %790 = vmatprep.mubr.f32.mxu0 0.0
        %791 = vmatmul.mubr.f32.gmra.mrb[0].mxu0 %v629
        %v792 = vpop.f32.mrb[0].mxu0
        %v793 = vadd.f32 0.0, %v792
        %v794 = vpop.f32.mrb[0].mxu0
        %795 = vmatprep.mubr.f32.mxu0 0.0
        %796 = vmatmul.mubr.f32.gmra.mrb[0].mxu0 %v630
        %v797 = vpop.f32.mrb[0].mxu0
        %v798 = vadd.f32 0.0, %v797
        %v799 = vpop.f32.mrb[0].mxu0
        %800 = vmatprep.mubr.f32.mxu0 0.0
        %801 = vmatmul.mubr.f32.gmra.mrb[0].mxu0 %v631
        %v802 = vpop.f32.mrb[0].mxu0
        %v803 = vadd.f32 0.0, %v802
        %v804 = vpop.f32.mrb[0].mxu0
        %805 = vmatprep.mubr.f32.mxu0 0.0
        %806 = vmatmul.mubr.f32.gmra.mrb[0].mxu0 %v632
        %v807 = vpop.f32.mrb[0].mxu0
        %v808 = vadd.f32 0.0, %v807
        %v809 = vpop.f32.mrb[0].mxu0
        %810 = vmatprep.mubr.f32.mxu0 0.0
        %811 = vmatmul.mubr.f32.gmra.mrb[0].mxu0 %v633
        %v812 = vpop.f32.mrb[0].mxu0
        %v813 = vadd.f32 0.0, %v812
        %v814 = vpop.f32.mrb[0].mxu0
        %815 = vmatprep.mubr.f32.mxu0 0.0
        %816 = vmatmul.mubr.f32.gmra.mrb[0].mxu0 %v634
        %v817 = vpop.f32.mrb[0].mxu0
        %v818 = vadd.f32 0.0, %v817
        %v819 = vpop.f32.mrb[0].mxu0
        %820 = vmatprep.mubr.f32.mxu0 0.0
        %821 = vmatmul.mubr.f32.gmra.mrb[0].mxu0 %v635
        %v822 = vpop.f32.mrb[0].mxu0
        %v823 = vadd.f32 0.0, %v822
        %v824 = vpop.f32.mrb[0].mxu0
        %825 = vmatprep.mubr.f32.mxu0 0.0
        %826 = vmatmul.mubr.f32.gmra.mrb[0].mxu0 %v636
        %v827 = vpop.f32.mrb[0].mxu0
        %v828 = vadd.f32 0.0, %v827
        %v829 = vpop.f32.mrb[0].mxu0
        %830 = vmatprep.mubr.f32.mxu0 0.0
        %831 = vmatmul.mubr.f32.gmra.mrb[0].mxu0 %v637
        %v832 = vpop.f32.mrb[0].mxu0
        %v833 = vadd.f32 0.0, %v832
        %v834 = vpop.f32.mrb[0].mxu0
        %835 = vmatprep.mubr.f32.mxu0 0.0
        %836 = vmatmul.mubr.f32.gmra.mrb[0].mxu0 %v638
        %v837 = vpop.f32.mrb[0].mxu0
        %v838 = vadd.f32 0.0, %v837
        %v839 = vpop.f32.mrb[0].mxu0
        %840 = vmatprep.mubr.f32.mxu0 0.0
        %841 = vmatmul.mubr.f32.gmra.mrb[0].mxu0 %v639
        %v842 = vpop.f32.mrb[0].mxu0
        %v843 = vadd.f32 0.0, %v842
        %v844 = vpop.f32.mrb[0].mxu0
        %845 = vmatprep.mubr.f32.mxu0 0.0
        %846 = vmatmul.mubr.f32.gmra.mrb[0].mxu0 %v640
        %v847 = vpop.f32.mrb[0].mxu0
        %v848 = vadd.f32 0.0, %v847
        %v849 = vpop.f32.mrb[0].mxu0
        %850 = vmatprep.mubr.f32.mxu0 0.0
        %851 = vmatmul.mubr.f32.gmra.mrb[0].mxu0 %v641
        %v852 = vpop.f32.mrb[0].mxu0
        %v853 = vadd.f32 0.0, %v852
        %v854 = vpop.f32.mrb[0].mxu0
        %855 = vmatprep.mubr.f32.mxu0 0.0
        %856 = vmatmul.mubr.f32.gmra.mrb[0].mxu0 %v642
        %v857 = vpop.f32.mrb[0].mxu0
        %v858 = vadd.f32 0.0, %v857
        %v859 = vpop.f32.mrb[0].mxu0
        %860 = vmatprep.mubr.f32.mxu0 0.0
        %861 = vmatmul.mubr.f32.gmra.mrb[0].mxu0 %v643
        %v862 = vpop.f32.mrb[0].mxu0
        %v863 = vadd.f32 0.0, %v862
        %v864 = vpop.f32.mrb[0].mxu0
        %865 = vmatprep.mubr.f32.mxu0 0.0
        %866 = vmatmul.mubr.f32.gmra.mrb[0].mxu0 %v644
        %v867 = vpop.f32.mrb[0].mxu0
        %v868 = vadd.f32 0.0, %v867
        %v869 = vpop.f32.mrb[0].mxu0
        %870 = vmatprep.mubr.f32.mxu0 0.0
        %871 = vmatmul.mubr.f32.gmra.mrb[0].mxu0 %v645
        %v872 = vpop.f32.mrb[0].mxu0
        %v873 = vadd.f32 0.0, %v872
        %v874 = vpop.f32.mrb[0].mxu0
        %875 = vmatprep.mubr.f32.mxu0 0.0
        %876 = vmatmul.mubr.f32.gmra.mrb[0].mxu0 %v646
        %v877 = vpop.f32.mrb[0].mxu0
        %v878 = vadd.f32 0.0, %v877
        %v879 = vpop.f32.mrb[0].mxu0
        %880 = vmatprep.mubr.f32.mxu0 0.0
        %881 = vmatmul.mubr.f32.gmra.mrb[0].mxu0 %v647
        %v882 = vpop.f32.mrb[0].mxu0
        %v883 = vadd.f32 0.0, %v882
        %v884 = vpop.f32.mrb[0].mxu0
        %885 = vmatprep.mubr.f32.mxu0 0.0
        %886 = vmatmul.mubr.f32.gmra.mrb[0].mxu0 %v648
        %v887 = vpop.f32.mrb[0].mxu0
        %v888 = vadd.f32 0.0, %v887
        %v889 = vpop.f32.mrb[0].mxu0
        %890 = vmatprep.mubr.f32.mxu0 0.0
        %891 = vmatmul.mubr.f32.gmra.mrb[0].mxu0 %v649
        %v892 = vpop.f32.mrb[0].mxu0
        %v893 = vadd.f32 0.0, %v892
        %v894 = vpop.f32.mrb[0].mxu0
        %895 = vmatprep.mubr.f32.mxu0 0.0
        %896 = vmatmul.mubr.f32.gmra.mrb[0].mxu0 %v650
        %v897 = vpop.f32.mrb[0].mxu0
        %v898 = vadd.f32 0.0, %v897
        %v899 = vpop.f32.mrb[0].mxu0
        %900 = vmatprep.mubr.f32.mxu0 0.0
        %901 = vmatmul.mubr.f32.gmra.mrb[0].mxu0 %v651
        %v902 = vpop.f32.mrb[0].mxu0
        %v903 = vadd.f32 0.0, %v902
        %v904 = vpop.f32.mrb[0].mxu0
        %905 = vmatprep.mubr.f32.mxu0 0.0
        %906 = vmatmul.mubr.f32.gmra.mrb[0].mxu0 %v652
        %v907 = vpop.f32.mrb[0].mxu0
        %v908 = vadd.f32 0.0, %v907
        %v909 = vpop.f32.mrb[0].mxu0
        %910 = vmatprep.mubr.f32.mxu0 0.0
        %911 = vmatmul.mubr.f32.gmra.mrb[0].mxu0 %v653
        %v912 = vpop.f32.mrb[0].mxu0
        %v913 = vadd.f32 0.0, %v912
        %v914 = vpop.f32.mrb[0].mxu0
        %915 = vmatprep.mubr.f32.mxu0 0.0
        %916 = vmatmul.mubr.f32.gmra.mrb[0].mxu0 %v654
        %v917 = vpop.f32.mrb[0].mxu0
        %v918 = vadd.f32 0.0, %v917
        %v919 = vpop.f32.mrb[0].mxu0
        %920 = vmatprep.mubr.f32.mxu0 0.0
        %921 = vmatmul.mubr.f32.gmra.mrb[0].mxu0 %v655
        %v922 = vpop.f32.mrb[0].mxu0
        %v923 = vadd.f32 0.0, %v922
        %v924 = vpop.f32.mrb[0].mxu0
        %925 = vmatprep.mubr.f32.mxu0 0.0
        %926 = vmatmul.mubr.f32.gmra.mrb[0].mxu0 %v656
        %v927 = vpop.f32.mrb[0].mxu0
        %v928 = vadd.f32 0.0, %v927
        %v929 = vpop.f32.mrb[0].mxu0
        %930 = vmatprep.mubr.f32.mxu0 0.0
        %931 = vmatmul.mubr.f32.gmra.mrb[0].mxu0 %v657
        %v932 = vpop.f32.mrb[0].mxu0
        %v933 = vadd.f32 0.0, %v932
        %v934 = vpop.f32.mrb[0].mxu0
        %935 = vmatprep.mubr.f32.mxu0 0.0
        %936 = vmatmul.mubr.f32.gmra.mrb[0].mxu0 %v658
        %v937 = vpop.f32.mrb[0].mxu0
        %v938 = vadd.f32 0.0, %v937
        %v939 = vpop.f32.mrb[0].mxu0
        %940 = vmatprep.mubr.f32.mxu0 0.0
        %941 = vmatmul.mubr.f32.gmra.mrb[0].mxu0 %v659
        %v942 = vpop.f32.mrb[0].mxu0
        %v943 = vadd.f32 0.0, %v942
        %v944 = vpop.f32.mrb[0].mxu0
        %945 = vmatprep.mubr.f32.mxu0 0.0
        %946 = vmatmul.mubr.f32.gmra.mrb[0].mxu0 %v660
        %v947 = vpop.f32.mrb[0].mxu0
        %v948 = vadd.f32 0.0, %v947
        %v949 = vpop.f32.mrb[0].mxu0
        %950 = vmatprep.mubr.f32.mxu0 0.0
        %951 = vmatmul.mubr.f32.gmra.mrb[0].mxu0 %v661
        %v952 = vpop.f32.mrb[0].mxu0
        %v953 = vadd.f32 0.0, %v952
        %v954 = vpop.f32.mrb[0].mxu0
        %955 = vmatprep.mubr.f32.mxu0 0.0
        %956 = vmatmul.mubr.f32.gmra.mrb[0].mxu0 %v662
        %v957 = vpop.f32.mrb[0].mxu0
        %v958 = vadd.f32 0.0, %v957
        %v959 = vpop.f32.mrb[0].mxu0
        %960 = vdwg.mxu0
        %v961 = vadd.f32 %v663, %v783
        %v962 = vadd.f32 %v664, %v788
        %v963 = vadd.f32 %v665, %v793
        %v964 = vadd.f32 %v666, %v798
        %v965 = vadd.f32 %v667, %v803
        %v966 = vadd.f32 %v668, %v808
        %v967 = vadd.f32 %v669, %v813
        %v968 = vadd.f32 %v670, %v818
        %v969 = vadd.f32 %v671, %v823
        %v970 = vadd.f32 %v672, %v828
        %v971 = vadd.f32 %v673, %v833
        %v972 = vadd.f32 %v674, %v838
        %v973 = vadd.f32 %v675, %v843
        %v974 = vadd.f32 %v676, %v848
        %v975 = vadd.f32 %v677, %v853
        %v976 = vadd.f32 %v678, %v858
        %v977 = vadd.f32 %v679, %v863
        %v978 = vadd.f32 %v680, %v868
        %v979 = vadd.f32 %v681, %v873
        %v980 = vadd.f32 %v682, %v878
        %v981 = vadd.f32 %v683, %v883
        %v982 = vadd.f32 %v684, %v888
        %v983 = vadd.f32 %v685, %v893
        %v984 = vadd.f32 %v686, %v898
        %v985 = vadd.f32 %v687, %v903
        %v986 = vadd.f32 %v688, %v908
        %v987 = vadd.f32 %v689, %v913
        %v988 = vadd.f32 %v690, %v918
        %v989 = vadd.f32 %v691, %v923
        %v990 = vadd.f32 %v692, %v928
        %v991 = vadd.f32 %v693, %v933
        %v992 = vadd.f32 %v694, %v938
        %v993 = vadd.f32 %v695, %v943
        %v994 = vadd.f32 %v696, %v948
        %v995 = vadd.f32 %v697, %v953
        %v996 = vadd.f32 %v698, %v958
        %997 = vst [vmem:[#allocation3] sm:$0xff] %v961
        %998 = vst [vmem:[#allocation3 + $0x8] sm:$0xff] %v962
        %999 = vst [vmem:[#allocation3 + $0x10] sm:$0xff] %v963
        %1000 = vst [vmem:[#allocation3 + $0x18] sm:$0xff] %v964
        %1001 = vst [vmem:[#allocation3 + $0x20] sm:$0xff] %v965
        %1002 = vst [vmem:[#allocation3 + $0x28] sm:$0xff] %v966
        %1003 = vst [vmem:[#allocation3 + $0x30] sm:$0xff] %v967
        %1004 = vst [vmem:[#allocation3 + $0x38] sm:$0xff] %v968
        %1005 = vst [vmem:[#allocation3 + $0x40] sm:$0xff] %v969
        %1006 = vst [vmem:[#allocation3 + $0x48] sm:$0xff] %v970
        %1007 = vst [vmem:[#allocation3 + $0x50] sm:$0xff] %v971
        %1008 = vst [vmem:[#allocation3 + $0x58] sm:$0xff] %v972
        %1009 = vst [vmem:[#allocation3 + $0x60] sm:$0xff] %v973
        %1010 = vst [vmem:[#allocation3 + $0x68] sm:$0xff] %v974
        %1011 = vst [vmem:[#allocation3 + $0x70] sm:$0xff] %v975
        %1012 = vst [vmem:[#allocation3 + $0x78] sm:$0xff] %v976
        %1013 = vst [vmem:[#allocation3 + $0x80] sm:$0xff] %v977
        %1014 = vst [vmem:[#allocation3 + $0x88] sm:$0xff] %v978
        %1015 = vst [vmem:[#allocation3 + $0x90] sm:$0xff] %v979
        %1016 = vst [vmem:[#allocation3 + $0x98] sm:$0xff] %v980
        %1017 = vst [vmem:[#allocation3 + $0xa0] sm:$0xff] %v981
        %1018 = vst [vmem:[#allocation3 + $0xa8] sm:$0xff] %v982
        %1019 = vst [vmem:[#allocation3 + $0xb0] sm:$0xff] %v983
        %1020 = vst [vmem:[#allocation3 + $0xb8] sm:$0xff] %v984
        %1021 = vst [vmem:[#allocation3 + $0xc0] sm:$0xff] %v985
        %1022 = vst [vmem:[#allocation3 + $0xc8] sm:$0xff] %v986
        %1023 = vst [vmem:[#allocation3 + $0xd0] sm:$0xff] %v987
        %1024 = vst [vmem:[#allocation3 + $0xd8] sm:$0xff] %v988
        %1025 = vst [vmem:[#allocation3 + $0xe0] sm:$0xff] %v989
        %1026 = vst [vmem:[#allocation3 + $0xe8] sm:$0xff] %v990
        %1027 = vst [vmem:[#allocation3 + $0xf0] sm:$0xff] %v991
        %1028 = vst [vmem:[#allocation3 + $0xf8] sm:$0xff] %v992
        %1029 = vst [vmem:[#allocation3 + $0x100] sm:$0xff] %v993
        %1030 = vst [vmem:[#allocation3 + $0x108] sm:$0xff] %v994
        %1031 = vst [vmem:[#allocation3 + $0x110] sm:$0xff] %v995
        %1032 = vst [vmem:[#allocation3 + $0x118] sm:$0xff] %v996
        %v1033 = vld [vmem:[#allocation2 + $0x2] sm:$0xff]
        %v1034 = vld [vmem:[#allocation2 + $0xa] sm:$0xff]
        %v1035 = vld [vmem:[#allocation2 + $0x12] sm:$0xff]
        %v1036 = vld [vmem:[#allocation2 + $0x1a] sm:$0xff]
        %v1037 = vld [vmem:[#allocation2 + $0x22] sm:$0xff]
        %v1038 = vld [vmem:[#allocation2 + $0x2a] sm:$0xff]
        %v1039 = vld [vmem:[#allocation2 + $0x32] sm:$0xff]
        %v1040 = vld [vmem:[#allocation2 + $0x3a] sm:$0xff]
        %v1041 = vld [vmem:[#allocation2 + $0x42] sm:$0xff]
        %v1042 = vld [vmem:[#allocation2 + $0x4a] sm:$0xff]
        %v1043 = vld [vmem:[#allocation2 + $0x52] sm:$0xff]
        %v1044 = vld [vmem:[#allocation2 + $0x5a] sm:$0xff]
        %v1045 = vld [vmem:[#allocation2 + $0x62] sm:$0xff]
        %v1046 = vld [vmem:[#allocation2 + $0x6a] sm:$0xff]
        %v1047 = vld [vmem:[#allocation2 + $0x72] sm:$0xff]
        %v1048 = vld [vmem:[#allocation2 + $0x7a] sm:$0xff]
        %v1049 = vld [vmem:[#allocation2 + $0x82] sm:$0xff]
        %v1050 = vld [vmem:[#allocation2 + $0x8a] sm:$0xff]
        %v1051 = vld [vmem:[#allocation2 + $0x92] sm:$0xff]
        %v1052 = vld [vmem:[#allocation2 + $0x9a] sm:$0xff]
        %v1053 = vld [vmem:[#allocation2 + $0xa2] sm:$0xff]
        %v1054 = vld [vmem:[#allocation2 + $0xaa] sm:$0xff]
        %v1055 = vld [vmem:[#allocation2 + $0xb2] sm:$0xff]
        %v1056 = vld [vmem:[#allocation2 + $0xba] sm:$0xff]
        %v1057 = vld [vmem:[#allocation2 + $0xc2] sm:$0xff]
        %v1058 = vld [vmem:[#allocation2 + $0xca] sm:$0xff]
        %v1059 = vld [vmem:[#allocation2 + $0xd2] sm:$0xff]
        %v1060 = vld [vmem:[#allocation2 + $0xda] sm:$0xff]
        %v1061 = vld [vmem:[#allocation2 + $0xe2] sm:$0xff]
        %v1062 = vld [vmem:[#allocation2 + $0xea] sm:$0xff]
        %v1063 = vld [vmem:[#allocation2 + $0xf2] sm:$0xff]
        %v1064 = vld [vmem:[#allocation2 + $0xfa] sm:$0xff]
        %v1065 = vld [vmem:[#allocation2 + $0x102] sm:$0xff]
        %v1066 = vld [vmem:[#allocation2 + $0x10a] sm:$0xff]
        %v1067 = vld [vmem:[#allocation2 + $0x112] sm:$0xff]
        %v1068 = vld [vmem:[#allocation2 + $0x11a] sm:$0xff]
        %v1069 = vld [vmem:[#allocation3] sm:$0xff]
        %v1070 = vld [vmem:[#allocation3 + $0x8] sm:$0xff]
        %v1071 = vld [vmem:[#allocation3 + $0x10] sm:$0xff]
        %v1072 = vld [vmem:[#allocation3 + $0x18] sm:$0xff]
        %v1073 = vld [vmem:[#allocation3 + $0x20] sm:$0xff]
        %v1074 = vld [vmem:[#allocation3 + $0x28] sm:$0xff]
        %v1075 = vld [vmem:[#allocation3 + $0x30] sm:$0xff]
        %v1076 = vld [vmem:[#allocation3 + $0x38] sm:$0xff]
        %v1077 = vld [vmem:[#allocation3 + $0x40] sm:$0xff]
        %v1078 = vld [vmem:[#allocation3 + $0x48] sm:$0xff]
        %v1079 = vld [vmem:[#allocation3 + $0x50] sm:$0xff]
        %v1080 = vld [vmem:[#allocation3 + $0x58] sm:$0xff]
        %v1081 = vld [vmem:[#allocation3 + $0x60] sm:$0xff]
        %v1082 = vld [vmem:[#allocation3 + $0x68] sm:$0xff]
        %v1083 = vld [vmem:[#allocation3 + $0x70] sm:$0xff]
        %v1084 = vld [vmem:[#allocation3 + $0x78] sm:$0xff]
        %v1085 = vld [vmem:[#allocation3 + $0x80] sm:$0xff]
        %v1086 = vld [vmem:[#allocation3 + $0x88] sm:$0xff]
        %v1087 = vld [vmem:[#allocation3 + $0x90] sm:$0xff]
        %v1088 = vld [vmem:[#allocation3 + $0x98] sm:$0xff]
        %v1089 = vld [vmem:[#allocation3 + $0xa0] sm:$0xff]
        %v1090 = vld [vmem:[#allocation3 + $0xa8] sm:$0xff]
        %v1091 = vld [vmem:[#allocation3 + $0xb0] sm:$0xff]
        %v1092 = vld [vmem:[#allocation3 + $0xb8] sm:$0xff]
        %v1093 = vld [vmem:[#allocation3 + $0xc0] sm:$0xff]
        %v1094 = vld [vmem:[#allocation3 + $0xc8] sm:$0xff]
        %v1095 = vld [vmem:[#allocation3 + $0xd0] sm:$0xff]
        %v1096 = vld [vmem:[#allocation3 + $0xd8] sm:$0xff]
        %v1097 = vld [vmem:[#allocation3 + $0xe0] sm:$0xff]
        %v1098 = vld [vmem:[#allocation3 + $0xe8] sm:$0xff]
        %v1099 = vld [vmem:[#allocation3 + $0xf0] sm:$0xff]
        %v1100 = vld [vmem:[#allocation3 + $0xf8] sm:$0xff]
        %v1101 = vld [vmem:[#allocation3 + $0x100] sm:$0xff]
        %v1102 = vld [vmem:[#allocation3 + $0x108] sm:$0xff]
        %v1103 = vld [vmem:[#allocation3 + $0x110] sm:$0xff]
        %v1104 = vld [vmem:[#allocation3 + $0x118] sm:$0xff]
        %s1105 = scalar_lea.vmem [#allocation5], 256
        %v1106 = vld [vmem:[%s1105] sm:$0xff]
        %v1107 = vld [vmem:[%s1105 + $0x8] sm:$0xff]
        %v1108 = vld [vmem:[%s1105 + $0x10] sm:$0xff]
        %v1109 = vld [vmem:[%s1105 + $0x18] sm:$0xff]
        %v1110 = vld [vmem:[%s1105 + $0x20] sm:$0xff]
        %v1111 = vld [vmem:[%s1105 + $0x28] sm:$0xff]
        %v1112 = vld [vmem:[%s1105 + $0x30] sm:$0xff]
        %v1113 = vld [vmem:[%s1105 + $0x38] sm:$0xff]
        %v1114 = vld [vmem:[%s1105 + $0x40] sm:$0xff]
        %v1115 = vld [vmem:[%s1105 + $0x48] sm:$0xff]
        %v1116 = vld [vmem:[%s1105 + $0x50] sm:$0xff]
        %v1117 = vld [vmem:[%s1105 + $0x58] sm:$0xff]
        %v1118 = vld [vmem:[%s1105 + $0x60] sm:$0xff]
        %v1119 = vld [vmem:[%s1105 + $0x68] sm:$0xff]
        %v1120 = vld [vmem:[%s1105 + $0x70] sm:$0xff]
        %v1121 = vld [vmem:[%s1105 + $0x78] sm:$0xff]
        %1122 = vmatprep.subr.mxu0 0.0
        %1123 = vmatpush1.msra.mxu0 %v1106
        %1124 = vmatprep.subr.mxu0 0.0
        %1125 = vmatpush1.msra.mxu0 %v1107
        %1126 = vmatprep.subr.mxu0 0.0
        %1127 = vmatpush1.msra.mxu0 %v1108
        %1128 = vmatprep.subr.mxu0 0.0
        %1129 = vmatpush1.msra.mxu0 %v1109
        %1130 = vmatprep.subr.mxu0 0.0
        %1131 = vmatpush1.msra.mxu0 %v1110
        %1132 = vmatprep.subr.mxu0 0.0
        %1133 = vmatpush1.msra.mxu0 %v1111
        %1134 = vmatprep.subr.mxu0 0.0
        %1135 = vmatpush1.msra.mxu0 %v1112
        %1136 = vmatprep.subr.mxu0 0.0
        %1137 = vmatpush1.msra.mxu0 %v1113
        %1138 = vmatprep.subr.mxu0 0.0
        %1139 = vmatpush1.msra.mxu0 %v1114
        %1140 = vmatprep.subr.mxu0 0.0
        %1141 = vmatpush1.msra.mxu0 %v1115
        %1142 = vmatprep.subr.mxu0 0.0
        %1143 = vmatpush1.msra.mxu0 %v1116
        %1144 = vmatprep.subr.mxu0 0.0
        %1145 = vmatpush1.msra.mxu0 %v1117
        %1146 = vmatprep.subr.mxu0 0.0
        %1147 = vmatpush1.msra.mxu0 %v1118
        %1148 = vmatprep.subr.mxu0 0.0
        %1149 = vmatpush1.msra.mxu0 %v1119
        %1150 = vmatprep.subr.mxu0 0.0
        %1151 = vmatpush1.msra.mxu0 %v1120
        %1152 = vmatprep.subr.mxu0 0.0
        %1153 = vmatpush1.msra.mxu0 %v1121
        %1154 = vmatprep.subr.mxu0 0.0
        %1155 = vmatpush1.msra.mxu0 0.0
        %1156 = vmatprep.subr.mxu0 0.0
        %1157 = vmatpush1.msra.mxu0 0.0
        %1158 = vmatprep.subr.mxu0 0.0
        %1159 = vmatpush1.msra.mxu0 0.0
        %1160 = vmatprep.subr.mxu0 0.0
        %1161 = vmatpush1.msra.mxu0 0.0
        %1162 = vmatprep.subr.mxu0 0.0
        %1163 = vmatpush1.msra.mxu0 0.0
        %1164 = vmatprep.subr.mxu0 0.0
        %1165 = vmatpush1.msra.mxu0 0.0
        %1166 = vmatprep.subr.mxu0 0.0
        %1167 = vmatpush1.msra.mxu0 0.0
        %1168 = vmatprep.subr.mxu0 0.0
        %1169 = vmatpush1.msra.mxu0 0.0
        %1170 = vmatprep.subr.mxu0 0.0
        %1171 = vmatpush1.msra.mxu0 0.0
        %1172 = vmatprep.subr.mxu0 0.0
        %1173 = vmatpush1.msra.mxu0 0.0
        %1174 = vmatprep.subr.mxu0 0.0
        %1175 = vmatpush1.msra.mxu0 0.0
        %1176 = vmatprep.subr.mxu0 0.0
        %1177 = vmatpush1.msra.mxu0 0.0
        %1178 = vmatprep.subr.mxu0 0.0
        %1179 = vmatpush1.msra.mxu0 0.0
        %1180 = vmatprep.subr.mxu0 0.0
        %1181 = vmatpush1.msra.mxu0 0.0
        %1182 = vmatprep.subr.mxu0 0.0
        %1183 = vmatpush1.msra.mxu0 0.0
        %1184 = vmatprep.subr.mxu0 0.0
        %1185 = vmatpush1.msra.mxu0 0.0
        %1186 = vmatprep.mubr.f32.mxu0 0.0
        %1187 = vmatmul.mubr.f32.gmra.mrb[0].mxu0 %v1033
        %v1188 = vpop.f32.mrb[0].mxu0
        %v1189 = vadd.f32 0.0, %v1188
        %v1190 = vpop.f32.mrb[0].mxu0
        %1191 = vmatprep.mubr.f32.mxu0 0.0
        %1192 = vmatmul.mubr.f32.gmra.mrb[0].mxu0 %v1034
        %v1193 = vpop.f32.mrb[0].mxu0
        %v1194 = vadd.f32 0.0, %v1193
        %v1195 = vpop.f32.mrb[0].mxu0
        %1196 = vmatprep.mubr.f32.mxu0 0.0
        %1197 = vmatmul.mubr.f32.gmra.mrb[0].mxu0 %v1035
        %v1198 = vpop.f32.mrb[0].mxu0
        %v1199 = vadd.f32 0.0, %v1198
        %v1200 = vpop.f32.mrb[0].mxu0
        %1201 = vmatprep.mubr.f32.mxu0 0.0
        %1202 = vmatmul.mubr.f32.gmra.mrb[0].mxu0 %v1036
        %v1203 = vpop.f32.mrb[0].mxu0
        %v1204 = vadd.f32 0.0, %v1203
        %v1205 = vpop.f32.mrb[0].mxu0
        %1206 = vmatprep.mubr.f32.mxu0 0.0
        %1207 = vmatmul.mubr.f32.gmra.mrb[0].mxu0 %v1037
        %v1208 = vpop.f32.mrb[0].mxu0
        %v1209 = vadd.f32 0.0, %v1208
        %v1210 = vpop.f32.mrb[0].mxu0
        %1211 = vmatprep.mubr.f32.mxu0 0.0
        %1212 = vmatmul.mubr.f32.gmra.mrb[0].mxu0 %v1038
        %v1213 = vpop.f32.mrb[0].mxu0
        %v1214 = vadd.f32 0.0, %v1213
        %v1215 = vpop.f32.mrb[0].mxu0
        %1216 = vmatprep.mubr.f32.mxu0 0.0
        %1217 = vmatmul.mubr.f32.gmra.mrb[0].mxu0 %v1039
        %v1218 = vpop.f32.mrb[0].mxu0
        %v1219 = vadd.f32 0.0, %v1218
        %v1220 = vpop.f32.mrb[0].mxu0
        %1221 = vmatprep.mubr.f32.mxu0 0.0
        %1222 = vmatmul.mubr.f32.gmra.mrb[0].mxu0 %v1040
        %v1223 = vpop.f32.mrb[0].mxu0
        %v1224 = vadd.f32 0.0, %v1223
        %v1225 = vpop.f32.mrb[0].mxu0
        %1226 = vmatprep.mubr.f32.mxu0 0.0
        %1227 = vmatmul.mubr.f32.gmra.mrb[0].mxu0 %v1041
        %v1228 = vpop.f32.mrb[0].mxu0
        %v1229 = vadd.f32 0.0, %v1228
        %v1230 = vpop.f32.mrb[0].mxu0
        %1231 = vmatprep.mubr.f32.mxu0 0.0
        %1232 = vmatmul.mubr.f32.gmra.mrb[0].mxu0 %v1042
        %v1233 = vpop.f32.mrb[0].mxu0
        %v1234 = vadd.f32 0.0, %v1233
        %v1235 = vpop.f32.mrb[0].mxu0
        %1236 = vmatprep.mubr.f32.mxu0 0.0
        %1237 = vmatmul.mubr.f32.gmra.mrb[0].mxu0 %v1043
        %v1238 = vpop.f32.mrb[0].mxu0
        %v1239 = vadd.f32 0.0, %v1238
        %v1240 = vpop.f32.mrb[0].mxu0
        %1241 = vmatprep.mubr.f32.mxu0 0.0
        %1242 = vmatmul.mubr.f32.gmra.mrb[0].mxu0 %v1044
        %v1243 = vpop.f32.mrb[0].mxu0
        %v1244 = vadd.f32 0.0, %v1243
        %v1245 = vpop.f32.mrb[0].mxu0
        %1246 = vmatprep.mubr.f32.mxu0 0.0
        %1247 = vmatmul.mubr.f32.gmra.mrb[0].mxu0 %v1045
        %v1248 = vpop.f32.mrb[0].mxu0
        %v1249 = vadd.f32 0.0, %v1248
        %v1250 = vpop.f32.mrb[0].mxu0
        %1251 = vmatprep.mubr.f32.mxu0 0.0
        %1252 = vmatmul.mubr.f32.gmra.mrb[0].mxu0 %v1046
        %v1253 = vpop.f32.mrb[0].mxu0
        %v1254 = vadd.f32 0.0, %v1253
        %v1255 = vpop.f32.mrb[0].mxu0
        %1256 = vmatprep.mubr.f32.mxu0 0.0
        %1257 = vmatmul.mubr.f32.gmra.mrb[0].mxu0 %v1047
        %v1258 = vpop.f32.mrb[0].mxu0
        %v1259 = vadd.f32 0.0, %v1258
        %v1260 = vpop.f32.mrb[0].mxu0
        %1261 = vmatprep.mubr.f32.mxu0 0.0
        %1262 = vmatmul.mubr.f32.gmra.mrb[0].mxu0 %v1048
        %v1263 = vpop.f32.mrb[0].mxu0
        %v1264 = vadd.f32 0.0, %v1263
        %v1265 = vpop.f32.mrb[0].mxu0
        %1266 = vmatprep.mubr.f32.mxu0 0.0
        %1267 = vmatmul.mubr.f32.gmra.mrb[0].mxu0 %v1049
        %v1268 = vpop.f32.mrb[0].mxu0
        %v1269 = vadd.f32 0.0, %v1268
        %v1270 = vpop.f32.mrb[0].mxu0
        %1271 = vmatprep.mubr.f32.mxu0 0.0
        %1272 = vmatmul.mubr.f32.gmra.mrb[0].mxu0 %v1050
        %v1273 = vpop.f32.mrb[0].mxu0
        %v1274 = vadd.f32 0.0, %v1273
        %v1275 = vpop.f32.mrb[0].mxu0
        %1276 = vmatprep.mubr.f32.mxu0 0.0
        %1277 = vmatmul.mubr.f32.gmra.mrb[0].mxu0 %v1051
        %v1278 = vpop.f32.mrb[0].mxu0
        %v1279 = vadd.f32 0.0, %v1278
        %v1280 = vpop.f32.mrb[0].mxu0
        %1281 = vmatprep.mubr.f32.mxu0 0.0
        %1282 = vmatmul.mubr.f32.gmra.mrb[0].mxu0 %v1052
        %v1283 = vpop.f32.mrb[0].mxu0
        %v1284 = vadd.f32 0.0, %v1283
        %v1285 = vpop.f32.mrb[0].mxu0
        %1286 = vmatprep.mubr.f32.mxu0 0.0
        %1287 = vmatmul.mubr.f32.gmra.mrb[0].mxu0 %v1053
        %v1288 = vpop.f32.mrb[0].mxu0
        %v1289 = vadd.f32 0.0, %v1288
        %v1290 = vpop.f32.mrb[0].mxu0
        %1291 = vmatprep.mubr.f32.mxu0 0.0
        %1292 = vmatmul.mubr.f32.gmra.mrb[0].mxu0 %v1054
        %v1293 = vpop.f32.mrb[0].mxu0
        %v1294 = vadd.f32 0.0, %v1293
        %v1295 = vpop.f32.mrb[0].mxu0
        %1296 = vmatprep.mubr.f32.mxu0 0.0
        %1297 = vmatmul.mubr.f32.gmra.mrb[0].mxu0 %v1055
        %v1298 = vpop.f32.mrb[0].mxu0
        %v1299 = vadd.f32 0.0, %v1298
        %v1300 = vpop.f32.mrb[0].mxu0
        %1301 = vmatprep.mubr.f32.mxu0 0.0
        %1302 = vmatmul.mubr.f32.gmra.mrb[0].mxu0 %v1056
        %v1303 = vpop.f32.mrb[0].mxu0
        %v1304 = vadd.f32 0.0, %v1303
        %v1305 = vpop.f32.mrb[0].mxu0
        %1306 = vmatprep.mubr.f32.mxu0 0.0
        %1307 = vmatmul.mubr.f32.gmra.mrb[0].mxu0 %v1057
        %v1308 = vpop.f32.mrb[0].mxu0
        %v1309 = vadd.f32 0.0, %v1308
        %v1310 = vpop.f32.mrb[0].mxu0
        %1311 = vmatprep.mubr.f32.mxu0 0.0
        %1312 = vmatmul.mubr.f32.gmra.mrb[0].mxu0 %v1058
        %v1313 = vpop.f32.mrb[0].mxu0
        %v1314 = vadd.f32 0.0, %v1313
        %v1315 = vpop.f32.mrb[0].mxu0
        %1316 = vmatprep.mubr.f32.mxu0 0.0
        %1317 = vmatmul.mubr.f32.gmra.mrb[0].mxu0 %v1059
        %v1318 = vpop.f32.mrb[0].mxu0
        %v1319 = vadd.f32 0.0, %v1318
        %v1320 = vpop.f32.mrb[0].mxu0
        %1321 = vmatprep.mubr.f32.mxu0 0.0
        %1322 = vmatmul.mubr.f32.gmra.mrb[0].mxu0 %v1060
        %v1323 = vpop.f32.mrb[0].mxu0
        %v1324 = vadd.f32 0.0, %v1323
        %v1325 = vpop.f32.mrb[0].mxu0
        %1326 = vmatprep.mubr.f32.mxu0 0.0
        %1327 = vmatmul.mubr.f32.gmra.mrb[0].mxu0 %v1061
        %v1328 = vpop.f32.mrb[0].mxu0
        %v1329 = vadd.f32 0.0, %v1328
        %v1330 = vpop.f32.mrb[0].mxu0
        %1331 = vmatprep.mubr.f32.mxu0 0.0
        %1332 = vmatmul.mubr.f32.gmra.mrb[0].mxu0 %v1062
        %v1333 = vpop.f32.mrb[0].mxu0
        %v1334 = vadd.f32 0.0, %v1333
        %v1335 = vpop.f32.mrb[0].mxu0
        %1336 = vmatprep.mubr.f32.mxu0 0.0
        %1337 = vmatmul.mubr.f32.gmra.mrb[0].mxu0 %v1063
        %v1338 = vpop.f32.mrb[0].mxu0
        %v1339 = vadd.f32 0.0, %v1338
        %v1340 = vpop.f32.mrb[0].mxu0
        %1341 = vmatprep.mubr.f32.mxu0 0.0
        %1342 = vmatmul.mubr.f32.gmra.mrb[0].mxu0 %v1064
        %v1343 = vpop.f32.mrb[0].mxu0
        %v1344 = vadd.f32 0.0, %v1343
        %v1345 = vpop.f32.mrb[0].mxu0
        %1346 = vmatprep.mubr.f32.mxu0 0.0
        %1347 = vmatmul.mubr.f32.gmra.mrb[0].mxu0 %v1065
        %v1348 = vpop.f32.mrb[0].mxu0
        %v1349 = vadd.f32 0.0, %v1348
        %v1350 = vpop.f32.mrb[0].mxu0
        %1351 = vmatprep.mubr.f32.mxu0 0.0
        %1352 = vmatmul.mubr.f32.gmra.mrb[0].mxu0 %v1066
        %v1353 = vpop.f32.mrb[0].mxu0
        %v1354 = vadd.f32 0.0, %v1353
        %v1355 = vpop.f32.mrb[0].mxu0
        %1356 = vmatprep.mubr.f32.mxu0 0.0
        %1357 = vmatmul.mubr.f32.gmra.mrb[0].mxu0 %v1067
        %v1358 = vpop.f32.mrb[0].mxu0
        %v1359 = vadd.f32 0.0, %v1358
        %v1360 = vpop.f32.mrb[0].mxu0
        %1361 = vmatprep.mubr.f32.mxu0 0.0
        %1362 = vmatmul.mubr.f32.gmra.mrb[0].mxu0 %v1068
        %v1363 = vpop.f32.mrb[0].mxu0
        %v1364 = vadd.f32 0.0, %v1363
        %v1365 = vpop.f32.mrb[0].mxu0
        %1366 = vdwg.mxu0
        %v1367 = vadd.f32 %v1069, %v1189
        %v1368 = vadd.f32 %v1070, %v1194
        %v1369 = vadd.f32 %v1071, %v1199
        %v1370 = vadd.f32 %v1072, %v1204
        %v1371 = vadd.f32 %v1073, %v1209
        %v1372 = vadd.f32 %v1074, %v1214
        %v1373 = vadd.f32 %v1075, %v1219
        %v1374 = vadd.f32 %v1076, %v1224
        %v1375 = vadd.f32 %v1077, %v1229
        %v1376 = vadd.f32 %v1078, %v1234
        %v1377 = vadd.f32 %v1079, %v1239
        %v1378 = vadd.f32 %v1080, %v1244
        %v1379 = vadd.f32 %v1081, %v1249
        %v1380 = vadd.f32 %v1082, %v1254
        %v1381 = vadd.f32 %v1083, %v1259
        %v1382 = vadd.f32 %v1084, %v1264
        %v1383 = vadd.f32 %v1085, %v1269
        %v1384 = vadd.f32 %v1086, %v1274
        %v1385 = vadd.f32 %v1087, %v1279
        %v1386 = vadd.f32 %v1088, %v1284
        %v1387 = vadd.f32 %v1089, %v1289
        %v1388 = vadd.f32 %v1090, %v1294
        %v1389 = vadd.f32 %v1091, %v1299
        %v1390 = vadd.f32 %v1092, %v1304
        %v1391 = vadd.f32 %v1093, %v1309
        %v1392 = vadd.f32 %v1094, %v1314
        %v1393 = vadd.f32 %v1095, %v1319
        %v1394 = vadd.f32 %v1096, %v1324
        %v1395 = vadd.f32 %v1097, %v1329
        %v1396 = vadd.f32 %v1098, %v1334
        %v1397 = vadd.f32 %v1099, %v1339
        %v1398 = vadd.f32 %v1100, %v1344
        %v1399 = vadd.f32 %v1101, %v1349
        %v1400 = vadd.f32 %v1102, %v1354
        %v1401 = vadd.f32 %v1103, %v1359
        %v1402 = vadd.f32 %v1104, %v1364
        %1403 = vst [vmem:[#allocation3] sm:$0xff] %v1367
        %1404 = vst [vmem:[#allocation3 + $0x8] sm:$0xff] %v1368
        %1405 = vst [vmem:[#allocation3 + $0x10] sm:$0xff] %v1369
        %1406 = vst [vmem:[#allocation3 + $0x18] sm:$0xff] %v1370
        %1407 = vst [vmem:[#allocation3 + $0x20] sm:$0xff] %v1371
        %1408 = vst [vmem:[#allocation3 + $0x28] sm:$0xff] %v1372
        %1409 = vst [vmem:[#allocation3 + $0x30] sm:$0xff] %v1373
        %1410 = vst [vmem:[#allocation3 + $0x38] sm:$0xff] %v1374
        %1411 = vst [vmem:[#allocation3 + $0x40] sm:$0xff] %v1375
        %1412 = vst [vmem:[#allocation3 + $0x48] sm:$0xff] %v1376
        %1413 = vst [vmem:[#allocation3 + $0x50] sm:$0xff] %v1377
        %1414 = vst [vmem:[#allocation3 + $0x58] sm:$0xff] %v1378
        %1415 = vst [vmem:[#allocation3 + $0x60] sm:$0xff] %v1379
        %1416 = vst [vmem:[#allocation3 + $0x68] sm:$0xff] %v1380
        %1417 = vst [vmem:[#allocation3 + $0x70] sm:$0xff] %v1381
        %1418 = vst [vmem:[#allocation3 + $0x78] sm:$0xff] %v1382
        %1419 = vst [vmem:[#allocation3 + $0x80] sm:$0xff] %v1383
        %1420 = vst [vmem:[#allocation3 + $0x88] sm:$0xff] %v1384
        %1421 = vst [vmem:[#allocation3 + $0x90] sm:$0xff] %v1385
        %1422 = vst [vmem:[#allocation3 + $0x98] sm:$0xff] %v1386
        %1423 = vst [vmem:[#allocation3 + $0xa0] sm:$0xff] %v1387
        %1424 = vst [vmem:[#allocation3 + $0xa8] sm:$0xff] %v1388
        %1425 = vst [vmem:[#allocation3 + $0xb0] sm:$0xff] %v1389
        %1426 = vst [vmem:[#allocation3 + $0xb8] sm:$0xff] %v1390
        %1427 = vst [vmem:[#allocation3 + $0xc0] sm:$0xff] %v1391
        %1428 = vst [vmem:[#allocation3 + $0xc8] sm:$0xff] %v1392
        %1429 = vst [vmem:[#allocation3 + $0xd0] sm:$0xff] %v1393
        %1430 = vst [vmem:[#allocation3 + $0xd8] sm:$0xff] %v1394
        %1431 = vst [vmem:[#allocation3 + $0xe0] sm:$0xff] %v1395
        %1432 = vst [vmem:[#allocation3 + $0xe8] sm:$0xff] %v1396
        %1433 = vst [vmem:[#allocation3 + $0xf0] sm:$0xff] %v1397
        %1434 = vst [vmem:[#allocation3 + $0xf8] sm:$0xff] %v1398
        %1435 = vst [vmem:[#allocation3 + $0x100] sm:$0xff] %v1399
        %1436 = vst [vmem:[#allocation3 + $0x108] sm:$0xff] %v1400
        %1437 = vst [vmem:[#allocation3 + $0x110] sm:$0xff] %v1401
        %1438 = vst [vmem:[#allocation3 + $0x118] sm:$0xff] %v1402
        %v1439 = vld [vmem:[#allocation2 + $0x12] sm:$0xff]
        %v1440 = vld [vmem:[#allocation2 + $0x1a] sm:$0xff]
        %v1441 = vld [vmem:[#allocation2 + $0x22] sm:$0xff]
        %v1442 = vld [vmem:[#allocation2 + $0x2a] sm:$0xff]
        %v1443 = vld [vmem:[#allocation2 + $0x32] sm:$0xff]
        %v1444 = vld [vmem:[#allocation2 + $0x3a] sm:$0xff]
        %v1445 = vld [vmem:[#allocation2 + $0x42] sm:$0xff]
        %v1446 = vld [vmem:[#allocation2 + $0x4a] sm:$0xff]
        %v1447 = vld [vmem:[#allocation2 + $0x52] sm:$0xff]
        %v1448 = vld [vmem:[#allocation2 + $0x5a] sm:$0xff]
        %v1449 = vld [vmem:[#allocation2 + $0x62] sm:$0xff]
        %v1450 = vld [vmem:[#allocation2 + $0x6a] sm:$0xff]
        %v1451 = vld [vmem:[#allocation2 + $0x72] sm:$0xff]
        %v1452 = vld [vmem:[#allocation2 + $0x7a] sm:$0xff]
        %v1453 = vld [vmem:[#allocation2 + $0x82] sm:$0xff]
        %v1454 = vld [vmem:[#allocation2 + $0x8a] sm:$0xff]
        %v1455 = vld [vmem:[#allocation2 + $0x92] sm:$0xff]
        %v1456 = vld [vmem:[#allocation2 + $0x9a] sm:$0xff]
        %v1457 = vld [vmem:[#allocation2 + $0xa2] sm:$0xff]
        %v1458 = vld [vmem:[#allocation2 + $0xaa] sm:$0xff]
        %v1459 = vld [vmem:[#allocation2 + $0xb2] sm:$0xff]
        %v1460 = vld [vmem:[#allocation2 + $0xba] sm:$0xff]
        %v1461 = vld [vmem:[#allocation2 + $0xc2] sm:$0xff]
        %v1462 = vld [vmem:[#allocation2 + $0xca] sm:$0xff]
        %v1463 = vld [vmem:[#allocation2 + $0xd2] sm:$0xff]
        %v1464 = vld [vmem:[#allocation2 + $0xda] sm:$0xff]
        %v1465 = vld [vmem:[#allocation2 + $0xe2] sm:$0xff]
        %v1466 = vld [vmem:[#allocation2 + $0xea] sm:$0xff]
        %v1467 = vld [vmem:[#allocation2 + $0xf2] sm:$0xff]
        %v1468 = vld [vmem:[#allocation2 + $0xfa] sm:$0xff]
        %v1469 = vld [vmem:[#allocation2 + $0x102] sm:$0xff]
        %v1470 = vld [vmem:[#allocation2 + $0x10a] sm:$0xff]
        %v1471 = vld [vmem:[#allocation2 + $0x112] sm:$0xff]
        %v1472 = vld [vmem:[#allocation2 + $0x11a] sm:$0xff]
        %v1473 = vld [vmem:[#allocation2 + $0x122] sm:$0xff]
        %v1474 = vld [vmem:[#allocation2 + $0x12a] sm:$0xff]
        %v1475 = vld [vmem:[#allocation3] sm:$0xff]
        %v1476 = vld [vmem:[#allocation3 + $0x8] sm:$0xff]
        %v1477 = vld [vmem:[#allocation3 + $0x10] sm:$0xff]
        %v1478 = vld [vmem:[#allocation3 + $0x18] sm:$0xff]
        %v1479 = vld [vmem:[#allocation3 + $0x20] sm:$0xff]
        %v1480 = vld [vmem:[#allocation3 + $0x28] sm:$0xff]
        %v1481 = vld [vmem:[#allocation3 + $0x30] sm:$0xff]
        %v1482 = vld [vmem:[#allocation3 + $0x38] sm:$0xff]
        %v1483 = vld [vmem:[#allocation3 + $0x40] sm:$0xff]
        %v1484 = vld [vmem:[#allocation3 + $0x48] sm:$0xff]
        %v1485 = vld [vmem:[#allocation3 + $0x50] sm:$0xff]
        %v1486 = vld [vmem:[#allocation3 + $0x58] sm:$0xff]
        %v1487 = vld [vmem:[#allocation3 + $0x60] sm:$0xff]
        %v1488 = vld [vmem:[#allocation3 + $0x68] sm:$0xff]
        %v1489 = vld [vmem:[#allocation3 + $0x70] sm:$0xff]
        %v1490 = vld [vmem:[#allocation3 + $0x78] sm:$0xff]
        %v1491 = vld [vmem:[#allocation3 + $0x80] sm:$0xff]
        %v1492 = vld [vmem:[#allocation3 + $0x88] sm:$0xff]
        %v1493 = vld [vmem:[#allocation3 + $0x90] sm:$0xff]
        %v1494 = vld [vmem:[#allocation3 + $0x98] sm:$0xff]
        %v1495 = vld [vmem:[#allocation3 + $0xa0] sm:$0xff]
        %v1496 = vld [vmem:[#allocation3 + $0xa8] sm:$0xff]
        %v1497 = vld [vmem:[#allocation3 + $0xb0] sm:$0xff]
        %v1498 = vld [vmem:[#allocation3 + $0xb8] sm:$0xff]
        %v1499 = vld [vmem:[#allocation3 + $0xc0] sm:$0xff]
        %v1500 = vld [vmem:[#allocation3 + $0xc8] sm:$0xff]
        %v1501 = vld [vmem:[#allocation3 + $0xd0] sm:$0xff]
        %v1502 = vld [vmem:[#allocation3 + $0xd8] sm:$0xff]
        %v1503 = vld [vmem:[#allocation3 + $0xe0] sm:$0xff]
        %v1504 = vld [vmem:[#allocation3 + $0xe8] sm:$0xff]
        %v1505 = vld [vmem:[#allocation3 + $0xf0] sm:$0xff]
        %v1506 = vld [vmem:[#allocation3 + $0xf8] sm:$0xff]
        %v1507 = vld [vmem:[#allocation3 + $0x100] sm:$0xff]
        %v1508 = vld [vmem:[#allocation3 + $0x108] sm:$0xff]
        %v1509 = vld [vmem:[#allocation3 + $0x110] sm:$0xff]
        %v1510 = vld [vmem:[#allocation3 + $0x118] sm:$0xff]
        %s1511 = scalar_lea.vmem [#allocation5], 384
        %v1512 = vld [vmem:[%s1511] sm:$0xff]
        %v1513 = vld [vmem:[%s1511 + $0x8] sm:$0xff]
        %v1514 = vld [vmem:[%s1511 + $0x10] sm:$0xff]
        %v1515 = vld [vmem:[%s1511 + $0x18] sm:$0xff]
        %v1516 = vld [vmem:[%s1511 + $0x20] sm:$0xff]
        %v1517 = vld [vmem:[%s1511 + $0x28] sm:$0xff]
        %v1518 = vld [vmem:[%s1511 + $0x30] sm:$0xff]
        %v1519 = vld [vmem:[%s1511 + $0x38] sm:$0xff]
        %v1520 = vld [vmem:[%s1511 + $0x40] sm:$0xff]
        %v1521 = vld [vmem:[%s1511 + $0x48] sm:$0xff]
        %v1522 = vld [vmem:[%s1511 + $0x50] sm:$0xff]
        %v1523 = vld [vmem:[%s1511 + $0x58] sm:$0xff]
        %v1524 = vld [vmem:[%s1511 + $0x60] sm:$0xff]
        %v1525 = vld [vmem:[%s1511 + $0x68] sm:$0xff]
        %v1526 = vld [vmem:[%s1511 + $0x70] sm:$0xff]
        %v1527 = vld [vmem:[%s1511 + $0x78] sm:$0xff]
        %1528 = vmatprep.subr.mxu0 0.0
        %1529 = vmatpush1.msra.mxu0 %v1512
        %1530 = vmatprep.subr.mxu0 0.0
        %1531 = vmatpush1.msra.mxu0 %v1513
        %1532 = vmatprep.subr.mxu0 0.0
        %1533 = vmatpush1.msra.mxu0 %v1514
        %1534 = vmatprep.subr.mxu0 0.0
        %1535 = vmatpush1.msra.mxu0 %v1515
        %1536 = vmatprep.subr.mxu0 0.0
        %1537 = vmatpush1.msra.mxu0 %v1516
        %1538 = vmatprep.subr.mxu0 0.0
        %1539 = vmatpush1.msra.mxu0 %v1517
        %1540 = vmatprep.subr.mxu0 0.0
        %1541 = vmatpush1.msra.mxu0 %v1518
        %1542 = vmatprep.subr.mxu0 0.0
        %1543 = vmatpush1.msra.mxu0 %v1519
        %1544 = vmatprep.subr.mxu0 0.0
        %1545 = vmatpush1.msra.mxu0 %v1520
        %1546 = vmatprep.subr.mxu0 0.0
        %1547 = vmatpush1.msra.mxu0 %v1521
        %1548 = vmatprep.subr.mxu0 0.0
        %1549 = vmatpush1.msra.mxu0 %v1522
        %1550 = vmatprep.subr.mxu0 0.0
        %1551 = vmatpush1.msra.mxu0 %v1523
        %1552 = vmatprep.subr.mxu0 0.0
        %1553 = vmatpush1.msra.mxu0 %v1524
        %1554 = vmatprep.subr.mxu0 0.0
        %1555 = vmatpush1.msra.mxu0 %v1525
        %1556 = vmatprep.subr.mxu0 0.0
        %1557 = vmatpush1.msra.mxu0 %v1526
        %1558 = vmatprep.subr.mxu0 0.0
        %1559 = vmatpush1.msra.mxu0 %v1527
        %1560 = vmatprep.subr.mxu0 0.0
        %1561 = vmatpush1.msra.mxu0 0.0
        %1562 = vmatprep.subr.mxu0 0.0
        %1563 = vmatpush1.msra.mxu0 0.0
        %1564 = vmatprep.subr.mxu0 0.0
        %1565 = vmatpush1.msra.mxu0 0.0
        %1566 = vmatprep.subr.mxu0 0.0
        %1567 = vmatpush1.msra.mxu0 0.0
        %1568 = vmatprep.subr.mxu0 0.0
        %1569 = vmatpush1.msra.mxu0 0.0
        %1570 = vmatprep.subr.mxu0 0.0
        %1571 = vmatpush1.msra.mxu0 0.0
        %1572 = vmatprep.subr.mxu0 0.0
        %1573 = vmatpush1.msra.mxu0 0.0
        %1574 = vmatprep.subr.mxu0 0.0
        %1575 = vmatpush1.msra.mxu0 0.0
        %1576 = vmatprep.subr.mxu0 0.0
        %1577 = vmatpush1.msra.mxu0 0.0
        %1578 = vmatprep.subr.mxu0 0.0
        %1579 = vmatpush1.msra.mxu0 0.0
        %1580 = vmatprep.subr.mxu0 0.0
        %1581 = vmatpush1.msra.mxu0 0.0
        %1582 = vmatprep.subr.mxu0 0.0
        %1583 = vmatpush1.msra.mxu0 0.0
        %1584 = vmatprep.subr.mxu0 0.0
        %1585 = vmatpush1.msra.mxu0 0.0
        %1586 = vmatprep.subr.mxu0 0.0
        %1587 = vmatpush1.msra.mxu0 0.0
        %1588 = vmatprep.subr.mxu0 0.0
        %1589 = vmatpush1.msra.mxu0 0.0
        %1590 = vmatprep.subr.mxu0 0.0
        %1591 = vmatpush1.msra.mxu0 0.0
        %1592 = vmatprep.mubr.f32.mxu0 0.0
        %1593 = vmatmul.mubr.f32.gmra.mrb[0].mxu0 %v1439
        %v1594 = vpop.f32.mrb[0].mxu0
        %v1595 = vadd.f32 0.0, %v1594
        %v1596 = vpop.f32.mrb[0].mxu0
        %1597 = vmatprep.mubr.f32.mxu0 0.0
        %1598 = vmatmul.mubr.f32.gmra.mrb[0].mxu0 %v1440
        %v1599 = vpop.f32.mrb[0].mxu0
        %v1600 = vadd.f32 0.0, %v1599
        %v1601 = vpop.f32.mrb[0].mxu0
        %1602 = vmatprep.mubr.f32.mxu0 0.0
        %1603 = vmatmul.mubr.f32.gmra.mrb[0].mxu0 %v1441
        %v1604 = vpop.f32.mrb[0].mxu0
        %v1605 = vadd.f32 0.0, %v1604
        %v1606 = vpop.f32.mrb[0].mxu0
        %1607 = vmatprep.mubr.f32.mxu0 0.0
        %1608 = vmatmul.mubr.f32.gmra.mrb[0].mxu0 %v1442
        %v1609 = vpop.f32.mrb[0].mxu0
        %v1610 = vadd.f32 0.0, %v1609
        %v1611 = vpop.f32.mrb[0].mxu0
        %1612 = vmatprep.mubr.f32.mxu0 0.0
        %1613 = vmatmul.mubr.f32.gmra.mrb[0].mxu0 %v1443
        %v1614 = vpop.f32.mrb[0].mxu0
        %v1615 = vadd.f32 0.0, %v1614
        %v1616 = vpop.f32.mrb[0].mxu0
        %1617 = vmatprep.mubr.f32.mxu0 0.0
        %1618 = vmatmul.mubr.f32.gmra.mrb[0].mxu0 %v1444
        %v1619 = vpop.f32.mrb[0].mxu0
        %v1620 = vadd.f32 0.0, %v1619
        %v1621 = vpop.f32.mrb[0].mxu0
        %1622 = vmatprep.mubr.f32.mxu0 0.0
        %1623 = vmatmul.mubr.f32.gmra.mrb[0].mxu0 %v1445
        %v1624 = vpop.f32.mrb[0].mxu0
        %v1625 = vadd.f32 0.0, %v1624
        %v1626 = vpop.f32.mrb[0].mxu0
        %1627 = vmatprep.mubr.f32.mxu0 0.0
        %1628 = vmatmul.mubr.f32.gmra.mrb[0].mxu0 %v1446
        %v1629 = vpop.f32.mrb[0].mxu0
        %v1630 = vadd.f32 0.0, %v1629
        %v1631 = vpop.f32.mrb[0].mxu0
        %1632 = vmatprep.mubr.f32.mxu0 0.0
        %1633 = vmatmul.mubr.f32.gmra.mrb[0].mxu0 %v1447
        %v1634 = vpop.f32.mrb[0].mxu0
        %v1635 = vadd.f32 0.0, %v1634
        %v1636 = vpop.f32.mrb[0].mxu0
        %1637 = vmatprep.mubr.f32.mxu0 0.0
        %1638 = vmatmul.mubr.f32.gmra.mrb[0].mxu0 %v1448
        %v1639 = vpop.f32.mrb[0].mxu0
        %v1640 = vadd.f32 0.0, %v1639
        %v1641 = vpop.f32.mrb[0].mxu0
        %1642 = vmatprep.mubr.f32.mxu0 0.0
        %1643 = vmatmul.mubr.f32.gmra.mrb[0].mxu0 %v1449
        %v1644 = vpop.f32.mrb[0].mxu0
        %v1645 = vadd.f32 0.0, %v1644
        %v1646 = vpop.f32.mrb[0].mxu0
        %1647 = vmatprep.mubr.f32.mxu0 0.0
        %1648 = vmatmul.mubr.f32.gmra.mrb[0].mxu0 %v1450
        %v1649 = vpop.f32.mrb[0].mxu0
        %v1650 = vadd.f32 0.0, %v1649
        %v1651 = vpop.f32.mrb[0].mxu0
        %1652 = vmatprep.mubr.f32.mxu0 0.0
        %1653 = vmatmul.mubr.f32.gmra.mrb[0].mxu0 %v1451
        %v1654 = vpop.f32.mrb[0].mxu0
        %v1655 = vadd.f32 0.0, %v1654
        %v1656 = vpop.f32.mrb[0].mxu0
        %1657 = vmatprep.mubr.f32.mxu0 0.0
        %1658 = vmatmul.mubr.f32.gmra.mrb[0].mxu0 %v1452
        %v1659 = vpop.f32.mrb[0].mxu0
        %v1660 = vadd.f32 0.0, %v1659
        %v1661 = vpop.f32.mrb[0].mxu0
        %1662 = vmatprep.mubr.f32.mxu0 0.0
        %1663 = vmatmul.mubr.f32.gmra.mrb[0].mxu0 %v1453
        %v1664 = vpop.f32.mrb[0].mxu0
        %v1665 = vadd.f32 0.0, %v1664
        %v1666 = vpop.f32.mrb[0].mxu0
        %1667 = vmatprep.mubr.f32.mxu0 0.0
        %1668 = vmatmul.mubr.f32.gmra.mrb[0].mxu0 %v1454
        %v1669 = vpop.f32.mrb[0].mxu0
        %v1670 = vadd.f32 0.0, %v1669
        %v1671 = vpop.f32.mrb[0].mxu0
        %1672 = vmatprep.mubr.f32.mxu0 0.0
        %1673 = vmatmul.mubr.f32.gmra.mrb[0].mxu0 %v1455
        %v1674 = vpop.f32.mrb[0].mxu0
        %v1675 = vadd.f32 0.0, %v1674
        %v1676 = vpop.f32.mrb[0].mxu0
        %1677 = vmatprep.mubr.f32.mxu0 0.0
        %1678 = vmatmul.mubr.f32.gmra.mrb[0].mxu0 %v1456
        %v1679 = vpop.f32.mrb[0].mxu0
        %v1680 = vadd.f32 0.0, %v1679
        %v1681 = vpop.f32.mrb[0].mxu0
        %1682 = vmatprep.mubr.f32.mxu0 0.0
        %1683 = vmatmul.mubr.f32.gmra.mrb[0].mxu0 %v1457
        %v1684 = vpop.f32.mrb[0].mxu0
        %v1685 = vadd.f32 0.0, %v1684
        %v1686 = vpop.f32.mrb[0].mxu0
        %1687 = vmatprep.mubr.f32.mxu0 0.0
        %1688 = vmatmul.mubr.f32.gmra.mrb[0].mxu0 %v1458
        %v1689 = vpop.f32.mrb[0].mxu0
        %v1690 = vadd.f32 0.0, %v1689
        %v1691 = vpop.f32.mrb[0].mxu0
        %1692 = vmatprep.mubr.f32.mxu0 0.0
        %1693 = vmatmul.mubr.f32.gmra.mrb[0].mxu0 %v1459
        %v1694 = vpop.f32.mrb[0].mxu0
        %v1695 = vadd.f32 0.0, %v1694
        %v1696 = vpop.f32.mrb[0].mxu0
        %1697 = vmatprep.mubr.f32.mxu0 0.0
        %1698 = vmatmul.mubr.f32.gmra.mrb[0].mxu0 %v1460
        %v1699 = vpop.f32.mrb[0].mxu0
        %v1700 = vadd.f32 0.0, %v1699
        %v1701 = vpop.f32.mrb[0].mxu0
        %1702 = vmatprep.mubr.f32.mxu0 0.0
        %1703 = vmatmul.mubr.f32.gmra.mrb[0].mxu0 %v1461
        %v1704 = vpop.f32.mrb[0].mxu0
        %v1705 = vadd.f32 0.0, %v1704
        %v1706 = vpop.f32.mrb[0].mxu0
        %1707 = vmatprep.mubr.f32.mxu0 0.0
        %1708 = vmatmul.mubr.f32.gmra.mrb[0].mxu0 %v1462
        %v1709 = vpop.f32.mrb[0].mxu0
        %v1710 = vadd.f32 0.0, %v1709
        %v1711 = vpop.f32.mrb[0].mxu0
        %1712 = vmatprep.mubr.f32.mxu0 0.0
        %1713 = vmatmul.mubr.f32.gmra.mrb[0].mxu0 %v1463
        %v1714 = vpop.f32.mrb[0].mxu0
        %v1715 = vadd.f32 0.0, %v1714
        %v1716 = vpop.f32.mrb[0].mxu0
        %1717 = vmatprep.mubr.f32.mxu0 0.0
        %1718 = vmatmul.mubr.f32.gmra.mrb[0].mxu0 %v1464
        %v1719 = vpop.f32.mrb[0].mxu0
        %v1720 = vadd.f32 0.0, %v1719
        %v1721 = vpop.f32.mrb[0].mxu0
        %1722 = vmatprep.mubr.f32.mxu0 0.0
        %1723 = vmatmul.mubr.f32.gmra.mrb[0].mxu0 %v1465
        %v1724 = vpop.f32.mrb[0].mxu0
        %v1725 = vadd.f32 0.0, %v1724
        %v1726 = vpop.f32.mrb[0].mxu0
        %1727 = vmatprep.mubr.f32.mxu0 0.0
        %1728 = vmatmul.mubr.f32.gmra.mrb[0].mxu0 %v1466
        %v1729 = vpop.f32.mrb[0].mxu0
        %v1730 = vadd.f32 0.0, %v1729
        %v1731 = vpop.f32.mrb[0].mxu0
        %1732 = vmatprep.mubr.f32.mxu0 0.0
        %1733 = vmatmul.mubr.f32.gmra.mrb[0].mxu0 %v1467
        %v1734 = vpop.f32.mrb[0].mxu0
        %v1735 = vadd.f32 0.0, %v1734
        %v1736 = vpop.f32.mrb[0].mxu0
        %1737 = vmatprep.mubr.f32.mxu0 0.0
        %1738 = vmatmul.mubr.f32.gmra.mrb[0].mxu0 %v1468
        %v1739 = vpop.f32.mrb[0].mxu0
        %v1740 = vadd.f32 0.0, %v1739
        %v1741 = vpop.f32.mrb[0].mxu0
        %1742 = vmatprep.mubr.f32.mxu0 0.0
        %1743 = vmatmul.mubr.f32.gmra.mrb[0].mxu0 %v1469
        %v1744 = vpop.f32.mrb[0].mxu0
        %v1745 = vadd.f32 0.0, %v1744
        %v1746 = vpop.f32.mrb[0].mxu0
        %1747 = vmatprep.mubr.f32.mxu0 0.0
        %1748 = vmatmul.mubr.f32.gmra.mrb[0].mxu0 %v1470
        %v1749 = vpop.f32.mrb[0].mxu0
        %v1750 = vadd.f32 0.0, %v1749
        %v1751 = vpop.f32.mrb[0].mxu0
        %1752 = vmatprep.mubr.f32.mxu0 0.0
        %1753 = vmatmul.mubr.f32.gmra.mrb[0].mxu0 %v1471
        %v1754 = vpop.f32.mrb[0].mxu0
        %v1755 = vadd.f32 0.0, %v1754
        %v1756 = vpop.f32.mrb[0].mxu0
        %1757 = vmatprep.mubr.f32.mxu0 0.0
        %1758 = vmatmul.mubr.f32.gmra.mrb[0].mxu0 %v1472
        %v1759 = vpop.f32.mrb[0].mxu0
        %v1760 = vadd.f32 0.0, %v1759
        %v1761 = vpop.f32.mrb[0].mxu0
        %1762 = vmatprep.mubr.f32.mxu0 0.0
        %1763 = vmatmul.mubr.f32.gmra.mrb[0].mxu0 %v1473
        %v1764 = vpop.f32.mrb[0].mxu0
        %v1765 = vadd.f32 0.0, %v1764
        %v1766 = vpop.f32.mrb[0].mxu0
        %1767 = vmatprep.mubr.f32.mxu0 0.0
        %1768 = vmatmul.mubr.f32.gmra.mrb[0].mxu0 %v1474
        %v1769 = vpop.f32.mrb[0].mxu0
        %v1770 = vadd.f32 0.0, %v1769
        %v1771 = vpop.f32.mrb[0].mxu0
        %1772 = vdwg.mxu0
        %v1773 = vadd.f32 %v1475, %v1595
        %v1774 = vadd.f32 %v1476, %v1600
        %v1775 = vadd.f32 %v1477, %v1605
        %v1776 = vadd.f32 %v1478, %v1610
        %v1777 = vadd.f32 %v1479, %v1615
        %v1778 = vadd.f32 %v1480, %v1620
        %v1779 = vadd.f32 %v1481, %v1625
        %v1780 = vadd.f32 %v1482, %v1630
        %v1781 = vadd.f32 %v1483, %v1635
        %v1782 = vadd.f32 %v1484, %v1640
        %v1783 = vadd.f32 %v1485, %v1645
        %v1784 = vadd.f32 %v1486, %v1650
        %v1785 = vadd.f32 %v1487, %v1655
        %v1786 = vadd.f32 %v1488, %v1660
        %v1787 = vadd.f32 %v1489, %v1665
        %v1788 = vadd.f32 %v1490, %v1670
        %v1789 = vadd.f32 %v1491, %v1675
        %v1790 = vadd.f32 %v1492, %v1680
        %v1791 = vadd.f32 %v1493, %v1685
        %v1792 = vadd.f32 %v1494, %v1690
        %v1793 = vadd.f32 %v1495, %v1695
        %v1794 = vadd.f32 %v1496, %v1700
        %v1795 = vadd.f32 %v1497, %v1705
        %v1796 = vadd.f32 %v1498, %v1710
        %v1797 = vadd.f32 %v1499, %v1715
        %v1798 = vadd.f32 %v1500, %v1720
        %v1799 = vadd.f32 %v1501, %v1725
        %v1800 = vadd.f32 %v1502, %v1730
        %v1801 = vadd.f32 %v1503, %v1735
        %v1802 = vadd.f32 %v1504, %v1740
        %v1803 = vadd.f32 %v1505, %v1745
        %v1804 = vadd.f32 %v1506, %v1750
        %v1805 = vadd.f32 %v1507, %v1755
        %v1806 = vadd.f32 %v1508, %v1760
        %v1807 = vadd.f32 %v1509, %v1765
        %v1808 = vadd.f32 %v1510, %v1770
        %1809 = vst [vmem:[#allocation3] sm:$0xff] %v1773
        %1810 = vst [vmem:[#allocation3 + $0x8] sm:$0xff] %v1774
        %1811 = vst [vmem:[#allocation3 + $0x10] sm:$0xff] %v1775
        %1812 = vst [vmem:[#allocation3 + $0x18] sm:$0xff] %v1776
        %1813 = vst [vmem:[#allocation3 + $0x20] sm:$0xff] %v1777
        %1814 = vst [vmem:[#allocation3 + $0x28] sm:$0xff] %v1778
        %1815 = vst [vmem:[#allocation3 + $0x30] sm:$0xff] %v1779
        %1816 = vst [vmem:[#allocation3 + $0x38] sm:$0xff] %v1780
        %1817 = vst [vmem:[#allocation3 + $0x40] sm:$0xff] %v1781
        %1818 = vst [vmem:[#allocation3 + $0x48] sm:$0xff] %v1782
        %1819 = vst [vmem:[#allocation3 + $0x50] sm:$0xff] %v1783
        %1820 = vst [vmem:[#allocation3 + $0x58] sm:$0xff] %v1784
        %1821 = vst [vmem:[#allocation3 + $0x60] sm:$0xff] %v1785
        %1822 = vst [vmem:[#allocation3 + $0x68] sm:$0xff] %v1786
        %1823 = vst [vmem:[#allocation3 + $0x70] sm:$0xff] %v1787
        %1824 = vst [vmem:[#allocation3 + $0x78] sm:$0xff] %v1788
        %1825 = vst [vmem:[#allocation3 + $0x80] sm:$0xff] %v1789
        %1826 = vst [vmem:[#allocation3 + $0x88] sm:$0xff] %v1790
        %1827 = vst [vmem:[#allocation3 + $0x90] sm:$0xff] %v1791
        %1828 = vst [vmem:[#allocation3 + $0x98] sm:$0xff] %v1792
        %1829 = vst [vmem:[#allocation3 + $0xa0] sm:$0xff] %v1793
        %1830 = vst [vmem:[#allocation3 + $0xa8] sm:$0xff] %v1794
        %1831 = vst [vmem:[#allocation3 + $0xb0] sm:$0xff] %v1795
        %1832 = vst [vmem:[#allocation3 + $0xb8] sm:$0xff] %v1796
        %1833 = vst [vmem:[#allocation3 + $0xc0] sm:$0xff] %v1797
        %1834 = vst [vmem:[#allocation3 + $0xc8] sm:$0xff] %v1798
        %1835 = vst [vmem:[#allocation3 + $0xd0] sm:$0xff] %v1799
        %1836 = vst [vmem:[#allocation3 + $0xd8] sm:$0xff] %v1800
        %1837 = vst [vmem:[#allocation3 + $0xe0] sm:$0xff] %v1801
        %1838 = vst [vmem:[#allocation3 + $0xe8] sm:$0xff] %v1802
        %1839 = vst [vmem:[#allocation3 + $0xf0] sm:$0xff] %v1803
        %1840 = vst [vmem:[#allocation3 + $0xf8] sm:$0xff] %v1804
        %1841 = vst [vmem:[#allocation3 + $0x100] sm:$0xff] %v1805
        %1842 = vst [vmem:[#allocation3 + $0x108] sm:$0xff] %v1806
        %1843 = vst [vmem:[#allocation3 + $0x110] sm:$0xff] %v1807
        %1844 = vst [vmem:[#allocation3 + $0x118] sm:$0xff] %v1808
        %v1845 = vld [vmem:[#allocation2 + $0x13] sm:$0xff]
        %v1846 = vld [vmem:[#allocation2 + $0x1b] sm:$0xff]
        %v1847 = vld [vmem:[#allocation2 + $0x23] sm:$0xff]
        %v1848 = vld [vmem:[#allocation2 + $0x2b] sm:$0xff]
        %v1849 = vld [vmem:[#allocation2 + $0x33] sm:$0xff]
        %v1850 = vld [vmem:[#allocation2 + $0x3b] sm:$0xff]
        %v1851 = vld [vmem:[#allocation2 + $0x43] sm:$0xff]
        %v1852 = vld [vmem:[#allocation2 + $0x4b] sm:$0xff]
        %v1853 = vld [vmem:[#allocation2 + $0x53] sm:$0xff]
        %v1854 = vld [vmem:[#allocation2 + $0x5b] sm:$0xff]
        %v1855 = vld [vmem:[#allocation2 + $0x63] sm:$0xff]
        %v1856 = vld [vmem:[#allocation2 + $0x6b] sm:$0xff]
        %v1857 = vld [vmem:[#allocation2 + $0x73] sm:$0xff]
        %v1858 = vld [vmem:[#allocation2 + $0x7b] sm:$0xff]
        %v1859 = vld [vmem:[#allocation2 + $0x83] sm:$0xff]
        %v1860 = vld [vmem:[#allocation2 + $0x8b] sm:$0xff]
        %v1861 = vld [vmem:[#allocation2 + $0x93] sm:$0xff]
        %v1862 = vld [vmem:[#allocation2 + $0x9b] sm:$0xff]
        %v1863 = vld [vmem:[#allocation2 + $0xa3] sm:$0xff]
        %v1864 = vld [vmem:[#allocation2 + $0xab] sm:$0xff]
        %v1865 = vld [vmem:[#allocation2 + $0xb3] sm:$0xff]
        %v1866 = vld [vmem:[#allocation2 + $0xbb] sm:$0xff]
        %v1867 = vld [vmem:[#allocation2 + $0xc3] sm:$0xff]
        %v1868 = vld [vmem:[#allocation2 + $0xcb] sm:$0xff]
        %v1869 = vld [vmem:[#allocation2 + $0xd3] sm:$0xff]
        %v1870 = vld [vmem:[#allocation2 + $0xdb] sm:$0xff]
        %v1871 = vld [vmem:[#allocation2 + $0xe3] sm:$0xff]
        %v1872 = vld [vmem:[#allocation2 + $0xeb] sm:$0xff]
        %v1873 = vld [vmem:[#allocation2 + $0xf3] sm:$0xff]
        %v1874 = vld [vmem:[#allocation2 + $0xfb] sm:$0xff]
        %v1875 = vld [vmem:[#allocation2 + $0x103] sm:$0xff]
        %v1876 = vld [vmem:[#allocation2 + $0x10b] sm:$0xff]
        %v1877 = vld [vmem:[#allocation2 + $0x113] sm:$0xff]
        %v1878 = vld [vmem:[#allocation2 + $0x11b] sm:$0xff]
        %v1879 = vld [vmem:[#allocation2 + $0x123] sm:$0xff]
        %v1880 = vld [vmem:[#allocation2 + $0x12b] sm:$0xff]
        %v1881 = vld [vmem:[#allocation3] sm:$0xff]
        %v1882 = vld [vmem:[#allocation3 + $0x8] sm:$0xff]
        %v1883 = vld [vmem:[#allocation3 + $0x10] sm:$0xff]
        %v1884 = vld [vmem:[#allocation3 + $0x18] sm:$0xff]
        %v1885 = vld [vmem:[#allocation3 + $0x20] sm:$0xff]
        %v1886 = vld [vmem:[#allocation3 + $0x28] sm:$0xff]
        %v1887 = vld [vmem:[#allocation3 + $0x30] sm:$0xff]
        %v1888 = vld [vmem:[#allocation3 + $0x38] sm:$0xff]
        %v1889 = vld [vmem:[#allocation3 + $0x40] sm:$0xff]
        %v1890 = vld [vmem:[#allocation3 + $0x48] sm:$0xff]
        %v1891 = vld [vmem:[#allocation3 + $0x50] sm:$0xff]
        %v1892 = vld [vmem:[#allocation3 + $0x58] sm:$0xff]
        %v1893 = vld [vmem:[#allocation3 + $0x60] sm:$0xff]
        %v1894 = vld [vmem:[#allocation3 + $0x68] sm:$0xff]
        %v1895 = vld [vmem:[#allocation3 + $0x70] sm:$0xff]
        %v1896 = vld [vmem:[#allocation3 + $0x78] sm:$0xff]
        %v1897 = vld [vmem:[#allocation3 + $0x80] sm:$0xff]
        %v1898 = vld [vmem:[#allocation3 + $0x88] sm:$0xff]
        %v1899 = vld [vmem:[#allocation3 + $0x90] sm:$0xff]
        %v1900 = vld [vmem:[#allocation3 + $0x98] sm:$0xff]
        %v1901 = vld [vmem:[#allocation3 + $0xa0] sm:$0xff]
        %v1902 = vld [vmem:[#allocation3 + $0xa8] sm:$0xff]
        %v1903 = vld [vmem:[#allocation3 + $0xb0] sm:$0xff]
        %v1904 = vld [vmem:[#allocation3 + $0xb8] sm:$0xff]
        %v1905 = vld [vmem:[#allocation3 + $0xc0] sm:$0xff]
        %v1906 = vld [vmem:[#allocation3 + $0xc8] sm:$0xff]
        %v1907 = vld [vmem:[#allocation3 + $0xd0] sm:$0xff]
        %v1908 = vld [vmem:[#allocation3 + $0xd8] sm:$0xff]
        %v1909 = vld [vmem:[#allocation3 + $0xe0] sm:$0xff]
        %v1910 = vld [vmem:[#allocation3 + $0xe8] sm:$0xff]
        %v1911 = vld [vmem:[#allocation3 + $0xf0] sm:$0xff]
        %v1912 = vld [vmem:[#allocation3 + $0xf8] sm:$0xff]
        %v1913 = vld [vmem:[#allocation3 + $0x100] sm:$0xff]
        %v1914 = vld [vmem:[#allocation3 + $0x108] sm:$0xff]
        %v1915 = vld [vmem:[#allocation3 + $0x110] sm:$0xff]
        %v1916 = vld [vmem:[#allocation3 + $0x118] sm:$0xff]
        %s1917 = scalar_lea.vmem [#allocation5], 512
        %v1918 = vld [vmem:[%s1917] sm:$0xff]
        %v1919 = vld [vmem:[%s1917 + $0x8] sm:$0xff]
        %v1920 = vld [vmem:[%s1917 + $0x10] sm:$0xff]
        %v1921 = vld [vmem:[%s1917 + $0x18] sm:$0xff]
        %v1922 = vld [vmem:[%s1917 + $0x20] sm:$0xff]
        %v1923 = vld [vmem:[%s1917 + $0x28] sm:$0xff]
        %v1924 = vld [vmem:[%s1917 + $0x30] sm:$0xff]
        %v1925 = vld [vmem:[%s1917 + $0x38] sm:$0xff]
        %v1926 = vld [vmem:[%s1917 + $0x40] sm:$0xff]
        %v1927 = vld [vmem:[%s1917 + $0x48] sm:$0xff]
        %v1928 = vld [vmem:[%s1917 + $0x50] sm:$0xff]
        %v1929 = vld [vmem:[%s1917 + $0x58] sm:$0xff]
        %v1930 = vld [vmem:[%s1917 + $0x60] sm:$0xff]
        %v1931 = vld [vmem:[%s1917 + $0x68] sm:$0xff]
        %v1932 = vld [vmem:[%s1917 + $0x70] sm:$0xff]
        %v1933 = vld [vmem:[%s1917 + $0x78] sm:$0xff]
        %1934 = vmatprep.subr.mxu0 0.0
        %1935 = vmatpush1.msra.mxu0 %v1918
        %1936 = vmatprep.subr.mxu0 0.0
        %1937 = vmatpush1.msra.mxu0 %v1919
        %1938 = vmatprep.subr.mxu0 0.0
        %1939 = vmatpush1.msra.mxu0 %v1920
        %1940 = vmatprep.subr.mxu0 0.0
        %1941 = vmatpush1.msra.mxu0 %v1921
        %1942 = vmatprep.subr.mxu0 0.0
        %1943 = vmatpush1.msra.mxu0 %v1922
        %1944 = vmatprep.subr.mxu0 0.0
        %1945 = vmatpush1.msra.mxu0 %v1923
        %1946 = vmatprep.subr.mxu0 0.0
        %1947 = vmatpush1.msra.mxu0 %v1924
        %1948 = vmatprep.subr.mxu0 0.0
        %1949 = vmatpush1.msra.mxu0 %v1925
        %1950 = vmatprep.subr.mxu0 0.0
        %1951 = vmatpush1.msra.mxu0 %v1926
        %1952 = vmatprep.subr.mxu0 0.0
        %1953 = vmatpush1.msra.mxu0 %v1927
        %1954 = vmatprep.subr.mxu0 0.0
        %1955 = vmatpush1.msra.mxu0 %v1928
        %1956 = vmatprep.subr.mxu0 0.0
        %1957 = vmatpush1.msra.mxu0 %v1929
        %1958 = vmatprep.subr.mxu0 0.0
        %1959 = vmatpush1.msra.mxu0 %v1930
        %1960 = vmatprep.subr.mxu0 0.0
        %1961 = vmatpush1.msra.mxu0 %v1931
        %1962 = vmatprep.subr.mxu0 0.0
        %1963 = vmatpush1.msra.mxu0 %v1932
        %1964 = vmatprep.subr.mxu0 0.0
        %1965 = vmatpush1.msra.mxu0 %v1933
        %1966 = vmatprep.subr.mxu0 0.0
        %1967 = vmatpush1.msra.mxu0 0.0
        %1968 = vmatprep.subr.mxu0 0.0
        %1969 = vmatpush1.msra.mxu0 0.0
        %1970 = vmatprep.subr.mxu0 0.0
        %1971 = vmatpush1.msra.mxu0 0.0
        %1972 = vmatprep.subr.mxu0 0.0
        %1973 = vmatpush1.msra.mxu0 0.0
        %1974 = vmatprep.subr.mxu0 0.0
        %1975 = vmatpush1.msra.mxu0 0.0
        %1976 = vmatprep.subr.mxu0 0.0
        %1977 = vmatpush1.msra.mxu0 0.0
        %1978 = vmatprep.subr.mxu0 0.0
        %1979 = vmatpush1.msra.mxu0 0.0
        %1980 = vmatprep.subr.mxu0 0.0
        %1981 = vmatpush1.msra.mxu0 0.0
        %1982 = vmatprep.subr.mxu0 0.0
        %1983 = vmatpush1.msra.mxu0 0.0
        %1984 = vmatprep.subr.mxu0 0.0
        %1985 = vmatpush1.msra.mxu0 0.0
        %1986 = vmatprep.subr.mxu0 0.0
        %1987 = vmatpush1.msra.mxu0 0.0
        %1988 = vmatprep.subr.mxu0 0.0
        %1989 = vmatpush1.msra.mxu0 0.0
        %1990 = vmatprep.subr.mxu0 0.0
        %1991 = vmatpush1.msra.mxu0 0.0
        %1992 = vmatprep.subr.mxu0 0.0
        %1993 = vmatpush1.msra.mxu0 0.0
        %1994 = vmatprep.subr.mxu0 0.0
        %1995 = vmatpush1.msra.mxu0 0.0
        %1996 = vmatprep.subr.mxu0 0.0
        %1997 = vmatpush1.msra.mxu0 0.0
        %1998 = vmatprep.mubr.f32.mxu0 0.0
        %1999 = vmatmul.mubr.f32.gmra.mrb[0].mxu0 %v1845
        %v2000 = vpop.f32.mrb[0].mxu0
        %v2001 = vadd.f32 0.0, %v2000
        %v2002 = vpop.f32.mrb[0].mxu0
        %2003 = vmatprep.mubr.f32.mxu0 0.0
        %2004 = vmatmul.mubr.f32.gmra.mrb[0].mxu0 %v1846
        %v2005 = vpop.f32.mrb[0].mxu0
        %v2006 = vadd.f32 0.0, %v2005
        %v2007 = vpop.f32.mrb[0].mxu0
        %2008 = vmatprep.mubr.f32.mxu0 0.0
        %2009 = vmatmul.mubr.f32.gmra.mrb[0].mxu0 %v1847
        %v2010 = vpop.f32.mrb[0].mxu0
        %v2011 = vadd.f32 0.0, %v2010
        %v2012 = vpop.f32.mrb[0].mxu0
        %2013 = vmatprep.mubr.f32.mxu0 0.0
        %2014 = vmatmul.mubr.f32.gmra.mrb[0].mxu0 %v1848
        %v2015 = vpop.f32.mrb[0].mxu0
        %v2016 = vadd.f32 0.0, %v2015
        %v2017 = vpop.f32.mrb[0].mxu0
        %2018 = vmatprep.mubr.f32.mxu0 0.0
        %2019 = vmatmul.mubr.f32.gmra.mrb[0].mxu0 %v1849
        %v2020 = vpop.f32.mrb[0].mxu0
        %v2021 = vadd.f32 0.0, %v2020
        %v2022 = vpop.f32.mrb[0].mxu0
        %2023 = vmatprep.mubr.f32.mxu0 0.0
        %2024 = vmatmul.mubr.f32.gmra.mrb[0].mxu0 %v1850
        %v2025 = vpop.f32.mrb[0].mxu0
        %v2026 = vadd.f32 0.0, %v2025
        %v2027 = vpop.f32.mrb[0].mxu0
        %2028 = vmatprep.mubr.f32.mxu0 0.0
        %2029 = vmatmul.mubr.f32.gmra.mrb[0].mxu0 %v1851
        %v2030 = vpop.f32.mrb[0].mxu0
        %v2031 = vadd.f32 0.0, %v2030
        %v2032 = vpop.f32.mrb[0].mxu0
        %2033 = vmatprep.mubr.f32.mxu0 0.0
        %2034 = vmatmul.mubr.f32.gmra.mrb[0].mxu0 %v1852
        %v2035 = vpop.f32.mrb[0].mxu0
        %v2036 = vadd.f32 0.0, %v2035
        %v2037 = vpop.f32.mrb[0].mxu0
        %2038 = vmatprep.mubr.f32.mxu0 0.0
        %2039 = vmatmul.mubr.f32.gmra.mrb[0].mxu0 %v1853
        %v2040 = vpop.f32.mrb[0].mxu0
        %v2041 = vadd.f32 0.0, %v2040
        %v2042 = vpop.f32.mrb[0].mxu0
        %2043 = vmatprep.mubr.f32.mxu0 0.0
        %2044 = vmatmul.mubr.f32.gmra.mrb[0].mxu0 %v1854
        %v2045 = vpop.f32.mrb[0].mxu0
        %v2046 = vadd.f32 0.0, %v2045
        %v2047 = vpop.f32.mrb[0].mxu0
        %2048 = vmatprep.mubr.f32.mxu0 0.0
        %2049 = vmatmul.mubr.f32.gmra.mrb[0].mxu0 %v1855
        %v2050 = vpop.f32.mrb[0].mxu0
        %v2051 = vadd.f32 0.0, %v2050
        %v2052 = vpop.f32.mrb[0].mxu0
        %2053 = vmatprep.mubr.f32.mxu0 0.0
        %2054 = vmatmul.mubr.f32.gmra.mrb[0].mxu0 %v1856
        %v2055 = vpop.f32.mrb[0].mxu0
        %v2056 = vadd.f32 0.0, %v2055
        %v2057 = vpop.f32.mrb[0].mxu0
        %2058 = vmatprep.mubr.f32.mxu0 0.0
        %2059 = vmatmul.mubr.f32.gmra.mrb[0].mxu0 %v1857
        %v2060 = vpop.f32.mrb[0].mxu0
        %v2061 = vadd.f32 0.0, %v2060
        %v2062 = vpop.f32.mrb[0].mxu0
        %2063 = vmatprep.mubr.f32.mxu0 0.0
        %2064 = vmatmul.mubr.f32.gmra.mrb[0].mxu0 %v1858
        %v2065 = vpop.f32.mrb[0].mxu0
        %v2066 = vadd.f32 0.0, %v2065
        %v2067 = vpop.f32.mrb[0].mxu0
        %2068 = vmatprep.mubr.f32.mxu0 0.0
        %2069 = vmatmul.mubr.f32.gmra.mrb[0].mxu0 %v1859
        %v2070 = vpop.f32.mrb[0].mxu0
        %v2071 = vadd.f32 0.0, %v2070
        %v2072 = vpop.f32.mrb[0].mxu0
        %2073 = vmatprep.mubr.f32.mxu0 0.0
        %2074 = vmatmul.mubr.f32.gmra.mrb[0].mxu0 %v1860
        %v2075 = vpop.f32.mrb[0].mxu0
        %v2076 = vadd.f32 0.0, %v2075
        %v2077 = vpop.f32.mrb[0].mxu0
        %2078 = vmatprep.mubr.f32.mxu0 0.0
        %2079 = vmatmul.mubr.f32.gmra.mrb[0].mxu0 %v1861
        %v2080 = vpop.f32.mrb[0].mxu0
        %v2081 = vadd.f32 0.0, %v2080
        %v2082 = vpop.f32.mrb[0].mxu0
        %2083 = vmatprep.mubr.f32.mxu0 0.0
        %2084 = vmatmul.mubr.f32.gmra.mrb[0].mxu0 %v1862
        %v2085 = vpop.f32.mrb[0].mxu0
        %v2086 = vadd.f32 0.0, %v2085
        %v2087 = vpop.f32.mrb[0].mxu0
        %2088 = vmatprep.mubr.f32.mxu0 0.0
        %2089 = vmatmul.mubr.f32.gmra.mrb[0].mxu0 %v1863
        %v2090 = vpop.f32.mrb[0].mxu0
        %v2091 = vadd.f32 0.0, %v2090
        %v2092 = vpop.f32.mrb[0].mxu0
        %2093 = vmatprep.mubr.f32.mxu0 0.0
        %2094 = vmatmul.mubr.f32.gmra.mrb[0].mxu0 %v1864
        %v2095 = vpop.f32.mrb[0].mxu0
        %v2096 = vadd.f32 0.0, %v2095
        %v2097 = vpop.f32.mrb[0].mxu0
        %2098 = vmatprep.mubr.f32.mxu0 0.0
        %2099 = vmatmul.mubr.f32.gmra.mrb[0].mxu0 %v1865
        %v2100 = vpop.f32.mrb[0].mxu0
        %v2101 = vadd.f32 0.0, %v2100
        %v2102 = vpop.f32.mrb[0].mxu0
        %2103 = vmatprep.mubr.f32.mxu0 0.0
        %2104 = vmatmul.mubr.f32.gmra.mrb[0].mxu0 %v1866
        %v2105 = vpop.f32.mrb[0].mxu0
        %v2106 = vadd.f32 0.0, %v2105
        %v2107 = vpop.f32.mrb[0].mxu0
        %2108 = vmatprep.mubr.f32.mxu0 0.0
        %2109 = vmatmul.mubr.f32.gmra.mrb[0].mxu0 %v1867
        %v2110 = vpop.f32.mrb[0].mxu0
        %v2111 = vadd.f32 0.0, %v2110
        %v2112 = vpop.f32.mrb[0].mxu0
        %2113 = vmatprep.mubr.f32.mxu0 0.0
        %2114 = vmatmul.mubr.f32.gmra.mrb[0].mxu0 %v1868
        %v2115 = vpop.f32.mrb[0].mxu0
        %v2116 = vadd.f32 0.0, %v2115
        %v2117 = vpop.f32.mrb[0].mxu0
        %2118 = vmatprep.mubr.f32.mxu0 0.0
        %2119 = vmatmul.mubr.f32.gmra.mrb[0].mxu0 %v1869
        %v2120 = vpop.f32.mrb[0].mxu0
        %v2121 = vadd.f32 0.0, %v2120
        %v2122 = vpop.f32.mrb[0].mxu0
        %2123 = vmatprep.mubr.f32.mxu0 0.0
        %2124 = vmatmul.mubr.f32.gmra.mrb[0].mxu0 %v1870
        %v2125 = vpop.f32.mrb[0].mxu0
        %v2126 = vadd.f32 0.0, %v2125
        %v2127 = vpop.f32.mrb[0].mxu0
        %2128 = vmatprep.mubr.f32.mxu0 0.0
        %2129 = vmatmul.mubr.f32.gmra.mrb[0].mxu0 %v1871
        %v2130 = vpop.f32.mrb[0].mxu0
        %v2131 = vadd.f32 0.0, %v2130
        %v2132 = vpop.f32.mrb[0].mxu0
        %2133 = vmatprep.mubr.f32.mxu0 0.0
        %2134 = vmatmul.mubr.f32.gmra.mrb[0].mxu0 %v1872
        %v2135 = vpop.f32.mrb[0].mxu0
        %v2136 = vadd.f32 0.0, %v2135
        %v2137 = vpop.f32.mrb[0].mxu0
        %2138 = vmatprep.mubr.f32.mxu0 0.0
        %2139 = vmatmul.mubr.f32.gmra.mrb[0].mxu0 %v1873
        %v2140 = vpop.f32.mrb[0].mxu0
        %v2141 = vadd.f32 0.0, %v2140
        %v2142 = vpop.f32.mrb[0].mxu0
        %2143 = vmatprep.mubr.f32.mxu0 0.0
        %2144 = vmatmul.mubr.f32.gmra.mrb[0].mxu0 %v1874
        %v2145 = vpop.f32.mrb[0].mxu0
        %v2146 = vadd.f32 0.0, %v2145
        %v2147 = vpop.f32.mrb[0].mxu0
        %2148 = vmatprep.mubr.f32.mxu0 0.0
        %2149 = vmatmul.mubr.f32.gmra.mrb[0].mxu0 %v1875
        %v2150 = vpop.f32.mrb[0].mxu0
        %v2151 = vadd.f32 0.0, %v2150
        %v2152 = vpop.f32.mrb[0].mxu0
        %2153 = vmatprep.mubr.f32.mxu0 0.0
        %2154 = vmatmul.mubr.f32.gmra.mrb[0].mxu0 %v1876
        %v2155 = vpop.f32.mrb[0].mxu0
        %v2156 = vadd.f32 0.0, %v2155
        %v2157 = vpop.f32.mrb[0].mxu0
        %2158 = vmatprep.mubr.f32.mxu0 0.0
        %2159 = vmatmul.mubr.f32.gmra.mrb[0].mxu0 %v1877
        %v2160 = vpop.f32.mrb[0].mxu0
        %v2161 = vadd.f32 0.0, %v2160
        %v2162 = vpop.f32.mrb[0].mxu0
        %2163 = vmatprep.mubr.f32.mxu0 0.0
        %2164 = vmatmul.mubr.f32.gmra.mrb[0].mxu0 %v1878
        %v2165 = vpop.f32.mrb[0].mxu0
        %v2166 = vadd.f32 0.0, %v2165
        %v2167 = vpop.f32.mrb[0].mxu0
        %2168 = vmatprep.mubr.f32.mxu0 0.0
        %2169 = vmatmul.mubr.f32.gmra.mrb[0].mxu0 %v1879
        %v2170 = vpop.f32.mrb[0].mxu0
        %v2171 = vadd.f32 0.0, %v2170
        %v2172 = vpop.f32.mrb[0].mxu0
        %2173 = vmatprep.mubr.f32.mxu0 0.0
        %2174 = vmatmul.mubr.f32.gmra.mrb[0].mxu0 %v1880
        %v2175 = vpop.f32.mrb[0].mxu0
        %v2176 = vadd.f32 0.0, %v2175
        %v2177 = vpop.f32.mrb[0].mxu0
        %2178 = vdwg.mxu0
        %v2179 = vadd.f32 %v1881, %v2001
        %v2180 = vadd.f32 %v1882, %v2006
        %v2181 = vadd.f32 %v1883, %v2011
        %v2182 = vadd.f32 %v1884, %v2016
        %v2183 = vadd.f32 %v1885, %v2021
        %v2184 = vadd.f32 %v1886, %v2026
        %v2185 = vadd.f32 %v1887, %v2031
        %v2186 = vadd.f32 %v1888, %v2036
        %v2187 = vadd.f32 %v1889, %v2041
        %v2188 = vadd.f32 %v1890, %v2046
        %v2189 = vadd.f32 %v1891, %v2051
        %v2190 = vadd.f32 %v1892, %v2056
        %v2191 = vadd.f32 %v1893, %v2061
        %v2192 = vadd.f32 %v1894, %v2066
        %v2193 = vadd.f32 %v1895, %v2071
        %v2194 = vadd.f32 %v1896, %v2076
        %v2195 = vadd.f32 %v1897, %v2081
        %v2196 = vadd.f32 %v1898, %v2086
        %v2197 = vadd.f32 %v1899, %v2091
        %v2198 = vadd.f32 %v1900, %v2096
        %v2199 = vadd.f32 %v1901, %v2101
        %v2200 = vadd.f32 %v1902, %v2106
        %v2201 = vadd.f32 %v1903, %v2111
        %v2202 = vadd.f32 %v1904, %v2116
        %v2203 = vadd.f32 %v1905, %v2121
        %v2204 = vadd.f32 %v1906, %v2126
        %v2205 = vadd.f32 %v1907, %v2131
        %v2206 = vadd.f32 %v1908, %v2136
        %v2207 = vadd.f32 %v1909, %v2141
        %v2208 = vadd.f32 %v1910, %v2146
        %v2209 = vadd.f32 %v1911, %v2151
        %v2210 = vadd.f32 %v1912, %v2156
        %v2211 = vadd.f32 %v1913, %v2161
        %v2212 = vadd.f32 %v1914, %v2166
        %v2213 = vadd.f32 %v1915, %v2171
        %v2214 = vadd.f32 %v1916, %v2176
        %2215 = vst [vmem:[#allocation3] sm:$0xff] %v2179
        %2216 = vst [vmem:[#allocation3 + $0x8] sm:$0xff] %v2180
        %2217 = vst [vmem:[#allocation3 + $0x10] sm:$0xff] %v2181
        %2218 = vst [vmem:[#allocation3 + $0x18] sm:$0xff] %v2182
        %2219 = vst [vmem:[#allocation3 + $0x20] sm:$0xff] %v2183
        %2220 = vst [vmem:[#allocation3 + $0x28] sm:$0xff] %v2184
        %2221 = vst [vmem:[#allocation3 + $0x30] sm:$0xff] %v2185
        %2222 = vst [vmem:[#allocation3 + $0x38] sm:$0xff] %v2186
        %2223 = vst [vmem:[#allocation3 + $0x40] sm:$0xff] %v2187
        %2224 = vst [vmem:[#allocation3 + $0x48] sm:$0xff] %v2188
        %2225 = vst [vmem:[#allocation3 + $0x50] sm:$0xff] %v2189
        %2226 = vst [vmem:[#allocation3 + $0x58] sm:$0xff] %v2190
        %2227 = vst [vmem:[#allocation3 + $0x60] sm:$0xff] %v2191
        %2228 = vst [vmem:[#allocation3 + $0x68] sm:$0xff] %v2192
        %2229 = vst [vmem:[#allocation3 + $0x70] sm:$0xff] %v2193
        %2230 = vst [vmem:[#allocation3 + $0x78] sm:$0xff] %v2194
        %2231 = vst [vmem:[#allocation3 + $0x80] sm:$0xff] %v2195
        %2232 = vst [vmem:[#allocation3 + $0x88] sm:$0xff] %v2196
        %2233 = vst [vmem:[#allocation3 + $0x90] sm:$0xff] %v2197
        %2234 = vst [vmem:[#allocation3 + $0x98] sm:$0xff] %v2198
        %2235 = vst [vmem:[#allocation3 + $0xa0] sm:$0xff] %v2199
        %2236 = vst [vmem:[#allocation3 + $0xa8] sm:$0xff] %v2200
        %2237 = vst [vmem:[#allocation3 + $0xb0] sm:$0xff] %v2201
        %2238 = vst [vmem:[#allocation3 + $0xb8] sm:$0xff] %v2202
        %2239 = vst [vmem:[#allocation3 + $0xc0] sm:$0xff] %v2203
        %2240 = vst [vmem:[#allocation3 + $0xc8] sm:$0xff] %v2204
        %2241 = vst [vmem:[#allocation3 + $0xd0] sm:$0xff] %v2205
        %2242 = vst [vmem:[#allocation3 + $0xd8] sm:$0xff] %v2206
        %2243 = vst [vmem:[#allocation3 + $0xe0] sm:$0xff] %v2207
        %2244 = vst [vmem:[#allocation3 + $0xe8] sm:$0xff] %v2208
        %2245 = vst [vmem:[#allocation3 + $0xf0] sm:$0xff] %v2209
        %2246 = vst [vmem:[#allocation3 + $0xf8] sm:$0xff] %v2210
        %2247 = vst [vmem:[#allocation3 + $0x100] sm:$0xff] %v2211
        %2248 = vst [vmem:[#allocation3 + $0x108] sm:$0xff] %v2212
        %2249 = vst [vmem:[#allocation3 + $0x110] sm:$0xff] %v2213
        %2250 = vst [vmem:[#allocation3 + $0x118] sm:$0xff] %v2214
        %v2251 = vld [vmem:[#allocation2 + $0x14] sm:$0xff]
        %v2252 = vld [vmem:[#allocation2 + $0x1c] sm:$0xff]
        %v2253 = vld [vmem:[#allocation2 + $0x24] sm:$0xff]
        %v2254 = vld [vmem:[#allocation2 + $0x2c] sm:$0xff]
        %v2255 = vld [vmem:[#allocation2 + $0x34] sm:$0xff]
        %v2256 = vld [vmem:[#allocation2 + $0x3c] sm:$0xff]
        %v2257 = vld [vmem:[#allocation2 + $0x44] sm:$0xff]
        %v2258 = vld [vmem:[#allocation2 + $0x4c] sm:$0xff]
        %v2259 = vld [vmem:[#allocation2 + $0x54] sm:$0xff]
        %v2260 = vld [vmem:[#allocation2 + $0x5c] sm:$0xff]
        %v2261 = vld [vmem:[#allocation2 + $0x64] sm:$0xff]
        %v2262 = vld [vmem:[#allocation2 + $0x6c] sm:$0xff]
        %v2263 = vld [vmem:[#allocation2 + $0x74] sm:$0xff]
        %v2264 = vld [vmem:[#allocation2 + $0x7c] sm:$0xff]
        %v2265 = vld [vmem:[#allocation2 + $0x84] sm:$0xff]
        %v2266 = vld [vmem:[#allocation2 + $0x8c] sm:$0xff]
        %v2267 = vld [vmem:[#allocation2 + $0x94] sm:$0xff]
        %v2268 = vld [vmem:[#allocation2 + $0x9c] sm:$0xff]
        %v2269 = vld [vmem:[#allocation2 + $0xa4] sm:$0xff]
        %v2270 = vld [vmem:[#allocation2 + $0xac] sm:$0xff]
        %v2271 = vld [vmem:[#allocation2 + $0xb4] sm:$0xff]
        %v2272 = vld [vmem:[#allocation2 + $0xbc] sm:$0xff]
        %v2273 = vld [vmem:[#allocation2 + $0xc4] sm:$0xff]
        %v2274 = vld [vmem:[#allocation2 + $0xcc] sm:$0xff]
        %v2275 = vld [vmem:[#allocation2 + $0xd4] sm:$0xff]
        %v2276 = vld [vmem:[#allocation2 + $0xdc] sm:$0xff]
        %v2277 = vld [vmem:[#allocation2 + $0xe4] sm:$0xff]
        %v2278 = vld [vmem:[#allocation2 + $0xec] sm:$0xff]
        %v2279 = vld [vmem:[#allocation2 + $0xf4] sm:$0xff]
        %v2280 = vld [vmem:[#allocation2 + $0xfc] sm:$0xff]
        %v2281 = vld [vmem:[#allocation2 + $0x104] sm:$0xff]
        %v2282 = vld [vmem:[#allocation2 + $0x10c] sm:$0xff]
        %v2283 = vld [vmem:[#allocation2 + $0x114] sm:$0xff]
        %v2284 = vld [vmem:[#allocation2 + $0x11c] sm:$0xff]
        %v2285 = vld [vmem:[#allocation2 + $0x124] sm:$0xff]
        %v2286 = vld [vmem:[#allocation2 + $0x12c] sm:$0xff]
        %v2287 = vld [vmem:[#allocation3] sm:$0xff]
        %v2288 = vld [vmem:[#allocation3 + $0x8] sm:$0xff]
        %v2289 = vld [vmem:[#allocation3 + $0x10] sm:$0xff]
        %v2290 = vld [vmem:[#allocation3 + $0x18] sm:$0xff]
        %v2291 = vld [vmem:[#allocation3 + $0x20] sm:$0xff]
        %v2292 = vld [vmem:[#allocation3 + $0x28] sm:$0xff]
        %v2293 = vld [vmem:[#allocation3 + $0x30] sm:$0xff]
        %v2294 = vld [vmem:[#allocation3 + $0x38] sm:$0xff]
        %v2295 = vld [vmem:[#allocation3 + $0x40] sm:$0xff]
        %v2296 = vld [vmem:[#allocation3 + $0x48] sm:$0xff]
        %v2297 = vld [vmem:[#allocation3 + $0x50] sm:$0xff]
        %v2298 = vld [vmem:[#allocation3 + $0x58] sm:$0xff]
        %v2299 = vld [vmem:[#allocation3 + $0x60] sm:$0xff]
        %v2300 = vld [vmem:[#allocation3 + $0x68] sm:$0xff]
        %v2301 = vld [vmem:[#allocation3 + $0x70] sm:$0xff]
        %v2302 = vld [vmem:[#allocation3 + $0x78] sm:$0xff]
        %v2303 = vld [vmem:[#allocation3 + $0x80] sm:$0xff]
        %v2304 = vld [vmem:[#allocation3 + $0x88] sm:$0xff]
        %v2305 = vld [vmem:[#allocation3 + $0x90] sm:$0xff]
        %v2306 = vld [vmem:[#allocation3 + $0x98] sm:$0xff]
        %v2307 = vld [vmem:[#allocation3 + $0xa0] sm:$0xff]
        %v2308 = vld [vmem:[#allocation3 + $0xa8] sm:$0xff]
        %v2309 = vld [vmem:[#allocation3 + $0xb0] sm:$0xff]
        %v2310 = vld [vmem:[#allocation3 + $0xb8] sm:$0xff]
        %v2311 = vld [vmem:[#allocation3 + $0xc0] sm:$0xff]
        %v2312 = vld [vmem:[#allocation3 + $0xc8] sm:$0xff]
        %v2313 = vld [vmem:[#allocation3 + $0xd0] sm:$0xff]
        %v2314 = vld [vmem:[#allocation3 + $0xd8] sm:$0xff]
        %v2315 = vld [vmem:[#allocation3 + $0xe0] sm:$0xff]
        %v2316 = vld [vmem:[#allocation3 + $0xe8] sm:$0xff]
        %v2317 = vld [vmem:[#allocation3 + $0xf0] sm:$0xff]
        %v2318 = vld [vmem:[#allocation3 + $0xf8] sm:$0xff]
        %v2319 = vld [vmem:[#allocation3 + $0x100] sm:$0xff]
        %v2320 = vld [vmem:[#allocation3 + $0x108] sm:$0xff]
        %v2321 = vld [vmem:[#allocation3 + $0x110] sm:$0xff]
        %v2322 = vld [vmem:[#allocation3 + $0x118] sm:$0xff]
        %s2323 = scalar_lea.vmem [#allocation5], 640
        %v2324 = vld [vmem:[%s2323] sm:$0xff]
        %v2325 = vld [vmem:[%s2323 + $0x8] sm:$0xff]
        %v2326 = vld [vmem:[%s2323 + $0x10] sm:$0xff]
        %v2327 = vld [vmem:[%s2323 + $0x18] sm:$0xff]
        %v2328 = vld [vmem:[%s2323 + $0x20] sm:$0xff]
        %v2329 = vld [vmem:[%s2323 + $0x28] sm:$0xff]
        %v2330 = vld [vmem:[%s2323 + $0x30] sm:$0xff]
        %v2331 = vld [vmem:[%s2323 + $0x38] sm:$0xff]
        %v2332 = vld [vmem:[%s2323 + $0x40] sm:$0xff]
        %v2333 = vld [vmem:[%s2323 + $0x48] sm:$0xff]
        %v2334 = vld [vmem:[%s2323 + $0x50] sm:$0xff]
        %v2335 = vld [vmem:[%s2323 + $0x58] sm:$0xff]
        %v2336 = vld [vmem:[%s2323 + $0x60] sm:$0xff]
        %v2337 = vld [vmem:[%s2323 + $0x68] sm:$0xff]
        %v2338 = vld [vmem:[%s2323 + $0x70] sm:$0xff]
        %v2339 = vld [vmem:[%s2323 + $0x78] sm:$0xff]
        %2340 = vmatprep.subr.mxu0 0.0
        %2341 = vmatpush1.msra.mxu0 %v2324
        %2342 = vmatprep.subr.mxu0 0.0
        %2343 = vmatpush1.msra.mxu0 %v2325
        %2344 = vmatprep.subr.mxu0 0.0
        %2345 = vmatpush1.msra.mxu0 %v2326
        %2346 = vmatprep.subr.mxu0 0.0
        %2347 = vmatpush1.msra.mxu0 %v2327
        %2348 = vmatprep.subr.mxu0 0.0
        %2349 = vmatpush1.msra.mxu0 %v2328
        %2350 = vmatprep.subr.mxu0 0.0
        %2351 = vmatpush1.msra.mxu0 %v2329
        %2352 = vmatprep.subr.mxu0 0.0
        %2353 = vmatpush1.msra.mxu0 %v2330
        %2354 = vmatprep.subr.mxu0 0.0
        %2355 = vmatpush1.msra.mxu0 %v2331
        %2356 = vmatprep.subr.mxu0 0.0
        %2357 = vmatpush1.msra.mxu0 %v2332
        %2358 = vmatprep.subr.mxu0 0.0
        %2359 = vmatpush1.msra.mxu0 %v2333
        %2360 = vmatprep.subr.mxu0 0.0
        %2361 = vmatpush1.msra.mxu0 %v2334
        %2362 = vmatprep.subr.mxu0 0.0
        %2363 = vmatpush1.msra.mxu0 %v2335
        %2364 = vmatprep.subr.mxu0 0.0
        %2365 = vmatpush1.msra.mxu0 %v2336
        %2366 = vmatprep.subr.mxu0 0.0
        %2367 = vmatpush1.msra.mxu0 %v2337
        %2368 = vmatprep.subr.mxu0 0.0
        %2369 = vmatpush1.msra.mxu0 %v2338
        %2370 = vmatprep.subr.mxu0 0.0
        %2371 = vmatpush1.msra.mxu0 %v2339
        %2372 = vmatprep.subr.mxu0 0.0
        %2373 = vmatpush1.msra.mxu0 0.0
        %2374 = vmatprep.subr.mxu0 0.0
        %2375 = vmatpush1.msra.mxu0 0.0
        %2376 = vmatprep.subr.mxu0 0.0
        %2377 = vmatpush1.msra.mxu0 0.0
        %2378 = vmatprep.subr.mxu0 0.0
        %2379 = vmatpush1.msra.mxu0 0.0
        %2380 = vmatprep.subr.mxu0 0.0
        %2381 = vmatpush1.msra.mxu0 0.0
        %2382 = vmatprep.subr.mxu0 0.0
        %2383 = vmatpush1.msra.mxu0 0.0
        %2384 = vmatprep.subr.mxu0 0.0
        %2385 = vmatpush1.msra.mxu0 0.0
        %2386 = vmatprep.subr.mxu0 0.0
        %2387 = vmatpush1.msra.mxu0 0.0
        %2388 = vmatprep.subr.mxu0 0.0
        %2389 = vmatpush1.msra.mxu0 0.0
        %2390 = vmatprep.subr.mxu0 0.0
        %2391 = vmatpush1.msra.mxu0 0.0
        %2392 = vmatprep.subr.mxu0 0.0
        %2393 = vmatpush1.msra.mxu0 0.0
        %2394 = vmatprep.subr.mxu0 0.0
        %2395 = vmatpush1.msra.mxu0 0.0
        %2396 = vmatprep.subr.mxu0 0.0
        %2397 = vmatpush1.msra.mxu0 0.0
        %2398 = vmatprep.subr.mxu0 0.0
        %2399 = vmatpush1.msra.mxu0 0.0
        %2400 = vmatprep.subr.mxu0 0.0
        %2401 = vmatpush1.msra.mxu0 0.0
        %2402 = vmatprep.subr.mxu0 0.0
        %2403 = vmatpush1.msra.mxu0 0.0
        %2404 = vmatprep.mubr.f32.mxu0 0.0
        %2405 = vmatmul.mubr.f32.gmra.mrb[0].mxu0 %v2251
        %v2406 = vpop.f32.mrb[0].mxu0
        %v2407 = vadd.f32 0.0, %v2406
        %v2408 = vpop.f32.mrb[0].mxu0
        %2409 = vmatprep.mubr.f32.mxu0 0.0
        %2410 = vmatmul.mubr.f32.gmra.mrb[0].mxu0 %v2252
        %v2411 = vpop.f32.mrb[0].mxu0
        %v2412 = vadd.f32 0.0, %v2411
        %v2413 = vpop.f32.mrb[0].mxu0
        %2414 = vmatprep.mubr.f32.mxu0 0.0
        %2415 = vmatmul.mubr.f32.gmra.mrb[0].mxu0 %v2253
        %v2416 = vpop.f32.mrb[0].mxu0
        %v2417 = vadd.f32 0.0, %v2416
        %v2418 = vpop.f32.mrb[0].mxu0
        %2419 = vmatprep.mubr.f32.mxu0 0.0
        %2420 = vmatmul.mubr.f32.gmra.mrb[0].mxu0 %v2254
        %v2421 = vpop.f32.mrb[0].mxu0
        %v2422 = vadd.f32 0.0, %v2421
        %v2423 = vpop.f32.mrb[0].mxu0
        %2424 = vmatprep.mubr.f32.mxu0 0.0
        %2425 = vmatmul.mubr.f32.gmra.mrb[0].mxu0 %v2255
        %v2426 = vpop.f32.mrb[0].mxu0
        %v2427 = vadd.f32 0.0, %v2426
        %v2428 = vpop.f32.mrb[0].mxu0
        %2429 = vmatprep.mubr.f32.mxu0 0.0
        %2430 = vmatmul.mubr.f32.gmra.mrb[0].mxu0 %v2256
        %v2431 = vpop.f32.mrb[0].mxu0
        %v2432 = vadd.f32 0.0, %v2431
        %v2433 = vpop.f32.mrb[0].mxu0
        %2434 = vmatprep.mubr.f32.mxu0 0.0
        %2435 = vmatmul.mubr.f32.gmra.mrb[0].mxu0 %v2257
        %v2436 = vpop.f32.mrb[0].mxu0
        %v2437 = vadd.f32 0.0, %v2436
        %v2438 = vpop.f32.mrb[0].mxu0
        %2439 = vmatprep.mubr.f32.mxu0 0.0
        %2440 = vmatmul.mubr.f32.gmra.mrb[0].mxu0 %v2258
        %v2441 = vpop.f32.mrb[0].mxu0
        %v2442 = vadd.f32 0.0, %v2441
        %v2443 = vpop.f32.mrb[0].mxu0
        %2444 = vmatprep.mubr.f32.mxu0 0.0
        %2445 = vmatmul.mubr.f32.gmra.mrb[0].mxu0 %v2259
        %v2446 = vpop.f32.mrb[0].mxu0
        %v2447 = vadd.f32 0.0, %v2446
        %v2448 = vpop.f32.mrb[0].mxu0
        %2449 = vmatprep.mubr.f32.mxu0 0.0
        %2450 = vmatmul.mubr.f32.gmra.mrb[0].mxu0 %v2260
        %v2451 = vpop.f32.mrb[0].mxu0
        %v2452 = vadd.f32 0.0, %v2451
        %v2453 = vpop.f32.mrb[0].mxu0
        %2454 = vmatprep.mubr.f32.mxu0 0.0
        %2455 = vmatmul.mubr.f32.gmra.mrb[0].mxu0 %v2261
        %v2456 = vpop.f32.mrb[0].mxu0
        %v2457 = vadd.f32 0.0, %v2456
        %v2458 = vpop.f32.mrb[0].mxu0
        %2459 = vmatprep.mubr.f32.mxu0 0.0
        %2460 = vmatmul.mubr.f32.gmra.mrb[0].mxu0 %v2262
        %v2461 = vpop.f32.mrb[0].mxu0
        %v2462 = vadd.f32 0.0, %v2461
        %v2463 = vpop.f32.mrb[0].mxu0
        %2464 = vmatprep.mubr.f32.mxu0 0.0
        %2465 = vmatmul.mubr.f32.gmra.mrb[0].mxu0 %v2263
        %v2466 = vpop.f32.mrb[0].mxu0
        %v2467 = vadd.f32 0.0, %v2466
        %v2468 = vpop.f32.mrb[0].mxu0
        %2469 = vmatprep.mubr.f32.mxu0 0.0
        %2470 = vmatmul.mubr.f32.gmra.mrb[0].mxu0 %v2264
        %v2471 = vpop.f32.mrb[0].mxu0
        %v2472 = vadd.f32 0.0, %v2471
        %v2473 = vpop.f32.mrb[0].mxu0
        %2474 = vmatprep.mubr.f32.mxu0 0.0
        %2475 = vmatmul.mubr.f32.gmra.mrb[0].mxu0 %v2265
        %v2476 = vpop.f32.mrb[0].mxu0
        %v2477 = vadd.f32 0.0, %v2476
        %v2478 = vpop.f32.mrb[0].mxu0
        %2479 = vmatprep.mubr.f32.mxu0 0.0
        %2480 = vmatmul.mubr.f32.gmra.mrb[0].mxu0 %v2266
        %v2481 = vpop.f32.mrb[0].mxu0
        %v2482 = vadd.f32 0.0, %v2481
        %v2483 = vpop.f32.mrb[0].mxu0
        %2484 = vmatprep.mubr.f32.mxu0 0.0
        %2485 = vmatmul.mubr.f32.gmra.mrb[0].mxu0 %v2267
        %v2486 = vpop.f32.mrb[0].mxu0
        %v2487 = vadd.f32 0.0, %v2486
        %v2488 = vpop.f32.mrb[0].mxu0
        %2489 = vmatprep.mubr.f32.mxu0 0.0
        %2490 = vmatmul.mubr.f32.gmra.mrb[0].mxu0 %v2268
        %v2491 = vpop.f32.mrb[0].mxu0
        %v2492 = vadd.f32 0.0, %v2491
        %v2493 = vpop.f32.mrb[0].mxu0
        %2494 = vmatprep.mubr.f32.mxu0 0.0
        %2495 = vmatmul.mubr.f32.gmra.mrb[0].mxu0 %v2269
        %v2496 = vpop.f32.mrb[0].mxu0
        %v2497 = vadd.f32 0.0, %v2496
        %v2498 = vpop.f32.mrb[0].mxu0
        %2499 = vmatprep.mubr.f32.mxu0 0.0
        %2500 = vmatmul.mubr.f32.gmra.mrb[0].mxu0 %v2270
        %v2501 = vpop.f32.mrb[0].mxu0
        %v2502 = vadd.f32 0.0, %v2501
        %v2503 = vpop.f32.mrb[0].mxu0
        %2504 = vmatprep.mubr.f32.mxu0 0.0
        %2505 = vmatmul.mubr.f32.gmra.mrb[0].mxu0 %v2271
        %v2506 = vpop.f32.mrb[0].mxu0
        %v2507 = vadd.f32 0.0, %v2506
        %v2508 = vpop.f32.mrb[0].mxu0
        %2509 = vmatprep.mubr.f32.mxu0 0.0
        %2510 = vmatmul.mubr.f32.gmra.mrb[0].mxu0 %v2272
        %v2511 = vpop.f32.mrb[0].mxu0
        %v2512 = vadd.f32 0.0, %v2511
        %v2513 = vpop.f32.mrb[0].mxu0
        %2514 = vmatprep.mubr.f32.mxu0 0.0
        %2515 = vmatmul.mubr.f32.gmra.mrb[0].mxu0 %v2273
        %v2516 = vpop.f32.mrb[0].mxu0
        %v2517 = vadd.f32 0.0, %v2516
        %v2518 = vpop.f32.mrb[0].mxu0
        %2519 = vmatprep.mubr.f32.mxu0 0.0
        %2520 = vmatmul.mubr.f32.gmra.mrb[0].mxu0 %v2274
        %v2521 = vpop.f32.mrb[0].mxu0
        %v2522 = vadd.f32 0.0, %v2521
        %v2523 = vpop.f32.mrb[0].mxu0
        %2524 = vmatprep.mubr.f32.mxu0 0.0
        %2525 = vmatmul.mubr.f32.gmra.mrb[0].mxu0 %v2275
        %v2526 = vpop.f32.mrb[0].mxu0
        %v2527 = vadd.f32 0.0, %v2526
        %v2528 = vpop.f32.mrb[0].mxu0
        %2529 = vmatprep.mubr.f32.mxu0 0.0
        %2530 = vmatmul.mubr.f32.gmra.mrb[0].mxu0 %v2276
        %v2531 = vpop.f32.mrb[0].mxu0
        %v2532 = vadd.f32 0.0, %v2531
        %v2533 = vpop.f32.mrb[0].mxu0
        %2534 = vmatprep.mubr.f32.mxu0 0.0
        %2535 = vmatmul.mubr.f32.gmra.mrb[0].mxu0 %v2277
        %v2536 = vpop.f32.mrb[0].mxu0
        %v2537 = vadd.f32 0.0, %v2536
        %v2538 = vpop.f32.mrb[0].mxu0
        %2539 = vmatprep.mubr.f32.mxu0 0.0
        %2540 = vmatmul.mubr.f32.gmra.mrb[0].mxu0 %v2278
        %v2541 = vpop.f32.mrb[0].mxu0
        %v2542 = vadd.f32 0.0, %v2541
        %v2543 = vpop.f32.mrb[0].mxu0
        %2544 = vmatprep.mubr.f32.mxu0 0.0
        %2545 = vmatmul.mubr.f32.gmra.mrb[0].mxu0 %v2279
        %v2546 = vpop.f32.mrb[0].mxu0
        %v2547 = vadd.f32 0.0, %v2546
        %v2548 = vpop.f32.mrb[0].mxu0
        %2549 = vmatprep.mubr.f32.mxu0 0.0
        %2550 = vmatmul.mubr.f32.gmra.mrb[0].mxu0 %v2280
        %v2551 = vpop.f32.mrb[0].mxu0
        %v2552 = vadd.f32 0.0, %v2551
        %v2553 = vpop.f32.mrb[0].mxu0
        %2554 = vmatprep.mubr.f32.mxu0 0.0
        %2555 = vmatmul.mubr.f32.gmra.mrb[0].mxu0 %v2281
        %v2556 = vpop.f32.mrb[0].mxu0
        %v2557 = vadd.f32 0.0, %v2556
        %v2558 = vpop.f32.mrb[0].mxu0
        %2559 = vmatprep.mubr.f32.mxu0 0.0
        %2560 = vmatmul.mubr.f32.gmra.mrb[0].mxu0 %v2282
        %v2561 = vpop.f32.mrb[0].mxu0
        %v2562 = vadd.f32 0.0, %v2561
        %v2563 = vpop.f32.mrb[0].mxu0
        %2564 = vmatprep.mubr.f32.mxu0 0.0
        %2565 = vmatmul.mubr.f32.gmra.mrb[0].mxu0 %v2283
        %v2566 = vpop.f32.mrb[0].mxu0
        %v2567 = vadd.f32 0.0, %v2566
        %v2568 = vpop.f32.mrb[0].mxu0
        %2569 = vmatprep.mubr.f32.mxu0 0.0
        %2570 = vmatmul.mubr.f32.gmra.mrb[0].mxu0 %v2284
        %v2571 = vpop.f32.mrb[0].mxu0
        %v2572 = vadd.f32 0.0, %v2571
        %v2573 = vpop.f32.mrb[0].mxu0
        %2574 = vmatprep.mubr.f32.mxu0 0.0
        %2575 = vmatmul.mubr.f32.gmra.mrb[0].mxu0 %v2285
        %v2576 = vpop.f32.mrb[0].mxu0
        %v2577 = vadd.f32 0.0, %v2576
        %v2578 = vpop.f32.mrb[0].mxu0
        %2579 = vmatprep.mubr.f32.mxu0 0.0
        %2580 = vmatmul.mubr.f32.gmra.mrb[0].mxu0 %v2286
        %v2581 = vpop.f32.mrb[0].mxu0
        %v2582 = vadd.f32 0.0, %v2581
        %v2583 = vpop.f32.mrb[0].mxu0
        %2584 = vdwg.mxu0
        %v2585 = vadd.f32 %v2287, %v2407
        %v2586 = vadd.f32 %v2288, %v2412
        %v2587 = vadd.f32 %v2289, %v2417
        %v2588 = vadd.f32 %v2290, %v2422
        %v2589 = vadd.f32 %v2291, %v2427
        %v2590 = vadd.f32 %v2292, %v2432
        %v2591 = vadd.f32 %v2293, %v2437
        %v2592 = vadd.f32 %v2294, %v2442
        %v2593 = vadd.f32 %v2295, %v2447
        %v2594 = vadd.f32 %v2296, %v2452
        %v2595 = vadd.f32 %v2297, %v2457
        %v2596 = vadd.f32 %v2298, %v2462
        %v2597 = vadd.f32 %v2299, %v2467
        %v2598 = vadd.f32 %v2300, %v2472
        %v2599 = vadd.f32 %v2301, %v2477
        %v2600 = vadd.f32 %v2302, %v2482
        %v2601 = vadd.f32 %v2303, %v2487
        %v2602 = vadd.f32 %v2304, %v2492
        %v2603 = vadd.f32 %v2305, %v2497
        %v2604 = vadd.f32 %v2306, %v2502
        %v2605 = vadd.f32 %v2307, %v2507
        %v2606 = vadd.f32 %v2308, %v2512
        %v2607 = vadd.f32 %v2309, %v2517
        %v2608 = vadd.f32 %v2310, %v2522
        %v2609 = vadd.f32 %v2311, %v2527
        %v2610 = vadd.f32 %v2312, %v2532
        %v2611 = vadd.f32 %v2313, %v2537
        %v2612 = vadd.f32 %v2314, %v2542
        %v2613 = vadd.f32 %v2315, %v2547
        %v2614 = vadd.f32 %v2316, %v2552
        %v2615 = vadd.f32 %v2317, %v2557
        %v2616 = vadd.f32 %v2318, %v2562
        %v2617 = vadd.f32 %v2319, %v2567
        %v2618 = vadd.f32 %v2320, %v2572
        %v2619 = vadd.f32 %v2321, %v2577
        %v2620 = vadd.f32 %v2322, %v2582
        %2621 = vst [vmem:[#allocation3] sm:$0xff] %v2585
        %2622 = vst [vmem:[#allocation3 + $0x8] sm:$0xff] %v2586
        %2623 = vst [vmem:[#allocation3 + $0x10] sm:$0xff] %v2587
        %2624 = vst [vmem:[#allocation3 + $0x18] sm:$0xff] %v2588
        %2625 = vst [vmem:[#allocation3 + $0x20] sm:$0xff] %v2589
        %2626 = vst [vmem:[#allocation3 + $0x28] sm:$0xff] %v2590
        %2627 = vst [vmem:[#allocation3 + $0x30] sm:$0xff] %v2591
        %2628 = vst [vmem:[#allocation3 + $0x38] sm:$0xff] %v2592
        %2629 = vst [vmem:[#allocation3 + $0x40] sm:$0xff] %v2593
        %2630 = vst [vmem:[#allocation3 + $0x48] sm:$0xff] %v2594
        %2631 = vst [vmem:[#allocation3 + $0x50] sm:$0xff] %v2595
        %2632 = vst [vmem:[#allocation3 + $0x58] sm:$0xff] %v2596
        %2633 = vst [vmem:[#allocation3 + $0x60] sm:$0xff] %v2597
        %2634 = vst [vmem:[#allocation3 + $0x68] sm:$0xff] %v2598
        %2635 = vst [vmem:[#allocation3 + $0x70] sm:$0xff] %v2599
        %2636 = vst [vmem:[#allocation3 + $0x78] sm:$0xff] %v2600
        %2637 = vst [vmem:[#allocation3 + $0x80] sm:$0xff] %v2601
        %2638 = vst [vmem:[#allocation3 + $0x88] sm:$0xff] %v2602
        %2639 = vst [vmem:[#allocation3 + $0x90] sm:$0xff] %v2603
        %2640 = vst [vmem:[#allocation3 + $0x98] sm:$0xff] %v2604
        %2641 = vst [vmem:[#allocation3 + $0xa0] sm:$0xff] %v2605
        %2642 = vst [vmem:[#allocation3 + $0xa8] sm:$0xff] %v2606
        %2643 = vst [vmem:[#allocation3 + $0xb0] sm:$0xff] %v2607
        %2644 = vst [vmem:[#allocation3 + $0xb8] sm:$0xff] %v2608
        %2645 = vst [vmem:[#allocation3 + $0xc0] sm:$0xff] %v2609
        %2646 = vst [vmem:[#allocation3 + $0xc8] sm:$0xff] %v2610
        %2647 = vst [vmem:[#allocation3 + $0xd0] sm:$0xff] %v2611
        %2648 = vst [vmem:[#allocation3 + $0xd8] sm:$0xff] %v2612
        %2649 = vst [vmem:[#allocation3 + $0xe0] sm:$0xff] %v2613
        %2650 = vst [vmem:[#allocation3 + $0xe8] sm:$0xff] %v2614
        %2651 = vst [vmem:[#allocation3 + $0xf0] sm:$0xff] %v2615
        %2652 = vst [vmem:[#allocation3 + $0xf8] sm:$0xff] %v2616
        %2653 = vst [vmem:[#allocation3 + $0x100] sm:$0xff] %v2617
        %2654 = vst [vmem:[#allocation3 + $0x108] sm:$0xff] %v2618
        %2655 = vst [vmem:[#allocation3 + $0x110] sm:$0xff] %v2619
        %2656 = vst [vmem:[#allocation3 + $0x118] sm:$0xff] %v2620
        %v2657 = vld [vmem:[#allocation2 + $0x24] sm:$0xff]
        %v2658 = vld [vmem:[#allocation2 + $0x2c] sm:$0xff]
        %v2659 = vld [vmem:[#allocation2 + $0x34] sm:$0xff]
        %v2660 = vld [vmem:[#allocation2 + $0x3c] sm:$0xff]
        %v2661 = vld [vmem:[#allocation2 + $0x44] sm:$0xff]
        %v2662 = vld [vmem:[#allocation2 + $0x4c] sm:$0xff]
        %v2663 = vld [vmem:[#allocation2 + $0x54] sm:$0xff]
        %v2664 = vld [vmem:[#allocation2 + $0x5c] sm:$0xff]
        %v2665 = vld [vmem:[#allocation2 + $0x64] sm:$0xff]
        %v2666 = vld [vmem:[#allocation2 + $0x6c] sm:$0xff]
        %v2667 = vld [vmem:[#allocation2 + $0x74] sm:$0xff]
        %v2668 = vld [vmem:[#allocation2 + $0x7c] sm:$0xff]
        %v2669 = vld [vmem:[#allocation2 + $0x84] sm:$0xff]
        %v2670 = vld [vmem:[#allocation2 + $0x8c] sm:$0xff]
        %v2671 = vld [vmem:[#allocation2 + $0x94] sm:$0xff]
        %v2672 = vld [vmem:[#allocation2 + $0x9c] sm:$0xff]
        %v2673 = vld [vmem:[#allocation2 + $0xa4] sm:$0xff]
        %v2674 = vld [vmem:[#allocation2 + $0xac] sm:$0xff]
        %v2675 = vld [vmem:[#allocation2 + $0xb4] sm:$0xff]
        %v2676 = vld [vmem:[#allocation2 + $0xbc] sm:$0xff]
        %v2677 = vld [vmem:[#allocation2 + $0xc4] sm:$0xff]
        %v2678 = vld [vmem:[#allocation2 + $0xcc] sm:$0xff]
        %v2679 = vld [vmem:[#allocation2 + $0xd4] sm:$0xff]
        %v2680 = vld [vmem:[#allocation2 + $0xdc] sm:$0xff]
        %v2681 = vld [vmem:[#allocation2 + $0xe4] sm:$0xff]
        %v2682 = vld [vmem:[#allocation2 + $0xec] sm:$0xff]
        %v2683 = vld [vmem:[#allocation2 + $0xf4] sm:$0xff]
        %v2684 = vld [vmem:[#allocation2 + $0xfc] sm:$0xff]
        %v2685 = vld [vmem:[#allocation2 + $0x104] sm:$0xff]
        %v2686 = vld [vmem:[#allocation2 + $0x10c] sm:$0xff]
        %v2687 = vld [vmem:[#allocation2 + $0x114] sm:$0xff]
        %v2688 = vld [vmem:[#allocation2 + $0x11c] sm:$0xff]
        %v2689 = vld [vmem:[#allocation2 + $0x124] sm:$0xff]
        %v2690 = vld [vmem:[#allocation2 + $0x12c] sm:$0xff]
        %v2691 = vld [vmem:[#allocation2 + $0x134] sm:$0xff]
        %v2692 = vld [vmem:[#allocation2 + $0x13c] sm:$0xff]
        %v2693 = vld [vmem:[#allocation3] sm:$0xff]
        %v2694 = vld [vmem:[#allocation3 + $0x8] sm:$0xff]
        %v2695 = vld [vmem:[#allocation3 + $0x10] sm:$0xff]
        %v2696 = vld [vmem:[#allocation3 + $0x18] sm:$0xff]
        %v2697 = vld [vmem:[#allocation3 + $0x20] sm:$0xff]
        %v2698 = vld [vmem:[#allocation3 + $0x28] sm:$0xff]
        %v2699 = vld [vmem:[#allocation3 + $0x30] sm:$0xff]
        %v2700 = vld [vmem:[#allocation3 + $0x38] sm:$0xff]
        %v2701 = vld [vmem:[#allocation3 + $0x40] sm:$0xff]
        %v2702 = vld [vmem:[#allocation3 + $0x48] sm:$0xff]
        %v2703 = vld [vmem:[#allocation3 + $0x50] sm:$0xff]
        %v2704 = vld [vmem:[#allocation3 + $0x58] sm:$0xff]
        %v2705 = vld [vmem:[#allocation3 + $0x60] sm:$0xff]
        %v2706 = vld [vmem:[#allocation3 + $0x68] sm:$0xff]
        %v2707 = vld [vmem:[#allocation3 + $0x70] sm:$0xff]
        %v2708 = vld [vmem:[#allocation3 + $0x78] sm:$0xff]
        %v2709 = vld [vmem:[#allocation3 + $0x80] sm:$0xff]
        %v2710 = vld [vmem:[#allocation3 + $0x88] sm:$0xff]
        %v2711 = vld [vmem:[#allocation3 + $0x90] sm:$0xff]
        %v2712 = vld [vmem:[#allocation3 + $0x98] sm:$0xff]
        %v2713 = vld [vmem:[#allocation3 + $0xa0] sm:$0xff]
        %v2714 = vld [vmem:[#allocation3 + $0xa8] sm:$0xff]
        %v2715 = vld [vmem:[#allocation3 + $0xb0] sm:$0xff]
        %v2716 = vld [vmem:[#allocation3 + $0xb8] sm:$0xff]
        %v2717 = vld [vmem:[#allocation3 + $0xc0] sm:$0xff]
        %v2718 = vld [vmem:[#allocation3 + $0xc8] sm:$0xff]
        %v2719 = vld [vmem:[#allocation3 + $0xd0] sm:$0xff]
        %v2720 = vld [vmem:[#allocation3 + $0xd8] sm:$0xff]
        %v2721 = vld [vmem:[#allocation3 + $0xe0] sm:$0xff]
        %v2722 = vld [vmem:[#allocation3 + $0xe8] sm:$0xff]
        %v2723 = vld [vmem:[#allocation3 + $0xf0] sm:$0xff]
        %v2724 = vld [vmem:[#allocation3 + $0xf8] sm:$0xff]
        %v2725 = vld [vmem:[#allocation3 + $0x100] sm:$0xff]
        %v2726 = vld [vmem:[#allocation3 + $0x108] sm:$0xff]
        %v2727 = vld [vmem:[#allocation3 + $0x110] sm:$0xff]
        %v2728 = vld [vmem:[#allocation3 + $0x118] sm:$0xff]
        %s2729 = scalar_lea.vmem [#allocation5], 768
        %v2730 = vld [vmem:[%s2729] sm:$0xff]
        %v2731 = vld [vmem:[%s2729 + $0x8] sm:$0xff]
        %v2732 = vld [vmem:[%s2729 + $0x10] sm:$0xff]
        %v2733 = vld [vmem:[%s2729 + $0x18] sm:$0xff]
        %v2734 = vld [vmem:[%s2729 + $0x20] sm:$0xff]
        %v2735 = vld [vmem:[%s2729 + $0x28] sm:$0xff]
        %v2736 = vld [vmem:[%s2729 + $0x30] sm:$0xff]
        %v2737 = vld [vmem:[%s2729 + $0x38] sm:$0xff]
        %v2738 = vld [vmem:[%s2729 + $0x40] sm:$0xff]
        %v2739 = vld [vmem:[%s2729 + $0x48] sm:$0xff]
        %v2740 = vld [vmem:[%s2729 + $0x50] sm:$0xff]
        %v2741 = vld [vmem:[%s2729 + $0x58] sm:$0xff]
        %v2742 = vld [vmem:[%s2729 + $0x60] sm:$0xff]
        %v2743 = vld [vmem:[%s2729 + $0x68] sm:$0xff]
        %v2744 = vld [vmem:[%s2729 + $0x70] sm:$0xff]
        %v2745 = vld [vmem:[%s2729 + $0x78] sm:$0xff]
        %2746 = vmatprep.subr.mxu0 0.0
        %2747 = vmatpush1.msra.mxu0 %v2730
        %2748 = vmatprep.subr.mxu0 0.0
        %2749 = vmatpush1.msra.mxu0 %v2731
        %2750 = vmatprep.subr.mxu0 0.0
        %2751 = vmatpush1.msra.mxu0 %v2732
        %2752 = vmatprep.subr.mxu0 0.0
        %2753 = vmatpush1.msra.mxu0 %v2733
        %2754 = vmatprep.subr.mxu0 0.0
        %2755 = vmatpush1.msra.mxu0 %v2734
        %2756 = vmatprep.subr.mxu0 0.0
        %2757 = vmatpush1.msra.mxu0 %v2735
        %2758 = vmatprep.subr.mxu0 0.0
        %2759 = vmatpush1.msra.mxu0 %v2736
        %2760 = vmatprep.subr.mxu0 0.0
        %2761 = vmatpush1.msra.mxu0 %v2737
        %2762 = vmatprep.subr.mxu0 0.0
        %2763 = vmatpush1.msra.mxu0 %v2738
        %2764 = vmatprep.subr.mxu0 0.0
        %2765 = vmatpush1.msra.mxu0 %v2739
        %2766 = vmatprep.subr.mxu0 0.0
        %2767 = vmatpush1.msra.mxu0 %v2740
        %2768 = vmatprep.subr.mxu0 0.0
        %2769 = vmatpush1.msra.mxu0 %v2741
        %2770 = vmatprep.subr.mxu0 0.0
        %2771 = vmatpush1.msra.mxu0 %v2742
        %2772 = vmatprep.subr.mxu0 0.0
        %2773 = vmatpush1.msra.mxu0 %v2743
        %2774 = vmatprep.subr.mxu0 0.0
        %2775 = vmatpush1.msra.mxu0 %v2744
        %2776 = vmatprep.subr.mxu0 0.0
        %2777 = vmatpush1.msra.mxu0 %v2745
        %2778 = vmatprep.subr.mxu0 0.0
        %2779 = vmatpush1.msra.mxu0 0.0
        %2780 = vmatprep.subr.mxu0 0.0
        %2781 = vmatpush1.msra.mxu0 0.0
        %2782 = vmatprep.subr.mxu0 0.0
        %2783 = vmatpush1.msra.mxu0 0.0
        %2784 = vmatprep.subr.mxu0 0.0
        %2785 = vmatpush1.msra.mxu0 0.0
        %2786 = vmatprep.subr.mxu0 0.0
        %2787 = vmatpush1.msra.mxu0 0.0
        %2788 = vmatprep.subr.mxu0 0.0
        %2789 = vmatpush1.msra.mxu0 0.0
        %2790 = vmatprep.subr.mxu0 0.0
        %2791 = vmatpush1.msra.mxu0 0.0
        %2792 = vmatprep.subr.mxu0 0.0
        %2793 = vmatpush1.msra.mxu0 0.0
        %2794 = vmatprep.subr.mxu0 0.0
        %2795 = vmatpush1.msra.mxu0 0.0
        %2796 = vmatprep.subr.mxu0 0.0
        %2797 = vmatpush1.msra.mxu0 0.0
        %2798 = vmatprep.subr.mxu0 0.0
        %2799 = vmatpush1.msra.mxu0 0.0
        %2800 = vmatprep.subr.mxu0 0.0
        %2801 = vmatpush1.msra.mxu0 0.0
        %2802 = vmatprep.subr.mxu0 0.0
        %2803 = vmatpush1.msra.mxu0 0.0
        %2804 = vmatprep.subr.mxu0 0.0
        %2805 = vmatpush1.msra.mxu0 0.0
        %2806 = vmatprep.subr.mxu0 0.0
        %2807 = vmatpush1.msra.mxu0 0.0
        %2808 = vmatprep.subr.mxu0 0.0
        %2809 = vmatpush1.msra.mxu0 0.0
        %2810 = vmatprep.mubr.f32.mxu0 0.0
        %2811 = vmatmul.mubr.f32.gmra.mrb[0].mxu0 %v2657
        %v2812 = vpop.f32.mrb[0].mxu0
        %v2813 = vadd.f32 0.0, %v2812
        %v2814 = vpop.f32.mrb[0].mxu0
        %2815 = vmatprep.mubr.f32.mxu0 0.0
        %2816 = vmatmul.mubr.f32.gmra.mrb[0].mxu0 %v2658
        %v2817 = vpop.f32.mrb[0].mxu0
        %v2818 = vadd.f32 0.0, %v2817
        %v2819 = vpop.f32.mrb[0].mxu0
        %2820 = vmatprep.mubr.f32.mxu0 0.0
        %2821 = vmatmul.mubr.f32.gmra.mrb[0].mxu0 %v2659
        %v2822 = vpop.f32.mrb[0].mxu0
        %v2823 = vadd.f32 0.0, %v2822
        %v2824 = vpop.f32.mrb[0].mxu0
        %2825 = vmatprep.mubr.f32.mxu0 0.0
        %2826 = vmatmul.mubr.f32.gmra.mrb[0].mxu0 %v2660
        %v2827 = vpop.f32.mrb[0].mxu0
        %v2828 = vadd.f32 0.0, %v2827
        %v2829 = vpop.f32.mrb[0].mxu0
        %2830 = vmatprep.mubr.f32.mxu0 0.0
        %2831 = vmatmul.mubr.f32.gmra.mrb[0].mxu0 %v2661
        %v2832 = vpop.f32.mrb[0].mxu0
        %v2833 = vadd.f32 0.0, %v2832
        %v2834 = vpop.f32.mrb[0].mxu0
        %2835 = vmatprep.mubr.f32.mxu0 0.0
        %2836 = vmatmul.mubr.f32.gmra.mrb[0].mxu0 %v2662
        %v2837 = vpop.f32.mrb[0].mxu0
        %v2838 = vadd.f32 0.0, %v2837
        %v2839 = vpop.f32.mrb[0].mxu0
        %2840 = vmatprep.mubr.f32.mxu0 0.0
        %2841 = vmatmul.mubr.f32.gmra.mrb[0].mxu0 %v2663
        %v2842 = vpop.f32.mrb[0].mxu0
        %v2843 = vadd.f32 0.0, %v2842
        %v2844 = vpop.f32.mrb[0].mxu0
        %2845 = vmatprep.mubr.f32.mxu0 0.0
        %2846 = vmatmul.mubr.f32.gmra.mrb[0].mxu0 %v2664
        %v2847 = vpop.f32.mrb[0].mxu0
        %v2848 = vadd.f32 0.0, %v2847
        %v2849 = vpop.f32.mrb[0].mxu0
        %2850 = vmatprep.mubr.f32.mxu0 0.0
        %2851 = vmatmul.mubr.f32.gmra.mrb[0].mxu0 %v2665
        %v2852 = vpop.f32.mrb[0].mxu0
        %v2853 = vadd.f32 0.0, %v2852
        %v2854 = vpop.f32.mrb[0].mxu0
        %2855 = vmatprep.mubr.f32.mxu0 0.0
        %2856 = vmatmul.mubr.f32.gmra.mrb[0].mxu0 %v2666
        %v2857 = vpop.f32.mrb[0].mxu0
        %v2858 = vadd.f32 0.0, %v2857
        %v2859 = vpop.f32.mrb[0].mxu0
        %2860 = vmatprep.mubr.f32.mxu0 0.0
        %2861 = vmatmul.mubr.f32.gmra.mrb[0].mxu0 %v2667
        %v2862 = vpop.f32.mrb[0].mxu0
        %v2863 = vadd.f32 0.0, %v2862
        %v2864 = vpop.f32.mrb[0].mxu0
        %2865 = vmatprep.mubr.f32.mxu0 0.0
        %2866 = vmatmul.mubr.f32.gmra.mrb[0].mxu0 %v2668
        %v2867 = vpop.f32.mrb[0].mxu0
        %v2868 = vadd.f32 0.0, %v2867
        %v2869 = vpop.f32.mrb[0].mxu0
        %2870 = vmatprep.mubr.f32.mxu0 0.0
        %2871 = vmatmul.mubr.f32.gmra.mrb[0].mxu0 %v2669
        %v2872 = vpop.f32.mrb[0].mxu0
        %v2873 = vadd.f32 0.0, %v2872
        %v2874 = vpop.f32.mrb[0].mxu0
        %2875 = vmatprep.mubr.f32.mxu0 0.0
        %2876 = vmatmul.mubr.f32.gmra.mrb[0].mxu0 %v2670
        %v2877 = vpop.f32.mrb[0].mxu0
        %v2878 = vadd.f32 0.0, %v2877
        %v2879 = vpop.f32.mrb[0].mxu0
        %2880 = vmatprep.mubr.f32.mxu0 0.0
        %2881 = vmatmul.mubr.f32.gmra.mrb[0].mxu0 %v2671
        %v2882 = vpop.f32.mrb[0].mxu0
        %v2883 = vadd.f32 0.0, %v2882
        %v2884 = vpop.f32.mrb[0].mxu0
        %2885 = vmatprep.mubr.f32.mxu0 0.0
        %2886 = vmatmul.mubr.f32.gmra.mrb[0].mxu0 %v2672
        %v2887 = vpop.f32.mrb[0].mxu0
        %v2888 = vadd.f32 0.0, %v2887
        %v2889 = vpop.f32.mrb[0].mxu0
        %2890 = vmatprep.mubr.f32.mxu0 0.0
        %2891 = vmatmul.mubr.f32.gmra.mrb[0].mxu0 %v2673
        %v2892 = vpop.f32.mrb[0].mxu0
        %v2893 = vadd.f32 0.0, %v2892
        %v2894 = vpop.f32.mrb[0].mxu0
        %2895 = vmatprep.mubr.f32.mxu0 0.0
        %2896 = vmatmul.mubr.f32.gmra.mrb[0].mxu0 %v2674
        %v2897 = vpop.f32.mrb[0].mxu0
        %v2898 = vadd.f32 0.0, %v2897
        %v2899 = vpop.f32.mrb[0].mxu0
        %2900 = vmatprep.mubr.f32.mxu0 0.0
        %2901 = vmatmul.mubr.f32.gmra.mrb[0].mxu0 %v2675
        %v2902 = vpop.f32.mrb[0].mxu0
        %v2903 = vadd.f32 0.0, %v2902
        %v2904 = vpop.f32.mrb[0].mxu0
        %2905 = vmatprep.mubr.f32.mxu0 0.0
        %2906 = vmatmul.mubr.f32.gmra.mrb[0].mxu0 %v2676
        %v2907 = vpop.f32.mrb[0].mxu0
        %v2908 = vadd.f32 0.0, %v2907
        %v2909 = vpop.f32.mrb[0].mxu0
        %2910 = vmatprep.mubr.f32.mxu0 0.0
        %2911 = vmatmul.mubr.f32.gmra.mrb[0].mxu0 %v2677
        %v2912 = vpop.f32.mrb[0].mxu0
        %v2913 = vadd.f32 0.0, %v2912
        %v2914 = vpop.f32.mrb[0].mxu0
        %2915 = vmatprep.mubr.f32.mxu0 0.0
        %2916 = vmatmul.mubr.f32.gmra.mrb[0].mxu0 %v2678
        %v2917 = vpop.f32.mrb[0].mxu0
        %v2918 = vadd.f32 0.0, %v2917
        %v2919 = vpop.f32.mrb[0].mxu0
        %2920 = vmatprep.mubr.f32.mxu0 0.0
        %2921 = vmatmul.mubr.f32.gmra.mrb[0].mxu0 %v2679
        %v2922 = vpop.f32.mrb[0].mxu0
        %v2923 = vadd.f32 0.0, %v2922
        %v2924 = vpop.f32.mrb[0].mxu0
        %2925 = vmatprep.mubr.f32.mxu0 0.0
        %2926 = vmatmul.mubr.f32.gmra.mrb[0].mxu0 %v2680
        %v2927 = vpop.f32.mrb[0].mxu0
        %v2928 = vadd.f32 0.0, %v2927
        %v2929 = vpop.f32.mrb[0].mxu0
        %2930 = vmatprep.mubr.f32.mxu0 0.0
        %2931 = vmatmul.mubr.f32.gmra.mrb[0].mxu0 %v2681
        %v2932 = vpop.f32.mrb[0].mxu0
        %v2933 = vadd.f32 0.0, %v2932
        %v2934 = vpop.f32.mrb[0].mxu0
        %2935 = vmatprep.mubr.f32.mxu0 0.0
        %2936 = vmatmul.mubr.f32.gmra.mrb[0].mxu0 %v2682
        %v2937 = vpop.f32.mrb[0].mxu0
        %v2938 = vadd.f32 0.0, %v2937
        %v2939 = vpop.f32.mrb[0].mxu0
        %2940 = vmatprep.mubr.f32.mxu0 0.0
        %2941 = vmatmul.mubr.f32.gmra.mrb[0].mxu0 %v2683
        %v2942 = vpop.f32.mrb[0].mxu0
        %v2943 = vadd.f32 0.0, %v2942
        %v2944 = vpop.f32.mrb[0].mxu0
        %2945 = vmatprep.mubr.f32.mxu0 0.0
        %2946 = vmatmul.mubr.f32.gmra.mrb[0].mxu0 %v2684
        %v2947 = vpop.f32.mrb[0].mxu0
        %v2948 = vadd.f32 0.0, %v2947
        %v2949 = vpop.f32.mrb[0].mxu0
        %2950 = vmatprep.mubr.f32.mxu0 0.0
        %2951 = vmatmul.mubr.f32.gmra.mrb[0].mxu0 %v2685
        %v2952 = vpop.f32.mrb[0].mxu0
        %v2953 = vadd.f32 0.0, %v2952
        %v2954 = vpop.f32.mrb[0].mxu0
        %2955 = vmatprep.mubr.f32.mxu0 0.0
        %2956 = vmatmul.mubr.f32.gmra.mrb[0].mxu0 %v2686
        %v2957 = vpop.f32.mrb[0].mxu0
        %v2958 = vadd.f32 0.0, %v2957
        %v2959 = vpop.f32.mrb[0].mxu0
        %2960 = vmatprep.mubr.f32.mxu0 0.0
        %2961 = vmatmul.mubr.f32.gmra.mrb[0].mxu0 %v2687
        %v2962 = vpop.f32.mrb[0].mxu0
        %v2963 = vadd.f32 0.0, %v2962
        %v2964 = vpop.f32.mrb[0].mxu0
        %2965 = vmatprep.mubr.f32.mxu0 0.0
        %2966 = vmatmul.mubr.f32.gmra.mrb[0].mxu0 %v2688
        %v2967 = vpop.f32.mrb[0].mxu0
        %v2968 = vadd.f32 0.0, %v2967
        %v2969 = vpop.f32.mrb[0].mxu0
        %2970 = vmatprep.mubr.f32.mxu0 0.0
        %2971 = vmatmul.mubr.f32.gmra.mrb[0].mxu0 %v2689
        %v2972 = vpop.f32.mrb[0].mxu0
        %v2973 = vadd.f32 0.0, %v2972
        %v2974 = vpop.f32.mrb[0].mxu0
        %2975 = vmatprep.mubr.f32.mxu0 0.0
        %2976 = vmatmul.mubr.f32.gmra.mrb[0].mxu0 %v2690
        %v2977 = vpop.f32.mrb[0].mxu0
        %v2978 = vadd.f32 0.0, %v2977
        %v2979 = vpop.f32.mrb[0].mxu0
        %2980 = vmatprep.mubr.f32.mxu0 0.0
        %2981 = vmatmul.mubr.f32.gmra.mrb[0].mxu0 %v2691
        %v2982 = vpop.f32.mrb[0].mxu0
        %v2983 = vadd.f32 0.0, %v2982
        %v2984 = vpop.f32.mrb[0].mxu0
        %2985 = vmatprep.mubr.f32.mxu0 0.0
        %2986 = vmatmul.mubr.f32.gmra.mrb[0].mxu0 %v2692
        %v2987 = vpop.f32.mrb[0].mxu0
        %v2988 = vadd.f32 0.0, %v2987
        %v2989 = vpop.f32.mrb[0].mxu0
        %2990 = vdwg.mxu0
        %v2991 = vadd.f32 %v2693, %v2813
        %v2992 = vadd.f32 %v2694, %v2818
        %v2993 = vadd.f32 %v2695, %v2823
        %v2994 = vadd.f32 %v2696, %v2828
        %v2995 = vadd.f32 %v2697, %v2833
        %v2996 = vadd.f32 %v2698, %v2838
        %v2997 = vadd.f32 %v2699, %v2843
        %v2998 = vadd.f32 %v2700, %v2848
        %v2999 = vadd.f32 %v2701, %v2853
        %v3000 = vadd.f32 %v2702, %v2858
        %v3001 = vadd.f32 %v2703, %v2863
        %v3002 = vadd.f32 %v2704, %v2868
        %v3003 = vadd.f32 %v2705, %v2873
        %v3004 = vadd.f32 %v2706, %v2878
        %v3005 = vadd.f32 %v2707, %v2883
        %v3006 = vadd.f32 %v2708, %v2888
        %v3007 = vadd.f32 %v2709, %v2893
        %v3008 = vadd.f32 %v2710, %v2898
        %v3009 = vadd.f32 %v2711, %v2903
        %v3010 = vadd.f32 %v2712, %v2908
        %v3011 = vadd.f32 %v2713, %v2913
        %v3012 = vadd.f32 %v2714, %v2918
        %v3013 = vadd.f32 %v2715, %v2923
        %v3014 = vadd.f32 %v2716, %v2928
        %v3015 = vadd.f32 %v2717, %v2933
        %v3016 = vadd.f32 %v2718, %v2938
        %v3017 = vadd.f32 %v2719, %v2943
        %v3018 = vadd.f32 %v2720, %v2948
        %v3019 = vadd.f32 %v2721, %v2953
        %v3020 = vadd.f32 %v2722, %v2958
        %v3021 = vadd.f32 %v2723, %v2963
        %v3022 = vadd.f32 %v2724, %v2968
        %v3023 = vadd.f32 %v2725, %v2973
        %v3024 = vadd.f32 %v2726, %v2978
        %v3025 = vadd.f32 %v2727, %v2983
        %v3026 = vadd.f32 %v2728, %v2988
        %3027 = vst [vmem:[#allocation3] sm:$0xff] %v2991
        %3028 = vst [vmem:[#allocation3 + $0x8] sm:$0xff] %v2992
        %3029 = vst [vmem:[#allocation3 + $0x10] sm:$0xff] %v2993
        %3030 = vst [vmem:[#allocation3 + $0x18] sm:$0xff] %v2994
        %3031 = vst [vmem:[#allocation3 + $0x20] sm:$0xff] %v2995
        %3032 = vst [vmem:[#allocation3 + $0x28] sm:$0xff] %v2996
        %3033 = vst [vmem:[#allocation3 + $0x30] sm:$0xff] %v2997
        %3034 = vst [vmem:[#allocation3 + $0x38] sm:$0xff] %v2998
        %3035 = vst [vmem:[#allocation3 + $0x40] sm:$0xff] %v2999
        %3036 = vst [vmem:[#allocation3 + $0x48] sm:$0xff] %v3000
        %3037 = vst [vmem:[#allocation3 + $0x50] sm:$0xff] %v3001
        %3038 = vst [vmem:[#allocation3 + $0x58] sm:$0xff] %v3002
        %3039 = vst [vmem:[#allocation3 + $0x60] sm:$0xff] %v3003
        %3040 = vst [vmem:[#allocation3 + $0x68] sm:$0xff] %v3004
        %3041 = vst [vmem:[#allocation3 + $0x70] sm:$0xff] %v3005
        %3042 = vst [vmem:[#allocation3 + $0x78] sm:$0xff] %v3006
        %3043 = vst [vmem:[#allocation3 + $0x80] sm:$0xff] %v3007
        %3044 = vst [vmem:[#allocation3 + $0x88] sm:$0xff] %v3008
        %3045 = vst [vmem:[#allocation3 + $0x90] sm:$0xff] %v3009
        %3046 = vst [vmem:[#allocation3 + $0x98] sm:$0xff] %v3010
        %3047 = vst [vmem:[#allocation3 + $0xa0] sm:$0xff] %v3011
        %3048 = vst [vmem:[#allocation3 + $0xa8] sm:$0xff] %v3012
        %3049 = vst [vmem:[#allocation3 + $0xb0] sm:$0xff] %v3013
        %3050 = vst [vmem:[#allocation3 + $0xb8] sm:$0xff] %v3014
        %3051 = vst [vmem:[#allocation3 + $0xc0] sm:$0xff] %v3015
        %3052 = vst [vmem:[#allocation3 + $0xc8] sm:$0xff] %v3016
        %3053 = vst [vmem:[#allocation3 + $0xd0] sm:$0xff] %v3017
        %3054 = vst [vmem:[#allocation3 + $0xd8] sm:$0xff] %v3018
        %3055 = vst [vmem:[#allocation3 + $0xe0] sm:$0xff] %v3019
        %3056 = vst [vmem:[#allocation3 + $0xe8] sm:$0xff] %v3020
        %3057 = vst [vmem:[#allocation3 + $0xf0] sm:$0xff] %v3021
        %3058 = vst [vmem:[#allocation3 + $0xf8] sm:$0xff] %v3022
        %3059 = vst [vmem:[#allocation3 + $0x100] sm:$0xff] %v3023
        %3060 = vst [vmem:[#allocation3 + $0x108] sm:$0xff] %v3024
        %3061 = vst [vmem:[#allocation3 + $0x110] sm:$0xff] %v3025
        %3062 = vst [vmem:[#allocation3 + $0x118] sm:$0xff] %v3026
        %v3063 = vld [vmem:[#allocation2 + $0x25] sm:$0xff]
        %v3064 = vld [vmem:[#allocation2 + $0x2d] sm:$0xff]
        %v3065 = vld [vmem:[#allocation2 + $0x35] sm:$0xff]
        %v3066 = vld [vmem:[#allocation2 + $0x3d] sm:$0xff]
        %v3067 = vld [vmem:[#allocation2 + $0x45] sm:$0xff]
        %v3068 = vld [vmem:[#allocation2 + $0x4d] sm:$0xff]
        %v3069 = vld [vmem:[#allocation2 + $0x55] sm:$0xff]
        %v3070 = vld [vmem:[#allocation2 + $0x5d] sm:$0xff]
        %v3071 = vld [vmem:[#allocation2 + $0x65] sm:$0xff]
        %v3072 = vld [vmem:[#allocation2 + $0x6d] sm:$0xff]
        %v3073 = vld [vmem:[#allocation2 + $0x75] sm:$0xff]
        %v3074 = vld [vmem:[#allocation2 + $0x7d] sm:$0xff]
        %v3075 = vld [vmem:[#allocation2 + $0x85] sm:$0xff]
        %v3076 = vld [vmem:[#allocation2 + $0x8d] sm:$0xff]
        %v3077 = vld [vmem:[#allocation2 + $0x95] sm:$0xff]
        %v3078 = vld [vmem:[#allocation2 + $0x9d] sm:$0xff]
        %v3079 = vld [vmem:[#allocation2 + $0xa5] sm:$0xff]
        %v3080 = vld [vmem:[#allocation2 + $0xad] sm:$0xff]
        %v3081 = vld [vmem:[#allocation2 + $0xb5] sm:$0xff]
        %v3082 = vld [vmem:[#allocation2 + $0xbd] sm:$0xff]
        %v3083 = vld [vmem:[#allocation2 + $0xc5] sm:$0xff]
        %v3084 = vld [vmem:[#allocation2 + $0xcd] sm:$0xff]
        %v3085 = vld [vmem:[#allocation2 + $0xd5] sm:$0xff]
        %v3086 = vld [vmem:[#allocation2 + $0xdd] sm:$0xff]
        %v3087 = vld [vmem:[#allocation2 + $0xe5] sm:$0xff]
        %v3088 = vld [vmem:[#allocation2 + $0xed] sm:$0xff]
        %v3089 = vld [vmem:[#allocation2 + $0xf5] sm:$0xff]
        %v3090 = vld [vmem:[#allocation2 + $0xfd] sm:$0xff]
        %v3091 = vld [vmem:[#allocation2 + $0x105] sm:$0xff]
        %v3092 = vld [vmem:[#allocation2 + $0x10d] sm:$0xff]
        %v3093 = vld [vmem:[#allocation2 + $0x115] sm:$0xff]
        %v3094 = vld [vmem:[#allocation2 + $0x11d] sm:$0xff]
        %v3095 = vld [vmem:[#allocation2 + $0x125] sm:$0xff]
        %v3096 = vld [vmem:[#allocation2 + $0x12d] sm:$0xff]
        %v3097 = vld [vmem:[#allocation2 + $0x135] sm:$0xff]
        %v3098 = vld [vmem:[#allocation2 + $0x13d] sm:$0xff]
        %v3099 = vld [vmem:[#allocation3] sm:$0xff]
        %v3100 = vld [vmem:[#allocation3 + $0x8] sm:$0xff]
        %v3101 = vld [vmem:[#allocation3 + $0x10] sm:$0xff]
        %v3102 = vld [vmem:[#allocation3 + $0x18] sm:$0xff]
        %v3103 = vld [vmem:[#allocation3 + $0x20] sm:$0xff]
        %v3104 = vld [vmem:[#allocation3 + $0x28] sm:$0xff]
        %v3105 = vld [vmem:[#allocation3 + $0x30] sm:$0xff]
        %v3106 = vld [vmem:[#allocation3 + $0x38] sm:$0xff]
        %v3107 = vld [vmem:[#allocation3 + $0x40] sm:$0xff]
        %v3108 = vld [vmem:[#allocation3 + $0x48] sm:$0xff]
        %v3109 = vld [vmem:[#allocation3 + $0x50] sm:$0xff]
        %v3110 = vld [vmem:[#allocation3 + $0x58] sm:$0xff]
        %v3111 = vld [vmem:[#allocation3 + $0x60] sm:$0xff]
        %v3112 = vld [vmem:[#allocation3 + $0x68] sm:$0xff]
        %v3113 = vld [vmem:[#allocation3 + $0x70] sm:$0xff]
        %v3114 = vld [vmem:[#allocation3 + $0x78] sm:$0xff]
        %v3115 = vld [vmem:[#allocation3 + $0x80] sm:$0xff]
        %v3116 = vld [vmem:[#allocation3 + $0x88] sm:$0xff]
        %v3117 = vld [vmem:[#allocation3 + $0x90] sm:$0xff]
        %v3118 = vld [vmem:[#allocation3 + $0x98] sm:$0xff]
        %v3119 = vld [vmem:[#allocation3 + $0xa0] sm:$0xff]
        %v3120 = vld [vmem:[#allocation3 + $0xa8] sm:$0xff]
        %v3121 = vld [vmem:[#allocation3 + $0xb0] sm:$0xff]
        %v3122 = vld [vmem:[#allocation3 + $0xb8] sm:$0xff]
        %v3123 = vld [vmem:[#allocation3 + $0xc0] sm:$0xff]
        %v3124 = vld [vmem:[#allocation3 + $0xc8] sm:$0xff]
        %v3125 = vld [vmem:[#allocation3 + $0xd0] sm:$0xff]
        %v3126 = vld [vmem:[#allocation3 + $0xd8] sm:$0xff]
        %v3127 = vld [vmem:[#allocation3 + $0xe0] sm:$0xff]
        %v3128 = vld [vmem:[#allocation3 + $0xe8] sm:$0xff]
        %v3129 = vld [vmem:[#allocation3 + $0xf0] sm:$0xff]
        %v3130 = vld [vmem:[#allocation3 + $0xf8] sm:$0xff]
        %v3131 = vld [vmem:[#allocation3 + $0x100] sm:$0xff]
        %v3132 = vld [vmem:[#allocation3 + $0x108] sm:$0xff]
        %v3133 = vld [vmem:[#allocation3 + $0x110] sm:$0xff]
        %v3134 = vld [vmem:[#allocation3 + $0x118] sm:$0xff]
        %s3135 = scalar_lea.vmem [#allocation5], 896
        %v3136 = vld [vmem:[%s3135] sm:$0xff]
        %v3137 = vld [vmem:[%s3135 + $0x8] sm:$0xff]
        %v3138 = vld [vmem:[%s3135 + $0x10] sm:$0xff]
        %v3139 = vld [vmem:[%s3135 + $0x18] sm:$0xff]
        %v3140 = vld [vmem:[%s3135 + $0x20] sm:$0xff]
        %v3141 = vld [vmem:[%s3135 + $0x28] sm:$0xff]
        %v3142 = vld [vmem:[%s3135 + $0x30] sm:$0xff]
        %v3143 = vld [vmem:[%s3135 + $0x38] sm:$0xff]
        %v3144 = vld [vmem:[%s3135 + $0x40] sm:$0xff]
        %v3145 = vld [vmem:[%s3135 + $0x48] sm:$0xff]
        %v3146 = vld [vmem:[%s3135 + $0x50] sm:$0xff]
        %v3147 = vld [vmem:[%s3135 + $0x58] sm:$0xff]
        %v3148 = vld [vmem:[%s3135 + $0x60] sm:$0xff]
        %v3149 = vld [vmem:[%s3135 + $0x68] sm:$0xff]
        %v3150 = vld [vmem:[%s3135 + $0x70] sm:$0xff]
        %v3151 = vld [vmem:[%s3135 + $0x78] sm:$0xff]
        %3152 = vmatprep.subr.mxu0 0.0
        %3153 = vmatpush1.msra.mxu0 %v3136
        %3154 = vmatprep.subr.mxu0 0.0
        %3155 = vmatpush1.msra.mxu0 %v3137
        %3156 = vmatprep.subr.mxu0 0.0
        %3157 = vmatpush1.msra.mxu0 %v3138
        %3158 = vmatprep.subr.mxu0 0.0
        %3159 = vmatpush1.msra.mxu0 %v3139
        %3160 = vmatprep.subr.mxu0 0.0
        %3161 = vmatpush1.msra.mxu0 %v3140
        %3162 = vmatprep.subr.mxu0 0.0
        %3163 = vmatpush1.msra.mxu0 %v3141
        %3164 = vmatprep.subr.mxu0 0.0
        %3165 = vmatpush1.msra.mxu0 %v3142
        %3166 = vmatprep.subr.mxu0 0.0
        %3167 = vmatpush1.msra.mxu0 %v3143
        %3168 = vmatprep.subr.mxu0 0.0
        %3169 = vmatpush1.msra.mxu0 %v3144
        %3170 = vmatprep.subr.mxu0 0.0
        %3171 = vmatpush1.msra.mxu0 %v3145
        %3172 = vmatprep.subr.mxu0 0.0
        %3173 = vmatpush1.msra.mxu0 %v3146
        %3174 = vmatprep.subr.mxu0 0.0
        %3175 = vmatpush1.msra.mxu0 %v3147
        %3176 = vmatprep.subr.mxu0 0.0
        %3177 = vmatpush1.msra.mxu0 %v3148
        %3178 = vmatprep.subr.mxu0 0.0
        %3179 = vmatpush1.msra.mxu0 %v3149
        %3180 = vmatprep.subr.mxu0 0.0
        %3181 = vmatpush1.msra.mxu0 %v3150
        %3182 = vmatprep.subr.mxu0 0.0
        %3183 = vmatpush1.msra.mxu0 %v3151
        %3184 = vmatprep.subr.mxu0 0.0
        %3185 = vmatpush1.msra.mxu0 0.0
        %3186 = vmatprep.subr.mxu0 0.0
        %3187 = vmatpush1.msra.mxu0 0.0
        %3188 = vmatprep.subr.mxu0 0.0
        %3189 = vmatpush1.msra.mxu0 0.0
        %3190 = vmatprep.subr.mxu0 0.0
        %3191 = vmatpush1.msra.mxu0 0.0
        %3192 = vmatprep.subr.mxu0 0.0
        %3193 = vmatpush1.msra.mxu0 0.0
        %3194 = vmatprep.subr.mxu0 0.0
        %3195 = vmatpush1.msra.mxu0 0.0
        %3196 = vmatprep.subr.mxu0 0.0
        %3197 = vmatpush1.msra.mxu0 0.0
        %3198 = vmatprep.subr.mxu0 0.0
        %3199 = vmatpush1.msra.mxu0 0.0
        %3200 = vmatprep.subr.mxu0 0.0
        %3201 = vmatpush1.msra.mxu0 0.0
        %3202 = vmatprep.subr.mxu0 0.0
        %3203 = vmatpush1.msra.mxu0 0.0
        %3204 = vmatprep.subr.mxu0 0.0
        %3205 = vmatpush1.msra.mxu0 0.0
        %3206 = vmatprep.subr.mxu0 0.0
        %3207 = vmatpush1.msra.mxu0 0.0
        %3208 = vmatprep.subr.mxu0 0.0
        %3209 = vmatpush1.msra.mxu0 0.0
        %3210 = vmatprep.subr.mxu0 0.0
        %3211 = vmatpush1.msra.mxu0 0.0
        %3212 = vmatprep.subr.mxu0 0.0
        %3213 = vmatpush1.msra.mxu0 0.0
        %3214 = vmatprep.subr.mxu0 0.0
        %3215 = vmatpush1.msra.mxu0 0.0
        %3216 = vmatprep.mubr.f32.mxu0 0.0
        %3217 = vmatmul.mubr.f32.gmra.mrb[0].mxu0 %v3063
        %v3218 = vpop.f32.mrb[0].mxu0
        %v3219 = vadd.f32 0.0, %v3218
        %v3220 = vpop.f32.mrb[0].mxu0
        %3221 = vmatprep.mubr.f32.mxu0 0.0
        %3222 = vmatmul.mubr.f32.gmra.mrb[0].mxu0 %v3064
        %v3223 = vpop.f32.mrb[0].mxu0
        %v3224 = vadd.f32 0.0, %v3223
        %v3225 = vpop.f32.mrb[0].mxu0
        %3226 = vmatprep.mubr.f32.mxu0 0.0
        %3227 = vmatmul.mubr.f32.gmra.mrb[0].mxu0 %v3065
        %v3228 = vpop.f32.mrb[0].mxu0
        %v3229 = vadd.f32 0.0, %v3228
        %v3230 = vpop.f32.mrb[0].mxu0
        %3231 = vmatprep.mubr.f32.mxu0 0.0
        %3232 = vmatmul.mubr.f32.gmra.mrb[0].mxu0 %v3066
        %v3233 = vpop.f32.mrb[0].mxu0
        %v3234 = vadd.f32 0.0, %v3233
        %v3235 = vpop.f32.mrb[0].mxu0
        %3236 = vmatprep.mubr.f32.mxu0 0.0
        %3237 = vmatmul.mubr.f32.gmra.mrb[0].mxu0 %v3067
        %v3238 = vpop.f32.mrb[0].mxu0
        %v3239 = vadd.f32 0.0, %v3238
        %v3240 = vpop.f32.mrb[0].mxu0
        %3241 = vmatprep.mubr.f32.mxu0 0.0
        %3242 = vmatmul.mubr.f32.gmra.mrb[0].mxu0 %v3068
        %v3243 = vpop.f32.mrb[0].mxu0
        %v3244 = vadd.f32 0.0, %v3243
        %v3245 = vpop.f32.mrb[0].mxu0
        %3246 = vmatprep.mubr.f32.mxu0 0.0
        %3247 = vmatmul.mubr.f32.gmra.mrb[0].mxu0 %v3069
        %v3248 = vpop.f32.mrb[0].mxu0
        %v3249 = vadd.f32 0.0, %v3248
        %v3250 = vpop.f32.mrb[0].mxu0
        %3251 = vmatprep.mubr.f32.mxu0 0.0
        %3252 = vmatmul.mubr.f32.gmra.mrb[0].mxu0 %v3070
        %v3253 = vpop.f32.mrb[0].mxu0
        %v3254 = vadd.f32 0.0, %v3253
        %v3255 = vpop.f32.mrb[0].mxu0
        %3256 = vmatprep.mubr.f32.mxu0 0.0
        %3257 = vmatmul.mubr.f32.gmra.mrb[0].mxu0 %v3071
        %v3258 = vpop.f32.mrb[0].mxu0
        %v3259 = vadd.f32 0.0, %v3258
        %v3260 = vpop.f32.mrb[0].mxu0
        %3261 = vmatprep.mubr.f32.mxu0 0.0
        %3262 = vmatmul.mubr.f32.gmra.mrb[0].mxu0 %v3072
        %v3263 = vpop.f32.mrb[0].mxu0
        %v3264 = vadd.f32 0.0, %v3263
        %v3265 = vpop.f32.mrb[0].mxu0
        %3266 = vmatprep.mubr.f32.mxu0 0.0
        %3267 = vmatmul.mubr.f32.gmra.mrb[0].mxu0 %v3073
        %v3268 = vpop.f32.mrb[0].mxu0
        %v3269 = vadd.f32 0.0, %v3268
        %v3270 = vpop.f32.mrb[0].mxu0
        %3271 = vmatprep.mubr.f32.mxu0 0.0
        %3272 = vmatmul.mubr.f32.gmra.mrb[0].mxu0 %v3074
        %v3273 = vpop.f32.mrb[0].mxu0
        %v3274 = vadd.f32 0.0, %v3273
        %v3275 = vpop.f32.mrb[0].mxu0
        %3276 = vmatprep.mubr.f32.mxu0 0.0
        %3277 = vmatmul.mubr.f32.gmra.mrb[0].mxu0 %v3075
        %v3278 = vpop.f32.mrb[0].mxu0
        %v3279 = vadd.f32 0.0, %v3278
        %v3280 = vpop.f32.mrb[0].mxu0
        %3281 = vmatprep.mubr.f32.mxu0 0.0
        %3282 = vmatmul.mubr.f32.gmra.mrb[0].mxu0 %v3076
        %v3283 = vpop.f32.mrb[0].mxu0
        %v3284 = vadd.f32 0.0, %v3283
        %v3285 = vpop.f32.mrb[0].mxu0
        %3286 = vmatprep.mubr.f32.mxu0 0.0
        %3287 = vmatmul.mubr.f32.gmra.mrb[0].mxu0 %v3077
        %v3288 = vpop.f32.mrb[0].mxu0
        %v3289 = vadd.f32 0.0, %v3288
        %v3290 = vpop.f32.mrb[0].mxu0
        %3291 = vmatprep.mubr.f32.mxu0 0.0
        %3292 = vmatmul.mubr.f32.gmra.mrb[0].mxu0 %v3078
        %v3293 = vpop.f32.mrb[0].mxu0
        %v3294 = vadd.f32 0.0, %v3293
        %v3295 = vpop.f32.mrb[0].mxu0
        %3296 = vmatprep.mubr.f32.mxu0 0.0
        %3297 = vmatmul.mubr.f32.gmra.mrb[0].mxu0 %v3079
        %v3298 = vpop.f32.mrb[0].mxu0
        %v3299 = vadd.f32 0.0, %v3298
        %v3300 = vpop.f32.mrb[0].mxu0
        %3301 = vmatprep.mubr.f32.mxu0 0.0
        %3302 = vmatmul.mubr.f32.gmra.mrb[0].mxu0 %v3080
        %v3303 = vpop.f32.mrb[0].mxu0
        %v3304 = vadd.f32 0.0, %v3303
        %v3305 = vpop.f32.mrb[0].mxu0
        %3306 = vmatprep.mubr.f32.mxu0 0.0
        %3307 = vmatmul.mubr.f32.gmra.mrb[0].mxu0 %v3081
        %v3308 = vpop.f32.mrb[0].mxu0
        %v3309 = vadd.f32 0.0, %v3308
        %v3310 = vpop.f32.mrb[0].mxu0
        %3311 = vmatprep.mubr.f32.mxu0 0.0
        %3312 = vmatmul.mubr.f32.gmra.mrb[0].mxu0 %v3082
        %v3313 = vpop.f32.mrb[0].mxu0
        %v3314 = vadd.f32 0.0, %v3313
        %v3315 = vpop.f32.mrb[0].mxu0
        %3316 = vmatprep.mubr.f32.mxu0 0.0
        %3317 = vmatmul.mubr.f32.gmra.mrb[0].mxu0 %v3083
        %v3318 = vpop.f32.mrb[0].mxu0
        %v3319 = vadd.f32 0.0, %v3318
        %v3320 = vpop.f32.mrb[0].mxu0
        %3321 = vmatprep.mubr.f32.mxu0 0.0
        %3322 = vmatmul.mubr.f32.gmra.mrb[0].mxu0 %v3084
        %v3323 = vpop.f32.mrb[0].mxu0
        %v3324 = vadd.f32 0.0, %v3323
        %v3325 = vpop.f32.mrb[0].mxu0
        %3326 = vmatprep.mubr.f32.mxu0 0.0
        %3327 = vmatmul.mubr.f32.gmra.mrb[0].mxu0 %v3085
        %v3328 = vpop.f32.mrb[0].mxu0
        %v3329 = vadd.f32 0.0, %v3328
        %v3330 = vpop.f32.mrb[0].mxu0
        %3331 = vmatprep.mubr.f32.mxu0 0.0
        %3332 = vmatmul.mubr.f32.gmra.mrb[0].mxu0 %v3086
        %v3333 = vpop.f32.mrb[0].mxu0
        %v3334 = vadd.f32 0.0, %v3333
        %v3335 = vpop.f32.mrb[0].mxu0
        %3336 = vmatprep.mubr.f32.mxu0 0.0
        %3337 = vmatmul.mubr.f32.gmra.mrb[0].mxu0 %v3087
        %v3338 = vpop.f32.mrb[0].mxu0
        %v3339 = vadd.f32 0.0, %v3338
        %v3340 = vpop.f32.mrb[0].mxu0
        %3341 = vmatprep.mubr.f32.mxu0 0.0
        %3342 = vmatmul.mubr.f32.gmra.mrb[0].mxu0 %v3088
        %v3343 = vpop.f32.mrb[0].mxu0
        %v3344 = vadd.f32 0.0, %v3343
        %v3345 = vpop.f32.mrb[0].mxu0
        %3346 = vmatprep.mubr.f32.mxu0 0.0
        %3347 = vmatmul.mubr.f32.gmra.mrb[0].mxu0 %v3089
        %v3348 = vpop.f32.mrb[0].mxu0
        %v3349 = vadd.f32 0.0, %v3348
        %v3350 = vpop.f32.mrb[0].mxu0
        %3351 = vmatprep.mubr.f32.mxu0 0.0
        %3352 = vmatmul.mubr.f32.gmra.mrb[0].mxu0 %v3090
        %v3353 = vpop.f32.mrb[0].mxu0
        %v3354 = vadd.f32 0.0, %v3353
        %v3355 = vpop.f32.mrb[0].mxu0
        %3356 = vmatprep.mubr.f32.mxu0 0.0
        %3357 = vmatmul.mubr.f32.gmra.mrb[0].mxu0 %v3091
        %v3358 = vpop.f32.mrb[0].mxu0
        %v3359 = vadd.f32 0.0, %v3358
        %v3360 = vpop.f32.mrb[0].mxu0
        %3361 = vmatprep.mubr.f32.mxu0 0.0
        %3362 = vmatmul.mubr.f32.gmra.mrb[0].mxu0 %v3092
        %v3363 = vpop.f32.mrb[0].mxu0
        %v3364 = vadd.f32 0.0, %v3363
        %v3365 = vpop.f32.mrb[0].mxu0
        %3366 = vmatprep.mubr.f32.mxu0 0.0
        %3367 = vmatmul.mubr.f32.gmra.mrb[0].mxu0 %v3093
        %v3368 = vpop.f32.mrb[0].mxu0
        %v3369 = vadd.f32 0.0, %v3368
        %v3370 = vpop.f32.mrb[0].mxu0
        %3371 = vmatprep.mubr.f32.mxu0 0.0
        %3372 = vmatmul.mubr.f32.gmra.mrb[0].mxu0 %v3094
        %v3373 = vpop.f32.mrb[0].mxu0
        %v3374 = vadd.f32 0.0, %v3373
        %v3375 = vpop.f32.mrb[0].mxu0
        %3376 = vmatprep.mubr.f32.mxu0 0.0
        %3377 = vmatmul.mubr.f32.gmra.mrb[0].mxu0 %v3095
        %v3378 = vpop.f32.mrb[0].mxu0
        %v3379 = vadd.f32 0.0, %v3378
        %v3380 = vpop.f32.mrb[0].mxu0
        %3381 = vmatprep.mubr.f32.mxu0 0.0
        %3382 = vmatmul.mubr.f32.gmra.mrb[0].mxu0 %v3096
        %v3383 = vpop.f32.mrb[0].mxu0
        %v3384 = vadd.f32 0.0, %v3383
        %v3385 = vpop.f32.mrb[0].mxu0
        %3386 = vmatprep.mubr.f32.mxu0 0.0
        %3387 = vmatmul.mubr.f32.gmra.mrb[0].mxu0 %v3097
        %v3388 = vpop.f32.mrb[0].mxu0
        %v3389 = vadd.f32 0.0, %v3388
        %v3390 = vpop.f32.mrb[0].mxu0
        %3391 = vmatprep.mubr.f32.mxu0 0.0
        %3392 = vmatmul.mubr.f32.gmra.mrb[0].mxu0 %v3098
        %v3393 = vpop.f32.mrb[0].mxu0
        %v3394 = vadd.f32 0.0, %v3393
        %v3395 = vpop.f32.mrb[0].mxu0
        %3396 = vdwg.mxu0
        %v3397 = vadd.f32 %v3099, %v3219
        %v3398 = vadd.f32 %v3100, %v3224
        %v3399 = vadd.f32 %v3101, %v3229
        %v3400 = vadd.f32 %v3102, %v3234
        %v3401 = vadd.f32 %v3103, %v3239
        %v3402 = vadd.f32 %v3104, %v3244
        %v3403 = vadd.f32 %v3105, %v3249
        %v3404 = vadd.f32 %v3106, %v3254
        %v3405 = vadd.f32 %v3107, %v3259
        %v3406 = vadd.f32 %v3108, %v3264
        %v3407 = vadd.f32 %v3109, %v3269
        %v3408 = vadd.f32 %v3110, %v3274
        %v3409 = vadd.f32 %v3111, %v3279
        %v3410 = vadd.f32 %v3112, %v3284
        %v3411 = vadd.f32 %v3113, %v3289
        %v3412 = vadd.f32 %v3114, %v3294
        %v3413 = vadd.f32 %v3115, %v3299
        %v3414 = vadd.f32 %v3116, %v3304
        %v3415 = vadd.f32 %v3117, %v3309
        %v3416 = vadd.f32 %v3118, %v3314
        %v3417 = vadd.f32 %v3119, %v3319
        %v3418 = vadd.f32 %v3120, %v3324
        %v3419 = vadd.f32 %v3121, %v3329
        %v3420 = vadd.f32 %v3122, %v3334
        %v3421 = vadd.f32 %v3123, %v3339
        %v3422 = vadd.f32 %v3124, %v3344
        %v3423 = vadd.f32 %v3125, %v3349
        %v3424 = vadd.f32 %v3126, %v3354
        %v3425 = vadd.f32 %v3127, %v3359
        %v3426 = vadd.f32 %v3128, %v3364
        %v3427 = vadd.f32 %v3129, %v3369
        %v3428 = vadd.f32 %v3130, %v3374
        %v3429 = vadd.f32 %v3131, %v3379
        %v3430 = vadd.f32 %v3132, %v3384
        %v3431 = vadd.f32 %v3133, %v3389
        %v3432 = vadd.f32 %v3134, %v3394
        %3433 = vst [vmem:[#allocation3] sm:$0xff] %v3397
        %3434 = vst [vmem:[#allocation3 + $0x8] sm:$0xff] %v3398
        %3435 = vst [vmem:[#allocation3 + $0x10] sm:$0xff] %v3399
        %3436 = vst [vmem:[#allocation3 + $0x18] sm:$0xff] %v3400
        %3437 = vst [vmem:[#allocation3 + $0x20] sm:$0xff] %v3401
        %3438 = vst [vmem:[#allocation3 + $0x28] sm:$0xff] %v3402
        %3439 = vst [vmem:[#allocation3 + $0x30] sm:$0xff] %v3403
        %3440 = vst [vmem:[#allocation3 + $0x38] sm:$0xff] %v3404
        %3441 = vst [vmem:[#allocation3 + $0x40] sm:$0xff] %v3405
        %3442 = vst [vmem:[#allocation3 + $0x48] sm:$0xff] %v3406
        %3443 = vst [vmem:[#allocation3 + $0x50] sm:$0xff] %v3407
        %3444 = vst [vmem:[#allocation3 + $0x58] sm:$0xff] %v3408
        %3445 = vst [vmem:[#allocation3 + $0x60] sm:$0xff] %v3409
        %3446 = vst [vmem:[#allocation3 + $0x68] sm:$0xff] %v3410
        %3447 = vst [vmem:[#allocation3 + $0x70] sm:$0xff] %v3411
        %3448 = vst [vmem:[#allocation3 + $0x78] sm:$0xff] %v3412
        %3449 = vst [vmem:[#allocation3 + $0x80] sm:$0xff] %v3413
        %3450 = vst [vmem:[#allocation3 + $0x88] sm:$0xff] %v3414
        %3451 = vst [vmem:[#allocation3 + $0x90] sm:$0xff] %v3415
        %3452 = vst [vmem:[#allocation3 + $0x98] sm:$0xff] %v3416
        %3453 = vst [vmem:[#allocation3 + $0xa0] sm:$0xff] %v3417
        %3454 = vst [vmem:[#allocation3 + $0xa8] sm:$0xff] %v3418
        %3455 = vst [vmem:[#allocation3 + $0xb0] sm:$0xff] %v3419
        %3456 = vst [vmem:[#allocation3 + $0xb8] sm:$0xff] %v3420
        %3457 = vst [vmem:[#allocation3 + $0xc0] sm:$0xff] %v3421
        %3458 = vst [vmem:[#allocation3 + $0xc8] sm:$0xff] %v3422
        %3459 = vst [vmem:[#allocation3 + $0xd0] sm:$0xff] %v3423
        %3460 = vst [vmem:[#allocation3 + $0xd8] sm:$0xff] %v3424
        %3461 = vst [vmem:[#allocation3 + $0xe0] sm:$0xff] %v3425
        %3462 = vst [vmem:[#allocation3 + $0xe8] sm:$0xff] %v3426
        %3463 = vst [vmem:[#allocation3 + $0xf0] sm:$0xff] %v3427
        %3464 = vst [vmem:[#allocation3 + $0xf8] sm:$0xff] %v3428
        %3465 = vst [vmem:[#allocation3 + $0x100] sm:$0xff] %v3429
        %3466 = vst [vmem:[#allocation3 + $0x108] sm:$0xff] %v3430
        %3467 = vst [vmem:[#allocation3 + $0x110] sm:$0xff] %v3431
        %3468 = vst [vmem:[#allocation3 + $0x118] sm:$0xff] %v3432
        %v3469 = vld [vmem:[#allocation2 + $0x26] sm:$0xff]
        %v3470 = vld [vmem:[#allocation2 + $0x2e] sm:$0xff]
        %v3471 = vld [vmem:[#allocation2 + $0x36] sm:$0xff]
        %v3472 = vld [vmem:[#allocation2 + $0x3e] sm:$0xff]
        %v3473 = vld [vmem:[#allocation2 + $0x46] sm:$0xff]
        %v3474 = vld [vmem:[#allocation2 + $0x4e] sm:$0xff]
        %v3475 = vld [vmem:[#allocation2 + $0x56] sm:$0xff]
        %v3476 = vld [vmem:[#allocation2 + $0x5e] sm:$0xff]
        %v3477 = vld [vmem:[#allocation2 + $0x66] sm:$0xff]
        %v3478 = vld [vmem:[#allocation2 + $0x6e] sm:$0xff]
        %v3479 = vld [vmem:[#allocation2 + $0x76] sm:$0xff]
        %v3480 = vld [vmem:[#allocation2 + $0x7e] sm:$0xff]
        %v3481 = vld [vmem:[#allocation2 + $0x86] sm:$0xff]
        %v3482 = vld [vmem:[#allocation2 + $0x8e] sm:$0xff]
        %v3483 = vld [vmem:[#allocation2 + $0x96] sm:$0xff]
        %v3484 = vld [vmem:[#allocation2 + $0x9e] sm:$0xff]
        %v3485 = vld [vmem:[#allocation2 + $0xa6] sm:$0xff]
        %v3486 = vld [vmem:[#allocation2 + $0xae] sm:$0xff]
        %v3487 = vld [vmem:[#allocation2 + $0xb6] sm:$0xff]
        %v3488 = vld [vmem:[#allocation2 + $0xbe] sm:$0xff]
        %v3489 = vld [vmem:[#allocation2 + $0xc6] sm:$0xff]
        %v3490 = vld [vmem:[#allocation2 + $0xce] sm:$0xff]
        %v3491 = vld [vmem:[#allocation2 + $0xd6] sm:$0xff]
        %v3492 = vld [vmem:[#allocation2 + $0xde] sm:$0xff]
        %v3493 = vld [vmem:[#allocation2 + $0xe6] sm:$0xff]
        %v3494 = vld [vmem:[#allocation2 + $0xee] sm:$0xff]
        %v3495 = vld [vmem:[#allocation2 + $0xf6] sm:$0xff]
        %v3496 = vld [vmem:[#allocation2 + $0xfe] sm:$0xff]
        %v3497 = vld [vmem:[#allocation2 + $0x106] sm:$0xff]
        %v3498 = vld [vmem:[#allocation2 + $0x10e] sm:$0xff]
        %v3499 = vld [vmem:[#allocation2 + $0x116] sm:$0xff]
        %v3500 = vld [vmem:[#allocation2 + $0x11e] sm:$0xff]
        %v3501 = vld [vmem:[#allocation2 + $0x126] sm:$0xff]
        %v3502 = vld [vmem:[#allocation2 + $0x12e] sm:$0xff]
        %v3503 = vld [vmem:[#allocation2 + $0x136] sm:$0xff]
        %v3504 = vld [vmem:[#allocation2 + $0x13e] sm:$0xff]
        %v3505 = vld [vmem:[#allocation3] sm:$0xff]
        %v3506 = vld [vmem:[#allocation3 + $0x8] sm:$0xff]
        %v3507 = vld [vmem:[#allocation3 + $0x10] sm:$0xff]
        %v3508 = vld [vmem:[#allocation3 + $0x18] sm:$0xff]
        %v3509 = vld [vmem:[#allocation3 + $0x20] sm:$0xff]
        %v3510 = vld [vmem:[#allocation3 + $0x28] sm:$0xff]
        %v3511 = vld [vmem:[#allocation3 + $0x30] sm:$0xff]
        %v3512 = vld [vmem:[#allocation3 + $0x38] sm:$0xff]
        %v3513 = vld [vmem:[#allocation3 + $0x40] sm:$0xff]
        %v3514 = vld [vmem:[#allocation3 + $0x48] sm:$0xff]
        %v3515 = vld [vmem:[#allocation3 + $0x50] sm:$0xff]
        %v3516 = vld [vmem:[#allocation3 + $0x58] sm:$0xff]
        %v3517 = vld [vmem:[#allocation3 + $0x60] sm:$0xff]
        %v3518 = vld [vmem:[#allocation3 + $0x68] sm:$0xff]
        %v3519 = vld [vmem:[#allocation3 + $0x70] sm:$0xff]
        %v3520 = vld [vmem:[#allocation3 + $0x78] sm:$0xff]
        %v3521 = vld [vmem:[#allocation3 + $0x80] sm:$0xff]
        %v3522 = vld [vmem:[#allocation3 + $0x88] sm:$0xff]
        %v3523 = vld [vmem:[#allocation3 + $0x90] sm:$0xff]
        %v3524 = vld [vmem:[#allocation3 + $0x98] sm:$0xff]
        %v3525 = vld [vmem:[#allocation3 + $0xa0] sm:$0xff]
        %v3526 = vld [vmem:[#allocation3 + $0xa8] sm:$0xff]
        %v3527 = vld [vmem:[#allocation3 + $0xb0] sm:$0xff]
        %v3528 = vld [vmem:[#allocation3 + $0xb8] sm:$0xff]
        %v3529 = vld [vmem:[#allocation3 + $0xc0] sm:$0xff]
        %v3530 = vld [vmem:[#allocation3 + $0xc8] sm:$0xff]
        %v3531 = vld [vmem:[#allocation3 + $0xd0] sm:$0xff]
        %v3532 = vld [vmem:[#allocation3 + $0xd8] sm:$0xff]
        %v3533 = vld [vmem:[#allocation3 + $0xe0] sm:$0xff]
        %v3534 = vld [vmem:[#allocation3 + $0xe8] sm:$0xff]
        %v3535 = vld [vmem:[#allocation3 + $0xf0] sm:$0xff]
        %v3536 = vld [vmem:[#allocation3 + $0xf8] sm:$0xff]
        %v3537 = vld [vmem:[#allocation3 + $0x100] sm:$0xff]
        %v3538 = vld [vmem:[#allocation3 + $0x108] sm:$0xff]
        %v3539 = vld [vmem:[#allocation3 + $0x110] sm:$0xff]
        %v3540 = vld [vmem:[#allocation3 + $0x118] sm:$0xff]
        %s3541 = scalar_lea.vmem [#allocation5], 1024
        %v3542 = vld [vmem:[%s3541] sm:$0xff]
        %v3543 = vld [vmem:[%s3541 + $0x8] sm:$0xff]
        %v3544 = vld [vmem:[%s3541 + $0x10] sm:$0xff]
        %v3545 = vld [vmem:[%s3541 + $0x18] sm:$0xff]
        %v3546 = vld [vmem:[%s3541 + $0x20] sm:$0xff]
        %v3547 = vld [vmem:[%s3541 + $0x28] sm:$0xff]
        %v3548 = vld [vmem:[%s3541 + $0x30] sm:$0xff]
        %v3549 = vld [vmem:[%s3541 + $0x38] sm:$0xff]
        %v3550 = vld [vmem:[%s3541 + $0x40] sm:$0xff]
        %v3551 = vld [vmem:[%s3541 + $0x48] sm:$0xff]
        %v3552 = vld [vmem:[%s3541 + $0x50] sm:$0xff]
        %v3553 = vld [vmem:[%s3541 + $0x58] sm:$0xff]
        %v3554 = vld [vmem:[%s3541 + $0x60] sm:$0xff]
        %v3555 = vld [vmem:[%s3541 + $0x68] sm:$0xff]
        %v3556 = vld [vmem:[%s3541 + $0x70] sm:$0xff]
        %v3557 = vld [vmem:[%s3541 + $0x78] sm:$0xff]
        %3558 = vmatprep.subr.mxu0 0.0
        %3559 = vmatpush1.msra.mxu0 %v3542
        %3560 = vmatprep.subr.mxu0 0.0
        %3561 = vmatpush1.msra.mxu0 %v3543
        %3562 = vmatprep.subr.mxu0 0.0
        %3563 = vmatpush1.msra.mxu0 %v3544
        %3564 = vmatprep.subr.mxu0 0.0
        %3565 = vmatpush1.msra.mxu0 %v3545
        %3566 = vmatprep.subr.mxu0 0.0
        %3567 = vmatpush1.msra.mxu0 %v3546
        %3568 = vmatprep.subr.mxu0 0.0
        %3569 = vmatpush1.msra.mxu0 %v3547
        %3570 = vmatprep.subr.mxu0 0.0
        %3571 = vmatpush1.msra.mxu0 %v3548
        %3572 = vmatprep.subr.mxu0 0.0
        %3573 = vmatpush1.msra.mxu0 %v3549
        %3574 = vmatprep.subr.mxu0 0.0
        %3575 = vmatpush1.msra.mxu0 %v3550
        %3576 = vmatprep.subr.mxu0 0.0
        %3577 = vmatpush1.msra.mxu0 %v3551
        %3578 = vmatprep.subr.mxu0 0.0
        %3579 = vmatpush1.msra.mxu0 %v3552
        %3580 = vmatprep.subr.mxu0 0.0
        %3581 = vmatpush1.msra.mxu0 %v3553
        %3582 = vmatprep.subr.mxu0 0.0
        %3583 = vmatpush1.msra.mxu0 %v3554
        %3584 = vmatprep.subr.mxu0 0.0
        %3585 = vmatpush1.msra.mxu0 %v3555
        %3586 = vmatprep.subr.mxu0 0.0
        %3587 = vmatpush1.msra.mxu0 %v3556
        %3588 = vmatprep.subr.mxu0 0.0
        %3589 = vmatpush1.msra.mxu0 %v3557
        %3590 = vmatprep.subr.mxu0 0.0
        %3591 = vmatpush1.msra.mxu0 0.0
        %3592 = vmatprep.subr.mxu0 0.0
        %3593 = vmatpush1.msra.mxu0 0.0
        %3594 = vmatprep.subr.mxu0 0.0
        %3595 = vmatpush1.msra.mxu0 0.0
        %3596 = vmatprep.subr.mxu0 0.0
        %3597 = vmatpush1.msra.mxu0 0.0
        %3598 = vmatprep.subr.mxu0 0.0
        %3599 = vmatpush1.msra.mxu0 0.0
        %3600 = vmatprep.subr.mxu0 0.0
        %3601 = vmatpush1.msra.mxu0 0.0
        %3602 = vmatprep.subr.mxu0 0.0
        %3603 = vmatpush1.msra.mxu0 0.0
        %3604 = vmatprep.subr.mxu0 0.0
        %3605 = vmatpush1.msra.mxu0 0.0
        %3606 = vmatprep.subr.mxu0 0.0
        %3607 = vmatpush1.msra.mxu0 0.0
        %3608 = vmatprep.subr.mxu0 0.0
        %3609 = vmatpush1.msra.mxu0 0.0
        %3610 = vmatprep.subr.mxu0 0.0
        %3611 = vmatpush1.msra.mxu0 0.0
        %3612 = vmatprep.subr.mxu0 0.0
        %3613 = vmatpush1.msra.mxu0 0.0
        %3614 = vmatprep.subr.mxu0 0.0
        %3615 = vmatpush1.msra.mxu0 0.0
        %3616 = vmatprep.subr.mxu0 0.0
        %3617 = vmatpush1.msra.mxu0 0.0
        %3618 = vmatprep.subr.mxu0 0.0
        %3619 = vmatpush1.msra.mxu0 0.0
        %3620 = vmatprep.subr.mxu0 0.0
        %3621 = vmatpush1.msra.mxu0 0.0
        %3622 = vmatprep.mubr.f32.mxu0 0.0
        %3623 = vmatmul.mubr.f32.gmra.mrb[0].mxu0 %v3469
        %v3624 = vpop.f32.mrb[0].mxu0
        %v3625 = vadd.f32 0.0, %v3624
        %v3626 = vpop.f32.mrb[0].mxu0
        %3627 = vmatprep.mubr.f32.mxu0 0.0
        %3628 = vmatmul.mubr.f32.gmra.mrb[0].mxu0 %v3470
        %v3629 = vpop.f32.mrb[0].mxu0
        %v3630 = vadd.f32 0.0, %v3629
        %v3631 = vpop.f32.mrb[0].mxu0
        %3632 = vmatprep.mubr.f32.mxu0 0.0
        %3633 = vmatmul.mubr.f32.gmra.mrb[0].mxu0 %v3471
        %v3634 = vpop.f32.mrb[0].mxu0
        %v3635 = vadd.f32 0.0, %v3634
        %v3636 = vpop.f32.mrb[0].mxu0
        %3637 = vmatprep.mubr.f32.mxu0 0.0
        %3638 = vmatmul.mubr.f32.gmra.mrb[0].mxu0 %v3472
        %v3639 = vpop.f32.mrb[0].mxu0
        %v3640 = vadd.f32 0.0, %v3639
        %v3641 = vpop.f32.mrb[0].mxu0
        %3642 = vmatprep.mubr.f32.mxu0 0.0
        %3643 = vmatmul.mubr.f32.gmra.mrb[0].mxu0 %v3473
        %v3644 = vpop.f32.mrb[0].mxu0
        %v3645 = vadd.f32 0.0, %v3644
        %v3646 = vpop.f32.mrb[0].mxu0
        %3647 = vmatprep.mubr.f32.mxu0 0.0
        %3648 = vmatmul.mubr.f32.gmra.mrb[0].mxu0 %v3474
        %v3649 = vpop.f32.mrb[0].mxu0
        %v3650 = vadd.f32 0.0, %v3649
        %v3651 = vpop.f32.mrb[0].mxu0
        %3652 = vmatprep.mubr.f32.mxu0 0.0
        %3653 = vmatmul.mubr.f32.gmra.mrb[0].mxu0 %v3475
        %v3654 = vpop.f32.mrb[0].mxu0
        %v3655 = vadd.f32 0.0, %v3654
        %v3656 = vpop.f32.mrb[0].mxu0
        %3657 = vmatprep.mubr.f32.mxu0 0.0
        %3658 = vmatmul.mubr.f32.gmra.mrb[0].mxu0 %v3476
        %v3659 = vpop.f32.mrb[0].mxu0
        %v3660 = vadd.f32 0.0, %v3659
        %v3661 = vpop.f32.mrb[0].mxu0
        %3662 = vmatprep.mubr.f32.mxu0 0.0
        %3663 = vmatmul.mubr.f32.gmra.mrb[0].mxu0 %v3477
        %v3664 = vpop.f32.mrb[0].mxu0
        %v3665 = vadd.f32 0.0, %v3664
        %v3666 = vpop.f32.mrb[0].mxu0
        %3667 = vmatprep.mubr.f32.mxu0 0.0
        %3668 = vmatmul.mubr.f32.gmra.mrb[0].mxu0 %v3478
        %v3669 = vpop.f32.mrb[0].mxu0
        %v3670 = vadd.f32 0.0, %v3669
        %v3671 = vpop.f32.mrb[0].mxu0
        %3672 = vmatprep.mubr.f32.mxu0 0.0
        %3673 = vmatmul.mubr.f32.gmra.mrb[0].mxu0 %v3479
        %v3674 = vpop.f32.mrb[0].mxu0
        %v3675 = vadd.f32 0.0, %v3674
        %v3676 = vpop.f32.mrb[0].mxu0
        %3677 = vmatprep.mubr.f32.mxu0 0.0
        %3678 = vmatmul.mubr.f32.gmra.mrb[0].mxu0 %v3480
        %v3679 = vpop.f32.mrb[0].mxu0
        %v3680 = vadd.f32 0.0, %v3679
        %v3681 = vpop.f32.mrb[0].mxu0
        %3682 = vmatprep.mubr.f32.mxu0 0.0
        %3683 = vmatmul.mubr.f32.gmra.mrb[0].mxu0 %v3481
        %v3684 = vpop.f32.mrb[0].mxu0
        %v3685 = vadd.f32 0.0, %v3684
        %v3686 = vpop.f32.mrb[0].mxu0
        %3687 = vmatprep.mubr.f32.mxu0 0.0
        %3688 = vmatmul.mubr.f32.gmra.mrb[0].mxu0 %v3482
        %v3689 = vpop.f32.mrb[0].mxu0
        %v3690 = vadd.f32 0.0, %v3689
        %v3691 = vpop.f32.mrb[0].mxu0
        %3692 = vmatprep.mubr.f32.mxu0 0.0
        %3693 = vmatmul.mubr.f32.gmra.mrb[0].mxu0 %v3483
        %v3694 = vpop.f32.mrb[0].mxu0
        %v3695 = vadd.f32 0.0, %v3694
        %v3696 = vpop.f32.mrb[0].mxu0
        %3697 = vmatprep.mubr.f32.mxu0 0.0
        %3698 = vmatmul.mubr.f32.gmra.mrb[0].mxu0 %v3484
        %v3699 = vpop.f32.mrb[0].mxu0
        %v3700 = vadd.f32 0.0, %v3699
        %v3701 = vpop.f32.mrb[0].mxu0
        %3702 = vmatprep.mubr.f32.mxu0 0.0
        %3703 = vmatmul.mubr.f32.gmra.mrb[0].mxu0 %v3485
        %v3704 = vpop.f32.mrb[0].mxu0
        %v3705 = vadd.f32 0.0, %v3704
        %v3706 = vpop.f32.mrb[0].mxu0
        %3707 = vmatprep.mubr.f32.mxu0 0.0
        %3708 = vmatmul.mubr.f32.gmra.mrb[0].mxu0 %v3486
        %v3709 = vpop.f32.mrb[0].mxu0
        %v3710 = vadd.f32 0.0, %v3709
        %v3711 = vpop.f32.mrb[0].mxu0
        %3712 = vmatprep.mubr.f32.mxu0 0.0
        %3713 = vmatmul.mubr.f32.gmra.mrb[0].mxu0 %v3487
        %v3714 = vpop.f32.mrb[0].mxu0
        %v3715 = vadd.f32 0.0, %v3714
        %v3716 = vpop.f32.mrb[0].mxu0
        %3717 = vmatprep.mubr.f32.mxu0 0.0
        %3718 = vmatmul.mubr.f32.gmra.mrb[0].mxu0 %v3488
        %v3719 = vpop.f32.mrb[0].mxu0
        %v3720 = vadd.f32 0.0, %v3719
        %v3721 = vpop.f32.mrb[0].mxu0
        %3722 = vmatprep.mubr.f32.mxu0 0.0
        %3723 = vmatmul.mubr.f32.gmra.mrb[0].mxu0 %v3489
        %v3724 = vpop.f32.mrb[0].mxu0
        %v3725 = vadd.f32 0.0, %v3724
        %v3726 = vpop.f32.mrb[0].mxu0
        %3727 = vmatprep.mubr.f32.mxu0 0.0
        %3728 = vmatmul.mubr.f32.gmra.mrb[0].mxu0 %v3490
        %v3729 = vpop.f32.mrb[0].mxu0
        %v3730 = vadd.f32 0.0, %v3729
        %v3731 = vpop.f32.mrb[0].mxu0
        %3732 = vmatprep.mubr.f32.mxu0 0.0
        %3733 = vmatmul.mubr.f32.gmra.mrb[0].mxu0 %v3491
        %v3734 = vpop.f32.mrb[0].mxu0
        %v3735 = vadd.f32 0.0, %v3734
        %v3736 = vpop.f32.mrb[0].mxu0
        %3737 = vmatprep.mubr.f32.mxu0 0.0
        %3738 = vmatmul.mubr.f32.gmra.mrb[0].mxu0 %v3492
        %v3739 = vpop.f32.mrb[0].mxu0
        %v3740 = vadd.f32 0.0, %v3739
        %v3741 = vpop.f32.mrb[0].mxu0
        %3742 = vmatprep.mubr.f32.mxu0 0.0
        %3743 = vmatmul.mubr.f32.gmra.mrb[0].mxu0 %v3493
        %v3744 = vpop.f32.mrb[0].mxu0
        %v3745 = vadd.f32 0.0, %v3744
        %v3746 = vpop.f32.mrb[0].mxu0
        %3747 = vmatprep.mubr.f32.mxu0 0.0
        %3748 = vmatmul.mubr.f32.gmra.mrb[0].mxu0 %v3494
        %v3749 = vpop.f32.mrb[0].mxu0
        %v3750 = vadd.f32 0.0, %v3749
        %v3751 = vpop.f32.mrb[0].mxu0
        %3752 = vmatprep.mubr.f32.mxu0 0.0
        %3753 = vmatmul.mubr.f32.gmra.mrb[0].mxu0 %v3495
        %v3754 = vpop.f32.mrb[0].mxu0
        %v3755 = vadd.f32 0.0, %v3754
        %v3756 = vpop.f32.mrb[0].mxu0
        %3757 = vmatprep.mubr.f32.mxu0 0.0
        %3758 = vmatmul.mubr.f32.gmra.mrb[0].mxu0 %v3496
        %v3759 = vpop.f32.mrb[0].mxu0
        %v3760 = vadd.f32 0.0, %v3759
        %v3761 = vpop.f32.mrb[0].mxu0
        %3762 = vmatprep.mubr.f32.mxu0 0.0
        %3763 = vmatmul.mubr.f32.gmra.mrb[0].mxu0 %v3497
        %v3764 = vpop.f32.mrb[0].mxu0
        %v3765 = vadd.f32 0.0, %v3764
        %v3766 = vpop.f32.mrb[0].mxu0
        %3767 = vmatprep.mubr.f32.mxu0 0.0
        %3768 = vmatmul.mubr.f32.gmra.mrb[0].mxu0 %v3498
        %v3769 = vpop.f32.mrb[0].mxu0
        %v3770 = vadd.f32 0.0, %v3769
        %v3771 = vpop.f32.mrb[0].mxu0
        %3772 = vmatprep.mubr.f32.mxu0 0.0
        %3773 = vmatmul.mubr.f32.gmra.mrb[0].mxu0 %v3499
        %v3774 = vpop.f32.mrb[0].mxu0
        %v3775 = vadd.f32 0.0, %v3774
        %v3776 = vpop.f32.mrb[0].mxu0
        %3777 = vmatprep.mubr.f32.mxu0 0.0
        %3778 = vmatmul.mubr.f32.gmra.mrb[0].mxu0 %v3500
        %v3779 = vpop.f32.mrb[0].mxu0
        %v3780 = vadd.f32 0.0, %v3779
        %v3781 = vpop.f32.mrb[0].mxu0
        %3782 = vmatprep.mubr.f32.mxu0 0.0
        %3783 = vmatmul.mubr.f32.gmra.mrb[0].mxu0 %v3501
        %v3784 = vpop.f32.mrb[0].mxu0
        %v3785 = vadd.f32 0.0, %v3784
        %v3786 = vpop.f32.mrb[0].mxu0
        %3787 = vmatprep.mubr.f32.mxu0 0.0
        %3788 = vmatmul.mubr.f32.gmra.mrb[0].mxu0 %v3502
        %v3789 = vpop.f32.mrb[0].mxu0
        %v3790 = vadd.f32 0.0, %v3789
        %v3791 = vpop.f32.mrb[0].mxu0
        %3792 = vmatprep.mubr.f32.mxu0 0.0
        %3793 = vmatmul.mubr.f32.gmra.mrb[0].mxu0 %v3503
        %v3794 = vpop.f32.mrb[0].mxu0
        %v3795 = vadd.f32 0.0, %v3794
        %v3796 = vpop.f32.mrb[0].mxu0
        %3797 = vmatprep.mubr.f32.mxu0 0.0
        %3798 = vmatmul.mubr.f32.gmra.mrb[0].mxu0 %v3504
        %v3799 = vpop.f32.mrb[0].mxu0
        %v3800 = vadd.f32 0.0, %v3799
        %v3801 = vpop.f32.mrb[0].mxu0
        %3802 = vdwg.mxu0
        %v3803 = vadd.f32 %v3505, %v3625
        %v3804 = vadd.f32 %v3506, %v3630
        %v3805 = vadd.f32 %v3507, %v3635
        %v3806 = vadd.f32 %v3508, %v3640
        %v3807 = vadd.f32 %v3509, %v3645
        %v3808 = vadd.f32 %v3510, %v3650
        %v3809 = vadd.f32 %v3511, %v3655
        %v3810 = vadd.f32 %v3512, %v3660
        %v3811 = vadd.f32 %v3513, %v3665
        %v3812 = vadd.f32 %v3514, %v3670
        %v3813 = vadd.f32 %v3515, %v3675
        %v3814 = vadd.f32 %v3516, %v3680
        %v3815 = vadd.f32 %v3517, %v3685
        %v3816 = vadd.f32 %v3518, %v3690
        %v3817 = vadd.f32 %v3519, %v3695
        %v3818 = vadd.f32 %v3520, %v3700
        %v3819 = vadd.f32 %v3521, %v3705
        %v3820 = vadd.f32 %v3522, %v3710
        %v3821 = vadd.f32 %v3523, %v3715
        %v3822 = vadd.f32 %v3524, %v3720
        %v3823 = vadd.f32 %v3525, %v3725
        %v3824 = vadd.f32 %v3526, %v3730
        %v3825 = vadd.f32 %v3527, %v3735
        %v3826 = vadd.f32 %v3528, %v3740
        %v3827 = vadd.f32 %v3529, %v3745
        %v3828 = vadd.f32 %v3530, %v3750
        %v3829 = vadd.f32 %v3531, %v3755
        %v3830 = vadd.f32 %v3532, %v3760
        %v3831 = vadd.f32 %v3533, %v3765
        %v3832 = vadd.f32 %v3534, %v3770
        %v3833 = vadd.f32 %v3535, %v3775
        %v3834 = vadd.f32 %v3536, %v3780
        %v3835 = vadd.f32 %v3537, %v3785
        %v3836 = vadd.f32 %v3538, %v3790
        %v3837 = vadd.f32 %v3539, %v3795
        %v3838 = vadd.f32 %v3540, %v3800
        %3839 = vst [vmem:[#allocation3] sm:$0xff] %v3803
        %3840 = vst [vmem:[#allocation3 + $0x8] sm:$0xff] %v3804
        %3841 = vst [vmem:[#allocation3 + $0x10] sm:$0xff] %v3805
        %3842 = vst [vmem:[#allocation3 + $0x18] sm:$0xff] %v3806
        %3843 = vst [vmem:[#allocation3 + $0x20] sm:$0xff] %v3807
        %3844 = vst [vmem:[#allocation3 + $0x28] sm:$0xff] %v3808
        %3845 = vst [vmem:[#allocation3 + $0x30] sm:$0xff] %v3809
        %3846 = vst [vmem:[#allocation3 + $0x38] sm:$0xff] %v3810
        %3847 = vst [vmem:[#allocation3 + $0x40] sm:$0xff] %v3811
        %3848 = vst [vmem:[#allocation3 + $0x48] sm:$0xff] %v3812
        %3849 = vst [vmem:[#allocation3 + $0x50] sm:$0xff] %v3813
        %3850 = vst [vmem:[#allocation3 + $0x58] sm:$0xff] %v3814
        %3851 = vst [vmem:[#allocation3 + $0x60] sm:$0xff] %v3815
        %3852 = vst [vmem:[#allocation3 + $0x68] sm:$0xff] %v3816
        %3853 = vst [vmem:[#allocation3 + $0x70] sm:$0xff] %v3817
        %3854 = vst [vmem:[#allocation3 + $0x78] sm:$0xff] %v3818
        %3855 = vst [vmem:[#allocation3 + $0x80] sm:$0xff] %v3819
        %3856 = vst [vmem:[#allocation3 + $0x88] sm:$0xff] %v3820
        %3857 = vst [vmem:[#allocation3 + $0x90] sm:$0xff] %v3821
        %3858 = vst [vmem:[#allocation3 + $0x98] sm:$0xff] %v3822
        %3859 = vst [vmem:[#allocation3 + $0xa0] sm:$0xff] %v3823
        %3860 = vst [vmem:[#allocation3 + $0xa8] sm:$0xff] %v3824
        %3861 = vst [vmem:[#allocation3 + $0xb0] sm:$0xff] %v3825
        %3862 = vst [vmem:[#allocation3 + $0xb8] sm:$0xff] %v3826
        %3863 = vst [vmem:[#allocation3 + $0xc0] sm:$0xff] %v3827
        %3864 = vst [vmem:[#allocation3 + $0xc8] sm:$0xff] %v3828
        %3865 = vst [vmem:[#allocation3 + $0xd0] sm:$0xff] %v3829
        %3866 = vst [vmem:[#allocation3 + $0xd8] sm:$0xff] %v3830
        %3867 = vst [vmem:[#allocation3 + $0xe0] sm:$0xff] %v3831
        %3868 = vst [vmem:[#allocation3 + $0xe8] sm:$0xff] %v3832
        %3869 = vst [vmem:[#allocation3 + $0xf0] sm:$0xff] %v3833
        %3870 = vst [vmem:[#allocation3 + $0xf8] sm:$0xff] %v3834
        %3871 = vst [vmem:[#allocation3 + $0x100] sm:$0xff] %v3835
        %3872 = vst [vmem:[#allocation3 + $0x108] sm:$0xff] %v3836
        %3873 = vst [vmem:[#allocation3 + $0x110] sm:$0xff] %v3837
        %3874 = vst [vmem:[#allocation3 + $0x118] sm:$0xff] %v3838
        %v3875 = vlaneseq
        %v3876 = vshrl.u32 %v3875, 7
        %v3877 = vadd.s32 %v3876, 8
        %v3878 = vadd.s32 %v3876, 16
        %v3879 = vadd.s32 %v3876, 24
        %v3880 = vadd.s32 %v3876, 32
        %v3881 = vadd.s32 %v3876, 40
        %v3882 = vadd.s32 %v3876, 48
        %v3883 = vadd.s32 %v3876, 56
        %v3884 = vadd.s32 %v3876, 64
        %v3885 = vadd.s32 %v3876, 72
        %v3886 = vadd.s32 %v3876, 80
        %v3887 = vadd.s32 %v3876, 88
        %v3888 = vadd.s32 %v3876, 96
        %v3889 = vadd.s32 %v3876, 104
        %v3890 = vadd.s32 %v3876, 112
        %v3891 = vadd.s32 %v3876, 120
        %v3892 = vadd.s32 %v3876, 128
        %v3893 = vadd.s32 %v3876, 136
        %v3894 = vadd.s32 %v3876, 144
        %v3895 = vadd.s32 %v3876, 152
        %v3896 = vadd.s32 %v3876, 160
        %v3897 = vadd.s32 %v3876, 168
        %v3898 = vadd.s32 %v3876, 176
        %v3899 = vadd.s32 %v3876, 184
        %v3900 = vadd.s32 %v3876, 192
        %v3901 = vadd.s32 %v3876, 200
        %v3902 = vadd.s32 %v3876, 208
        %v3903 = vadd.s32 %v3876, 216
        %v3904 = vadd.s32 %v3876, 224
        %v3905 = vadd.s32 %v3876, 232
        %v3906 = vadd.s32 %v3876, 240
        %v3907 = vadd.s32 %v3876, 248
        %v3908 = vadd.s32 %v3876, 256
        %v3909 = vadd.s32 %v3876, 264
        %v3910 = vadd.s32 %v3876, 272
        %v3911 = vadd.s32 %v3876, 280
        %vm3912 = vcmp.lt.s32.totalorder %v3876, 0
        %v3913 = vsub.s32 0, %v3876
        %v3914 = vsel %vm3912, %v3913, %v3876
        %v3915 = vmul.u32.u64.compose %v3914, 3817748708
        %v3916 = vextract.low.u32 %v3915
        %v3917 = vextract.high.u32 %v3915
        %v3918 = vshrl.u32 %v3917, 4
        %v3919 = vmul.u32 %v3918, 18
        %v3920 = vsub.s32 %v3914, %v3919
        %v3921 = vsub.s32 0, %v3920
        %v3922 = vsel %vm3912, %v3921, %v3920
        %vm3923 = vcmp.lt.s32.totalorder %v3877, 0
        %v3924 = vsub.s32 0, %v3877
        %v3925 = vsel %vm3923, %v3924, %v3877
        %v3926 = vmul.u32.u64.compose %v3925, 3817748708
        %v3927 = vextract.low.u32 %v3926
        %v3928 = vextract.high.u32 %v3926
        %v3929 = vshrl.u32 %v3928, 4
        %v3930 = vmul.u32 %v3929, 18
        %v3931 = vsub.s32 %v3925, %v3930
        %v3932 = vsub.s32 0, %v3931
        %v3933 = vsel %vm3923, %v3932, %v3931
        %vm3934 = vcmp.lt.s32.totalorder %v3878, 0
        %v3935 = vsub.s32 0, %v3878
        %v3936 = vsel %vm3934, %v3935, %v3878
        %v3937 = vmul.u32.u64.compose %v3936, 3817748708
        %v3938 = vextract.low.u32 %v3937
        %v3939 = vextract.high.u32 %v3937
        %v3940 = vshrl.u32 %v3939, 4
        %v3941 = vmul.u32 %v3940, 18
        %v3942 = vsub.s32 %v3936, %v3941
        %v3943 = vsub.s32 0, %v3942
        %v3944 = vsel %vm3934, %v3943, %v3942
        %vm3945 = vcmp.lt.s32.totalorder %v3879, 0
        %v3946 = vsub.s32 0, %v3879
        %v3947 = vsel %vm3945, %v3946, %v3879
        %v3948 = vmul.u32.u64.compose %v3947, 3817748708
        %v3949 = vextract.low.u32 %v3948
        %v3950 = vextract.high.u32 %v3948
        %v3951 = vshrl.u32 %v3950, 4
        %v3952 = vmul.u32 %v3951, 18
        %v3953 = vsub.s32 %v3947, %v3952
        %v3954 = vsub.s32 0, %v3953
        %v3955 = vsel %vm3945, %v3954, %v3953
        %vm3956 = vcmp.lt.s32.totalorder %v3880, 0
        %v3957 = vsub.s32 0, %v3880
        %v3958 = vsel %vm3956, %v3957, %v3880
        %v3959 = vmul.u32.u64.compose %v3958, 3817748708
        %v3960 = vextract.low.u32 %v3959
        %v3961 = vextract.high.u32 %v3959
        %v3962 = vshrl.u32 %v3961, 4
        %v3963 = vmul.u32 %v3962, 18
        %v3964 = vsub.s32 %v3958, %v3963
        %v3965 = vsub.s32 0, %v3964
        %v3966 = vsel %vm3956, %v3965, %v3964
        %vm3967 = vcmp.lt.s32.totalorder %v3881, 0
        %v3968 = vsub.s32 0, %v3881
        %v3969 = vsel %vm3967, %v3968, %v3881
        %v3970 = vmul.u32.u64.compose %v3969, 3817748708
        %v3971 = vextract.low.u32 %v3970
        %v3972 = vextract.high.u32 %v3970
        %v3973 = vshrl.u32 %v3972, 4
        %v3974 = vmul.u32 %v3973, 18
        %v3975 = vsub.s32 %v3969, %v3974
        %v3976 = vsub.s32 0, %v3975
        %v3977 = vsel %vm3967, %v3976, %v3975
        %vm3978 = vcmp.lt.s32.totalorder %v3882, 0
        %v3979 = vsub.s32 0, %v3882
        %v3980 = vsel %vm3978, %v3979, %v3882
        %v3981 = vmul.u32.u64.compose %v3980, 3817748708
        %v3982 = vextract.low.u32 %v3981
        %v3983 = vextract.high.u32 %v3981
        %v3984 = vshrl.u32 %v3983, 4
        %v3985 = vmul.u32 %v3984, 18
        %v3986 = vsub.s32 %v3980, %v3985
        %v3987 = vsub.s32 0, %v3986
        %v3988 = vsel %vm3978, %v3987, %v3986
        %vm3989 = vcmp.lt.s32.totalorder %v3883, 0
        %v3990 = vsub.s32 0, %v3883
        %v3991 = vsel %vm3989, %v3990, %v3883
        %v3992 = vmul.u32.u64.compose %v3991, 3817748708
        %v3993 = vextract.low.u32 %v3992
        %v3994 = vextract.high.u32 %v3992
        %v3995 = vshrl.u32 %v3994, 4
        %v3996 = vmul.u32 %v3995, 18
        %v3997 = vsub.s32 %v3991, %v3996
        %v3998 = vsub.s32 0, %v3997
        %v3999 = vsel %vm3989, %v3998, %v3997
        %vm4000 = vcmp.lt.s32.totalorder %v3884, 0
        %v4001 = vsub.s32 0, %v3884
        %v4002 = vsel %vm4000, %v4001, %v3884
        %v4003 = vmul.u32.u64.compose %v4002, 3817748708
        %v4004 = vextract.low.u32 %v4003
        %v4005 = vextract.high.u32 %v4003
        %v4006 = vshrl.u32 %v4005, 4
        %v4007 = vmul.u32 %v4006, 18
        %v4008 = vsub.s32 %v4002, %v4007
        %v4009 = vsub.s32 0, %v4008
        %v4010 = vsel %vm4000, %v4009, %v4008
        %vm4011 = vcmp.lt.s32.totalorder %v3885, 0
        %v4012 = vsub.s32 0, %v3885
        %v4013 = vsel %vm4011, %v4012, %v3885
        %v4014 = vmul.u32.u64.compose %v4013, 3817748708
        %v4015 = vextract.low.u32 %v4014
        %v4016 = vextract.high.u32 %v4014
        %v4017 = vshrl.u32 %v4016, 4
        %v4018 = vmul.u32 %v4017, 18
        %v4019 = vsub.s32 %v4013, %v4018
        %v4020 = vsub.s32 0, %v4019
        %v4021 = vsel %vm4011, %v4020, %v4019
        %vm4022 = vcmp.lt.s32.totalorder %v3886, 0
        %v4023 = vsub.s32 0, %v3886
        %v4024 = vsel %vm4022, %v4023, %v3886
        %v4025 = vmul.u32.u64.compose %v4024, 3817748708
        %v4026 = vextract.low.u32 %v4025
        %v4027 = vextract.high.u32 %v4025
        %v4028 = vshrl.u32 %v4027, 4
        %v4029 = vmul.u32 %v4028, 18
        %v4030 = vsub.s32 %v4024, %v4029
        %v4031 = vsub.s32 0, %v4030
        %v4032 = vsel %vm4022, %v4031, %v4030
        %vm4033 = vcmp.lt.s32.totalorder %v3887, 0
        %v4034 = vsub.s32 0, %v3887
        %v4035 = vsel %vm4033, %v4034, %v3887
        %v4036 = vmul.u32.u64.compose %v4035, 3817748708
        %v4037 = vextract.low.u32 %v4036
        %v4038 = vextract.high.u32 %v4036
        %v4039 = vshrl.u32 %v4038, 4
        %v4040 = vmul.u32 %v4039, 18
        %v4041 = vsub.s32 %v4035, %v4040
        %v4042 = vsub.s32 0, %v4041
        %v4043 = vsel %vm4033, %v4042, %v4041
        %vm4044 = vcmp.lt.s32.totalorder %v3888, 0
        %v4045 = vsub.s32 0, %v3888
        %v4046 = vsel %vm4044, %v4045, %v3888
        %v4047 = vmul.u32.u64.compose %v4046, 3817748708
        %v4048 = vextract.low.u32 %v4047
        %v4049 = vextract.high.u32 %v4047
        %v4050 = vshrl.u32 %v4049, 4
        %v4051 = vmul.u32 %v4050, 18
        %v4052 = vsub.s32 %v4046, %v4051
        %v4053 = vsub.s32 0, %v4052
        %v4054 = vsel %vm4044, %v4053, %v4052
        %vm4055 = vcmp.lt.s32.totalorder %v3889, 0
        %v4056 = vsub.s32 0, %v3889
        %v4057 = vsel %vm4055, %v4056, %v3889
        %v4058 = vmul.u32.u64.compose %v4057, 3817748708
        %v4059 = vextract.low.u32 %v4058
        %v4060 = vextract.high.u32 %v4058
        %v4061 = vshrl.u32 %v4060, 4
        %v4062 = vmul.u32 %v4061, 18
        %v4063 = vsub.s32 %v4057, %v4062
        %v4064 = vsub.s32 0, %v4063
        %v4065 = vsel %vm4055, %v4064, %v4063
        %vm4066 = vcmp.lt.s32.totalorder %v3890, 0
        %v4067 = vsub.s32 0, %v3890
        %v4068 = vsel %vm4066, %v4067, %v3890
        %v4069 = vmul.u32.u64.compose %v4068, 3817748708
        %v4070 = vextract.low.u32 %v4069
        %v4071 = vextract.high.u32 %v4069
        %v4072 = vshrl.u32 %v4071, 4
        %v4073 = vmul.u32 %v4072, 18
        %v4074 = vsub.s32 %v4068, %v4073
        %v4075 = vsub.s32 0, %v4074
        %v4076 = vsel %vm4066, %v4075, %v4074
        %vm4077 = vcmp.lt.s32.totalorder %v3891, 0
        %v4078 = vsub.s32 0, %v3891
        %v4079 = vsel %vm4077, %v4078, %v3891
        %v4080 = vmul.u32.u64.compose %v4079, 3817748708
        %v4081 = vextract.low.u32 %v4080
        %v4082 = vextract.high.u32 %v4080
        %v4083 = vshrl.u32 %v4082, 4
        %v4084 = vmul.u32 %v4083, 18
        %v4085 = vsub.s32 %v4079, %v4084
        %v4086 = vsub.s32 0, %v4085
        %v4087 = vsel %vm4077, %v4086, %v4085
        %vm4088 = vcmp.lt.s32.totalorder %v3892, 0
        %v4089 = vsub.s32 0, %v3892
        %v4090 = vsel %vm4088, %v4089, %v3892
        %v4091 = vmul.u32.u64.compose %v4090, 3817748708
        %v4092 = vextract.low.u32 %v4091
        %v4093 = vextract.high.u32 %v4091
        %v4094 = vshrl.u32 %v4093, 4
        %v4095 = vmul.u32 %v4094, 18
        %v4096 = vsub.s32 %v4090, %v4095
        %v4097 = vsub.s32 0, %v4096
        %v4098 = vsel %vm4088, %v4097, %v4096
        %vm4099 = vcmp.lt.s32.totalorder %v3893, 0
        %v4100 = vsub.s32 0, %v3893
        %v4101 = vsel %vm4099, %v4100, %v3893
        %v4102 = vmul.u32.u64.compose %v4101, 3817748708
        %v4103 = vextract.low.u32 %v4102
        %v4104 = vextract.high.u32 %v4102
        %v4105 = vshrl.u32 %v4104, 4
        %v4106 = vmul.u32 %v4105, 18
        %v4107 = vsub.s32 %v4101, %v4106
        %v4108 = vsub.s32 0, %v4107
        %v4109 = vsel %vm4099, %v4108, %v4107
        %vm4110 = vcmp.lt.s32.totalorder %v3894, 0
        %v4111 = vsub.s32 0, %v3894
        %v4112 = vsel %vm4110, %v4111, %v3894
        %v4113 = vmul.u32.u64.compose %v4112, 3817748708
        %v4114 = vextract.low.u32 %v4113
        %v4115 = vextract.high.u32 %v4113
        %v4116 = vshrl.u32 %v4115, 4
        %v4117 = vmul.u32 %v4116, 18
        %v4118 = vsub.s32 %v4112, %v4117
        %v4119 = vsub.s32 0, %v4118
        %v4120 = vsel %vm4110, %v4119, %v4118
        %vm4121 = vcmp.lt.s32.totalorder %v3895, 0
        %v4122 = vsub.s32 0, %v3895
        %v4123 = vsel %vm4121, %v4122, %v3895
        %v4124 = vmul.u32.u64.compose %v4123, 3817748708
        %v4125 = vextract.low.u32 %v4124
        %v4126 = vextract.high.u32 %v4124
        %v4127 = vshrl.u32 %v4126, 4
        %v4128 = vmul.u32 %v4127, 18
        %v4129 = vsub.s32 %v4123, %v4128
        %v4130 = vsub.s32 0, %v4129
        %v4131 = vsel %vm4121, %v4130, %v4129
        %vm4132 = vcmp.lt.s32.totalorder %v3896, 0
        %v4133 = vsub.s32 0, %v3896
        %v4134 = vsel %vm4132, %v4133, %v3896
        %v4135 = vmul.u32.u64.compose %v4134, 3817748708
        %v4136 = vextract.low.u32 %v4135
        %v4137 = vextract.high.u32 %v4135
        %v4138 = vshrl.u32 %v4137, 4
        %v4139 = vmul.u32 %v4138, 18
        %v4140 = vsub.s32 %v4134, %v4139
        %v4141 = vsub.s32 0, %v4140
        %v4142 = vsel %vm4132, %v4141, %v4140
        %vm4143 = vcmp.lt.s32.totalorder %v3897, 0
        %v4144 = vsub.s32 0, %v3897
        %v4145 = vsel %vm4143, %v4144, %v3897
        %v4146 = vmul.u32.u64.compose %v4145, 3817748708
        %v4147 = vextract.low.u32 %v4146
        %v4148 = vextract.high.u32 %v4146
        %v4149 = vshrl.u32 %v4148, 4
        %v4150 = vmul.u32 %v4149, 18
        %v4151 = vsub.s32 %v4145, %v4150
        %v4152 = vsub.s32 0, %v4151
        %v4153 = vsel %vm4143, %v4152, %v4151
        %vm4154 = vcmp.lt.s32.totalorder %v3898, 0
        %v4155 = vsub.s32 0, %v3898
        %v4156 = vsel %vm4154, %v4155, %v3898
        %v4157 = vmul.u32.u64.compose %v4156, 3817748708
        %v4158 = vextract.low.u32 %v4157
        %v4159 = vextract.high.u32 %v4157
        %v4160 = vshrl.u32 %v4159, 4
        %v4161 = vmul.u32 %v4160, 18
        %v4162 = vsub.s32 %v4156, %v4161
        %v4163 = vsub.s32 0, %v4162
        %v4164 = vsel %vm4154, %v4163, %v4162
        %vm4165 = vcmp.lt.s32.totalorder %v3899, 0
        %v4166 = vsub.s32 0, %v3899
        %v4167 = vsel %vm4165, %v4166, %v3899
        %v4168 = vmul.u32.u64.compose %v4167, 3817748708
        %v4169 = vextract.low.u32 %v4168
        %v4170 = vextract.high.u32 %v4168
        %v4171 = vshrl.u32 %v4170, 4
        %v4172 = vmul.u32 %v4171, 18
        %v4173 = vsub.s32 %v4167, %v4172
        %v4174 = vsub.s32 0, %v4173
        %v4175 = vsel %vm4165, %v4174, %v4173
        %vm4176 = vcmp.lt.s32.totalorder %v3900, 0
        %v4177 = vsub.s32 0, %v3900
        %v4178 = vsel %vm4176, %v4177, %v3900
        %v4179 = vmul.u32.u64.compose %v4178, 3817748708
        %v4180 = vextract.low.u32 %v4179
        %v4181 = vextract.high.u32 %v4179
        %v4182 = vshrl.u32 %v4181, 4
        %v4183 = vmul.u32 %v4182, 18
        %v4184 = vsub.s32 %v4178, %v4183
        %v4185 = vsub.s32 0, %v4184
        %v4186 = vsel %vm4176, %v4185, %v4184
        %vm4187 = vcmp.lt.s32.totalorder %v3901, 0
        %v4188 = vsub.s32 0, %v3901
        %v4189 = vsel %vm4187, %v4188, %v3901
        %v4190 = vmul.u32.u64.compose %v4189, 3817748708
        %v4191 = vextract.low.u32 %v4190
        %v4192 = vextract.high.u32 %v4190
        %v4193 = vshrl.u32 %v4192, 4
        %v4194 = vmul.u32 %v4193, 18
        %v4195 = vsub.s32 %v4189, %v4194
        %v4196 = vsub.s32 0, %v4195
        %v4197 = vsel %vm4187, %v4196, %v4195
        %vm4198 = vcmp.lt.s32.totalorder %v3902, 0
        %v4199 = vsub.s32 0, %v3902
        %v4200 = vsel %vm4198, %v4199, %v3902
        %v4201 = vmul.u32.u64.compose %v4200, 3817748708
        %v4202 = vextract.low.u32 %v4201
        %v4203 = vextract.high.u32 %v4201
        %v4204 = vshrl.u32 %v4203, 4
        %v4205 = vmul.u32 %v4204, 18
        %v4206 = vsub.s32 %v4200, %v4205
        %v4207 = vsub.s32 0, %v4206
        %v4208 = vsel %vm4198, %v4207, %v4206
        %vm4209 = vcmp.lt.s32.totalorder %v3903, 0
        %v4210 = vsub.s32 0, %v3903
        %v4211 = vsel %vm4209, %v4210, %v3903
        %v4212 = vmul.u32.u64.compose %v4211, 3817748708
        %v4213 = vextract.low.u32 %v4212
        %v4214 = vextract.high.u32 %v4212
        %v4215 = vshrl.u32 %v4214, 4
        %v4216 = vmul.u32 %v4215, 18
        %v4217 = vsub.s32 %v4211, %v4216
        %v4218 = vsub.s32 0, %v4217
        %v4219 = vsel %vm4209, %v4218, %v4217
        %vm4220 = vcmp.lt.s32.totalorder %v3904, 0
        %v4221 = vsub.s32 0, %v3904
        %v4222 = vsel %vm4220, %v4221, %v3904
        %v4223 = vmul.u32.u64.compose %v4222, 3817748708
        %v4224 = vextract.low.u32 %v4223
        %v4225 = vextract.high.u32 %v4223
        %v4226 = vshrl.u32 %v4225, 4
        %v4227 = vmul.u32 %v4226, 18
        %v4228 = vsub.s32 %v4222, %v4227
        %v4229 = vsub.s32 0, %v4228
        %v4230 = vsel %vm4220, %v4229, %v4228
        %vm4231 = vcmp.lt.s32.totalorder %v3905, 0
        %v4232 = vsub.s32 0, %v3905
        %v4233 = vsel %vm4231, %v4232, %v3905
        %v4234 = vmul.u32.u64.compose %v4233, 3817748708
        %v4235 = vextract.low.u32 %v4234
        %v4236 = vextract.high.u32 %v4234
        %v4237 = vshrl.u32 %v4236, 4
        %v4238 = vmul.u32 %v4237, 18
        %v4239 = vsub.s32 %v4233, %v4238
        %v4240 = vsub.s32 0, %v4239
        %v4241 = vsel %vm4231, %v4240, %v4239
        %vm4242 = vcmp.lt.s32.totalorder %v3906, 0
        %v4243 = vsub.s32 0, %v3906
        %v4244 = vsel %vm4242, %v4243, %v3906
        %v4245 = vmul.u32.u64.compose %v4244, 3817748708
        %v4246 = vextract.low.u32 %v4245
        %v4247 = vextract.high.u32 %v4245
        %v4248 = vshrl.u32 %v4247, 4
        %v4249 = vmul.u32 %v4248, 18
        %v4250 = vsub.s32 %v4244, %v4249
        %v4251 = vsub.s32 0, %v4250
        %v4252 = vsel %vm4242, %v4251, %v4250
        %vm4253 = vcmp.lt.s32.totalorder %v3907, 0
        %v4254 = vsub.s32 0, %v3907
        %v4255 = vsel %vm4253, %v4254, %v3907
        %v4256 = vmul.u32.u64.compose %v4255, 3817748708
        %v4257 = vextract.low.u32 %v4256
        %v4258 = vextract.high.u32 %v4256
        %v4259 = vshrl.u32 %v4258, 4
        %v4260 = vmul.u32 %v4259, 18
        %v4261 = vsub.s32 %v4255, %v4260
        %v4262 = vsub.s32 0, %v4261
        %v4263 = vsel %vm4253, %v4262, %v4261
        %vm4264 = vcmp.lt.s32.totalorder %v3908, 0
        %v4265 = vsub.s32 0, %v3908
        %v4266 = vsel %vm4264, %v4265, %v3908
        %v4267 = vmul.u32.u64.compose %v4266, 3817748708
        %v4268 = vextract.low.u32 %v4267
        %v4269 = vextract.high.u32 %v4267
        %v4270 = vshrl.u32 %v4269, 4
        %v4271 = vmul.u32 %v4270, 18
        %v4272 = vsub.s32 %v4266, %v4271
        %v4273 = vsub.s32 0, %v4272
        %v4274 = vsel %vm4264, %v4273, %v4272
        %vm4275 = vcmp.lt.s32.totalorder %v3909, 0
        %v4276 = vsub.s32 0, %v3909
        %v4277 = vsel %vm4275, %v4276, %v3909
        %v4278 = vmul.u32.u64.compose %v4277, 3817748708
        %v4279 = vextract.low.u32 %v4278
        %v4280 = vextract.high.u32 %v4278
        %v4281 = vshrl.u32 %v4280, 4
        %v4282 = vmul.u32 %v4281, 18
        %v4283 = vsub.s32 %v4277, %v4282
        %v4284 = vsub.s32 0, %v4283
        %v4285 = vsel %vm4275, %v4284, %v4283
        %vm4286 = vcmp.lt.s32.totalorder %v3910, 0
        %v4287 = vsub.s32 0, %v3910
        %v4288 = vsel %vm4286, %v4287, %v3910
        %v4289 = vmul.u32.u64.compose %v4288, 3817748708
        %v4290 = vextract.low.u32 %v4289
        %v4291 = vextract.high.u32 %v4289
        %v4292 = vshrl.u32 %v4291, 4
        %v4293 = vmul.u32 %v4292, 18
        %v4294 = vsub.s32 %v4288, %v4293
        %v4295 = vsub.s32 0, %v4294
        %v4296 = vsel %vm4286, %v4295, %v4294
        %vm4297 = vcmp.lt.s32.totalorder %v3911, 0
        %v4298 = vsub.s32 0, %v3911
        %v4299 = vsel %vm4297, %v4298, %v3911
        %v4300 = vmul.u32.u64.compose %v4299, 3817748708
        %v4301 = vextract.low.u32 %v4300
        %v4302 = vextract.high.u32 %v4300
        %v4303 = vshrl.u32 %v4302, 4
        %v4304 = vmul.u32 %v4303, 18
        %v4305 = vsub.s32 %v4299, %v4304
        %v4306 = vsub.s32 0, %v4305
        %v4307 = vsel %vm4297, %v4306, %v4305
        %vm4308 = vcmp.ne.s32.totalorder %v3922, 0
        %vm4309 = vcmp.ne.s32.totalorder %v3933, 0
        %vm4310 = vcmp.ne.s32.totalorder %v3944, 0
        %vm4311 = vcmp.ne.s32.totalorder %v3955, 0
        %vm4312 = vcmp.ne.s32.totalorder %v3966, 0
        %vm4313 = vcmp.ne.s32.totalorder %v3977, 0
        %vm4314 = vcmp.ne.s32.totalorder %v3988, 0
        %vm4315 = vcmp.ne.s32.totalorder %v3999, 0
        %vm4316 = vcmp.ne.s32.totalorder %v4010, 0
        %vm4317 = vcmp.ne.s32.totalorder %v4021, 0
        %vm4318 = vcmp.ne.s32.totalorder %v4032, 0
        %vm4319 = vcmp.ne.s32.totalorder %v4043, 0
        %vm4320 = vcmp.ne.s32.totalorder %v4054, 0
        %vm4321 = vcmp.ne.s32.totalorder %v4065, 0
        %vm4322 = vcmp.ne.s32.totalorder %v4076, 0
        %vm4323 = vcmp.ne.s32.totalorder %v4087, 0
        %vm4324 = vcmp.ne.s32.totalorder %v4098, 0
        %vm4325 = vcmp.ne.s32.totalorder %v4109, 0
        %vm4326 = vcmp.ne.s32.totalorder %v4120, 0
        %vm4327 = vcmp.ne.s32.totalorder %v4131, 0
        %vm4328 = vcmp.ne.s32.totalorder %v4142, 0
        %vm4329 = vcmp.ne.s32.totalorder %v4153, 0
        %vm4330 = vcmp.ne.s32.totalorder %v4164, 0
        %vm4331 = vcmp.ne.s32.totalorder %v4175, 0
        %vm4332 = vcmp.ne.s32.totalorder %v4186, 0
        %vm4333 = vcmp.ne.s32.totalorder %v4197, 0
        %vm4334 = vcmp.ne.s32.totalorder %v4208, 0
        %vm4335 = vcmp.ne.s32.totalorder %v4219, 0
        %vm4336 = vcmp.ne.s32.totalorder %v4230, 0
        %vm4337 = vcmp.ne.s32.totalorder %v4241, 0
        %vm4338 = vcmp.ne.s32.totalorder %v4252, 0
        %vm4339 = vcmp.ne.s32.totalorder %v4263, 0
        %vm4340 = vcmp.ne.s32.totalorder %v4274, 0
        %vm4341 = vcmp.ne.s32.totalorder %v4285, 0
        %vm4342 = vcmp.ne.s32.totalorder %v4296, 0
        %vm4343 = vcmp.ne.s32.totalorder %v4307, 0
        %vm4344 = vcmp.lt.s32.totalorder %v3922, 0
        %vm4345 = vcmp.lt.s32.totalorder %v3933, 0
        %vm4346 = vcmp.lt.s32.totalorder %v3944, 0
        %vm4347 = vcmp.lt.s32.totalorder %v3955, 0
        %vm4348 = vcmp.lt.s32.totalorder %v3966, 0
        %vm4349 = vcmp.lt.s32.totalorder %v3977, 0
        %vm4350 = vcmp.lt.s32.totalorder %v3988, 0
        %vm4351 = vcmp.lt.s32.totalorder %v3999, 0
        %vm4352 = vcmp.lt.s32.totalorder %v4010, 0
        %vm4353 = vcmp.lt.s32.totalorder %v4021, 0
        %vm4354 = vcmp.lt.s32.totalorder %v4032, 0
        %vm4355 = vcmp.lt.s32.totalorder %v4043, 0
        %vm4356 = vcmp.lt.s32.totalorder %v4054, 0
        %vm4357 = vcmp.lt.s32.totalorder %v4065, 0
        %vm4358 = vcmp.lt.s32.totalorder %v4076, 0
        %vm4359 = vcmp.lt.s32.totalorder %v4087, 0
        %vm4360 = vcmp.lt.s32.totalorder %v4098, 0
        %vm4361 = vcmp.lt.s32.totalorder %v4109, 0
        %vm4362 = vcmp.lt.s32.totalorder %v4120, 0
        %vm4363 = vcmp.lt.s32.totalorder %v4131, 0
        %vm4364 = vcmp.lt.s32.totalorder %v4142, 0
        %vm4365 = vcmp.lt.s32.totalorder %v4153, 0
        %vm4366 = vcmp.lt.s32.totalorder %v4164, 0
        %vm4367 = vcmp.lt.s32.totalorder %v4175, 0
        %vm4368 = vcmp.lt.s32.totalorder %v4186, 0
        %vm4369 = vcmp.lt.s32.totalorder %v4197, 0
        %vm4370 = vcmp.lt.s32.totalorder %v4208, 0
        %vm4371 = vcmp.lt.s32.totalorder %v4219, 0
        %vm4372 = vcmp.lt.s32.totalorder %v4230, 0
        %vm4373 = vcmp.lt.s32.totalorder %v4241, 0
        %vm4374 = vcmp.lt.s32.totalorder %v4252, 0
        %vm4375 = vcmp.lt.s32.totalorder %v4263, 0
        %vm4376 = vcmp.lt.s32.totalorder %v4274, 0
        %vm4377 = vcmp.lt.s32.totalorder %v4285, 0
        %vm4378 = vcmp.lt.s32.totalorder %v4296, 0
        %vm4379 = vcmp.lt.s32.totalorder %v4307, 0
        %vm4380 = vmand %vm4344, %vm4308
        %vm4381 = vmand %vm4345, %vm4309
        %vm4382 = vmand %vm4346, %vm4310
        %vm4383 = vmand %vm4347, %vm4311
        %vm4384 = vmand %vm4348, %vm4312
        %vm4385 = vmand %vm4349, %vm4313
        %vm4386 = vmand %vm4350, %vm4314
        %vm4387 = vmand %vm4351, %vm4315
        %vm4388 = vmand %vm4352, %vm4316
        %vm4389 = vmand %vm4353, %vm4317
        %vm4390 = vmand %vm4354, %vm4318
        %vm4391 = vmand %vm4355, %vm4319
        %vm4392 = vmand %vm4356, %vm4320
        %vm4393 = vmand %vm4357, %vm4321
        %vm4394 = vmand %vm4358, %vm4322
        %vm4395 = vmand %vm4359, %vm4323
        %vm4396 = vmand %vm4360, %vm4324
        %vm4397 = vmand %vm4361, %vm4325
        %vm4398 = vmand %vm4362, %vm4326
        %vm4399 = vmand %vm4363, %vm4327
        %vm4400 = vmand %vm4364, %vm4328
        %vm4401 = vmand %vm4365, %vm4329
        %vm4402 = vmand %vm4366, %vm4330
        %vm4403 = vmand %vm4367, %vm4331
        %vm4404 = vmand %vm4368, %vm4332
        %vm4405 = vmand %vm4369, %vm4333
        %vm4406 = vmand %vm4370, %vm4334
        %vm4407 = vmand %vm4371, %vm4335
        %vm4408 = vmand %vm4372, %vm4336
        %vm4409 = vmand %vm4373, %vm4337
        %vm4410 = vmand %vm4374, %vm4338
        %vm4411 = vmand %vm4375, %vm4339
        %vm4412 = vmand %vm4376, %vm4340
        %vm4413 = vmand %vm4377, %vm4341
        %vm4414 = vmand %vm4378, %vm4342
        %vm4415 = vmand %vm4379, %vm4343
        %v4416 = vadd.s32 %v3922, 18
        %v4417 = vadd.s32 %v3933, 18
        %v4418 = vadd.s32 %v3944, 18
        %v4419 = vadd.s32 %v3955, 18
        %v4420 = vadd.s32 %v3966, 18
        %v4421 = vadd.s32 %v3977, 18
        %v4422 = vadd.s32 %v3988, 18
        %v4423 = vadd.s32 %v3999, 18
        %v4424 = vadd.s32 %v4010, 18
        %v4425 = vadd.s32 %v4021, 18
        %v4426 = vadd.s32 %v4032, 18
        %v4427 = vadd.s32 %v4043, 18
        %v4428 = vadd.s32 %v4054, 18
        %v4429 = vadd.s32 %v4065, 18
        %v4430 = vadd.s32 %v4076, 18
        %v4431 = vadd.s32 %v4087, 18
        %v4432 = vadd.s32 %v4098, 18
        %v4433 = vadd.s32 %v4109, 18
        %v4434 = vadd.s32 %v4120, 18
        %v4435 = vadd.s32 %v4131, 18
        %v4436 = vadd.s32 %v4142, 18
        %v4437 = vadd.s32 %v4153, 18
        %v4438 = vadd.s32 %v4164, 18
        %v4439 = vadd.s32 %v4175, 18
        %v4440 = vadd.s32 %v4186, 18
        %v4441 = vadd.s32 %v4197, 18
        %v4442 = vadd.s32 %v4208, 18
        %v4443 = vadd.s32 %v4219, 18
        %v4444 = vadd.s32 %v4230, 18
        %v4445 = vadd.s32 %v4241, 18
        %v4446 = vadd.s32 %v4252, 18
        %v4447 = vadd.s32 %v4263, 18
        %v4448 = vadd.s32 %v4274, 18
        %v4449 = vadd.s32 %v4285, 18
        %v4450 = vadd.s32 %v4296, 18
        %v4451 = vadd.s32 %v4307, 18
        %v4452 = vsel %vm4380, %v4416, %v3922
        %v4453 = vsel %vm4381, %v4417, %v3933
        %v4454 = vsel %vm4382, %v4418, %v3944
        %v4455 = vsel %vm4383, %v4419, %v3955
        %v4456 = vsel %vm4384, %v4420, %v3966
        %v4457 = vsel %vm4385, %v4421, %v3977
        %v4458 = vsel %vm4386, %v4422, %v3988
        %v4459 = vsel %vm4387, %v4423, %v3999
        %v4460 = vsel %vm4388, %v4424, %v4010
        %v4461 = vsel %vm4389, %v4425, %v4021
        %v4462 = vsel %vm4390, %v4426, %v4032
        %v4463 = vsel %vm4391, %v4427, %v4043
        %v4464 = vsel %vm4392, %v4428, %v4054
        %v4465 = vsel %vm4393, %v4429, %v4065
        %v4466 = vsel %vm4394, %v4430, %v4076
        %v4467 = vsel %vm4395, %v4431, %v4087
        %v4468 = vsel %vm4396, %v4432, %v4098
        %v4469 = vsel %vm4397, %v4433, %v4109
        %v4470 = vsel %vm4398, %v4434, %v4120
        %v4471 = vsel %vm4399, %v4435, %v4131
        %v4472 = vsel %vm4400, %v4436, %v4142
        %v4473 = vsel %vm4401, %v4437, %v4153
        %v4474 = vsel %vm4402, %v4438, %v4164
        %v4475 = vsel %vm4403, %v4439, %v4175
        %v4476 = vsel %vm4404, %v4440, %v4186
        %v4477 = vsel %vm4405, %v4441, %v4197
        %v4478 = vsel %vm4406, %v4442, %v4208
        %v4479 = vsel %vm4407, %v4443, %v4219
        %v4480 = vsel %vm4408, %v4444, %v4230
        %v4481 = vsel %vm4409, %v4445, %v4241
        %v4482 = vsel %vm4410, %v4446, %v4252
        %v4483 = vsel %vm4411, %v4447, %v4263
        %v4484 = vsel %vm4412, %v4448, %v4274
        %v4485 = vsel %vm4413, %v4449, %v4285
        %v4486 = vsel %vm4414, %v4450, %v4296
        %v4487 = vsel %vm4415, %v4451, %v4307
        %vm4488 = vcmp.ge.s32.totalorder %v4452, 1
        %vm4489 = vcmp.ge.s32.totalorder %v4453, 1
        %vm4490 = vcmp.ge.s32.totalorder %v4454, 1
        %vm4491 = vcmp.ge.s32.totalorder %v4455, 1
        %vm4492 = vcmp.ge.s32.totalorder %v4456, 1
        %vm4493 = vcmp.ge.s32.totalorder %v4457, 1
        %vm4494 = vcmp.ge.s32.totalorder %v4458, 1
        %vm4495 = vcmp.ge.s32.totalorder %v4459, 1
        %vm4496 = vcmp.ge.s32.totalorder %v4460, 1
        %vm4497 = vcmp.ge.s32.totalorder %v4461, 1
        %vm4498 = vcmp.ge.s32.totalorder %v4462, 1
        %vm4499 = vcmp.ge.s32.totalorder %v4463, 1
        %vm4500 = vcmp.ge.s32.totalorder %v4464, 1
        %vm4501 = vcmp.ge.s32.totalorder %v4465, 1
        %vm4502 = vcmp.ge.s32.totalorder %v4466, 1
        %vm4503 = vcmp.ge.s32.totalorder %v4467, 1
        %vm4504 = vcmp.ge.s32.totalorder %v4468, 1
        %vm4505 = vcmp.ge.s32.totalorder %v4469, 1
        %vm4506 = vcmp.ge.s32.totalorder %v4470, 1
        %vm4507 = vcmp.ge.s32.totalorder %v4471, 1
        %vm4508 = vcmp.ge.s32.totalorder %v4472, 1
        %vm4509 = vcmp.ge.s32.totalorder %v4473, 1
        %vm4510 = vcmp.ge.s32.totalorder %v4474, 1
        %vm4511 = vcmp.ge.s32.totalorder %v4475, 1
        %vm4512 = vcmp.ge.s32.totalorder %v4476, 1
        %vm4513 = vcmp.ge.s32.totalorder %v4477, 1
        %vm4514 = vcmp.ge.s32.totalorder %v4478, 1
        %vm4515 = vcmp.ge.s32.totalorder %v4479, 1
        %vm4516 = vcmp.ge.s32.totalorder %v4480, 1
        %vm4517 = vcmp.ge.s32.totalorder %v4481, 1
        %vm4518 = vcmp.ge.s32.totalorder %v4482, 1
        %vm4519 = vcmp.ge.s32.totalorder %v4483, 1
        %vm4520 = vcmp.ge.s32.totalorder %v4484, 1
        %vm4521 = vcmp.ge.s32.totalorder %v4485, 1
        %vm4522 = vcmp.ge.s32.totalorder %v4486, 1
        %vm4523 = vcmp.ge.s32.totalorder %v4487, 1
        %vm4524 = vcmp.le.s32.totalorder %v4452, 16
        %vm4525 = vcmp.le.s32.totalorder %v4453, 16
        %vm4526 = vcmp.le.s32.totalorder %v4454, 16
        %vm4527 = vcmp.le.s32.totalorder %v4455, 16
        %vm4528 = vcmp.le.s32.totalorder %v4456, 16
        %vm4529 = vcmp.le.s32.totalorder %v4457, 16
        %vm4530 = vcmp.le.s32.totalorder %v4458, 16
        %vm4531 = vcmp.le.s32.totalorder %v4459, 16
        %vm4532 = vcmp.le.s32.totalorder %v4460, 16
        %vm4533 = vcmp.le.s32.totalorder %v4461, 16
        %vm4534 = vcmp.le.s32.totalorder %v4462, 16
        %vm4535 = vcmp.le.s32.totalorder %v4463, 16
        %vm4536 = vcmp.le.s32.totalorder %v4464, 16
        %vm4537 = vcmp.le.s32.totalorder %v4465, 16
        %vm4538 = vcmp.le.s32.totalorder %v4466, 16
        %vm4539 = vcmp.le.s32.totalorder %v4467, 16
        %vm4540 = vcmp.le.s32.totalorder %v4468, 16
        %vm4541 = vcmp.le.s32.totalorder %v4469, 16
        %vm4542 = vcmp.le.s32.totalorder %v4470, 16
        %vm4543 = vcmp.le.s32.totalorder %v4471, 16
        %vm4544 = vcmp.le.s32.totalorder %v4472, 16
        %vm4545 = vcmp.le.s32.totalorder %v4473, 16
        %vm4546 = vcmp.le.s32.totalorder %v4474, 16
        %vm4547 = vcmp.le.s32.totalorder %v4475, 16
        %vm4548 = vcmp.le.s32.totalorder %v4476, 16
        %vm4549 = vcmp.le.s32.totalorder %v4477, 16
        %vm4550 = vcmp.le.s32.totalorder %v4478, 16
        %vm4551 = vcmp.le.s32.totalorder %v4479, 16
        %vm4552 = vcmp.le.s32.totalorder %v4480, 16
        %vm4553 = vcmp.le.s32.totalorder %v4481, 16
        %vm4554 = vcmp.le.s32.totalorder %v4482, 16
        %vm4555 = vcmp.le.s32.totalorder %v4483, 16
        %vm4556 = vcmp.le.s32.totalorder %v4484, 16
        %vm4557 = vcmp.le.s32.totalorder %v4485, 16
        %vm4558 = vcmp.le.s32.totalorder %v4486, 16
        %vm4559 = vcmp.le.s32.totalorder %v4487, 16
        %vm4560 = vmand %vm4488, %vm4524
        %vm4561 = vmand %vm4489, %vm4525
        %vm4562 = vmand %vm4490, %vm4526
        %vm4563 = vmand %vm4491, %vm4527
        %vm4564 = vmand %vm4492, %vm4528
        %vm4565 = vmand %vm4493, %vm4529
        %vm4566 = vmand %vm4494, %vm4530
        %vm4567 = vmand %vm4495, %vm4531
        %vm4568 = vmand %vm4496, %vm4532
        %vm4569 = vmand %vm4497, %vm4533
        %vm4570 = vmand %vm4498, %vm4534
        %vm4571 = vmand %vm4499, %vm4535
        %vm4572 = vmand %vm4500, %vm4536
        %vm4573 = vmand %vm4501, %vm4537
        %vm4574 = vmand %vm4502, %vm4538
        %vm4575 = vmand %vm4503, %vm4539
        %vm4576 = vmand %vm4504, %vm4540
        %vm4577 = vmand %vm4505, %vm4541
        %vm4578 = vmand %vm4506, %vm4542
        %vm4579 = vmand %vm4507, %vm4543
        %vm4580 = vmand %vm4508, %vm4544
        %vm4581 = vmand %vm4509, %vm4545
        %vm4582 = vmand %vm4510, %vm4546
        %vm4583 = vmand %vm4511, %vm4547
        %vm4584 = vmand %vm4512, %vm4548
        %vm4585 = vmand %vm4513, %vm4549
        %vm4586 = vmand %vm4514, %vm4550
        %vm4587 = vmand %vm4515, %vm4551
        %vm4588 = vmand %vm4516, %vm4552
        %vm4589 = vmand %vm4517, %vm4553
        %vm4590 = vmand %vm4518, %vm4554
        %vm4591 = vmand %vm4519, %vm4555
        %vm4592 = vmand %vm4520, %vm4556
        %vm4593 = vmand %vm4521, %vm4557
        %vm4594 = vmand %vm4522, %vm4558
        %vm4595 = vmand %vm4523, %vm4559
        %v4596 = vld [vmem:[#allocation3] sm:$0xff]
        %v4597 = vld [vmem:[#allocation3 + $0x8] sm:$0xff]
        %v4598 = vld [vmem:[#allocation3 + $0x10] sm:$0xff]
        %v4599 = vld [vmem:[#allocation3 + $0x18] sm:$0xff]
        %v4600 = vld [vmem:[#allocation3 + $0x20] sm:$0xff]
        %v4601 = vld [vmem:[#allocation3 + $0x28] sm:$0xff]
        %v4602 = vld [vmem:[#allocation3 + $0x30] sm:$0xff]
        %v4603 = vld [vmem:[#allocation3 + $0x38] sm:$0xff]
        %v4604 = vld [vmem:[#allocation3 + $0x40] sm:$0xff]
        %v4605 = vld [vmem:[#allocation3 + $0x48] sm:$0xff]
        %v4606 = vld [vmem:[#allocation3 + $0x50] sm:$0xff]
        %v4607 = vld [vmem:[#allocation3 + $0x58] sm:$0xff]
        %v4608 = vld [vmem:[#allocation3 + $0x60] sm:$0xff]
        %v4609 = vld [vmem:[#allocation3 + $0x68] sm:$0xff]
        %v4610 = vld [vmem:[#allocation3 + $0x70] sm:$0xff]
        %v4611 = vld [vmem:[#allocation3 + $0x78] sm:$0xff]
        %v4612 = vld [vmem:[#allocation3 + $0x80] sm:$0xff]
        %v4613 = vld [vmem:[#allocation3 + $0x88] sm:$0xff]
        %v4614 = vld [vmem:[#allocation3 + $0x90] sm:$0xff]
        %v4615 = vld [vmem:[#allocation3 + $0x98] sm:$0xff]
        %v4616 = vld [vmem:[#allocation3 + $0xa0] sm:$0xff]
        %v4617 = vld [vmem:[#allocation3 + $0xa8] sm:$0xff]
        %v4618 = vld [vmem:[#allocation3 + $0xb0] sm:$0xff]
        %v4619 = vld [vmem:[#allocation3 + $0xb8] sm:$0xff]
        %v4620 = vld [vmem:[#allocation3 + $0xc0] sm:$0xff]
        %v4621 = vld [vmem:[#allocation3 + $0xc8] sm:$0xff]
        %v4622 = vld [vmem:[#allocation3 + $0xd0] sm:$0xff]
        %v4623 = vld [vmem:[#allocation3 + $0xd8] sm:$0xff]
        %v4624 = vld [vmem:[#allocation3 + $0xe0] sm:$0xff]
        %v4625 = vld [vmem:[#allocation3 + $0xe8] sm:$0xff]
        %v4626 = vld [vmem:[#allocation3 + $0xf0] sm:$0xff]
        %v4627 = vld [vmem:[#allocation3 + $0xf8] sm:$0xff]
        %v4628 = vld [vmem:[#allocation3 + $0x100] sm:$0xff]
        %v4629 = vld [vmem:[#allocation3 + $0x108] sm:$0xff]
        %v4630 = vld [vmem:[#allocation3 + $0x110] sm:$0xff]
        %v4631 = vld [vmem:[#allocation3 + $0x118] sm:$0xff]
        %v4632 = vsel %vm4560, 1, 0
        %v4633 = vsel %vm4561, 1, 0
        %v4634 = vsel %vm4562, 1, 0
        %v4635 = vsel %vm4563, 1, 0
        %v4636 = vsel %vm4564, 1, 0
        %v4637 = vsel %vm4565, 1, 0
        %v4638 = vsel %vm4566, 1, 0
        %v4639 = vsel %vm4567, 1, 0
        %v4640 = vsel %vm4568, 1, 0
        %v4641 = vsel %vm4569, 1, 0
        %v4642 = vsel %vm4570, 1, 0
        %v4643 = vsel %vm4571, 1, 0
        %v4644 = vsel %vm4572, 1, 0
        %v4645 = vsel %vm4573, 1, 0
        %v4646 = vsel %vm4574, 1, 0
        %v4647 = vsel %vm4575, 1, 0
        %v4648 = vsel %vm4576, 1, 0
        %v4649 = vsel %vm4577, 1, 0
        %v4650 = vsel %vm4578, 1, 0
        %v4651 = vsel %vm4579, 1, 0
        %v4652 = vsel %vm4580, 1, 0
        %v4653 = vsel %vm4581, 1, 0
        %v4654 = vsel %vm4582, 1, 0
        %v4655 = vsel %vm4583, 1, 0
        %v4656 = vsel %vm4584, 1, 0
        %v4657 = vsel %vm4585, 1, 0
        %v4658 = vsel %vm4586, 1, 0
        %v4659 = vsel %vm4587, 1, 0
        %v4660 = vsel %vm4588, 1, 0
        %v4661 = vsel %vm4589, 1, 0
        %v4662 = vsel %vm4590, 1, 0
        %v4663 = vsel %vm4591, 1, 0
        %v4664 = vsel %vm4592, 1, 0
        %v4665 = vsel %vm4593, 1, 0
        %v4666 = vsel %vm4594, 1, 0
        %v4667 = vsel %vm4595, 1, 0
        %vm4668 = vcmp.eq.s32.totalorder %v4632, 1
        %vm4669 = vcmp.eq.s32.totalorder %v4633, 1
        %vm4670 = vcmp.eq.s32.totalorder %v4634, 1
        %vm4671 = vcmp.eq.s32.totalorder %v4635, 1
        %vm4672 = vcmp.eq.s32.totalorder %v4636, 1
        %vm4673 = vcmp.eq.s32.totalorder %v4637, 1
        %vm4674 = vcmp.eq.s32.totalorder %v4638, 1
        %vm4675 = vcmp.eq.s32.totalorder %v4639, 1
        %vm4676 = vcmp.eq.s32.totalorder %v4640, 1
        %vm4677 = vcmp.eq.s32.totalorder %v4641, 1
        %vm4678 = vcmp.eq.s32.totalorder %v4642, 1
        %vm4679 = vcmp.eq.s32.totalorder %v4643, 1
        %vm4680 = vcmp.eq.s32.totalorder %v4644, 1
        %vm4681 = vcmp.eq.s32.totalorder %v4645, 1
        %vm4682 = vcmp.eq.s32.totalorder %v4646, 1
        %vm4683 = vcmp.eq.s32.totalorder %v4647, 1
        %vm4684 = vcmp.eq.s32.totalorder %v4648, 1
        %vm4685 = vcmp.eq.s32.totalorder %v4649, 1
        %vm4686 = vcmp.eq.s32.totalorder %v4650, 1
        %vm4687 = vcmp.eq.s32.totalorder %v4651, 1
        %vm4688 = vcmp.eq.s32.totalorder %v4652, 1
        %vm4689 = vcmp.eq.s32.totalorder %v4653, 1
        %vm4690 = vcmp.eq.s32.totalorder %v4654, 1
        %vm4691 = vcmp.eq.s32.totalorder %v4655, 1
        %vm4692 = vcmp.eq.s32.totalorder %v4656, 1
        %vm4693 = vcmp.eq.s32.totalorder %v4657, 1
        %vm4694 = vcmp.eq.s32.totalorder %v4658, 1
        %vm4695 = vcmp.eq.s32.totalorder %v4659, 1
        %vm4696 = vcmp.eq.s32.totalorder %v4660, 1
        %vm4697 = vcmp.eq.s32.totalorder %v4661, 1
        %vm4698 = vcmp.eq.s32.totalorder %v4662, 1
        %vm4699 = vcmp.eq.s32.totalorder %v4663, 1
        %vm4700 = vcmp.eq.s32.totalorder %v4664, 1
        %vm4701 = vcmp.eq.s32.totalorder %v4665, 1
        %vm4702 = vcmp.eq.s32.totalorder %v4666, 1
        %vm4703 = vcmp.eq.s32.totalorder %v4667, 1
        %v4704 = vsel %vm4668, %v4596, 0.0
        %v4705 = vsel %vm4669, %v4597, 0.0
        %v4706 = vsel %vm4670, %v4598, 0.0
        %v4707 = vsel %vm4671, %v4599, 0.0
        %v4708 = vsel %vm4672, %v4600, 0.0
        %v4709 = vsel %vm4673, %v4601, 0.0
        %v4710 = vsel %vm4674, %v4602, 0.0
        %v4711 = vsel %vm4675, %v4603, 0.0
        %v4712 = vsel %vm4676, %v4604, 0.0
        %v4713 = vsel %vm4677, %v4605, 0.0
        %v4714 = vsel %vm4678, %v4606, 0.0
        %v4715 = vsel %vm4679, %v4607, 0.0
        %v4716 = vsel %vm4680, %v4608, 0.0
        %v4717 = vsel %vm4681, %v4609, 0.0
        %v4718 = vsel %vm4682, %v4610, 0.0
        %v4719 = vsel %vm4683, %v4611, 0.0
        %v4720 = vsel %vm4684, %v4612, 0.0
        %v4721 = vsel %vm4685, %v4613, 0.0
        %v4722 = vsel %vm4686, %v4614, 0.0
        %v4723 = vsel %vm4687, %v4615, 0.0
        %v4724 = vsel %vm4688, %v4616, 0.0
        %v4725 = vsel %vm4689, %v4617, 0.0
        %v4726 = vsel %vm4690, %v4618, 0.0
        %v4727 = vsel %vm4691, %v4619, 0.0
        %v4728 = vsel %vm4692, %v4620, 0.0
        %v4729 = vsel %vm4693, %v4621, 0.0
        %v4730 = vsel %vm4694, %v4622, 0.0
        %v4731 = vsel %vm4695, %v4623, 0.0
        %v4732 = vsel %vm4696, %v4624, 0.0
        %v4733 = vsel %vm4697, %v4625, 0.0
        %v4734 = vsel %vm4698, %v4626, 0.0
        %v4735 = vsel %vm4699, %v4627, 0.0
        %v4736 = vsel %vm4700, %v4628, 0.0
        %v4737 = vsel %vm4701, %v4629, 0.0
        %v4738 = vsel %vm4702, %v4630, 0.0
        %v4739 = vsel %vm4703, %v4631, 0.0
        %4740 = vst [vmem:[%s157] sm:$0xff] %v4704
        %4741 = vst [vmem:[%s157 + $0x8] sm:$0xff] %v4705
        %4742 = vst [vmem:[%s157 + $0x10] sm:$0xff] %v4706
        %4743 = vst [vmem:[%s157 + $0x18] sm:$0xff] %v4707
        %4744 = vst [vmem:[%s157 + $0x20] sm:$0xff] %v4708
        %4745 = vst [vmem:[%s157 + $0x28] sm:$0xff] %v4709
        %4746 = vst [vmem:[%s157 + $0x30] sm:$0xff] %v4710
        %4747 = vst [vmem:[%s157 + $0x38] sm:$0xff] %v4711
        %4748 = vst [vmem:[%s157 + $0x40] sm:$0xff] %v4712
        %4749 = vst [vmem:[%s157 + $0x48] sm:$0xff] %v4713
        %4750 = vst [vmem:[%s157 + $0x50] sm:$0xff] %v4714
        %4751 = vst [vmem:[%s157 + $0x58] sm:$0xff] %v4715
        %4752 = vst [vmem:[%s157 + $0x60] sm:$0xff] %v4716
        %4753 = vst [vmem:[%s157 + $0x68] sm:$0xff] %v4717
        %4754 = vst [vmem:[%s157 + $0x70] sm:$0xff] %v4718
        %4755 = vst [vmem:[%s157 + $0x78] sm:$0xff] %v4719
        %4756 = vst [vmem:[%s157 + $0x80] sm:$0xff] %v4720
        %4757 = vst [vmem:[%s157 + $0x88] sm:$0xff] %v4721
        %4758 = vst [vmem:[%s157 + $0x90] sm:$0xff] %v4722
        %4759 = vst [vmem:[%s157 + $0x98] sm:$0xff] %v4723
        %4760 = vst [vmem:[%s157 + $0xa0] sm:$0xff] %v4724
        %4761 = vst [vmem:[%s157 + $0xa8] sm:$0xff] %v4725
        %4762 = vst [vmem:[%s157 + $0xb0] sm:$0xff] %v4726
        %4763 = vst [vmem:[%s157 + $0xb8] sm:$0xff] %v4727
        %4764 = vst [vmem:[%s157 + $0xc0] sm:$0xff] %v4728
        %4765 = vst [vmem:[%s157 + $0xc8] sm:$0xff] %v4729
        %4766 = vst [vmem:[%s157 + $0xd0] sm:$0xff] %v4730
        %4767 = vst [vmem:[%s157 + $0xd8] sm:$0xff] %v4731
        %4768 = vst [vmem:[%s157 + $0xe0] sm:$0xff] %v4732
        %4769 = vst [vmem:[%s157 + $0xe8] sm:$0xff] %v4733
        %4770 = vst [vmem:[%s157 + $0xf0] sm:$0xff] %v4734
        %4771 = vst [vmem:[%s157 + $0xf8] sm:$0xff] %v4735
        %4772 = vst [vmem:[%s157 + $0x100] sm:$0xff] %v4736
        %4773 = vst [vmem:[%s157 + $0x108] sm:$0xff] %v4737
        %4774 = vst [vmem:[%s157 + $0x110] sm:$0xff] %v4738
        %4775 = vst [vmem:[%s157 + $0x118] sm:$0xff] %v4739
        %v4776 = vadd.f32 %v4704, %v4705
        %v4777 = vadd.f32 %v4776, %v4706
        %v4778 = vadd.f32 %v4777, %v4707
        %v4779 = vadd.f32 %v4778, %v4708
        %v4780 = vadd.f32 %v4779, %v4709
        %v4781 = vadd.f32 %v4780, %v4710
        %v4782 = vadd.f32 %v4781, %v4711
        %v4783 = vadd.f32 %v4782, %v4712
        %v4784 = vadd.f32 %v4783, %v4713
        %v4785 = vadd.f32 %v4784, %v4714
        %v4786 = vadd.f32 %v4785, %v4715
        %v4787 = vadd.f32 %v4786, %v4716
        %v4788 = vadd.f32 %v4787, %v4717
        %v4789 = vadd.f32 %v4788, %v4718
        %v4790 = vadd.f32 %v4789, %v4719
        %v4791 = vadd.f32 %v4790, %v4720
        %v4792 = vadd.f32 %v4791, %v4721
        %v4793 = vadd.f32 %v4792, %v4722
        %v4794 = vadd.f32 %v4793, %v4723
        %v4795 = vadd.f32 %v4794, %v4724
        %v4796 = vadd.f32 %v4795, %v4725
        %v4797 = vadd.f32 %v4796, %v4726
        %v4798 = vadd.f32 %v4797, %v4727
        %v4799 = vadd.f32 %v4798, %v4728
        %v4800 = vadd.f32 %v4799, %v4729
        %v4801 = vadd.f32 %v4800, %v4730
        %v4802 = vadd.f32 %v4801, %v4731
        %v4803 = vadd.f32 %v4802, %v4732
        %v4804 = vadd.f32 %v4803, %v4733
        %v4805 = vadd.f32 %v4804, %v4734
        %v4806 = vadd.f32 %v4805, %v4735
        %v4807 = vadd.f32 %v4806, %v4736
        %v4808 = vadd.f32 %v4807, %v4737
        %v4809 = vadd.f32 %v4808, %v4738
        %v4810 = vadd.f32 %v4809, %v4739
        %v4811 = vrot.slane %v4810, 4
        %v4812 = vadd.f32 %v4810, %v4811
        %v4813 = vrot.slane %v4812, 2
        %v4814 = vadd.f32 %v4812, %v4813
        %v4815 = vrot.slane %v4814, 1
        %v4816 = vadd.f32 %v4814, %v4815
        %v4817 = vmul.f32 %v4704, %v4704
        %v4818 = vmul.f32 %v4705, %v4705
        %v4819 = vmul.f32 %v4706, %v4706
        %v4820 = vmul.f32 %v4707, %v4707
        %v4821 = vmul.f32 %v4708, %v4708
        %v4822 = vmul.f32 %v4709, %v4709
        %v4823 = vmul.f32 %v4710, %v4710
        %v4824 = vmul.f32 %v4711, %v4711
        %v4825 = vmul.f32 %v4712, %v4712
        %v4826 = vmul.f32 %v4713, %v4713
        %v4827 = vmul.f32 %v4714, %v4714
        %v4828 = vmul.f32 %v4715, %v4715
        %v4829 = vmul.f32 %v4716, %v4716
        %v4830 = vmul.f32 %v4717, %v4717
        %v4831 = vmul.f32 %v4718, %v4718
        %v4832 = vmul.f32 %v4719, %v4719
        %v4833 = vmul.f32 %v4720, %v4720
        %v4834 = vmul.f32 %v4721, %v4721
        %v4835 = vmul.f32 %v4722, %v4722
        %v4836 = vmul.f32 %v4723, %v4723
        %v4837 = vmul.f32 %v4724, %v4724
        %v4838 = vmul.f32 %v4725, %v4725
        %v4839 = vmul.f32 %v4726, %v4726
        %v4840 = vmul.f32 %v4727, %v4727
        %v4841 = vmul.f32 %v4728, %v4728
        %v4842 = vmul.f32 %v4729, %v4729
        %v4843 = vmul.f32 %v4730, %v4730
        %v4844 = vmul.f32 %v4731, %v4731
        %v4845 = vmul.f32 %v4732, %v4732
        %v4846 = vmul.f32 %v4733, %v4733
        %v4847 = vmul.f32 %v4734, %v4734
        %v4848 = vmul.f32 %v4735, %v4735
        %v4849 = vmul.f32 %v4736, %v4736
        %v4850 = vmul.f32 %v4737, %v4737
        %v4851 = vmul.f32 %v4738, %v4738
        %v4852 = vmul.f32 %v4739, %v4739
        %v4853 = vadd.f32 %v4817, %v4818
        %v4854 = vadd.f32 %v4853, %v4819
        %v4855 = vadd.f32 %v4854, %v4820
        %v4856 = vadd.f32 %v4855, %v4821
        %v4857 = vadd.f32 %v4856, %v4822
        %v4858 = vadd.f32 %v4857, %v4823
        %v4859 = vadd.f32 %v4858, %v4824
        %v4860 = vadd.f32 %v4859, %v4825
        %v4861 = vadd.f32 %v4860, %v4826
        %v4862 = vadd.f32 %v4861, %v4827
        %v4863 = vadd.f32 %v4862, %v4828
        %v4864 = vadd.f32 %v4863, %v4829
        %v4865 = vadd.f32 %v4864, %v4830
        %v4866 = vadd.f32 %v4865, %v4831
        %v4867 = vadd.f32 %v4866, %v4832
        %v4868 = vadd.f32 %v4867, %v4833
        %v4869 = vadd.f32 %v4868, %v4834
        %v4870 = vadd.f32 %v4869, %v4835
        %v4871 = vadd.f32 %v4870, %v4836
        %v4872 = vadd.f32 %v4871, %v4837
        %v4873 = vadd.f32 %v4872, %v4838
        %v4874 = vadd.f32 %v4873, %v4839
        %v4875 = vadd.f32 %v4874, %v4840
        %v4876 = vadd.f32 %v4875, %v4841
        %v4877 = vadd.f32 %v4876, %v4842
        %v4878 = vadd.f32 %v4877, %v4843
        %v4879 = vadd.f32 %v4878, %v4844
        %v4880 = vadd.f32 %v4879, %v4845
        %v4881 = vadd.f32 %v4880, %v4846
        %v4882 = vadd.f32 %v4881, %v4847
        %v4883 = vadd.f32 %v4882, %v4848
        %v4884 = vadd.f32 %v4883, %v4849
        %v4885 = vadd.f32 %v4884, %v4850
        %v4886 = vadd.f32 %v4885, %v4851
        %v4887 = vadd.f32 %v4886, %v4852
        %v4888 = vrot.slane %v4887, 4
        %v4889 = vadd.f32 %v4887, %v4888
        %v4890 = vrot.slane %v4889, 2
        %v4891 = vadd.f32 %v4889, %v4890
        %v4892 = vrot.slane %v4891, 1
        %v4893 = vadd.f32 %v4891, %v4892
        %vm4894 = vcmask 1040384
        %v4895 = vsel %vm4894, %v4816, %v4893
        %4896 = vst [vmem:[%s164] sm:$0x3] %v4895
        %s4897 = sand.u32 %s65, 1
        %s4898 = scalar_lea.sflag [#allocation7], %s4897
        %s4899 = sand.u32 %s65, 1
        %s4900 = smul.addr %s4899, 288
        %s4901 = scalar_lea.vmem [#allocation8], %s4900
        %s4902 = sand.u32 %s93, 1
        %s4903 = scalar_lea.sflag [#allocation10], %s4902
        %s4904 = sand.u32 %s93, 1
        %s4905 = smul.addr %s4904, 2
        %s4906 = scalar_lea.vmem [#allocation9], %s4905
        // Predicated region
        $region33: #{resblock_forward.6} parent=23 // pred_check
          %p4907 = pneg %p75
        $region34: #{resblock_forward.6} parent=23 // pred_check_branch
          %4909 = sbr.rel (%p4907) target = $region36
        $region35: #{resblock_forward.6} parent=23 // pred_region
          %s4910 = sadd.s32 %s26, %s27
          %s4911 = smul.u32 36, %s4910
          %s4913 = ssub.s32 4608, 4608
          %4914 = vsyncadd %s4898, %s4913
          %s4915 = smul.addr %s4911, 128
          %s4916 = scalar_lea.hbm %s2, %s4915
          %s4917 = sshll.u32 %s4901, 4
          %s4918 = int_to_ptr.vmem [resolvable:$true] %s4917
          %4923 = dma.vmem_to_hbm [thread:$0]  %s4918, 4608, %s4916, %s4898, 128, 128, 8
        $region36: #{resblock_forward.6} parent=23 // pred_fallthru
          _
        // Predicated region
        $region37: #{resblock_forward.6} parent=23 // pred_check
          %p4924 = pneg %p103
        $region38: #{resblock_forward.6} parent=23 // pred_check_branch
          %4926 = sbr.rel (%p4924) target = $region40
        $region39: #{resblock_forward.6} parent=23 // pred_region
          %s4928 = ssub.s32 32, 32
          %4929 = vsyncadd %s4903, %s4928
          %s4930 = sadd.s32 %s27, %s26
          %s4931 = smul.addr %s4930, 32
          %s4932 = scalar_lea.hbm %s3, %s4931
          %s4934 = sshll.u32 %s4906, 4
          %s4935 = int_to_ptr.vmem [resolvable:$true] %s4934
          %4937 = dma.vmem_to_hbm [thread:$0]  %s4935, 32, %s4932, %s4903
        $region40: #{resblock_forward.6} parent=23 // pred_fallthru
          _
      $region24: #{resblock_forward.6} parent=5 // pred_fallthru
        _
      %p4938 = scmp.le.s32.totalorder 2, %s17
      // Predicated region
      $region41: #{resblock_forward.6} parent=5 // pred_check
        %p4939 = pneg %p4938
      $region42: #{resblock_forward.6} parent=5 // pred_check_branch
        %4941 = sbr.rel (%p4939) target = $region44
      $region43: #{resblock_forward.6} parent=5 // pred_region
        %s4942 = ssub.s32 %s17, 2
        // Predicated region
        $region45: #{resblock_forward.6} parent=43 // pred_check
          %p4943 = pneg %p81
        $region46: #{resblock_forward.6} parent=43 // pred_check_branch
          %4945 = sbr.rel (%p4943) target = $region48
        $region47: #{resblock_forward.6} parent=43 // pred_region
          %s4946 = sand.u32 %s66, 1
          %s4947 = scalar_lea.sflag [#allocation7], %s4946
          %s4948 = sand.u32 %s66, 1
          %s4949 = smul.addr %s4948, 288
          %s4950 = scalar_lea.vmem [#allocation8], %s4949
          %4951 = dma.done %s4947, 4608
        $region48: #{resblock_forward.6} parent=43 // pred_fallthru
          _
        // Predicated region
        $region49: #{resblock_forward.6} parent=43 // pred_check
          %p4952 = pneg %p109
        $region50: #{resblock_forward.6} parent=43 // pred_check_branch
          %4954 = sbr.rel (%p4952) target = $region52
        $region51: #{resblock_forward.6} parent=43 // pred_region
          %s4955 = sand.u32 %s94, 1
          %s4956 = scalar_lea.sflag [#allocation10], %s4955
          %s4957 = sand.u32 %s94, 1
          %s4958 = smul.addr %s4957, 2
          %s4959 = scalar_lea.vmem [#allocation9], %s4958
          %4960 = dma.done %s4956, 32
        $region52: #{resblock_forward.6} parent=43 // pred_fallthru
          _
      $region44: #{resblock_forward.6} parent=5 // pred_fallthru
        _
    $region6: #{resblock_forward.6} parent=1 // loop_footer
      %s21 = sadd.s32 1, %s17
    $region7: #{resblock_forward.6} parent=1 // loop_footer_branch
      %16 = sbr.rel target = $region3
    $region8: #{resblock_forward.6} parent=1 // loop_exit
      _
    %4961 = vsyncpa [#allocation6], 1
    %s4962 = scalar_lea.sflag [#allocation6], 1
    %4963 = vsyncpa %s4962, 1
    %4964 = vsyncpa [#allocation7], 1
    %s4965 = scalar_lea.sflag [#allocation7], 1
    %4966 = vsyncpa %s4965, 1
    %4967 = vsyncpa [#allocation10], 1
    %s4968 = scalar_lea.sflag [#allocation10], 1
    %4969 = vsyncpa %s4968, 1
  %4970 = vsyncmov [#allocation4]
  %s4971 = vpop.sfrf %4970
  %p4972 = scmp.eq.s32.totalorder %s4971, 0
  %p4973 = pneg %p4972
  %4975 = shalt.err (%p4973)

</llo_original>
